<compile_context>
chip_gen: v7x
topology: tpu7x:2x2x1
jax: 0.10.0
libtpu: 0.0.40
codegen_flags: <defaults>
</compile_context>

<pallas_src>
import functools

import jax
import jax.numpy as jnp
from jax import lax
from jax.experimental import pallas as pl
from jax.experimental.pallas import tpu as pltpu

LANE = 128
DEFAULT_TCO = 256          # output-channel tile (multiple of 128)


def _round_up(x, m):
    return ((x + m - 1) // m) * m


def _pad_ch(c):
    """Channel padding rule: multiples of 256 for wide layers so the Cout tile
    can stay 256 wide (full v6e/v7x MXU); 128 for narrow layers (v5e MXU)."""
    return _round_up(c, 256) if c > LANE else LANE


def _pick_co_tile(cout_pad, tco_max):
    """Largest multiple of 128 that divides cout_pad and is <= tco_max."""
    best = LANE
    for c in range(LANE, cout_pad + 1, LANE):
        if cout_pad % c == 0 and c <= tco_max:
            best = c
    return best


def _default_vmem_limit():
    """Generation-dependent scoped-VMEM limit: ~100 MiB on 128-MiB parts
    (v5e/v6e), capacity - 16 MiB headroom on v7x (64 MiB)."""
    try:
        cap = getattr(pltpu.get_tpu_info(), "vmem_capacity_bytes", None)
    except Exception:
        cap = None
    if cap is None:
        return 64 * 1024 * 1024
    return int(max(32 * 1024 * 1024,
                   min(int(cap) - 16 * 1024 * 1024, 100 * 1024 * 1024)))


# ---------------------------------------------------------------------------
# Pallas kernel: K-tap conv + folded-BN bias [+ fused 1x1 identity] [+ ReLU],
# margin-layout in -> margin-layout out (margins/tail rows written as zeros).
# ---------------------------------------------------------------------------
def _make_kernel(*, K, dilation, row0, lv, l_real, relu, fuse_id, margin,
                 t_out):
    tail = t_out - margin - lv

    def kernel(*refs):
        if fuse_id:
            x_ref, w_ref, b_ref, xid_ref, wid_ref, bid_ref, o_ref, acc_ref = refs
        else:
            x_ref, w_ref, b_ref, o_ref, acc_ref = refs

        # K-tap conv accumulation.  Tap 0 *initializes* the accumulator (no
        # separate zero pass); taps 1..K-1 accumulate.  On v7x Mosaic can keep
        # the chain in the MXU result buffer (MRB) without per-tap VPU adds.
        for k in range(K):
            start = row0 + k * dilation                      # static offset
            xs = x_ref[0, pl.ds(start, lv), :]
            d = jnp.dot(xs, w_ref[k], preferred_element_type=jnp.float32)
            if k == 0:
                acc_ref[...] = d
            else:
                acc_ref[...] += d

        y = acc_ref[...] + b_ref[...]                        # folded-BN bias
        if fuse_id:
            # fused 1x1 identity branch (conv + folded BN, no activation)
            xid = xid_ref[0, pl.ds(margin, lv), :]
            y = y + jnp.dot(xid, wid_ref[0],
                            preferred_element_type=jnp.float32)
            y = y + bid_ref[...]
        if relu:
            y = jnp.maximum(y, 0.0)
        if lv > l_real:
            # zero rows >= l_real so the next layer's right halo reads exact
            # zeros (replicates PyTorch zero padding)
            rows = lax.broadcasted_iota(jnp.int32, y.shape, 0)
            y = jnp.where(rows < l_real, y, 0.0)

        cw = y.shape[1]
        o_ref[0, margin:margin + lv, :] = y.astype(o_ref.dtype)
        # carried margins stay exactly zero — they are the next layer's
        # left/right zero padding
        o_ref[0, :margin, :] = jnp.zeros((margin, cw), o_ref.dtype)
        if tail > 0:
            o_ref[0, margin + lv:, :] = jnp.zeros((tail, cw), o_ref.dtype)

    return kernel


# ---------------------------------------------------------------------------
# Fused ConvBlock1d wrapper
# ---------------------------------------------------------------------------
def _fused_conv_layer(x, w, b, *, K, dilation, padding, relu, out_dtype,
                      margin, lv, l_real, t_out, vmem_limit, identity=None,
                      tco_max=DEFAULT_TCO):
    """x: (N, t_in, cin_pad) margin-layout activations (compute dtype);
    w: (K, cin_pad, cout_pad) BN-folded weights (compute dtype);
    b: (cout_pad,) f32 folded bias;
    identity: optional (x_id, w_id, b_id) for the fused 1x1 identity branch."""
    N, t_in, cin_pad = x.shape
    kw, wcin, cout_pad = w.shape
    assert kw == K and wcin == cin_pad
    row0 = margin - padding
    assert 0 <= row0 and row0 + dilation * (K - 1) + lv <= t_in

    tco = _pick_co_tile(cout_pad, tco_max)
    co_blocks = cout_pad // tco
    b2 = b.reshape(1, cout_pad).astype(jnp.float32)

    in_specs = [
        # resident (margin-layout) activation block of one batch element
        pl.BlockSpec((1, t_in, cin_pad), lambda n, co: (n, 0, 0)),
        # all K taps, full Cin, one lane-dense Cout tile
        pl.BlockSpec((K, cin_pad, tco), lambda n, co: (0, 0, co)),
        pl.BlockSpec((1, tco), lambda n, co: (0, co)),
    ]
    args = [x, w, b2]
    flops = 2 * N * lv * K * cin_pad * cout_pad
    bytes_acc = (x.size * x.dtype.itemsize + w.size * w.dtype.itemsize
                 + b2.size * 4
                 + N * t_out * cout_pad * jnp.dtype(out_dtype).itemsize)

    fuse_id = identity is not None
    if fuse_id:
        x_id, w_id, b_id = identity
        _, t_id, cid = x_id.shape
        assert t_id >= margin + lv and w_id.shape == (1, cid, cout_pad)
        in_specs += [
            pl.BlockSpec((1, t_id, cid), lambda n, co: (n, 0, 0)),
            pl.BlockSpec((1, cid, tco), lambda n, co: (0, 0, co)),
            pl.BlockSpec((1, tco), lambda n, co: (0, co)),
        ]
        args += [x_id, w_id, b_id.reshape(1, cout_pad).astype(jnp.float32)]
        flops += 2 * N * lv * cid * cout_pad
        bytes_acc += (x_id.size * x_id.dtype.itemsize
                      + w_id.size * w_id.dtype.itemsize + cout_pad * 4)

    kernel = _make_kernel(K=K, dilation=dilation, row0=row0, lv=lv,
                          l_real=l_real, relu=relu, fuse_id=fuse_id,
                          margin=margin, t_out=t_out)
    return pl.pallas_call(
        kernel,
        out_shape=jax.ShapeDtypeStruct((N, t_out, cout_pad), out_dtype),
        grid=(N, co_blocks),
        in_specs=in_specs,
        out_specs=pl.BlockSpec((1, t_out, tco), lambda n, co: (n, 0, co)),
        scratch_shapes=[pltpu.VMEM((lv, tco), jnp.float32)],
        compiler_params=pltpu.CompilerParams(
            dimension_semantics=("parallel", "parallel"),
            vmem_limit_bytes=vmem_limit),
        cost_estimate=pl.CostEstimate(flops=int(flops), transcendentals=0,
                                      bytes_accessed=int(bytes_acc)),
    )(*args)


# ---------------------------------------------------------------------------
# Parameter construction (synthetic, deterministic).  BN folded offline:
#   w_folded[k, ci, co] = w[co, ci, k] * gamma[co] / sqrt(var[co] + eps)
#   b_folded[co]        = beta[co] - mean[co] * scale[co]
# Channels padded per _pad_ch; weights pre-cast to bf16 at build time.
# ---------------------------------------------------------------------------
def make_conv_params(key, cin, cout, k, use_bn=True, conv_bias=False,
                     bn_eps=1e-5):
    k0, k1, k2, k3, k4, k5 = jax.random.split(key, 6)
    w = jax.random.normal(k0, (cout, cin, k), jnp.float32) / jnp.sqrt(
        float(cin * k))
    if use_bn:
        gamma = 1.0 + 0.1 * jax.random.normal(k1, (cout,), jnp.float32)
        beta = 0.1 * jax.random.normal(k2, (cout,), jnp.float32)
        rmean = 0.1 * jax.random.normal(k3, (cout,), jnp.float32)
        rvar = 1.0 + 0.1 * jnp.abs(jax.random.normal(k4, (cout,), jnp.float32))
        scale = gamma / jnp.sqrt(rvar + bn_eps)
        bias = beta - rmean * scale
    else:
        scale = jnp.ones((cout,), jnp.float32)
        bias = (0.01 * jax.random.normal(k5, (cout,), jnp.float32)
                if conv_bias else jnp.zeros((cout,), jnp.float32))

    cin_pad, cout_pad = _pad_ch(cin), _pad_ch(cout)
    w_fold = jnp.transpose(w, (2, 1, 0)) * scale[None, None, :]  # (k,cin,cout)
    w_pal = jnp.zeros((k, cin_pad, cout_pad), jnp.float32)
    w_pal = w_pal.at[:, :cin, :cout].set(w_fold)
    b_pal = jnp.zeros((cout_pad,), jnp.float32).at[:cout].set(bias)
    return {"w_raw": w, "scale": scale, "bias": bias,
            "w_pal": w_pal, "w_bf16": w_pal.astype(jnp.bfloat16),
            "b_pal": b_pal}


def _phase_fold_weights(w_pal):
    """(K, Cin, Cout) stride-1 weights -> (ceil(K/2), 2*Cin, Cout) weights for
    the even/odd-phase-paired input (computes the stride-2 conv densely)."""
    K, cin_pad, cout_pad = w_pal.shape
    kh = (K + 1) // 2
    w2 = jnp.zeros((kh, 2 * cin_pad, cout_pad), w_pal.dtype)
    w2 = w2.at[:, :cin_pad, :].set(w_pal[0::2])
    odd = w_pal[1::2]
    w2 = w2.at[:odd.shape[0], cin_pad:, :].set(odd)
    return w2


def build_jasper_params(key, channels, kernel_sizes, repeat, in_channels,
                        num_classes):
    params = {}
    key, k = jax.random.split(key)
    init = make_conv_params(k, in_channels, channels[0], kernel_sizes[0])
    init["w2_f32"] = _phase_fold_weights(init["w_pal"])
    init["w2_bf16"] = init["w2_f32"].astype(jnp.bfloat16)
    params["init"] = init

    c = channels[0]
    units = []
    for out_c, ks in zip(channels[1:-2], kernel_sizes[1:-2]):
        key, ki = jax.random.split(key)
        ident = make_conv_params(ki, c, out_c, 1)
        body = []
        ci = c
        for _ in range(repeat):
            key, kb = jax.random.split(key)
            body.append(make_conv_params(kb, ci, out_c, ks))
            ci = out_c
        units.append({"ident": ident, "body": body})
        c = out_c
    params["units"] = units

    key, k1 = jax.random.split(key)
    params["final1"] = make_conv_params(k1, c, channels[-2], kernel_sizes[-2])
    key, k2 = jax.random.split(key)
    params["final2"] = make_conv_params(k2, channels[-2], channels[-1],
                                        kernel_sizes[-1])
    key, k3 = jax.random.split(key)
    params["out"] = make_conv_params(k3, channels[-1], num_classes, 1,
                                     use_bn=False, conv_bias=True)
    return params


# ---------------------------------------------------------------------------
# Jasper forward (Pallas-backed).  Input/output in PyTorch NCL layout.
# ---------------------------------------------------------------------------
@functools.partial(jax.jit,
                   static_argnames=("kernel_sizes", "num_classes",
                                    "compute_dtype"))
def jasper_forward(x_ncl, params, *, kernel_sizes, num_classes,
                   compute_dtype=jnp.bfloat16):
    N, cin, L = x_ncl.shape
    ks = kernel_sizes
    ks0 = ks[0]
    pad0 = ks0 // 2

    # ---- static layout constants -------------------------------------------
    L1 = (L + 2 * pad0 - (ks0 - 1) - 1) // 2 + 1       # init stride-2 out len
    unit_pads = [k // 2 for k in ks[1:-2]]
    pad_f1 = 2 * ks[-2] // 2 - 1                       # dilated "same" conv
    pad_f2 = ks[-1] // 2
    for k_odd in ks[1:-2] + (ks[-1],):
        assert k_odd % 2 == 1, "Jasper 'same' convs need odd kernel sizes"
    max_pad = max(unit_pads + [pad_f1, pad_f2, 1])
    margin = _round_up(max_pad, 16)      # left/right zero margin (halo source)
    lv = _round_up(L1, 16)               # valid-row block (rows >= L1 zeroed)
    T = margin + lv + margin             # carried row count, all post-init
    vmem_limit = _default_vmem_limit()

    use_bf16 = jnp.dtype(compute_dtype) == jnp.dtype(jnp.bfloat16)
    wkey = "w_bf16" if use_bf16 else "w_pal"
    act_dtype = compute_dtype

    layer = functools.partial(_fused_conv_layer, margin=margin, lv=lv,
                              l_real=L1, t_out=T, vmem_limit=vmem_limit)

    # ---- init block: stride-2 conv via even/odd phase folding ---------------
    p = params["init"]
    cin_pad0 = p["w_pal"].shape[1]
    kh = (ks0 + 1) // 2
    U = max(lv + kh - 1, -(-(pad0 + L) // 2))
    x = jnp.transpose(x_ncl, (0, 2, 1)).astype(act_dtype)        # NCL -> NLC
    xp = jnp.zeros((N, 2 * U, cin_pad0), act_dtype)
    xp = xp.at[:, pad0:pad0 + L, :cin].set(x)                    # left zero-pad
    x_pair = xp.reshape(N, U, 2 * cin_pad0)  # row u = (x_pad[2u], x_pad[2u+1])
    t_in0 = margin + _round_up(U, 16)
    x0 = jnp.zeros((N, t_in0, 2 * cin_pad0), act_dtype)
    x0 = x0.at[:, margin:margin + U, :].set(x_pair)
    w2 = p["w2_bf16"] if use_bf16 else p["w2_f32"]
    h = layer(x0, w2, p["b_pal"], K=kh, dilation=1, padding=0, relu=True,
              out_dtype=act_dtype)

    # ---- Jasper units (1x1 identity fused into the last body block) ---------
    for u, k_u in zip(params["units"], ks[1:-2]):
        pad_u = k_u // 2
        x_unit = h
        n_body = len(u["body"])
        for i, pb in enumerate(u["body"]):
            ident = None
            if i == n_body - 1:
                ident = (x_unit, u["ident"][wkey], u["ident"]["b_pal"])
            h = layer(h, pb[wkey], pb["b_pal"], K=k_u, dilation=1,
                      padding=pad_u, relu=True, identity=ident,
                      out_dtype=act_dtype)

    # ---- final blocks (dilated conv, plain conv), then 1x1 logits conv ------
    p = params["final1"]
    h = layer(h, p[wkey], p["b_pal"], K=ks[-2], dilation=2, padding=pad_f1,
              relu=True, out_dtype=act_dtype)
    p = params["final2"]
    h = layer(h, p[wkey], p["b_pal"], K=ks[-1], dilation=1, padding=pad_f2,
              relu=True, out_dtype=act_dtype)
    p = params["out"]
    h = layer(h, p[wkey], p["b_pal"], K=1, dilation=1, padding=0, relu=False,
              out_dtype=jnp.float32)

    logits = h[:, margin:margin + L1, :num_classes]
    return jnp.transpose(logits, (0, 2, 1)).astype(jnp.float32)  # NLC -> NCL


# ---------------------------------------------------------------------------
# Pure-JAX reference (lax.conv, f32) for correctness checking
# ---------------------------------------------------------------------------
def _ref_block(x_ncl, w, scale, bias, stride, padding, dilation, relu,
               residual=None):
    y = lax.conv_general_dilated(
        x_ncl, w, window_strides=(stride,), padding=[(padding, padding)],
        rhs_dilation=(dilation,), dimension_numbers=("NCH", "OIH", "NCH"))
    y = y * scale[None, :, None] + bias[None, :, None]
    if residual is not None:
        y = y + residual
    if relu:
        y = jnp.maximum(y, 0.0)
    return y


def jasper_reference(x_ncl, params, kernel_sizes):
    x = x_ncl
    p = params["init"]
    x = _ref_block(x, p["w_raw"], p["scale"], p["bias"], 2,
                   kernel_sizes[0] // 2, 1, True)
    for u, ks in zip(params["units"], kernel_sizes[1:-2]):
        pi = u["ident"]
        identity = _ref_block(x, pi["w_raw"], pi["scale"], pi["bias"],
                              1, 0, 1, False)
        h = x
        n = len(u["body"])
        for i, pb in enumerate(u["body"]):
            res = identity if i == n - 1 else None
            h = _ref_block(h, pb["w_raw"], pb["scale"], pb["bias"], 1,
                           ks // 2, 1, True, residual=res)
        x = h
    ks_m2, ks_m1 = kernel_sizes[-2], kernel_sizes[-1]
    p = params["final1"]
    x = _ref_block(x, p["w_raw"], p["scale"], p["bias"], 1,
                   2 * ks_m2 // 2 - 1, 2, True)
    p = params["final2"]
    x = _ref_block(x, p["w_raw"], p["scale"], p["bias"], 1, ks_m1 // 2, 1, True)
    p = params["out"]
    x = _ref_block(x, p["w_raw"], p["scale"], p["bias"], 1, 0, 1, False)
    return x


# ---------------------------------------------------------------------------
if __name__ == "__main__":
    # Small synthetic Jasper configuration.
    channels = [16, 24, 32, 48, 64]       # init, unit1, unit2, final1, final2
    kernel_sizes = (3, 3, 5, 7, 1)
    repeat = 2
    in_channels = 8
    num_classes = 11

    key = jax.random.PRNGKey(0)
    key, kp, kx = jax.random.split(key, 3)
    params = build_jasper_params(kp, channels, kernel_sizes, repeat,
                                 in_channels, num_classes)

    # Input: (batch, audio features, sequence length) — PyTorch NCL layout.
    x = jax.random.normal(kx, (2, in_channels, 32), jnp.float32)

    ref = jax.block_until_ready(jasper_reference(x, params, kernel_sizes))

    # 1) Exact-math check: f32 operands through the Pallas path.
    out_f32 = jax.block_until_ready(
        jasper_forward(x, params, kernel_sizes=kernel_sizes,
                       num_classes=num_classes, compute_dtype=jnp.float32))
    assert out_f32.shape == (2, num_classes, 16), out_f32.shape
    assert jnp.all(jnp.isfinite(out_f32))
    assert jnp.allclose(out_f32, ref, rtol=1e-3, atol=1e-3), (
        float(jnp.max(jnp.abs(out_f32 - ref))))

    # 2) Fast path: bf16 MXU operands + bf16 inter-layer activations.
    out_bf16 = jax.block_until_ready(
        jasper_forward(x, params, kernel_sizes=kernel_sizes,
                       num_classes=num_classes, compute_dtype=jnp.bfloat16))
    assert out_bf16.shape == (2, num_classes, 16), out_bf16.shape
    assert jnp.all(jnp.isfinite(out_bf16))
    assert jnp.allclose(out_bf16, ref, rtol=1e-1, atol=1e-1), (
        float(jnp.max(jnp.abs(out_bf16 - ref))))

    print("KERNEL_OK")
</pallas_src>

<mosaic_0001>
module attributes {stable_mosaic.version = 11 : i64} {
  func.func @kernel(%arg0: i32, %arg1: i32, %arg2: memref<1x48x128xf32, #tpu.memory_space<vmem>>, %arg3: memref<3x128x128xf32, #tpu.memory_space<vmem>>, %arg4: memref<1x128xf32, #tpu.memory_space<vmem>>, %arg5: memref<1x48x128xf32, #tpu.memory_space<vmem>>, %arg6: memref<16x128xf32, #tpu.memory_space<vmem>>) attributes {dimension_semantics = [#tpu.dimension_semantics<parallel>, #tpu.dimension_semantics<parallel>], iteration_bounds = array<i64: 2, 1>, scalar_prefetch = 0 : i64, scratch_operands = 1 : i64, tpu.core_type = #tpu.core_type<tc>, window_params = [{transform_indices = @transform_0, window_bounds = array<i64: 1, 48, 128>}, {transform_indices = @transform_1, window_bounds = array<i64: 3, 128, 128>}, {transform_indices = @transform_2, window_bounds = array<i64: 1, 128>}, {transform_indices = @transform_3, window_bounds = array<i64: 1, 48, 128>}]} {
    %c0 = arith.constant 0 : index
    %c15 = arith.constant 15 : index
    %c0_0 = arith.constant 0 : index
    %0 = vector.load %arg2[%c0, %c15, %c0_0] : memref<1x48x128xf32, #tpu.memory_space<vmem>>, vector<1x16x128xf32>
    %1 = vector.shape_cast %0 : vector<1x16x128xf32> to vector<16x128xf32>
    %c0_1 = arith.constant 0 : index
    %c0_2 = arith.constant 0 : index
    %c0_3 = arith.constant 0 : index
    %2 = vector.load %arg3[%c0_1, %c0_2, %c0_3] : memref<3x128x128xf32, #tpu.memory_space<vmem>>, vector<1x128x128xf32>
    %3 = vector.shape_cast %2 : vector<1x128x128xf32> to vector<128x128xf32>
    %cst = arith.constant dense<0.000000e+00> : vector<16x128xf32>
    %4 = tpu.matmul %1, %3, %cst {dimension_numbers = #tpu.dot_dimension_numbers<[1], [0], [0], [1], [0, 0, 1, 1], [], []>} : vector<16x128xf32>, vector<128x128xf32>, vector<16x128xf32> -> vector<16x128xf32>
    %c0_4 = arith.constant 0 : index
    %c0_5 = arith.constant 0 : index
    %5 = vector.load %arg6[%c0_4, %c0_5] : memref<16x128xf32, #tpu.memory_space<vmem>>, vector<16x128xf32>
    tpu.vector_store %arg6[%c0_4, %c0_5], %4 {strides = array<i32>} : memref<16x128xf32, #tpu.memory_space<vmem>>, vector<16x128xf32>,
    %c0_6 = arith.constant 0 : index
    %c16 = arith.constant 16 : index
    %c0_7 = arith.constant 0 : index
    %6 = vector.load %arg2[%c0_6, %c16, %c0_7] : memref<1x48x128xf32, #tpu.memory_space<vmem>>, vector<1x16x128xf32>
    %7 = vector.shape_cast %6 : vector<1x16x128xf32> to vector<16x128xf32>
    %c1 = arith.constant 1 : index
    %c0_8 = arith.constant 0 : index
    %c0_9 = arith.constant 0 : index
    %8 = vector.load %arg3[%c1, %c0_8, %c0_9] : memref<3x128x128xf32, #tpu.memory_space<vmem>>, vector<1x128x128xf32>
    %9 = vector.shape_cast %8 : vector<1x128x128xf32> to vector<128x128xf32>
    %cst_10 = arith.constant dense<0.000000e+00> : vector<16x128xf32>
    %10 = tpu.matmul %7, %9, %cst_10 {dimension_numbers = #tpu.dot_dimension_numbers<[1], [0], [0], [1], [0, 0, 1, 1], [], []>} : vector<16x128xf32>, vector<128x128xf32>, vector<16x128xf32> -> vector<16x128xf32>
    %c0_11 = arith.constant 0 : index
    %c0_12 = arith.constant 0 : index
    %11 = vector.load %arg6[%c0_11, %c0_12] : memref<16x128xf32, #tpu.memory_space<vmem>>, vector<16x128xf32>
    %12 = arith.addf %11, %10 : vector<16x128xf32>
    %c0_13 = arith.constant 0 : index
    %c0_14 = arith.constant 0 : index
    %13 = vector.load %arg6[%c0_13, %c0_14] : memref<16x128xf32, #tpu.memory_space<vmem>>, vector<16x128xf32>
    tpu.vector_store %arg6[%c0_13, %c0_14], %12 {strides = array<i32>} : memref<16x128xf32, #tpu.memory_space<vmem>>, vector<16x128xf32>,
    %c0_15 = arith.constant 0 : index
    %c17 = arith.constant 17 : index
    %c0_16 = arith.constant 0 : index
    %14 = vector.load %arg2[%c0_15, %c17, %c0_16] : memref<1x48x128xf32, #tpu.memory_space<vmem>>, vector<1x16x128xf32>
    %15 = vector.shape_cast %14 : vector<1x16x128xf32> to vector<16x128xf32>
    %c2 = arith.constant 2 : index
    %c0_17 = arith.constant 0 : index
    %c0_18 = arith.constant 0 : index
    %16 = vector.load %arg3[%c2, %c0_17, %c0_18] : memref<3x128x128xf32, #tpu.memory_space<vmem>>, vector<1x128x128xf32>
    %17 = vector.shape_cast %16 : vector<1x128x128xf32> to vector<128x128xf32>
    %cst_19 = arith.constant dense<0.000000e+00> : vector<16x128xf32>
    %18 = tpu.matmul %15, %17, %cst_19 {dimension_numbers = #tpu.dot_dimension_numbers<[1], [0], [0], [1], [0, 0, 1, 1], [], []>} : vector<16x128xf32>, vector<128x128xf32>, vector<16x128xf32> -> vector<16x128xf32>
    %c0_20 = arith.constant 0 : index
    %c0_21 = arith.constant 0 : index
    %19 = vector.load %arg6[%c0_20, %c0_21] : memref<16x128xf32, #tpu.memory_space<vmem>>, vector<16x128xf32>
    %20 = arith.addf %19, %18 : vector<16x128xf32>
    %c0_22 = arith.constant 0 : index
    %c0_23 = arith.constant 0 : index
    %21 = vector.load %arg6[%c0_22, %c0_23] : memref<16x128xf32, #tpu.memory_space<vmem>>, vector<16x128xf32>
    tpu.vector_store %arg6[%c0_22, %c0_23], %20 {strides = array<i32>} : memref<16x128xf32, #tpu.memory_space<vmem>>, vector<16x128xf32>,
    %c0_24 = arith.constant 0 : index
    %c0_25 = arith.constant 0 : index
    %22 = vector.load %arg6[%c0_24, %c0_25] : memref<16x128xf32, #tpu.memory_space<vmem>>, vector<16x128xf32>
    %c0_26 = arith.constant 0 : index
    %c0_27 = arith.constant 0 : index
    %23 = vector.load %arg4[%c0_26, %c0_27] : memref<1x128xf32, #tpu.memory_space<vmem>>, vector<1x128xf32>
    %24 = vector.broadcast %23 : vector<1x128xf32> to vector<16x128xf32>
    %25 = arith.addf %22, %24 : vector<16x128xf32>
    %cst_28 = arith.constant 0.000000e+00 : f32
    %26 = vector.broadcast %cst_28 : f32 to vector<16x128xf32>
    %27 = arith.maximumf %25, %26 : vector<16x128xf32>
    %c0_29 = arith.constant 0 : index
    %c16_30 = arith.constant 16 : index
    %c0_31 = arith.constant 0 : index
    %28 = vector.load %arg5[%c0_29, %c16_30, %c0_31] : memref<1x48x128xf32, #tpu.memory_space<vmem>>, vector<1x16x128xf32>
    %29 = vector.shape_cast %28 : vector<1x16x128xf32> to vector<16x128xf32>
    %30 = vector.shape_cast %27 : vector<16x128xf32> to vector<1x16x128xf32>
    tpu.vector_store %arg5[%c0_29, %c16_30, %c0_31], %30 {strides = array<i32>} : memref<1x48x128xf32, #tpu.memory_space<vmem>>, vector<1x16x128xf32>,
    %cst_32 = arith.constant 0.000000e+00 : f32
    %31 = vector.broadcast %cst_32 : f32 to vector<16x128xf32>
    %c0_33 = arith.constant 0 : index
    %c0_34 = arith.constant 0 : index
    %c0_35 = arith.constant 0 : index
    %32 = vector.load %arg5[%c0_33, %c0_34, %c0_35] : memref<1x48x128xf32, #tpu.memory_space<vmem>>, vector<1x16x128xf32>
    %33 = vector.shape_cast %32 : vector<1x16x128xf32> to vector<16x128xf32>
    %34 = vector.shape_cast %31 : vector<16x128xf32> to vector<1x16x128xf32>
    tpu.vector_store %arg5[%c0_33, %c0_34, %c0_35], %34 {strides = array<i32>} : memref<1x48x128xf32, #tpu.memory_space<vmem>>, vector<1x16x128xf32>,
    %cst_36 = arith.constant 0.000000e+00 : f32
    %35 = vector.broadcast %cst_36 : f32 to vector<16x128xf32>
    %c0_37 = arith.constant 0 : index
    %c32 = arith.constant 32 : index
    %c0_38 = arith.constant 0 : index
    %36 = vector.load %arg5[%c0_37, %c32, %c0_38] : memref<1x48x128xf32, #tpu.memory_space<vmem>>, vector<1x16x128xf32>
    %37 = vector.shape_cast %36 : vector<1x16x128xf32> to vector<16x128xf32>
    %38 = vector.shape_cast %35 : vector<16x128xf32> to vector<1x16x128xf32>
    tpu.vector_store %arg5[%c0_37, %c32, %c0_38], %38 {strides = array<i32>} : memref<1x48x128xf32, #tpu.memory_space<vmem>>, vector<1x16x128xf32>,
    return
  }
  func.func @transform_0(%arg0: i32, %arg1: i32) -> (i32, i32, i32) {
    %c0_i32 = arith.constant 0 : i32
    %c0_i32_0 = arith.constant 0 : i32
    %c0_i32_1 = arith.constant 0 : i32
    return %arg0, %c0_i32, %c0_i32_0 : i32, i32, i32
  }
  func.func @transform_1(%arg0: i32, %arg1: i32) -> (i32, i32, i32) {
    %c0_i32 = arith.constant 0 : i32
    %c0_i32_0 = arith.constant 0 : i32
    %c0_i32_1 = arith.constant 0 : i32
    return %c0_i32, %c0_i32_0, %arg1 : i32, i32, i32
  }
  func.func @transform_2(%arg0: i32, %arg1: i32) -> (i32, i32) {
    %c0_i32 = arith.constant 0 : i32
    %c0_i32_0 = arith.constant 0 : i32
    return %c0_i32, %arg1 : i32, i32
  }
  func.func @transform_3(%arg0: i32, %arg1: i32) -> (i32, i32, i32) {
    %c0_i32 = arith.constant 0 : i32
    %c0_i32_0 = arith.constant 0 : i32
    return %arg0, %c0_i32, %arg1 : i32, i32, i32
  }
}

module attributes {stable_mosaic.version = 11 : i64} {
  func.func @kernel(%arg0: i32, %arg1: i32, %arg2: memref<1x48x128xf32, #tpu.memory_space<vmem>>, %arg3: memref<3x128x128xf32, #tpu.memory_space<vmem>>, %arg4: memref<1x128xf32, #tpu.memory_space<vmem>>, %arg5: memref<1x48x128xf32, #tpu.memory_space<vmem>>, %arg6: memref<1x128x128xf32, #tpu.memory_space<vmem>>, %arg7: memref<1x128xf32, #tpu.memory_space<vmem>>, %arg8: memref<1x48x128xf32, #tpu.memory_space<vmem>>, %arg9: memref<16x128xf32, #tpu.memory_space<vmem>>) attributes {dimension_semantics = [#tpu.dimension_semantics<parallel>, #tpu.dimension_semantics<parallel>], iteration_bounds = array<i64: 2, 1>, scalar_prefetch = 0 : i64, scratch_operands = 1 : i64, tpu.core_type = #tpu.core_type<tc>, window_params = [{transform_indices = @transform_0, window_bounds = array<i64: 1, 48, 128>}, {transform_indices = @transform_1, window_bounds = array<i64: 3, 128, 128>}, {transform_indices = @transform_2, window_bounds = array<i64: 1, 128>}, {transform_indices = @transform_3, window_bounds = array<i64: 1, 48, 128>}, {transform_indices = @transform_4, window_bounds = array<i64: 1, 128, 128>}, {transform_indices = @transform_5, window_bounds = array<i64: 1, 128>}, {transform_indices = @transform_6, window_bounds = array<i64: 1, 48, 128>}]} {
    %c0 = arith.constant 0 : index
    %c15 = arith.constant 15 : index
    %c0_0 = arith.constant 0 : index
    %0 = vector.load %arg2[%c0, %c15, %c0_0] : memref<1x48x128xf32, #tpu.memory_space<vmem>>, vector<1x16x128xf32>
    %1 = vector.shape_cast %0 : vector<1x16x128xf32> to vector<16x128xf32>
    %c0_1 = arith.constant 0 : index
    %c0_2 = arith.constant 0 : index
    %c0_3 = arith.constant 0 : index
    %2 = vector.load %arg3[%c0_1, %c0_2, %c0_3] : memref<3x128x128xf32, #tpu.memory_space<vmem>>, vector<1x128x128xf32>
    %3 = vector.shape_cast %2 : vector<1x128x128xf32> to vector<128x128xf32>
    %cst = arith.constant dense<0.000000e+00> : vector<16x128xf32>
    %4 = tpu.matmul %1, %3, %cst {dimension_numbers = #tpu.dot_dimension_numbers<[1], [0], [0], [1], [0, 0, 1, 1], [], []>} : vector<16x128xf32>, vector<128x128xf32>, vector<16x128xf32> -> vector<16x128xf32>
    %c0_4 = arith.constant 0 : index
    %c0_5 = arith.constant 0 : index
    %5 = vector.load %arg9[%c0_4, %c0_5] : memref<16x128xf32, #tpu.memory_space<vmem>>, vector<16x128xf32>
    tpu.vector_store %arg9[%c0_4, %c0_5], %4 {strides = array<i32>} : memref<16x128xf32, #tpu.memory_space<vmem>>, vector<16x128xf32>,
    %c0_6 = arith.constant 0 : index
    %c16 = arith.constant 16 : index
    %c0_7 = arith.constant 0 : index
    %6 = vector.load %arg2[%c0_6, %c16, %c0_7] : memref<1x48x128xf32, #tpu.memory_space<vmem>>, vector<1x16x128xf32>
    %7 = vector.shape_cast %6 : vector<1x16x128xf32> to vector<16x128xf32>
    %c1 = arith.constant 1 : index
    %c0_8 = arith.constant 0 : index
    %c0_9 = arith.constant 0 : index
    %8 = vector.load %arg3[%c1, %c0_8, %c0_9] : memref<3x128x128xf32, #tpu.memory_space<vmem>>, vector<1x128x128xf32>
    %9 = vector.shape_cast %8 : vector<1x128x128xf32> to vector<128x128xf32>
    %cst_10 = arith.constant dense<0.000000e+00> : vector<16x128xf32>
    %10 = tpu.matmul %7, %9, %cst_10 {dimension_numbers = #tpu.dot_dimension_numbers<[1], [0], [0], [1], [0, 0, 1, 1], [], []>} : vector<16x128xf32>, vector<128x128xf32>, vector<16x128xf32> -> vector<16x128xf32>
    %c0_11 = arith.constant 0 : index
    %c0_12 = arith.constant 0 : index
    %11 = vector.load %arg9[%c0_11, %c0_12] : memref<16x128xf32, #tpu.memory_space<vmem>>, vector<16x128xf32>
    %12 = arith.addf %11, %10 : vector<16x128xf32>
    %c0_13 = arith.constant 0 : index
    %c0_14 = arith.constant 0 : index
    %13 = vector.load %arg9[%c0_13, %c0_14] : memref<16x128xf32, #tpu.memory_space<vmem>>, vector<16x128xf32>
    tpu.vector_store %arg9[%c0_13, %c0_14], %12 {strides = array<i32>} : memref<16x128xf32, #tpu.memory_space<vmem>>, vector<16x128xf32>,
    %c0_15 = arith.constant 0 : index
    %c17 = arith.constant 17 : index
    %c0_16 = arith.constant 0 : index
    %14 = vector.load %arg2[%c0_15, %c17, %c0_16] : memref<1x48x128xf32, #tpu.memory_space<vmem>>, vector<1x16x128xf32>
    %15 = vector.shape_cast %14 : vector<1x16x128xf32> to vector<16x128xf32>
    %c2 = arith.constant 2 : index
    %c0_17 = arith.constant 0 : index
    %c0_18 = arith.constant 0 : index
    %16 = vector.load %arg3[%c2, %c0_17, %c0_18] : memref<3x128x128xf32, #tpu.memory_space<vmem>>, vector<1x128x128xf32>
    %17 = vector.shape_cast %16 : vector<1x128x128xf32> to vector<128x128xf32>
    %cst_19 = arith.constant dense<0.000000e+00> : vector<16x128xf32>
    %18 = tpu.matmul %15, %17, %cst_19 {dimension_numbers = #tpu.dot_dimension_numbers<[1], [0], [0], [1], [0, 0, 1, 1], [], []>} : vector<16x128xf32>, vector<128x128xf32>, vector<16x128xf32> -> vector<16x128xf32>
    %c0_20 = arith.constant 0 : index
    %c0_21 = arith.constant 0 : index
    %19 = vector.load %arg9[%c0_20, %c0_21] : memref<16x128xf32, #tpu.memory_space<vmem>>, vector<16x128xf32>
    %20 = arith.addf %19, %18 : vector<16x128xf32>
    %c0_22 = arith.constant 0 : index
    %c0_23 = arith.constant 0 : index
    %21 = vector.load %arg9[%c0_22, %c0_23] : memref<16x128xf32, #tpu.memory_space<vmem>>, vector<16x128xf32>
    tpu.vector_store %arg9[%c0_22, %c0_23], %20 {strides = array<i32>} : memref<16x128xf32, #tpu.memory_space<vmem>>, vector<16x128xf32>,
    %c0_24 = arith.constant 0 : index
    %c0_25 = arith.constant 0 : index
    %22 = vector.load %arg9[%c0_24, %c0_25] : memref<16x128xf32, #tpu.memory_space<vmem>>, vector<16x128xf32>
    %c0_26 = arith.constant 0 : index
    %c0_27 = arith.constant 0 : index
    %23 = vector.load %arg4[%c0_26, %c0_27] : memref<1x128xf32, #tpu.memory_space<vmem>>, vector<1x128xf32>
    %24 = vector.broadcast %23 : vector<1x128xf32> to vector<16x128xf32>
    %25 = arith.addf %22, %24 : vector<16x128xf32>
    %c0_28 = arith.constant 0 : index
    %c16_29 = arith.constant 16 : index
    %c0_30 = arith.constant 0 : index
    %26 = vector.load %arg5[%c0_28, %c16_29, %c0_30] : memref<1x48x128xf32, #tpu.memory_space<vmem>>, vector<1x16x128xf32>
    %27 = vector.shape_cast %26 : vector<1x16x128xf32> to vector<16x128xf32>
    %c0_31 = arith.constant 0 : index
    %c0_32 = arith.constant 0 : index
    %c0_33 = arith.constant 0 : index
    %28 = vector.load %arg6[%c0_31, %c0_32, %c0_33] : memref<1x128x128xf32, #tpu.memory_space<vmem>>, vector<1x128x128xf32>
    %29 = vector.shape_cast %28 : vector<1x128x128xf32> to vector<128x128xf32>
    %cst_34 = arith.constant dense<0.000000e+00> : vector<16x128xf32>
    %30 = tpu.matmul %27, %29, %cst_34 {dimension_numbers = #tpu.dot_dimension_numbers<[1], [0], [0], [1], [0, 0, 1, 1], [], []>} : vector<16x128xf32>, vector<128x128xf32>, vector<16x128xf32> -> vector<16x128xf32>
    %31 = arith.addf %25, %30 : vector<16x128xf32>
    %c0_35 = arith.constant 0 : index
    %c0_36 = arith.constant 0 : index
    %32 = vector.load %arg7[%c0_35, %c0_36] : memref<1x128xf32, #tpu.memory_space<vmem>>, vector<1x128xf32>
    %33 = vector.broadcast %32 : vector<1x128xf32> to vector<16x128xf32>
    %34 = arith.addf %31, %33 : vector<16x128xf32>
    %cst_37 = arith.constant 0.000000e+00 : f32
    %35 = vector.broadcast %cst_37 : f32 to vector<16x128xf32>
    %36 = arith.maximumf %34, %35 : vector<16x128xf32>
    %c0_38 = arith.constant 0 : index
    %c16_39 = arith.constant 16 : index
    %c0_40 = arith.constant 0 : index
    %37 = vector.load %arg8[%c0_38, %c16_39, %c0_40] : memref<1x48x128xf32, #tpu.memory_space<vmem>>, vector<1x16x128xf32>
    %38 = vector.shape_cast %37 : vector<1x16x128xf32> to vector<16x128xf32>
    %39 = vector.shape_cast %36 : vector<16x128xf32> to vector<1x16x128xf32>
    tpu.vector_store %arg8[%c0_38, %c16_39, %c0_40], %39 {strides = array<i32>} : memref<1x48x128xf32, #tpu.memory_space<vmem>>, vector<1x16x128xf32>,
    %cst_41 = arith.constant 0.000000e+00 : f32
    %40 = vector.broadcast %cst_41 : f32 to vector<16x128xf32>
    %c0_42 = arith.constant 0 : index
    %c0_43 = arith.constant 0 : index
    %c0_44 = arith.constant 0 : index
    %41 = vector.load %arg8[%c0_42, %c0_43, %c0_44] : memref<1x48x128xf32, #tpu.memory_space<vmem>>, vector<1x16x128xf32>
    %42 = vector.shape_cast %41 : vector<1x16x128xf32> to vector<16x128xf32>
    %43 = vector.shape_cast %40 : vector<16x128xf32> to vector<1x16x128xf32>
    tpu.vector_store %arg8[%c0_42, %c0_43, %c0_44], %43 {strides = array<i32>} : memref<1x48x128xf32, #tpu.memory_space<vmem>>, vector<1x16x128xf32>,
    %cst_45 = arith.constant 0.000000e+00 : f32
    %44 = vector.broadcast %cst_45 : f32 to vector<16x128xf32>
    %c0_46 = arith.constant 0 : index
    %c32 = arith.constant 32 : index
    %c0_47 = arith.constant 0 : index
    %45 = vector.load %arg8[%c0_46, %c32, %c0_47] : memref<1x48x128xf32, #tpu.memory_space<vmem>>, vector<1x16x128xf32>
    %46 = vector.shape_cast %45 : vector<1x16x128xf32> to vector<16x128xf32>
    %47 = vector.shape_cast %44 : vector<16x128xf32> to vector<1x16x128xf32>
    tpu.vector_store %arg8[%c0_46, %c32, %c0_47], %47 {strides = array<i32>} : memref<1x48x128xf32, #tpu.memory_space<vmem>>, vector<1x16x128xf32>,
    return
  }
  func.func @transform_0(%arg0: i32, %arg1: i32) -> (i32, i32, i32) {
    %c0_i32 = arith.constant 0 : i32
    %c0_i32_0 = arith.constant 0 : i32
    %c0_i32_1 = arith.constant 0 : i32
    return %arg0, %c0_i32, %c0_i32_0 : i32, i32, i32
  }
  func.func @transform_1(%arg0: i32, %arg1: i32) -> (i32, i32, i32) {
    %c0_i32 = arith.constant 0 : i32
    %c0_i32_0 = arith.constant 0 : i32
    %c0_i32_1 = arith.constant 0 : i32
    return %c0_i32, %c0_i32_0, %arg1 : i32, i32, i32
  }
  func.func @transform_2(%arg0: i32, %arg1: i32) -> (i32, i32) {
    %c0_i32 = arith.constant 0 : i32
    %c0_i32_0 = arith.constant 0 : i32
    return %c0_i32, %arg1 : i32, i32
  }
  func.func @transform_3(%arg0: i32, %arg1: i32) -> (i32, i32, i32) {
    %c0_i32 = arith.constant 0 : i32
    %c0_i32_0 = arith.constant 0 : i32
    %c0_i32_1 = arith.constant 0 : i32
    return %arg0, %c0_i32, %c0_i32_0 : i32, i32, i32
  }
  func.func @transform_4(%arg0: i32, %arg1: i32) -> (i32, i32, i32) {
    %c0_i32 = arith.constant 0 : i32
    %c0_i32_0 = arith.constant 0 : i32
    %c0_i32_1 = arith.constant 0 : i32
    return %c0_i32, %c0_i32_0, %arg1 : i32, i32, i32
  }
  func.func @transform_5(%arg0: i32, %arg1: i32) -> (i32, i32) {
    %c0_i32 = arith.constant 0 : i32
    %c0_i32_0 = arith.constant 0 : i32
    return %c0_i32, %arg1 : i32, i32
  }
  func.func @transform_6(%arg0: i32, %arg1: i32) -> (i32, i32, i32) {
    %c0_i32 = arith.constant 0 : i32
    %c0_i32_0 = arith.constant 0 : i32
    return %arg0, %c0_i32, %arg1 : i32, i32, i32
  }
}

module attributes {stable_mosaic.version = 11 : i64} {
  func.func @kernel(%arg0: i32, %arg1: i32, %arg2: memref<1x48x128xf32, #tpu.memory_space<vmem>>, %arg3: memref<5x128x128xf32, #tpu.memory_space<vmem>>, %arg4: memref<1x128xf32, #tpu.memory_space<vmem>>, %arg5: memref<1x48x128xf32, #tpu.memory_space<vmem>>, %arg6: memref<16x128xf32, #tpu.memory_space<vmem>>) attributes {dimension_semantics = [#tpu.dimension_semantics<parallel>, #tpu.dimension_semantics<parallel>], iteration_bounds = array<i64: 2, 1>, scalar_prefetch = 0 : i64, scratch_operands = 1 : i64, tpu.core_type = #tpu.core_type<tc>, window_params = [{transform_indices = @transform_0, window_bounds = array<i64: 1, 48, 128>}, {transform_indices = @transform_1, window_bounds = array<i64: 5, 128, 128>}, {transform_indices = @transform_2, window_bounds = array<i64: 1, 128>}, {transform_indices = @transform_3, window_bounds = array<i64: 1, 48, 128>}]} {
    %c0 = arith.constant 0 : index
    %c14 = arith.constant 14 : index
    %c0_0 = arith.constant 0 : index
    %0 = vector.load %arg2[%c0, %c14, %c0_0] : memref<1x48x128xf32, #tpu.memory_space<vmem>>, vector<1x16x128xf32>
    %1 = vector.shape_cast %0 : vector<1x16x128xf32> to vector<16x128xf32>
    %c0_1 = arith.constant 0 : index
    %c0_2 = arith.constant 0 : index
    %c0_3 = arith.constant 0 : index
    %2 = vector.load %arg3[%c0_1, %c0_2, %c0_3] : memref<5x128x128xf32, #tpu.memory_space<vmem>>, vector<1x128x128xf32>
    %3 = vector.shape_cast %2 : vector<1x128x128xf32> to vector<128x128xf32>
    %cst = arith.constant dense<0.000000e+00> : vector<16x128xf32>
    %4 = tpu.matmul %1, %3, %cst {dimension_numbers = #tpu.dot_dimension_numbers<[1], [0], [0], [1], [0, 0, 1, 1], [], []>} : vector<16x128xf32>, vector<128x128xf32>, vector<16x128xf32> -> vector<16x128xf32>
    %c0_4 = arith.constant 0 : index
    %c0_5 = arith.constant 0 : index
    %5 = vector.load %arg6[%c0_4, %c0_5] : memref<16x128xf32, #tpu.memory_space<vmem>>, vector<16x128xf32>
    tpu.vector_store %arg6[%c0_4, %c0_5], %4 {strides = array<i32>} : memref<16x128xf32, #tpu.memory_space<vmem>>, vector<16x128xf32>,
    %c0_6 = arith.constant 0 : index
    %c15 = arith.constant 15 : index
    %c0_7 = arith.constant 0 : index
    %6 = vector.load %arg2[%c0_6, %c15, %c0_7] : memref<1x48x128xf32, #tpu.memory_space<vmem>>, vector<1x16x128xf32>
    %7 = vector.shape_cast %6 : vector<1x16x128xf32> to vector<16x128xf32>
    %c1 = arith.constant 1 : index
    %c0_8 = arith.constant 0 : index
    %c0_9 = arith.constant 0 : index
    %8 = vector.load %arg3[%c1, %c0_8, %c0_9] : memref<5x128x128xf32, #tpu.memory_space<vmem>>, vector<1x128x128xf32>
    %9 = vector.shape_cast %8 : vector<1x128x128xf32> to vector<128x128xf32>
    %cst_10 = arith.constant dense<0.000000e+00> : vector<16x128xf32>
    %10 = tpu.matmul %7, %9, %cst_10 {dimension_numbers = #tpu.dot_dimension_numbers<[1], [0], [0], [1], [0, 0, 1, 1], [], []>} : vector<16x128xf32>, vector<128x128xf32>, vector<16x128xf32> -> vector<16x128xf32>
    %c0_11 = arith.constant 0 : index
    %c0_12 = arith.constant 0 : index
    %11 = vector.load %arg6[%c0_11, %c0_12] : memref<16x128xf32, #tpu.memory_space<vmem>>, vector<16x128xf32>
    %12 = arith.addf %11, %10 : vector<16x128xf32>
    %c0_13 = arith.constant 0 : index
    %c0_14 = arith.constant 0 : index
    %13 = vector.load %arg6[%c0_13, %c0_14] : memref<16x128xf32, #tpu.memory_space<vmem>>, vector<16x128xf32>
    tpu.vector_store %arg6[%c0_13, %c0_14], %12 {strides = array<i32>} : memref<16x128xf32, #tpu.memory_space<vmem>>, vector<16x128xf32>,
    %c0_15 = arith.constant 0 : index
    %c16 = arith.constant 16 : index
    %c0_16 = arith.constant 0 : index
    %14 = vector.load %arg2[%c0_15, %c16, %c0_16] : memref<1x48x128xf32, #tpu.memory_space<vmem>>, vector<1x16x128xf32>
    %15 = vector.shape_cast %14 : vector<1x16x128xf32> to vector<16x128xf32>
    %c2 = arith.constant 2 : index
    %c0_17 = arith.constant 0 : index
    %c0_18 = arith.constant 0 : index
    %16 = vector.load %arg3[%c2, %c0_17, %c0_18] : memref<5x128x128xf32, #tpu.memory_space<vmem>>, vector<1x128x128xf32>
    %17 = vector.shape_cast %16 : vector<1x128x128xf32> to vector<128x128xf32>
    %cst_19 = arith.constant dense<0.000000e+00> : vector<16x128xf32>
    %18 = tpu.matmul %15, %17, %cst_19 {dimension_numbers = #tpu.dot_dimension_numbers<[1], [0], [0], [1], [0, 0, 1, 1], [], []>} : vector<16x128xf32>, vector<128x128xf32>, vector<16x128xf32> -> vector<16x128xf32>
    %c0_20 = arith.constant 0 : index
    %c0_21 = arith.constant 0 : index
    %19 = vector.load %arg6[%c0_20, %c0_21] : memref<16x128xf32, #tpu.memory_space<vmem>>, vector<16x128xf32>
    %20 = arith.addf %19, %18 : vector<16x128xf32>
    %c0_22 = arith.constant 0 : index
    %c0_23 = arith.constant 0 : index
    %21 = vector.load %arg6[%c0_22, %c0_23] : memref<16x128xf32, #tpu.memory_space<vmem>>, vector<16x128xf32>
    tpu.vector_store %arg6[%c0_22, %c0_23], %20 {strides = array<i32>} : memref<16x128xf32, #tpu.memory_space<vmem>>, vector<16x128xf32>,
    %c0_24 = arith.constant 0 : index
    %c17 = arith.constant 17 : index
    %c0_25 = arith.constant 0 : index
    %22 = vector.load %arg2[%c0_24, %c17, %c0_25] : memref<1x48x128xf32, #tpu.memory_space<vmem>>, vector<1x16x128xf32>
    %23 = vector.shape_cast %22 : vector<1x16x128xf32> to vector<16x128xf32>
    %c3 = arith.constant 3 : index
    %c0_26 = arith.constant 0 : index
    %c0_27 = arith.constant 0 : index
    %24 = vector.load %arg3[%c3, %c0_26, %c0_27] : memref<5x128x128xf32, #tpu.memory_space<vmem>>, vector<1x128x128xf32>
    %25 = vector.shape_cast %24 : vector<1x128x128xf32> to vector<128x128xf32>
    %cst_28 = arith.constant dense<0.000000e+00> : vector<16x128xf32>
    %26 = tpu.matmul %23, %25, %cst_28 {dimension_numbers = #tpu.dot_dimension_numbers<[1], [0], [0], [1], [0, 0, 1, 1], [], []>} : vector<16x128xf32>, vector<128x128xf32>, vector<16x128xf32> -> vector<16x128xf32>
    %c0_29 = arith.constant 0 : index
    %c0_30 = arith.constant 0 : index
    %27 = vector.load %arg6[%c0_29, %c0_30] : memref<16x128xf32, #tpu.memory_space<vmem>>, vector<16x128xf32>
    %28 = arith.addf %27, %26 : vector<16x128xf32>
    %c0_31 = arith.constant 0 : index
    %c0_32 = arith.constant 0 : index
    %29 = vector.load %arg6[%c0_31, %c0_32] : memref<16x128xf32, #tpu.memory_space<vmem>>, vector<16x128xf32>
    tpu.vector_store %arg6[%c0_31, %c0_32], %28 {strides = array<i32>} : memref<16x128xf32, #tpu.memory_space<vmem>>, vector<16x128xf32>,
    %c0_33 = arith.constant 0 : index
    %c18 = arith.constant 18 : index
    %c0_34 = arith.constant 0 : index
    %30 = vector.load %arg2[%c0_33, %c18, %c0_34] : memref<1x48x128xf32, #tpu.memory_space<vmem>>, vector<1x16x128xf32>
    %31 = vector.shape_cast %30 : vector<1x16x128xf32> to vector<16x128xf32>
    %c4 = arith.constant 4 : index
    %c0_35 = arith.constant 0 : index
    %c0_36 = arith.constant 0 : index
    %32 = vector.load %arg3[%c4, %c0_35, %c0_36] : memref<5x128x128xf32, #tpu.memory_space<vmem>>, vector<1x128x128xf32>
    %33 = vector.shape_cast %32 : vector<1x128x128xf32> to vector<128x128xf32>
    %cst_37 = arith.constant dense<0.000000e+00> : vector<16x128xf32>
    %34 = tpu.matmul %31, %33, %cst_37 {dimension_numbers = #tpu.dot_dimension_numbers<[1], [0], [0], [1], [0, 0, 1, 1], [], []>} : vector<16x128xf32>, vector<128x128xf32>, vector<16x128xf32> -> vector<16x128xf32>
    %c0_38 = arith.constant 0 : index
    %c0_39 = arith.constant 0 : index
    %35 = vector.load %arg6[%c0_38, %c0_39] : memref<16x128xf32, #tpu.memory_space<vmem>>, vector<16x128xf32>
    %36 = arith.addf %35, %34 : vector<16x128xf32>
    %c0_40 = arith.constant 0 : index
    %c0_41 = arith.constant 0 : index
    %37 = vector.load %arg6[%c0_40, %c0_41] : memref<16x128xf32, #tpu.memory_space<vmem>>, vector<16x128xf32>
    tpu.vector_store %arg6[%c0_40, %c0_41], %36 {strides = array<i32>} : memref<16x128xf32, #tpu.memory_space<vmem>>, vector<16x128xf32>,
    %c0_42 = arith.constant 0 : index
    %c0_43 = arith.constant 0 : index
    %38 = vector.load %arg6[%c0_42, %c0_43] : memref<16x128xf32, #tpu.memory_space<vmem>>, vector<16x128xf32>
    %c0_44 = arith.constant 0 : index
    %c0_45 = arith.constant 0 : index
    %39 = vector.load %arg4[%c0_44, %c0_45] : memref<1x128xf32, #tpu.memory_space<vmem>>, vector<1x128xf32>
    %40 = vector.broadcast %39 : vector<1x128xf32> to vector<16x128xf32>
    %41 = arith.addf %38, %40 : vector<16x128xf32>
    %cst_46 = arith.constant 0.000000e+00 : f32
    %42 = vector.broadcast %cst_46 : f32 to vector<16x128xf32>
    %43 = arith.maximumf %41, %42 : vector<16x128xf32>
    %c0_47 = arith.constant 0 : index
    %c16_48 = arith.constant 16 : index
    %c0_49 = arith.constant 0 : index
    %44 = vector.load %arg5[%c0_47, %c16_48, %c0_49] : memref<1x48x128xf32, #tpu.memory_space<vmem>>, vector<1x16x128xf32>
    %45 = vector.shape_cast %44 : vector<1x16x128xf32> to vector<16x128xf32>
    %46 = vector.shape_cast %43 : vector<16x128xf32> to vector<1x16x128xf32>
    tpu.vector_store %arg5[%c0_47, %c16_48, %c0_49], %46 {strides = array<i32>} : memref<1x48x128xf32, #tpu.memory_space<vmem>>, vector<1x16x128xf32>,
    %cst_50 = arith.constant 0.000000e+00 : f32
    %47 = vector.broadcast %cst_50 : f32 to vector<16x128xf32>
    %c0_51 = arith.constant 0 : index
    %c0_52 = arith.constant 0 : index
    %c0_53 = arith.constant 0 : index
    %48 = vector.load %arg5[%c0_51, %c0_52, %c0_53] : memref<1x48x128xf32, #tpu.memory_space<vmem>>, vector<1x16x128xf32>
    %49 = vector.shape_cast %48 : vector<1x16x128xf32> to vector<16x128xf32>
    %50 = vector.shape_cast %47 : vector<16x128xf32> to vector<1x16x128xf32>
    tpu.vector_store %arg5[%c0_51, %c0_52, %c0_53], %50 {strides = array<i32>} : memref<1x48x128xf32, #tpu.memory_space<vmem>>, vector<1x16x128xf32>,
    %cst_54 = arith.constant 0.000000e+00 : f32
    %51 = vector.broadcast %cst_54 : f32 to vector<16x128xf32>
    %c0_55 = arith.constant 0 : index
    %c32 = arith.constant 32 : index
    %c0_56 = arith.constant 0 : index
    %52 = vector.load %arg5[%c0_55, %c32, %c0_56] : memref<1x48x128xf32, #tpu.memory_space<vmem>>, vector<1x16x128xf32>
    %53 = vector.shape_cast %52 : vector<1x16x128xf32> to vector<16x128xf32>
    %54 = vector.shape_cast %51 : vector<16x128xf32> to vector<1x16x128xf32>
    tpu.vector_store %arg5[%c0_55, %c32, %c0_56], %54 {strides = array<i32>} : memref<1x48x128xf32, #tpu.memory_space<vmem>>, vector<1x16x128xf32>,
    return
  }
  func.func @transform_0(%arg0: i32, %arg1: i32) -> (i32, i32, i32) {
    %c0_i32 = arith.constant 0 : i32
    %c0_i32_0 = arith.constant 0 : i32
    %c0_i32_1 = arith.constant 0 : i32
    return %arg0, %c0_i32, %c0_i32_0 : i32, i32, i32
  }
  func.func @transform_1(%arg0: i32, %arg1: i32) -> (i32, i32, i32) {
    %c0_i32 = arith.constant 0 : i32
    %c0_i32_0 = arith.constant 0 : i32
    %c0_i32_1 = arith.constant 0 : i32
    return %c0_i32, %c0_i32_0, %arg1 : i32, i32, i32
  }
  func.func @transform_2(%arg0: i32, %arg1: i32) -> (i32, i32) {
    %c0_i32 = arith.constant 0 : i32
    %c0_i32_0 = arith.constant 0 : i32
    return %c0_i32, %arg1 : i32, i32
  }
  func.func @transform_3(%arg0: i32, %arg1: i32) -> (i32, i32, i32) {
    %c0_i32 = arith.constant 0 : i32
    %c0_i32_0 = arith.constant 0 : i32
    return %arg0, %c0_i32, %arg1 : i32, i32, i32
  }
}

module attributes {stable_mosaic.version = 11 : i64} {
  func.func @kernel(%arg0: i32, %arg1: i32, %arg2: memref<1x48x256xf32, #tpu.memory_space<vmem>>, %arg3: memref<2x256x128xf32, #tpu.memory_space<vmem>>, %arg4: memref<1x128xf32, #tpu.memory_space<vmem>>, %arg5: memref<1x48x128xf32, #tpu.memory_space<vmem>>, %arg6: memref<16x128xf32, #tpu.memory_space<vmem>>) attributes {dimension_semantics = [#tpu.dimension_semantics<parallel>, #tpu.dimension_semantics<parallel>], iteration_bounds = array<i64: 2, 1>, scalar_prefetch = 0 : i64, scratch_operands = 1 : i64, tpu.core_type = #tpu.core_type<tc>, window_params = [{transform_indices = @transform_0, window_bounds = array<i64: 1, 48, 256>}, {transform_indices = @transform_1, window_bounds = array<i64: 2, 256, 128>}, {transform_indices = @transform_2, window_bounds = array<i64: 1, 128>}, {transform_indices = @transform_3, window_bounds = array<i64: 1, 48, 128>}]} {
    %c0 = arith.constant 0 : index
    %c16 = arith.constant 16 : index
    %c0_0 = arith.constant 0 : index
    %0 = vector.load %arg2[%c0, %c16, %c0_0] : memref<1x48x256xf32, #tpu.memory_space<vmem>>, vector<1x16x256xf32>
    %1 = vector.shape_cast %0 : vector<1x16x256xf32> to vector<16x256xf32>
    %c0_1 = arith.constant 0 : index
    %c0_2 = arith.constant 0 : index
    %c0_3 = arith.constant 0 : index
    %2 = vector.load %arg3[%c0_1, %c0_2, %c0_3] : memref<2x256x128xf32, #tpu.memory_space<vmem>>, vector<1x256x128xf32>
    %3 = vector.shape_cast %2 : vector<1x256x128xf32> to vector<256x128xf32>
    %cst = arith.constant dense<0.000000e+00> : vector<16x128xf32>
    %4 = tpu.matmul %1, %3, %cst {dimension_numbers = #tpu.dot_dimension_numbers<[1], [0], [0], [1], [0, 0, 1, 1], [], []>} : vector<16x256xf32>, vector<256x128xf32>, vector<16x128xf32> -> vector<16x128xf32>
    %c0_4 = arith.constant 0 : index
    %c0_5 = arith.constant 0 : index
    %5 = vector.load %arg6[%c0_4, %c0_5] : memref<16x128xf32, #tpu.memory_space<vmem>>, vector<16x128xf32>
    tpu.vector_store %arg6[%c0_4, %c0_5], %4 {strides = array<i32>} : memref<16x128xf32, #tpu.memory_space<vmem>>, vector<16x128xf32>,
    %c0_6 = arith.constant 0 : index
    %c17 = arith.constant 17 : index
    %c0_7 = arith.constant 0 : index
    %6 = vector.load %arg2[%c0_6, %c17, %c0_7] : memref<1x48x256xf32, #tpu.memory_space<vmem>>, vector<1x16x256xf32>
    %7 = vector.shape_cast %6 : vector<1x16x256xf32> to vector<16x256xf32>
    %c1 = arith.constant 1 : index
    %c0_8 = arith.constant 0 : index
    %c0_9 = arith.constant 0 : index
    %8 = vector.load %arg3[%c1, %c0_8, %c0_9] : memref<2x256x128xf32, #tpu.memory_space<vmem>>, vector<1x256x128xf32>
    %9 = vector.shape_cast %8 : vector<1x256x128xf32> to vector<256x128xf32>
    %cst_10 = arith.constant dense<0.000000e+00> : vector<16x128xf32>
    %10 = tpu.matmul %7, %9, %cst_10 {dimension_numbers = #tpu.dot_dimension_numbers<[1], [0], [0], [1], [0, 0, 1, 1], [], []>} : vector<16x256xf32>, vector<256x128xf32>, vector<16x128xf32> -> vector<16x128xf32>
    %c0_11 = arith.constant 0 : index
    %c0_12 = arith.constant 0 : index
    %11 = vector.load %arg6[%c0_11, %c0_12] : memref<16x128xf32, #tpu.memory_space<vmem>>, vector<16x128xf32>
    %12 = arith.addf %11, %10 : vector<16x128xf32>
    %c0_13 = arith.constant 0 : index
    %c0_14 = arith.constant 0 : index
    %13 = vector.load %arg6[%c0_13, %c0_14] : memref<16x128xf32, #tpu.memory_space<vmem>>, vector<16x128xf32>
    tpu.vector_store %arg6[%c0_13, %c0_14], %12 {strides = array<i32>} : memref<16x128xf32, #tpu.memory_space<vmem>>, vector<16x128xf32>,
    %c0_15 = arith.constant 0 : index
    %c0_16 = arith.constant 0 : index
    %14 = vector.load %arg6[%c0_15, %c0_16] : memref<16x128xf32, #tpu.memory_space<vmem>>, vector<16x128xf32>
    %c0_17 = arith.constant 0 : index
    %c0_18 = arith.constant 0 : index
    %15 = vector.load %arg4[%c0_17, %c0_18] : memref<1x128xf32, #tpu.memory_space<vmem>>, vector<1x128xf32>
    %16 = vector.broadcast %15 : vector<1x128xf32> to vector<16x128xf32>
    %17 = arith.addf %14, %16 : vector<16x128xf32>
    %cst_19 = arith.constant 0.000000e+00 : f32
    %18 = vector.broadcast %cst_19 : f32 to vector<16x128xf32>
    %19 = arith.maximumf %17, %18 : vector<16x128xf32>
    %c0_20 = arith.constant 0 : index
    %c16_21 = arith.constant 16 : index
    %c0_22 = arith.constant 0 : index
    %20 = vector.load %arg5[%c0_20, %c16_21, %c0_22] : memref<1x48x128xf32, #tpu.memory_space<vmem>>, vector<1x16x128xf32>
    %21 = vector.shape_cast %20 : vector<1x16x128xf32> to vector<16x128xf32>
    %22 = vector.shape_cast %19 : vector<16x128xf32> to vector<1x16x128xf32>
    tpu.vector_store %arg5[%c0_20, %c16_21, %c0_22], %22 {strides = array<i32>} : memref<1x48x128xf32, #tpu.memory_space<vmem>>, vector<1x16x128xf32>,
    %cst_23 = arith.constant 0.000000e+00 : f32
    %23 = vector.broadcast %cst_23 : f32 to vector<16x128xf32>
    %c0_24 = arith.constant 0 : index
    %c0_25 = arith.constant 0 : index
    %c0_26 = arith.constant 0 : index
    %24 = vector.load %arg5[%c0_24, %c0_25, %c0_26] : memref<1x48x128xf32, #tpu.memory_space<vmem>>, vector<1x16x128xf32>
    %25 = vector.shape_cast %24 : vector<1x16x128xf32> to vector<16x128xf32>
    %26 = vector.shape_cast %23 : vector<16x128xf32> to vector<1x16x128xf32>
    tpu.vector_store %arg5[%c0_24, %c0_25, %c0_26], %26 {strides = array<i32>} : memref<1x48x128xf32, #tpu.memory_space<vmem>>, vector<1x16x128xf32>,
    %cst_27 = arith.constant 0.000000e+00 : f32
    %27 = vector.broadcast %cst_27 : f32 to vector<16x128xf32>
    %c0_28 = arith.constant 0 : index
    %c32 = arith.constant 32 : index
    %c0_29 = arith.constant 0 : index
    %28 = vector.load %arg5[%c0_28, %c32, %c0_29] : memref<1x48x128xf32, #tpu.memory_space<vmem>>, vector<1x16x128xf32>
    %29 = vector.shape_cast %28 : vector<1x16x128xf32> to vector<16x128xf32>
    %30 = vector.shape_cast %27 : vector<16x128xf32> to vector<1x16x128xf32>
    tpu.vector_store %arg5[%c0_28, %c32, %c0_29], %30 {strides = array<i32>} : memref<1x48x128xf32, #tpu.memory_space<vmem>>, vector<1x16x128xf32>,
    return
  }
  func.func @transform_0(%arg0: i32, %arg1: i32) -> (i32, i32, i32) {
    %c0_i32 = arith.constant 0 : i32
    %c0_i32_0 = arith.constant 0 : i32
    %c0_i32_1 = arith.constant 0 : i32
    return %arg0, %c0_i32, %c0_i32_0 : i32, i32, i32
  }
  func.func @transform_1(%arg0: i32, %arg1: i32) -> (i32, i32, i32) {
    %c0_i32 = arith.constant 0 : i32
    %c0_i32_0 = arith.constant 0 : i32
    %c0_i32_1 = arith.constant 0 : i32
    return %c0_i32, %c0_i32_0, %arg1 : i32, i32, i32
  }
  func.func @transform_2(%arg0: i32, %arg1: i32) -> (i32, i32) {
    %c0_i32 = arith.constant 0 : i32
    %c0_i32_0 = arith.constant 0 : i32
    return %c0_i32, %arg1 : i32, i32
  }
  func.func @transform_3(%arg0: i32, %arg1: i32) -> (i32, i32, i32) {
    %c0_i32 = arith.constant 0 : i32
    %c0_i32_0 = arith.constant 0 : i32
    return %arg0, %c0_i32, %arg1 : i32, i32, i32
  }
}

module attributes {stable_mosaic.version = 11 : i64} {
  func.func @kernel(%arg0: i32, %arg1: i32, %arg2: memref<1x48x128xf32, #tpu.memory_space<vmem>>, %arg3: memref<5x128x128xf32, #tpu.memory_space<vmem>>, %arg4: memref<1x128xf32, #tpu.memory_space<vmem>>, %arg5: memref<1x48x128xf32, #tpu.memory_space<vmem>>, %arg6: memref<1x128x128xf32, #tpu.memory_space<vmem>>, %arg7: memref<1x128xf32, #tpu.memory_space<vmem>>, %arg8: memref<1x48x128xf32, #tpu.memory_space<vmem>>, %arg9: memref<16x128xf32, #tpu.memory_space<vmem>>) attributes {dimension_semantics = [#tpu.dimension_semantics<parallel>, #tpu.dimension_semantics<parallel>], iteration_bounds = array<i64: 2, 1>, scalar_prefetch = 0 : i64, scratch_operands = 1 : i64, tpu.core_type = #tpu.core_type<tc>, window_params = [{transform_indices = @transform_0, window_bounds = array<i64: 1, 48, 128>}, {transform_indices = @transform_1, window_bounds = array<i64: 5, 128, 128>}, {transform_indices = @transform_2, window_bounds = array<i64: 1, 128>}, {transform_indices = @transform_3, window_bounds = array<i64: 1, 48, 128>}, {transform_indices = @transform_4, window_bounds = array<i64: 1, 128, 128>}, {transform_indices = @transform_5, window_bounds = array<i64: 1, 128>}, {transform_indices = @transform_6, window_bounds = array<i64: 1, 48, 128>}]} {
    %c0 = arith.constant 0 : index
    %c14 = arith.constant 14 : index
    %c0_0 = arith.constant 0 : index
    %0 = vector.load %arg2[%c0, %c14, %c0_0] : memref<1x48x128xf32, #tpu.memory_space<vmem>>, vector<1x16x128xf32>
    %1 = vector.shape_cast %0 : vector<1x16x128xf32> to vector<16x128xf32>
    %c0_1 = arith.constant 0 : index
    %c0_2 = arith.constant 0 : index
    %c0_3 = arith.constant 0 : index
    %2 = vector.load %arg3[%c0_1, %c0_2, %c0_3] : memref<5x128x128xf32, #tpu.memory_space<vmem>>, vector<1x128x128xf32>
    %3 = vector.shape_cast %2 : vector<1x128x128xf32> to vector<128x128xf32>
    %cst = arith.constant dense<0.000000e+00> : vector<16x128xf32>
    %4 = tpu.matmul %1, %3, %cst {dimension_numbers = #tpu.dot_dimension_numbers<[1], [0], [0], [1], [0, 0, 1, 1], [], []>} : vector<16x128xf32>, vector<128x128xf32>, vector<16x128xf32> -> vector<16x128xf32>
    %c0_4 = arith.constant 0 : index
    %c0_5 = arith.constant 0 : index
    %5 = vector.load %arg9[%c0_4, %c0_5] : memref<16x128xf32, #tpu.memory_space<vmem>>, vector<16x128xf32>
    tpu.vector_store %arg9[%c0_4, %c0_5], %4 {strides = array<i32>} : memref<16x128xf32, #tpu.memory_space<vmem>>, vector<16x128xf32>,
    %c0_6 = arith.constant 0 : index
    %c15 = arith.constant 15 : index
    %c0_7 = arith.constant 0 : index
    %6 = vector.load %arg2[%c0_6, %c15, %c0_7] : memref<1x48x128xf32, #tpu.memory_space<vmem>>, vector<1x16x128xf32>
    %7 = vector.shape_cast %6 : vector<1x16x128xf32> to vector<16x128xf32>
    %c1 = arith.constant 1 : index
    %c0_8 = arith.constant 0 : index
    %c0_9 = arith.constant 0 : index
    %8 = vector.load %arg3[%c1, %c0_8, %c0_9] : memref<5x128x128xf32, #tpu.memory_space<vmem>>, vector<1x128x128xf32>
    %9 = vector.shape_cast %8 : vector<1x128x128xf32> to vector<128x128xf32>
    %cst_10 = arith.constant dense<0.000000e+00> : vector<16x128xf32>
    %10 = tpu.matmul %7, %9, %cst_10 {dimension_numbers = #tpu.dot_dimension_numbers<[1], [0], [0], [1], [0, 0, 1, 1], [], []>} : vector<16x128xf32>, vector<128x128xf32>, vector<16x128xf32> -> vector<16x128xf32>
    %c0_11 = arith.constant 0 : index
    %c0_12 = arith.constant 0 : index
    %11 = vector.load %arg9[%c0_11, %c0_12] : memref<16x128xf32, #tpu.memory_space<vmem>>, vector<16x128xf32>
    %12 = arith.addf %11, %10 : vector<16x128xf32>
    %c0_13 = arith.constant 0 : index
    %c0_14 = arith.constant 0 : index
    %13 = vector.load %arg9[%c0_13, %c0_14] : memref<16x128xf32, #tpu.memory_space<vmem>>, vector<16x128xf32>
    tpu.vector_store %arg9[%c0_13, %c0_14], %12 {strides = array<i32>} : memref<16x128xf32, #tpu.memory_space<vmem>>, vector<16x128xf32>,
    %c0_15 = arith.constant 0 : index
    %c16 = arith.constant 16 : index
    %c0_16 = arith.constant 0 : index
    %14 = vector.load %arg2[%c0_15, %c16, %c0_16] : memref<1x48x128xf32, #tpu.memory_space<vmem>>, vector<1x16x128xf32>
    %15 = vector.shape_cast %14 : vector<1x16x128xf32> to vector<16x128xf32>
    %c2 = arith.constant 2 : index
    %c0_17 = arith.constant 0 : index
    %c0_18 = arith.constant 0 : index
    %16 = vector.load %arg3[%c2, %c0_17, %c0_18] : memref<5x128x128xf32, #tpu.memory_space<vmem>>, vector<1x128x128xf32>
    %17 = vector.shape_cast %16 : vector<1x128x128xf32> to vector<128x128xf32>
    %cst_19 = arith.constant dense<0.000000e+00> : vector<16x128xf32>
    %18 = tpu.matmul %15, %17, %cst_19 {dimension_numbers = #tpu.dot_dimension_numbers<[1], [0], [0], [1], [0, 0, 1, 1], [], []>} : vector<16x128xf32>, vector<128x128xf32>, vector<16x128xf32> -> vector<16x128xf32>
    %c0_20 = arith.constant 0 : index
    %c0_21 = arith.constant 0 : index
    %19 = vector.load %arg9[%c0_20, %c0_21] : memref<16x128xf32, #tpu.memory_space<vmem>>, vector<16x128xf32>
    %20 = arith.addf %19, %18 : vector<16x128xf32>
    %c0_22 = arith.constant 0 : index
    %c0_23 = arith.constant 0 : index
    %21 = vector.load %arg9[%c0_22, %c0_23] : memref<16x128xf32, #tpu.memory_space<vmem>>, vector<16x128xf32>
    tpu.vector_store %arg9[%c0_22, %c0_23], %20 {strides = array<i32>} : memref<16x128xf32, #tpu.memory_space<vmem>>, vector<16x128xf32>,
    %c0_24 = arith.constant 0 : index
    %c17 = arith.constant 17 : index
    %c0_25 = arith.constant 0 : index
    %22 = vector.load %arg2[%c0_24, %c17, %c0_25] : memref<1x48x128xf32, #tpu.memory_space<vmem>>, vector<1x16x128xf32>
    %23 = vector.shape_cast %22 : vector<1x16x128xf32> to vector<16x128xf32>
    %c3 = arith.constant 3 : index
    %c0_26 = arith.constant 0 : index
    %c0_27 = arith.constant 0 : index
    %24 = vector.load %arg3[%c3, %c0_26, %c0_27] : memref<5x128x128xf32, #tpu.memory_space<vmem>>, vector<1x128x128xf32>
    %25 = vector.shape_cast %24 : vector<1x128x128xf32> to vector<128x128xf32>
    %cst_28 = arith.constant dense<0.000000e+00> : vector<16x128xf32>
    %26 = tpu.matmul %23, %25, %cst_28 {dimension_numbers = #tpu.dot_dimension_numbers<[1], [0], [0], [1], [0, 0, 1, 1], [], []>} : vector<16x128xf32>, vector<128x128xf32>, vector<16x128xf32> -> vector<16x128xf32>
    %c0_29 = arith.constant 0 : index
    %c0_30 = arith.constant 0 : index
    %27 = vector.load %arg9[%c0_29, %c0_30] : memref<16x128xf32, #tpu.memory_space<vmem>>, vector<16x128xf32>
    %28 = arith.addf %27, %26 : vector<16x128xf32>
    %c0_31 = arith.constant 0 : index
    %c0_32 = arith.constant 0 : index
    %29 = vector.load %arg9[%c0_31, %c0_32] : memref<16x128xf32, #tpu.memory_space<vmem>>, vector<16x128xf32>
    tpu.vector_store %arg9[%c0_31, %c0_32], %28 {strides = array<i32>} : memref<16x128xf32, #tpu.memory_space<vmem>>, vector<16x128xf32>,
    %c0_33 = arith.constant 0 : index
    %c18 = arith.constant 18 : index
    %c0_34 = arith.constant 0 : index
    %30 = vector.load %arg2[%c0_33, %c18, %c0_34] : memref<1x48x128xf32, #tpu.memory_space<vmem>>, vector<1x16x128xf32>
    %31 = vector.shape_cast %30 : vector<1x16x128xf32> to vector<16x128xf32>
    %c4 = arith.constant 4 : index
    %c0_35 = arith.constant 0 : index
    %c0_36 = arith.constant 0 : index
    %32 = vector.load %arg3[%c4, %c0_35, %c0_36] : memref<5x128x128xf32, #tpu.memory_space<vmem>>, vector<1x128x128xf32>
    %33 = vector.shape_cast %32 : vector<1x128x128xf32> to vector<128x128xf32>
    %cst_37 = arith.constant dense<0.000000e+00> : vector<16x128xf32>
    %34 = tpu.matmul %31, %33, %cst_37 {dimension_numbers = #tpu.dot_dimension_numbers<[1], [0], [0], [1], [0, 0, 1, 1], [], []>} : vector<16x128xf32>, vector<128x128xf32>, vector<16x128xf32> -> vector<16x128xf32>
    %c0_38 = arith.constant 0 : index
    %c0_39 = arith.constant 0 : index
    %35 = vector.load %arg9[%c0_38, %c0_39] : memref<16x128xf32, #tpu.memory_space<vmem>>, vector<16x128xf32>
    %36 = arith.addf %35, %34 : vector<16x128xf32>
    %c0_40 = arith.constant 0 : index
    %c0_41 = arith.constant 0 : index
    %37 = vector.load %arg9[%c0_40, %c0_41] : memref<16x128xf32, #tpu.memory_space<vmem>>, vector<16x128xf32>
    tpu.vector_store %arg9[%c0_40, %c0_41], %36 {strides = array<i32>} : memref<16x128xf32, #tpu.memory_space<vmem>>, vector<16x128xf32>,
    %c0_42 = arith.constant 0 : index
    %c0_43 = arith.constant 0 : index
    %38 = vector.load %arg9[%c0_42, %c0_43] : memref<16x128xf32, #tpu.memory_space<vmem>>, vector<16x128xf32>
    %c0_44 = arith.constant 0 : index
    %c0_45 = arith.constant 0 : index
    %39 = vector.load %arg4[%c0_44, %c0_45] : memref<1x128xf32, #tpu.memory_space<vmem>>, vector<1x128xf32>
    %40 = vector.broadcast %39 : vector<1x128xf32> to vector<16x128xf32>
    %41 = arith.addf %38, %40 : vector<16x128xf32>
    %c0_46 = arith.constant 0 : index
    %c16_47 = arith.constant 16 : index
    %c0_48 = arith.constant 0 : index
    %42 = vector.load %arg5[%c0_46, %c16_47, %c0_48] : memref<1x48x128xf32, #tpu.memory_space<vmem>>, vector<1x16x128xf32>
    %43 = vector.shape_cast %42 : vector<1x16x128xf32> to vector<16x128xf32>
    %c0_49 = arith.constant 0 : index
    %c0_50 = arith.constant 0 : index
    %c0_51 = arith.constant 0 : index
    %44 = vector.load %arg6[%c0_49, %c0_50, %c0_51] : memref<1x128x128xf32, #tpu.memory_space<vmem>>, vector<1x128x128xf32>
    %45 = vector.shape_cast %44 : vector<1x128x128xf32> to vector<128x128xf32>
    %cst_52 = arith.constant dense<0.000000e+00> : vector<16x128xf32>
    %46 = tpu.matmul %43, %45, %cst_52 {dimension_numbers = #tpu.dot_dimension_numbers<[1], [0], [0], [1], [0, 0, 1, 1], [], []>} : vector<16x128xf32>, vector<128x128xf32>, vector<16x128xf32> -> vector<16x128xf32>
    %47 = arith.addf %41, %46 : vector<16x128xf32>
    %c0_53 = arith.constant 0 : index
    %c0_54 = arith.constant 0 : index
    %48 = vector.load %arg7[%c0_53, %c0_54] : memref<1x128xf32, #tpu.memory_space<vmem>>, vector<1x128xf32>
    %49 = vector.broadcast %48 : vector<1x128xf32> to vector<16x128xf32>
    %50 = arith.addf %47, %49 : vector<16x128xf32>
    %cst_55 = arith.constant 0.000000e+00 : f32
    %51 = vector.broadcast %cst_55 : f32 to vector<16x128xf32>
    %52 = arith.maximumf %50, %51 : vector<16x128xf32>
    %c0_56 = arith.constant 0 : index
    %c16_57 = arith.constant 16 : index
    %c0_58 = arith.constant 0 : index
    %53 = vector.load %arg8[%c0_56, %c16_57, %c0_58] : memref<1x48x128xf32, #tpu.memory_space<vmem>>, vector<1x16x128xf32>
    %54 = vector.shape_cast %53 : vector<1x16x128xf32> to vector<16x128xf32>
    %55 = vector.shape_cast %52 : vector<16x128xf32> to vector<1x16x128xf32>
    tpu.vector_store %arg8[%c0_56, %c16_57, %c0_58], %55 {strides = array<i32>} : memref<1x48x128xf32, #tpu.memory_space<vmem>>, vector<1x16x128xf32>,
    %cst_59 = arith.constant 0.000000e+00 : f32
    %56 = vector.broadcast %cst_59 : f32 to vector<16x128xf32>
    %c0_60 = arith.constant 0 : index
    %c0_61 = arith.constant 0 : index
    %c0_62 = arith.constant 0 : index
    %57 = vector.load %arg8[%c0_60, %c0_61, %c0_62] : memref<1x48x128xf32, #tpu.memory_space<vmem>>, vector<1x16x128xf32>
    %58 = vector.shape_cast %57 : vector<1x16x128xf32> to vector<16x128xf32>
    %59 = vector.shape_cast %56 : vector<16x128xf32> to vector<1x16x128xf32>
    tpu.vector_store %arg8[%c0_60, %c0_61, %c0_62], %59 {strides = array<i32>} : memref<1x48x128xf32, #tpu.memory_space<vmem>>, vector<1x16x128xf32>,
    %cst_63 = arith.constant 0.000000e+00 : f32
    %60 = vector.broadcast %cst_63 : f32 to vector<16x128xf32>
    %c0_64 = arith.constant 0 : index
    %c32 = arith.constant 32 : index
    %c0_65 = arith.constant 0 : index
    %61 = vector.load %arg8[%c0_64, %c32, %c0_65] : memref<1x48x128xf32, #tpu.memory_space<vmem>>, vector<1x16x128xf32>
    %62 = vector.shape_cast %61 : vector<1x16x128xf32> to vector<16x128xf32>
    %63 = vector.shape_cast %60 : vector<16x128xf32> to vector<1x16x128xf32>
    tpu.vector_store %arg8[%c0_64, %c32, %c0_65], %63 {strides = array<i32>} : memref<1x48x128xf32, #tpu.memory_space<vmem>>, vector<1x16x128xf32>,
    return
  }
  func.func @transform_0(%arg0: i32, %arg1: i32) -> (i32, i32, i32) {
    %c0_i32 = arith.constant 0 : i32
    %c0_i32_0 = arith.constant 0 : i32
    %c0_i32_1 = arith.constant 0 : i32
    return %arg0, %c0_i32, %c0_i32_0 : i32, i32, i32
  }
  func.func @transform_1(%arg0: i32, %arg1: i32) -> (i32, i32, i32) {
    %c0_i32 = arith.constant 0 : i32
    %c0_i32_0 = arith.constant 0 : i32
    %c0_i32_1 = arith.constant 0 : i32
    return %c0_i32, %c0_i32_0, %arg1 : i32, i32, i32
  }
  func.func @transform_2(%arg0: i32, %arg1: i32) -> (i32, i32) {
    %c0_i32 = arith.constant 0 : i32
    %c0_i32_0 = arith.constant 0 : i32
    return %c0_i32, %arg1 : i32, i32
  }
  func.func @transform_3(%arg0: i32, %arg1: i32) -> (i32, i32, i32) {
    %c0_i32 = arith.constant 0 : i32
    %c0_i32_0 = arith.constant 0 : i32
    %c0_i32_1 = arith.constant 0 : i32
    return %arg0, %c0_i32, %c0_i32_0 : i32, i32, i32
  }
  func.func @transform_4(%arg0: i32, %arg1: i32) -> (i32, i32, i32) {
    %c0_i32 = arith.constant 0 : i32
    %c0_i32_0 = arith.constant 0 : i32
    %c0_i32_1 = arith.constant 0 : i32
    return %c0_i32, %c0_i32_0, %arg1 : i32, i32, i32
  }
  func.func @transform_5(%arg0: i32, %arg1: i32) -> (i32, i32) {
    %c0_i32 = arith.constant 0 : i32
    %c0_i32_0 = arith.constant 0 : i32
    return %c0_i32, %arg1 : i32, i32
  }
  func.func @transform_6(%arg0: i32, %arg1: i32) -> (i32, i32, i32) {
    %c0_i32 = arith.constant 0 : i32
    %c0_i32_0 = arith.constant 0 : i32
    return %arg0, %c0_i32, %arg1 : i32, i32, i32
  }
}

module attributes {stable_mosaic.version = 11 : i64} {
  func.func @kernel(%arg0: i32, %arg1: i32, %arg2: memref<1x48x128xf32, #tpu.memory_space<vmem>>, %arg3: memref<7x128x128xf32, #tpu.memory_space<vmem>>, %arg4: memref<1x128xf32, #tpu.memory_space<vmem>>, %arg5: memref<1x48x128xf32, #tpu.memory_space<vmem>>, %arg6: memref<16x128xf32, #tpu.memory_space<vmem>>) attributes {dimension_semantics = [#tpu.dimension_semantics<parallel>, #tpu.dimension_semantics<parallel>], iteration_bounds = array<i64: 2, 1>, scalar_prefetch = 0 : i64, scratch_operands = 1 : i64, tpu.core_type = #tpu.core_type<tc>, window_params = [{transform_indices = @transform_0, window_bounds = array<i64: 1, 48, 128>}, {transform_indices = @transform_1, window_bounds = array<i64: 7, 128, 128>}, {transform_indices = @transform_2, window_bounds = array<i64: 1, 128>}, {transform_indices = @transform_3, window_bounds = array<i64: 1, 48, 128>}]} {
    %c0 = arith.constant 0 : index
    %c10 = arith.constant 10 : index
    %c0_0 = arith.constant 0 : index
    %0 = vector.load %arg2[%c0, %c10, %c0_0] : memref<1x48x128xf32, #tpu.memory_space<vmem>>, vector<1x16x128xf32>
    %1 = vector.shape_cast %0 : vector<1x16x128xf32> to vector<16x128xf32>
    %c0_1 = arith.constant 0 : index
    %c0_2 = arith.constant 0 : index
    %c0_3 = arith.constant 0 : index
    %2 = vector.load %arg3[%c0_1, %c0_2, %c0_3] : memref<7x128x128xf32, #tpu.memory_space<vmem>>, vector<1x128x128xf32>
    %3 = vector.shape_cast %2 : vector<1x128x128xf32> to vector<128x128xf32>
    %cst = arith.constant dense<0.000000e+00> : vector<16x128xf32>
    %4 = tpu.matmul %1, %3, %cst {dimension_numbers = #tpu.dot_dimension_numbers<[1], [0], [0], [1], [0, 0, 1, 1], [], []>} : vector<16x128xf32>, vector<128x128xf32>, vector<16x128xf32> -> vector<16x128xf32>
    %c0_4 = arith.constant 0 : index
    %c0_5 = arith.constant 0 : index
    %5 = vector.load %arg6[%c0_4, %c0_5] : memref<16x128xf32, #tpu.memory_space<vmem>>, vector<16x128xf32>
    tpu.vector_store %arg6[%c0_4, %c0_5], %4 {strides = array<i32>} : memref<16x128xf32, #tpu.memory_space<vmem>>, vector<16x128xf32>,
    %c0_6 = arith.constant 0 : index
    %c12 = arith.constant 12 : index
    %c0_7 = arith.constant 0 : index
    %6 = vector.load %arg2[%c0_6, %c12, %c0_7] : memref<1x48x128xf32, #tpu.memory_space<vmem>>, vector<1x16x128xf32>
    %7 = vector.shape_cast %6 : vector<1x16x128xf32> to vector<16x128xf32>
    %c1 = arith.constant 1 : index
    %c0_8 = arith.constant 0 : index
    %c0_9 = arith.constant 0 : index
    %8 = vector.load %arg3[%c1, %c0_8, %c0_9] : memref<7x128x128xf32, #tpu.memory_space<vmem>>, vector<1x128x128xf32>
    %9 = vector.shape_cast %8 : vector<1x128x128xf32> to vector<128x128xf32>
    %cst_10 = arith.constant dense<0.000000e+00> : vector<16x128xf32>
    %10 = tpu.matmul %7, %9, %cst_10 {dimension_numbers = #tpu.dot_dimension_numbers<[1], [0], [0], [1], [0, 0, 1, 1], [], []>} : vector<16x128xf32>, vector<128x128xf32>, vector<16x128xf32> -> vector<16x128xf32>
    %c0_11 = arith.constant 0 : index
    %c0_12 = arith.constant 0 : index
    %11 = vector.load %arg6[%c0_11, %c0_12] : memref<16x128xf32, #tpu.memory_space<vmem>>, vector<16x128xf32>
    %12 = arith.addf %11, %10 : vector<16x128xf32>
    %c0_13 = arith.constant 0 : index
    %c0_14 = arith.constant 0 : index
    %13 = vector.load %arg6[%c0_13, %c0_14] : memref<16x128xf32, #tpu.memory_space<vmem>>, vector<16x128xf32>
    tpu.vector_store %arg6[%c0_13, %c0_14], %12 {strides = array<i32>} : memref<16x128xf32, #tpu.memory_space<vmem>>, vector<16x128xf32>,
    %c0_15 = arith.constant 0 : index
    %c14 = arith.constant 14 : index
    %c0_16 = arith.constant 0 : index
    %14 = vector.load %arg2[%c0_15, %c14, %c0_16] : memref<1x48x128xf32, #tpu.memory_space<vmem>>, vector<1x16x128xf32>
    %15 = vector.shape_cast %14 : vector<1x16x128xf32> to vector<16x128xf32>
    %c2 = arith.constant 2 : index
    %c0_17 = arith.constant 0 : index
    %c0_18 = arith.constant 0 : index
    %16 = vector.load %arg3[%c2, %c0_17, %c0_18] : memref<7x128x128xf32, #tpu.memory_space<vmem>>, vector<1x128x128xf32>
    %17 = vector.shape_cast %16 : vector<1x128x128xf32> to vector<128x128xf32>
    %cst_19 = arith.constant dense<0.000000e+00> : vector<16x128xf32>
    %18 = tpu.matmul %15, %17, %cst_19 {dimension_numbers = #tpu.dot_dimension_numbers<[1], [0], [0], [1], [0, 0, 1, 1], [], []>} : vector<16x128xf32>, vector<128x128xf32>, vector<16x128xf32> -> vector<16x128xf32>
    %c0_20 = arith.constant 0 : index
    %c0_21 = arith.constant 0 : index
    %19 = vector.load %arg6[%c0_20, %c0_21] : memref<16x128xf32, #tpu.memory_space<vmem>>, vector<16x128xf32>
    %20 = arith.addf %19, %18 : vector<16x128xf32>
    %c0_22 = arith.constant 0 : index
    %c0_23 = arith.constant 0 : index
    %21 = vector.load %arg6[%c0_22, %c0_23] : memref<16x128xf32, #tpu.memory_space<vmem>>, vector<16x128xf32>
    tpu.vector_store %arg6[%c0_22, %c0_23], %20 {strides = array<i32>} : memref<16x128xf32, #tpu.memory_space<vmem>>, vector<16x128xf32>,
    %c0_24 = arith.constant 0 : index
    %c16 = arith.constant 16 : index
    %c0_25 = arith.constant 0 : index
    %22 = vector.load %arg2[%c0_24, %c16, %c0_25] : memref<1x48x128xf32, #tpu.memory_space<vmem>>, vector<1x16x128xf32>
    %23 = vector.shape_cast %22 : vector<1x16x128xf32> to vector<16x128xf32>
    %c3 = arith.constant 3 : index
    %c0_26 = arith.constant 0 : index
    %c0_27 = arith.constant 0 : index
    %24 = vector.load %arg3[%c3, %c0_26, %c0_27] : memref<7x128x128xf32, #tpu.memory_space<vmem>>, vector<1x128x128xf32>
    %25 = vector.shape_cast %24 : vector<1x128x128xf32> to vector<128x128xf32>
    %cst_28 = arith.constant dense<0.000000e+00> : vector<16x128xf32>
    %26 = tpu.matmul %23, %25, %cst_28 {dimension_numbers = #tpu.dot_dimension_numbers<[1], [0], [0], [1], [0, 0, 1, 1], [], []>} : vector<16x128xf32>, vector<128x128xf32>, vector<16x128xf32> -> vector<16x128xf32>
    %c0_29 = arith.constant 0 : index
    %c0_30 = arith.constant 0 : index
    %27 = vector.load %arg6[%c0_29, %c0_30] : memref<16x128xf32, #tpu.memory_space<vmem>>, vector<16x128xf32>
    %28 = arith.addf %27, %26 : vector<16x128xf32>
    %c0_31 = arith.constant 0 : index
    %c0_32 = arith.constant 0 : index
    %29 = vector.load %arg6[%c0_31, %c0_32] : memref<16x128xf32, #tpu.memory_space<vmem>>, vector<16x128xf32>
    tpu.vector_store %arg6[%c0_31, %c0_32], %28 {strides = array<i32>} : memref<16x128xf32, #tpu.memory_space<vmem>>, vector<16x128xf32>,
    %c0_33 = arith.constant 0 : index
    %c18 = arith.constant 18 : index
    %c0_34 = arith.constant 0 : index
    %30 = vector.load %arg2[%c0_33, %c18, %c0_34] : memref<1x48x128xf32, #tpu.memory_space<vmem>>, vector<1x16x128xf32>
    %31 = vector.shape_cast %30 : vector<1x16x128xf32> to vector<16x128xf32>
    %c4 = arith.constant 4 : index
    %c0_35 = arith.constant 0 : index
    %c0_36 = arith.constant 0 : index
    %32 = vector.load %arg3[%c4, %c0_35, %c0_36] : memref<7x128x128xf32, #tpu.memory_space<vmem>>, vector<1x128x128xf32>
    %33 = vector.shape_cast %32 : vector<1x128x128xf32> to vector<128x128xf32>
    %cst_37 = arith.constant dense<0.000000e+00> : vector<16x128xf32>
    %34 = tpu.matmul %31, %33, %cst_37 {dimension_numbers = #tpu.dot_dimension_numbers<[1], [0], [0], [1], [0, 0, 1, 1], [], []>} : vector<16x128xf32>, vector<128x128xf32>, vector<16x128xf32> -> vector<16x128xf32>
    %c0_38 = arith.constant 0 : index
    %c0_39 = arith.constant 0 : index
    %35 = vector.load %arg6[%c0_38, %c0_39] : memref<16x128xf32, #tpu.memory_space<vmem>>, vector<16x128xf32>
    %36 = arith.addf %35, %34 : vector<16x128xf32>
    %c0_40 = arith.constant 0 : index
    %c0_41 = arith.constant 0 : index
    %37 = vector.load %arg6[%c0_40, %c0_41] : memref<16x128xf32, #tpu.memory_space<vmem>>, vector<16x128xf32>
    tpu.vector_store %arg6[%c0_40, %c0_41], %36 {strides = array<i32>} : memref<16x128xf32, #tpu.memory_space<vmem>>, vector<16x128xf32>,
    %c0_42 = arith.constant 0 : index
    %c20 = arith.constant 20 : index
    %c0_43 = arith.constant 0 : index
    %38 = vector.load %arg2[%c0_42, %c20, %c0_43] : memref<1x48x128xf32, #tpu.memory_space<vmem>>, vector<1x16x128xf32>
    %39 = vector.shape_cast %38 : vector<1x16x128xf32> to vector<16x128xf32>
    %c5 = arith.constant 5 : index
    %c0_44 = arith.constant 0 : index
    %c0_45 = arith.constant 0 : index
    %40 = vector.load %arg3[%c5, %c0_44, %c0_45] : memref<7x128x128xf32, #tpu.memory_space<vmem>>, vector<1x128x128xf32>
    %41 = vector.shape_cast %40 : vector<1x128x128xf32> to vector<128x128xf32>
    %cst_46 = arith.constant dense<0.000000e+00> : vector<16x128xf32>
    %42 = tpu.matmul %39, %41, %cst_46 {dimension_numbers = #tpu.dot_dimension_numbers<[1], [0], [0], [1], [0, 0, 1, 1], [], []>} : vector<16x128xf32>, vector<128x128xf32>, vector<16x128xf32> -> vector<16x128xf32>
    %c0_47 = arith.constant 0 : index
    %c0_48 = arith.constant 0 : index
    %43 = vector.load %arg6[%c0_47, %c0_48] : memref<16x128xf32, #tpu.memory_space<vmem>>, vector<16x128xf32>
    %44 = arith.addf %43, %42 : vector<16x128xf32>
    %c0_49 = arith.constant 0 : index
    %c0_50 = arith.constant 0 : index
    %45 = vector.load %arg6[%c0_49, %c0_50] : memref<16x128xf32, #tpu.memory_space<vmem>>, vector<16x128xf32>
    tpu.vector_store %arg6[%c0_49, %c0_50], %44 {strides = array<i32>} : memref<16x128xf32, #tpu.memory_space<vmem>>, vector<16x128xf32>,
    %c0_51 = arith.constant 0 : index
    %c22 = arith.constant 22 : index
    %c0_52 = arith.constant 0 : index
    %46 = vector.load %arg2[%c0_51, %c22, %c0_52] : memref<1x48x128xf32, #tpu.memory_space<vmem>>, vector<1x16x128xf32>
    %47 = vector.shape_cast %46 : vector<1x16x128xf32> to vector<16x128xf32>
    %c6 = arith.constant 6 : index
    %c0_53 = arith.constant 0 : index
    %c0_54 = arith.constant 0 : index
    %48 = vector.load %arg3[%c6, %c0_53, %c0_54] : memref<7x128x128xf32, #tpu.memory_space<vmem>>, vector<1x128x128xf32>
    %49 = vector.shape_cast %48 : vector<1x128x128xf32> to vector<128x128xf32>
    %cst_55 = arith.constant dense<0.000000e+00> : vector<16x128xf32>
    %50 = tpu.matmul %47, %49, %cst_55 {dimension_numbers = #tpu.dot_dimension_numbers<[1], [0], [0], [1], [0, 0, 1, 1], [], []>} : vector<16x128xf32>, vector<128x128xf32>, vector<16x128xf32> -> vector<16x128xf32>
    %c0_56 = arith.constant 0 : index
    %c0_57 = arith.constant 0 : index
    %51 = vector.load %arg6[%c0_56, %c0_57] : memref<16x128xf32, #tpu.memory_space<vmem>>, vector<16x128xf32>
    %52 = arith.addf %51, %50 : vector<16x128xf32>
    %c0_58 = arith.constant 0 : index
    %c0_59 = arith.constant 0 : index
    %53 = vector.load %arg6[%c0_58, %c0_59] : memref<16x128xf32, #tpu.memory_space<vmem>>, vector<16x128xf32>
    tpu.vector_store %arg6[%c0_58, %c0_59], %52 {strides = array<i32>} : memref<16x128xf32, #tpu.memory_space<vmem>>, vector<16x128xf32>,
    %c0_60 = arith.constant 0 : index
    %c0_61 = arith.constant 0 : index
    %54 = vector.load %arg6[%c0_60, %c0_61] : memref<16x128xf32, #tpu.memory_space<vmem>>, vector<16x128xf32>
    %c0_62 = arith.constant 0 : index
    %c0_63 = arith.constant 0 : index
    %55 = vector.load %arg4[%c0_62, %c0_63] : memref<1x128xf32, #tpu.memory_space<vmem>>, vector<1x128xf32>
    %56 = vector.broadcast %55 : vector<1x128xf32> to vector<16x128xf32>
    %57 = arith.addf %54, %56 : vector<16x128xf32>
    %cst_64 = arith.constant 0.000000e+00 : f32
    %58 = vector.broadcast %cst_64 : f32 to vector<16x128xf32>
    %59 = arith.maximumf %57, %58 : vector<16x128xf32>
    %c0_65 = arith.constant 0 : index
    %c16_66 = arith.constant 16 : index
    %c0_67 = arith.constant 0 : index
    %60 = vector.load %arg5[%c0_65, %c16_66, %c0_67] : memref<1x48x128xf32, #tpu.memory_space<vmem>>, vector<1x16x128xf32>
    %61 = vector.shape_cast %60 : vector<1x16x128xf32> to vector<16x128xf32>
    %62 = vector.shape_cast %59 : vector<16x128xf32> to vector<1x16x128xf32>
    tpu.vector_store %arg5[%c0_65, %c16_66, %c0_67], %62 {strides = array<i32>} : memref<1x48x128xf32, #tpu.memory_space<vmem>>, vector<1x16x128xf32>,
    %cst_68 = arith.constant 0.000000e+00 : f32
    %63 = vector.broadcast %cst_68 : f32 to vector<16x128xf32>
    %c0_69 = arith.constant 0 : index
    %c0_70 = arith.constant 0 : index
    %c0_71 = arith.constant 0 : index
    %64 = vector.load %arg5[%c0_69, %c0_70, %c0_71] : memref<1x48x128xf32, #tpu.memory_space<vmem>>, vector<1x16x128xf32>
    %65 = vector.shape_cast %64 : vector<1x16x128xf32> to vector<16x128xf32>
    %66 = vector.shape_cast %63 : vector<16x128xf32> to vector<1x16x128xf32>
    tpu.vector_store %arg5[%c0_69, %c0_70, %c0_71], %66 {strides = array<i32>} : memref<1x48x128xf32, #tpu.memory_space<vmem>>, vector<1x16x128xf32>,
    %cst_72 = arith.constant 0.000000e+00 : f32
    %67 = vector.broadcast %cst_72 : f32 to vector<16x128xf32>
    %c0_73 = arith.constant 0 : index
    %c32 = arith.constant 32 : index
    %c0_74 = arith.constant 0 : index
    %68 = vector.load %arg5[%c0_73, %c32, %c0_74] : memref<1x48x128xf32, #tpu.memory_space<vmem>>, vector<1x16x128xf32>
    %69 = vector.shape_cast %68 : vector<1x16x128xf32> to vector<16x128xf32>
    %70 = vector.shape_cast %67 : vector<16x128xf32> to vector<1x16x128xf32>
    tpu.vector_store %arg5[%c0_73, %c32, %c0_74], %70 {strides = array<i32>} : memref<1x48x128xf32, #tpu.memory_space<vmem>>, vector<1x16x128xf32>,
    return
  }
  func.func @transform_0(%arg0: i32, %arg1: i32) -> (i32, i32, i32) {
    %c0_i32 = arith.constant 0 : i32
    %c0_i32_0 = arith.constant 0 : i32
    %c0_i32_1 = arith.constant 0 : i32
    return %arg0, %c0_i32, %c0_i32_0 : i32, i32, i32
  }
  func.func @transform_1(%arg0: i32, %arg1: i32) -> (i32, i32, i32) {
    %c0_i32 = arith.constant 0 : i32
    %c0_i32_0 = arith.constant 0 : i32
    %c0_i32_1 = arith.constant 0 : i32
    return %c0_i32, %c0_i32_0, %arg1 : i32, i32, i32
  }
  func.func @transform_2(%arg0: i32, %arg1: i32) -> (i32, i32) {
    %c0_i32 = arith.constant 0 : i32
    %c0_i32_0 = arith.constant 0 : i32
    return %c0_i32, %arg1 : i32, i32
  }
  func.func @transform_3(%arg0: i32, %arg1: i32) -> (i32, i32, i32) {
    %c0_i32 = arith.constant 0 : i32
    %c0_i32_0 = arith.constant 0 : i32
    return %arg0, %c0_i32, %arg1 : i32, i32, i32
  }
}

module attributes {stable_mosaic.version = 11 : i64} {
  func.func @kernel(%arg0: i32, %arg1: i32, %arg2: memref<1x48x128xf32, #tpu.memory_space<vmem>>, %arg3: memref<1x128x128xf32, #tpu.memory_space<vmem>>, %arg4: memref<1x128xf32, #tpu.memory_space<vmem>>, %arg5: memref<1x48x128xf32, #tpu.memory_space<vmem>>, %arg6: memref<16x128xf32, #tpu.memory_space<vmem>>) attributes {dimension_semantics = [#tpu.dimension_semantics<parallel>, #tpu.dimension_semantics<parallel>], iteration_bounds = array<i64: 2, 1>, scalar_prefetch = 0 : i64, scratch_operands = 1 : i64, tpu.core_type = #tpu.core_type<tc>, window_params = [{transform_indices = @transform_0, window_bounds = array<i64: 1, 48, 128>}, {transform_indices = @transform_1, window_bounds = array<i64: 1, 128, 128>}, {transform_indices = @transform_2, window_bounds = array<i64: 1, 128>}, {transform_indices = @transform_3, window_bounds = array<i64: 1, 48, 128>}]} {
    %c0 = arith.constant 0 : index
    %c16 = arith.constant 16 : index
    %c0_0 = arith.constant 0 : index
    %0 = vector.load %arg2[%c0, %c16, %c0_0] : memref<1x48x128xf32, #tpu.memory_space<vmem>>, vector<1x16x128xf32>
    %1 = vector.shape_cast %0 : vector<1x16x128xf32> to vector<16x128xf32>
    %c0_1 = arith.constant 0 : index
    %c0_2 = arith.constant 0 : index
    %c0_3 = arith.constant 0 : index
    %2 = vector.load %arg3[%c0_1, %c0_2, %c0_3] : memref<1x128x128xf32, #tpu.memory_space<vmem>>, vector<1x128x128xf32>
    %3 = vector.shape_cast %2 : vector<1x128x128xf32> to vector<128x128xf32>
    %cst = arith.constant dense<0.000000e+00> : vector<16x128xf32>
    %4 = tpu.matmul %1, %3, %cst {dimension_numbers = #tpu.dot_dimension_numbers<[1], [0], [0], [1], [0, 0, 1, 1], [], []>} : vector<16x128xf32>, vector<128x128xf32>, vector<16x128xf32> -> vector<16x128xf32>
    %c0_4 = arith.constant 0 : index
    %c0_5 = arith.constant 0 : index
    %5 = vector.load %arg6[%c0_4, %c0_5] : memref<16x128xf32, #tpu.memory_space<vmem>>, vector<16x128xf32>
    tpu.vector_store %arg6[%c0_4, %c0_5], %4 {strides = array<i32>} : memref<16x128xf32, #tpu.memory_space<vmem>>, vector<16x128xf32>,
    %c0_6 = arith.constant 0 : index
    %c0_7 = arith.constant 0 : index
    %6 = vector.load %arg6[%c0_6, %c0_7] : memref<16x128xf32, #tpu.memory_space<vmem>>, vector<16x128xf32>
    %c0_8 = arith.constant 0 : index
    %c0_9 = arith.constant 0 : index
    %7 = vector.load %arg4[%c0_8, %c0_9] : memref<1x128xf32, #tpu.memory_space<vmem>>, vector<1x128xf32>
    %8 = vector.broadcast %7 : vector<1x128xf32> to vector<16x128xf32>
    %9 = arith.addf %6, %8 : vector<16x128xf32>
    %cst_10 = arith.constant 0.000000e+00 : f32
    %10 = vector.broadcast %cst_10 : f32 to vector<16x128xf32>
    %11 = arith.maximumf %9, %10 : vector<16x128xf32>
    %c0_11 = arith.constant 0 : index
    %c16_12 = arith.constant 16 : index
    %c0_13 = arith.constant 0 : index
    %12 = vector.load %arg5[%c0_11, %c16_12, %c0_13] : memref<1x48x128xf32, #tpu.memory_space<vmem>>, vector<1x16x128xf32>
    %13 = vector.shape_cast %12 : vector<1x16x128xf32> to vector<16x128xf32>
    %14 = vector.shape_cast %11 : vector<16x128xf32> to vector<1x16x128xf32>
    tpu.vector_store %arg5[%c0_11, %c16_12, %c0_13], %14 {strides = array<i32>} : memref<1x48x128xf32, #tpu.memory_space<vmem>>, vector<1x16x128xf32>,
    %cst_14 = arith.constant 0.000000e+00 : f32
    %15 = vector.broadcast %cst_14 : f32 to vector<16x128xf32>
    %c0_15 = arith.constant 0 : index
    %c0_16 = arith.constant 0 : index
    %c0_17 = arith.constant 0 : index
    %16 = vector.load %arg5[%c0_15, %c0_16, %c0_17] : memref<1x48x128xf32, #tpu.memory_space<vmem>>, vector<1x16x128xf32>
    %17 = vector.shape_cast %16 : vector<1x16x128xf32> to vector<16x128xf32>
    %18 = vector.shape_cast %15 : vector<16x128xf32> to vector<1x16x128xf32>
    tpu.vector_store %arg5[%c0_15, %c0_16, %c0_17], %18 {strides = array<i32>} : memref<1x48x128xf32, #tpu.memory_space<vmem>>, vector<1x16x128xf32>,
    %cst_18 = arith.constant 0.000000e+00 : f32
    %19 = vector.broadcast %cst_18 : f32 to vector<16x128xf32>
    %c0_19 = arith.constant 0 : index
    %c32 = arith.constant 32 : index
    %c0_20 = arith.constant 0 : index
    %20 = vector.load %arg5[%c0_19, %c32, %c0_20] : memref<1x48x128xf32, #tpu.memory_space<vmem>>, vector<1x16x128xf32>
    %21 = vector.shape_cast %20 : vector<1x16x128xf32> to vector<16x128xf32>
    %22 = vector.shape_cast %19 : vector<16x128xf32> to vector<1x16x128xf32>
    tpu.vector_store %arg5[%c0_19, %c32, %c0_20], %22 {strides = array<i32>} : memref<1x48x128xf32, #tpu.memory_space<vmem>>, vector<1x16x128xf32>,
    return
  }
  func.func @transform_0(%arg0: i32, %arg1: i32) -> (i32, i32, i32) {
    %c0_i32 = arith.constant 0 : i32
    %c0_i32_0 = arith.constant 0 : i32
    %c0_i32_1 = arith.constant 0 : i32
    return %arg0, %c0_i32, %c0_i32_0 : i32, i32, i32
  }
  func.func @transform_1(%arg0: i32, %arg1: i32) -> (i32, i32, i32) {
    %c0_i32 = arith.constant 0 : i32
    %c0_i32_0 = arith.constant 0 : i32
    %c0_i32_1 = arith.constant 0 : i32
    return %c0_i32, %c0_i32_0, %arg1 : i32, i32, i32
  }
  func.func @transform_2(%arg0: i32, %arg1: i32) -> (i32, i32) {
    %c0_i32 = arith.constant 0 : i32
    %c0_i32_0 = arith.constant 0 : i32
    return %c0_i32, %arg1 : i32, i32
  }
  func.func @transform_3(%arg0: i32, %arg1: i32) -> (i32, i32, i32) {
    %c0_i32 = arith.constant 0 : i32
    %c0_i32_0 = arith.constant 0 : i32
    return %arg0, %c0_i32, %arg1 : i32, i32, i32
  }
}

module attributes {stable_mosaic.version = 11 : i64} {
  func.func @kernel(%arg0: i32, %arg1: i32, %arg2: memref<1x48x128xf32, #tpu.memory_space<vmem>>, %arg3: memref<1x128x128xf32, #tpu.memory_space<vmem>>, %arg4: memref<1x128xf32, #tpu.memory_space<vmem>>, %arg5: memref<1x48x128xf32, #tpu.memory_space<vmem>>, %arg6: memref<16x128xf32, #tpu.memory_space<vmem>>) attributes {dimension_semantics = [#tpu.dimension_semantics<parallel>, #tpu.dimension_semantics<parallel>], iteration_bounds = array<i64: 2, 1>, scalar_prefetch = 0 : i64, scratch_operands = 1 : i64, tpu.core_type = #tpu.core_type<tc>, window_params = [{transform_indices = @transform_0, window_bounds = array<i64: 1, 48, 128>}, {transform_indices = @transform_1, window_bounds = array<i64: 1, 128, 128>}, {transform_indices = @transform_2, window_bounds = array<i64: 1, 128>}, {transform_indices = @transform_3, window_bounds = array<i64: 1, 48, 128>}]} {
    %c0 = arith.constant 0 : index
    %c16 = arith.constant 16 : index
    %c0_0 = arith.constant 0 : index
    %0 = vector.load %arg2[%c0, %c16, %c0_0] : memref<1x48x128xf32, #tpu.memory_space<vmem>>, vector<1x16x128xf32>
    %1 = vector.shape_cast %0 : vector<1x16x128xf32> to vector<16x128xf32>
    %c0_1 = arith.constant 0 : index
    %c0_2 = arith.constant 0 : index
    %c0_3 = arith.constant 0 : index
    %2 = vector.load %arg3[%c0_1, %c0_2, %c0_3] : memref<1x128x128xf32, #tpu.memory_space<vmem>>, vector<1x128x128xf32>
    %3 = vector.shape_cast %2 : vector<1x128x128xf32> to vector<128x128xf32>
    %cst = arith.constant dense<0.000000e+00> : vector<16x128xf32>
    %4 = tpu.matmul %1, %3, %cst {dimension_numbers = #tpu.dot_dimension_numbers<[1], [0], [0], [1], [0, 0, 1, 1], [], []>} : vector<16x128xf32>, vector<128x128xf32>, vector<16x128xf32> -> vector<16x128xf32>
    %c0_4 = arith.constant 0 : index
    %c0_5 = arith.constant 0 : index
    %5 = vector.load %arg6[%c0_4, %c0_5] : memref<16x128xf32, #tpu.memory_space<vmem>>, vector<16x128xf32>
    tpu.vector_store %arg6[%c0_4, %c0_5], %4 {strides = array<i32>} : memref<16x128xf32, #tpu.memory_space<vmem>>, vector<16x128xf32>,
    %c0_6 = arith.constant 0 : index
    %c0_7 = arith.constant 0 : index
    %6 = vector.load %arg6[%c0_6, %c0_7] : memref<16x128xf32, #tpu.memory_space<vmem>>, vector<16x128xf32>
    %c0_8 = arith.constant 0 : index
    %c0_9 = arith.constant 0 : index
    %7 = vector.load %arg4[%c0_8, %c0_9] : memref<1x128xf32, #tpu.memory_space<vmem>>, vector<1x128xf32>
    %8 = vector.broadcast %7 : vector<1x128xf32> to vector<16x128xf32>
    %9 = arith.addf %6, %8 : vector<16x128xf32>
    %c0_10 = arith.constant 0 : index
    %c16_11 = arith.constant 16 : index
    %c0_12 = arith.constant 0 : index
    %10 = vector.load %arg5[%c0_10, %c16_11, %c0_12] : memref<1x48x128xf32, #tpu.memory_space<vmem>>, vector<1x16x128xf32>
    %11 = vector.shape_cast %10 : vector<1x16x128xf32> to vector<16x128xf32>
    %12 = vector.shape_cast %9 : vector<16x128xf32> to vector<1x16x128xf32>
    tpu.vector_store %arg5[%c0_10, %c16_11, %c0_12], %12 {strides = array<i32>} : memref<1x48x128xf32, #tpu.memory_space<vmem>>, vector<1x16x128xf32>,
    %cst_13 = arith.constant 0.000000e+00 : f32
    %13 = vector.broadcast %cst_13 : f32 to vector<16x128xf32>
    %c0_14 = arith.constant 0 : index
    %c0_15 = arith.constant 0 : index
    %c0_16 = arith.constant 0 : index
    %14 = vector.load %arg5[%c0_14, %c0_15, %c0_16] : memref<1x48x128xf32, #tpu.memory_space<vmem>>, vector<1x16x128xf32>
    %15 = vector.shape_cast %14 : vector<1x16x128xf32> to vector<16x128xf32>
    %16 = vector.shape_cast %13 : vector<16x128xf32> to vector<1x16x128xf32>
    tpu.vector_store %arg5[%c0_14, %c0_15, %c0_16], %16 {strides = array<i32>} : memref<1x48x128xf32, #tpu.memory_space<vmem>>, vector<1x16x128xf32>,
    %cst_17 = arith.constant 0.000000e+00 : f32
    %17 = vector.broadcast %cst_17 : f32 to vector<16x128xf32>
    %c0_18 = arith.constant 0 : index
    %c32 = arith.constant 32 : index
    %c0_19 = arith.constant 0 : index
    %18 = vector.load %arg5[%c0_18, %c32, %c0_19] : memref<1x48x128xf32, #tpu.memory_space<vmem>>, vector<1x16x128xf32>
    %19 = vector.shape_cast %18 : vector<1x16x128xf32> to vector<16x128xf32>
    %20 = vector.shape_cast %17 : vector<16x128xf32> to vector<1x16x128xf32>
    tpu.vector_store %arg5[%c0_18, %c32, %c0_19], %20 {strides = array<i32>} : memref<1x48x128xf32, #tpu.memory_space<vmem>>, vector<1x16x128xf32>,
    return
  }
  func.func @transform_0(%arg0: i32, %arg1: i32) -> (i32, i32, i32) {
    %c0_i32 = arith.constant 0 : i32
    %c0_i32_0 = arith.constant 0 : i32
    %c0_i32_1 = arith.constant 0 : i32
    return %arg0, %c0_i32, %c0_i32_0 : i32, i32, i32
  }
  func.func @transform_1(%arg0: i32, %arg1: i32) -> (i32, i32, i32) {
    %c0_i32 = arith.constant 0 : i32
    %c0_i32_0 = arith.constant 0 : i32
    %c0_i32_1 = arith.constant 0 : i32
    return %c0_i32, %c0_i32_0, %arg1 : i32, i32, i32
  }
  func.func @transform_2(%arg0: i32, %arg1: i32) -> (i32, i32) {
    %c0_i32 = arith.constant 0 : i32
    %c0_i32_0 = arith.constant 0 : i32
    return %c0_i32, %arg1 : i32, i32
  }
  func.func @transform_3(%arg0: i32, %arg1: i32) -> (i32, i32, i32) {
    %c0_i32 = arith.constant 0 : i32
    %c0_i32_0 = arith.constant 0 : i32
    return %arg0, %c0_i32, %arg1 : i32, i32, i32
  }
}

</mosaic_0001>

<llo_original>
// kernel: jasper_forward.9
$region0: #{jasper_forward.9}
  #allocation0 [shape = 'u32[]', space=smem, size = 0x4, offset = 0x4, fixed_abs, tag = 'smem constant byte address 0x4 - core index']
  #allocation1 [shape = 'u32[144,128]{1,0:T(1,128)}', space=vmem, size = 0x12000, scoped, tag = 'internal scratch']
  #allocation2 [shape = 'f32[16,128]{1,0:T(8,128)}', space=vmem, size = 0x2000, scoped, tag = 'scratch operand']
  %s0 = inlined_call_operand.hbm [shape: f32[2,48,128], index: 0, kind: input, shape index: {}]
  %s1 = inlined_call_operand.hbm [shape: f32[3,128,128], index: 1, kind: input, shape index: {}]
  %s2 = inlined_call_operand.hbm [shape: f32[1,128], index: 2, kind: input, shape index: {}]
  %s3 = inlined_call_operand.hbm [shape: f32[2,48,128], index: 3, kind: output, shape index: {}]
  %s4 = sld [smem:[#allocation0]]
  $region57: #{jasper_forward.9} parent=0
    _
  %s6 = ssub.s32 1, %s4
  %s7 = scalar_select 0, %s6, %s4
  $region1: #{jasper_forward.9} parent=0
    #allocation3 [shape = 'u8[49152]{0}', space=vmem, size = 0xc000, scoped, tag = 'input window, operand 0']
    #allocation4 [shape = 's32[2]{0}', space=sflag, size = 0x8, scoped, tag = 'scoped memory for jasper_forward.9']
    #allocation5 [shape = 's32[2]{0}', space=sflag, size = 0x8, scoped, tag = 'scoped memory for jasper_forward.9']
    #allocation6 [shape = 'u8[196608]{0}', space=vmem, size = 0x30000, scoped, tag = 'input window, operand 1, single buffered']
    #allocation7 [shape = 's32[1]{0}', space=sflag, size = 0x4, scoped, tag = 'scoped memory for jasper_forward.9']
    #allocation8 [shape = 'u8[512]{0}', space=vmem, size = 0x400, scoped, tag = 'input window, operand 2, single buffered']
    #allocation9 [shape = 'u8[49152]{0}', space=vmem, size = 0xc000, scoped, tag = 'output window, operand 0']
    %8 = vsyncpa [#allocation4], 0
    %s9 = scalar_lea.sflag [#allocation4], 1
    %10 = vsyncpa %s9, 0
    %11 = vsyncpa [#allocation7], 0
    %12 = vsyncpa [#allocation5], 0
    %s13 = scalar_lea.sflag [#allocation5], 1
    %14 = vsyncpa %s13, 0
    loop: start=0, step=1, limit=4
    $region2: #{jasper_forward.9} parent=1 // loop_pre_header
      _
    $region3: #{jasper_forward.9} parent=1 // loop_header
      %s16 = sphi 0, %s20
      %p17 = scmp.ge.s32.totalorder %s16, 4
      %s23 = sphi 0, %s35
      %s24 = sphi 0, %s31
      %s25 = sphi 0, %s23
      %s26 = sphi 0, %s24
      %s27 = sphi 0, %s25
      %s28 = sphi 0, %s26
      %s38 = sphi 0, %s40
      %s41 = sphi 0, %s38
      %s42 = sphi 0, %s41
      %s58 = sphi 0, %s42
      %s64 = sphi 0, %s66
      %s67 = sphi 0, %s64
      %s68 = sphi 0, %s67
      %s84 = sphi 0, %s68
      %s90 = sphi 0, %s92
      %s93 = sphi 0, %s90
      %s94 = sphi 0, %s93
      %s110 = sphi 0, %s94
      %s118 = sphi 0, %s120
      %s121 = sphi 0, %s118
      %s122 = sphi 0, %s121
      %s138 = sphi 0, %s122
    $region4: #{jasper_forward.9} parent=1 // loop_header_branch
      %19 = sbr.rel (%p17) target = $region8
    $region5: #{jasper_forward.9} parent=1 // loop_body
      %s21 = ssub.s32 %s16, 1
      %s22 = ssub.s32 %s16, 2
      %s29 = sadd.s32 1, %s24
      %p30 = scmp.ge.s32.totalorder %s29, 1
      %s31 = scalar_select %p30, 0, %s29
      %s32 = sadd.s32 1, %s23
      %s33 = scalar_select %p30, %s32, %s23
      %p34 = scmp.ge.s32.totalorder %s33, 2
      %s35 = scalar_select %p34, 0, %s33
      %s36 = ssub.s32 %s23, %s35
      %p37 = scmp.eq.s32.totalorder %s36, 0
      %s39 = sadd.s32 %s38, 1
      %s40 = scalar_select %p37, %s38, %s39
      %p43 = pneg %p37
      %p44 = scmp.eq.s32.totalorder %s16, 1
      %p45 = por %p43, %p44
      %p46 = scmp.ne.s32.totalorder %s38, %s41
      %p47 = scmp.eq.s32.totalorder %s16, 0
      %p48 = por %p46, %p47
      %p49 = scmp.ne.s32.totalorder %s38, %s41
      %p50 = scmp.eq.s32.totalorder %s21, 1
      %p51 = por %p49, %p50
      %p52 = scmp.ne.s32.totalorder %s41, %s42
      %p53 = scmp.eq.s32.totalorder %s21, 0
      %p54 = por %p52, %p53
      %p55 = scmp.ne.s32.totalorder %s41, %s42
      %p56 = scmp.eq.s32.totalorder %s22, 1
      %p57 = por %p55, %p56
      %p59 = scmp.ne.s32.totalorder %s42, %s58
      %p60 = scmp.eq.s32.totalorder %s22, 0
      %p61 = por %p59, %p60
      %s62 = ssub.s32 %s24, %s31
      %p63 = scmp.eq.s32.totalorder %s62, 0
      %s65 = sadd.s32 %s64, 1
      %s66 = scalar_select %p63, %s64, %s65
      %p69 = pneg %p63
      %p70 = scmp.eq.s32.totalorder %s16, 1
      %p71 = por %p69, %p70
      %p72 = scmp.ne.s32.totalorder %s64, %s67
      %p73 = scmp.eq.s32.totalorder %s16, 0
      %p74 = por %p72, %p73
      %p75 = scmp.ne.s32.totalorder %s64, %s67
      %p76 = scmp.eq.s32.totalorder %s21, 1
      %p77 = por %p75, %p76
      %p78 = scmp.ne.s32.totalorder %s67, %s68
      %p79 = scmp.eq.s32.totalorder %s21, 0
      %p80 = por %p78, %p79
      %p81 = scmp.ne.s32.totalorder %s67, %s68
      %p82 = scmp.eq.s32.totalorder %s22, 1
      %p83 = por %p81, %p82
      %p85 = scmp.ne.s32.totalorder %s68, %s84
      %p86 = scmp.eq.s32.totalorder %s22, 0
      %p87 = por %p85, %p86
      %s88 = ssub.s32 %s24, %s31
      %p89 = scmp.eq.s32.totalorder %s88, 0
      %s91 = sadd.s32 %s90, 1
      %s92 = scalar_select %p89, %s90, %s91
      %p95 = pneg %p89
      %p96 = scmp.eq.s32.totalorder %s16, 1
      %p97 = por %p95, %p96
      %p98 = scmp.ne.s32.totalorder %s90, %s93
      %p99 = scmp.eq.s32.totalorder %s16, 0
      %p100 = por %p98, %p99
      %p101 = scmp.ne.s32.totalorder %s90, %s93
      %p102 = scmp.eq.s32.totalorder %s21, 1
      %p103 = por %p101, %p102
      %p104 = scmp.ne.s32.totalorder %s93, %s94
      %p105 = scmp.eq.s32.totalorder %s21, 0
      %p106 = por %p104, %p105
      %p107 = scmp.ne.s32.totalorder %s93, %s94
      %p108 = scmp.eq.s32.totalorder %s22, 1
      %p109 = por %p107, %p108
      %p111 = scmp.ne.s32.totalorder %s94, %s110
      %p112 = scmp.eq.s32.totalorder %s22, 0
      %p113 = por %p111, %p112
      %s114 = ssub.s32 %s23, %s35
      %s115 = ssub.s32 %s24, %s31
      %s116 = sor.u32 %s114, %s115
      %p117 = scmp.eq.s32.totalorder %s116, 0
      %s119 = sadd.s32 %s118, 1
      %s120 = scalar_select %p117, %s118, %s119
      %p123 = pneg %p117
      %p124 = scmp.eq.s32.totalorder %s16, 1
      %p125 = por %p123, %p124
      %p126 = scmp.ne.s32.totalorder %s118, %s121
      %p127 = scmp.eq.s32.totalorder %s16, 0
      %p128 = por %p126, %p127
      %p129 = scmp.ne.s32.totalorder %s118, %s121
      %p130 = scmp.eq.s32.totalorder %s21, 1
      %p131 = por %p129, %p130
      %p132 = scmp.ne.s32.totalorder %s121, %s122
      %p133 = scmp.eq.s32.totalorder %s21, 0
      %p134 = por %p132, %p133
      %p135 = scmp.ne.s32.totalorder %s121, %s122
      %p136 = scmp.eq.s32.totalorder %s22, 1
      %p137 = por %p135, %p136
      %p139 = scmp.ne.s32.totalorder %s122, %s138
      %p140 = scmp.eq.s32.totalorder %s22, 0
      %p141 = por %p139, %p140
      %p142 = scmp.le.s32.totalorder 1, %s16
      %p143 = scmp.lt.s32.totalorder %s16, 3
      %p144 = pnand %p142, %p143
      %p145 = pneg %p144
      // Predicated region
      $region9: #{jasper_forward.9} parent=5 // pred_check
        _
      $region10: #{jasper_forward.9} parent=5 // pred_check_branch
        %147 = sbr.rel (%p144) target = $region12
      $region11: #{jasper_forward.9} parent=5 // pred_region
        %s148 = ssub.s32 %s16, 1
        // Predicated region
        $region13: #{jasper_forward.9} parent=11 // pred_check
          %p149 = pneg %p80
        $region14: #{jasper_forward.9} parent=11 // pred_check_branch
          %151 = sbr.rel (%p149) target = $region16
        $region15: #{jasper_forward.9} parent=11 // pred_region
          %s153 = ssub.s32 6144, 6144
          %154 = vsyncadd [#allocation7], %s153
          %s155 = smul.addr %s26, 128
          %s156 = scalar_lea.hbm %s1, %s155
          %s157 = sshll.u32 [#allocation6], 4
          %s158 = int_to_ptr.vmem [resolvable:$true] %s157
          %163 = dma.hbm_to_vmem [thread:$0]  %s156, 6144, %s158, [#allocation7], 128, 128, 8
        $region16: #{jasper_forward.9} parent=11 // pred_fallthru
          _
        // Predicated region
        $region17: #{jasper_forward.9} parent=11 // pred_check
          %p164 = pneg %p106
        $region18: #{jasper_forward.9} parent=11 // pred_check_branch
          %166 = sbr.rel (%p164) target = $region20
        $region19: #{jasper_forward.9} parent=11 // pred_region
          %s168 = ssub.s32 16, 16
          %169 = vsyncadd [#allocation7], %s168
          %s170 = smul.addr %s26, 16
          %s171 = scalar_lea.hbm %s2, %s170
          %s173 = sshll.u32 [#allocation8], 4
          %s174 = int_to_ptr.vmem [resolvable:$true] %s173
          %176 = dma.hbm_to_vmem [thread:$0]  %s171, 16, %s174, [#allocation7]
        $region20: #{jasper_forward.9} parent=11 // pred_fallthru
          _
      $region12: #{jasper_forward.9} parent=5 // pred_fallthru
        _
      %p177 = scmp.lt.s32.totalorder %s16, 2
      // Predicated region
      $region21: #{jasper_forward.9} parent=5 // pred_check
        %p178 = pneg %p177
      $region22: #{jasper_forward.9} parent=5 // pred_check_branch
        %180 = sbr.rel (%p178) target = $region24
      $region23: #{jasper_forward.9} parent=5 // pred_region
        // Predicated region
        $region25: #{jasper_forward.9} parent=23 // pred_check
          %p181 = pneg %p48
        $region26: #{jasper_forward.9} parent=23 // pred_check_branch
          %183 = sbr.rel (%p181) target = $region28
        $region27: #{jasper_forward.9} parent=23 // pred_region
          %s184 = sand.u32 %s38, 1
          %s185 = scalar_lea.sflag [#allocation4], %s184
          %s186 = sand.u32 %s38, 1
          %s187 = smul.addr %s186, 48
          %s188 = scalar_lea.vmem [#allocation3], %s187
          %s190 = ssub.s32 768, 768
          %191 = vsyncadd %s185, %s190
          %s192 = smul.addr %s23, 6
          %s193 = smul.addr %s192, 128
          %s194 = scalar_lea.hbm %s0, %s193
          %s195 = sshll.u32 %s188, 4
          %s196 = int_to_ptr.vmem [resolvable:$true] %s195
          %201 = dma.hbm_to_vmem [thread:$0]  %s194, 768, %s196, %s185, 128, 128, 8
        $region28: #{jasper_forward.9} parent=23 // pred_fallthru
          _
      $region24: #{jasper_forward.9} parent=5 // pred_fallthru
        _
      %p202 = scmp.le.s32.totalorder 1, %s16
      %p203 = scmp.lt.s32.totalorder %s16, 3
      %p204 = pnand %p202, %p203
      %p205 = pneg %p204
      // Predicated region
      $region29: #{jasper_forward.9} parent=5 // pred_check
        _
      $region30: #{jasper_forward.9} parent=5 // pred_check_branch
        %207 = sbr.rel (%p204) target = $region32
      $region31: #{jasper_forward.9} parent=5 // pred_region
        %s208 = ssub.s32 %s16, 1
        %s209 = sand.u32 %s41, 1
        %s210 = scalar_lea.sflag [#allocation4], %s209
        %s211 = sand.u32 %s41, 1
        %s212 = smul.addr %s211, 48
        %s213 = scalar_lea.vmem [#allocation3], %s212
        // Predicated region
        $region33: #{jasper_forward.9} parent=31 // pred_check
          %p214 = pneg %p54
        $region34: #{jasper_forward.9} parent=31 // pred_check_branch
          %216 = sbr.rel (%p214) target = $region36
        $region35: #{jasper_forward.9} parent=31 // pred_region
          %217 = dma.done %s210, 768
        $region36: #{jasper_forward.9} parent=31 // pred_fallthru
          _
        // Predicated region
        $region37: #{jasper_forward.9} parent=31 // pred_check
          %p218 = pneg %p80
        $region38: #{jasper_forward.9} parent=31 // pred_check_branch
          %220 = sbr.rel (%p218) target = $region40
        $region39: #{jasper_forward.9} parent=31 // pred_region
          %221 = dma.done [#allocation7], 6144
        $region40: #{jasper_forward.9} parent=31 // pred_fallthru
          _
        // Predicated region
        $region41: #{jasper_forward.9} parent=31 // pred_check
          %p222 = pneg %p106
        $region42: #{jasper_forward.9} parent=31 // pred_check_branch
          %224 = sbr.rel (%p222) target = $region44
        $region43: #{jasper_forward.9} parent=31 // pred_region
          %225 = dma.done [#allocation7], 16
        $region44: #{jasper_forward.9} parent=31 // pred_fallthru
          _
        %s226 = sand.u32 %s41, 1
        %s227 = scalar_lea.sflag [#allocation4], %s226
        %s228 = sand.u32 %s41, 1
        %s229 = smul.addr %s228, 48
        %s230 = scalar_lea.vmem [#allocation3], %s229
        %p231 = pneg %p54
        %p232 = pneg %p51
        %p233 = pneg %p80
        %p234 = pneg %p77
        %p235 = pneg %p106
        %p236 = pneg %p103
        %p237 = pneg %p134
        %p238 = pneg %p131
        %s239 = sand.u32 %s121, 1
        %s240 = scalar_lea.sflag [#allocation5], %s239
        %s241 = sand.u32 %s121, 1
        %s242 = smul.addr %s241, 48
        %s243 = scalar_lea.vmem [#allocation9], %s242
        %v244 = vld [vmem:[%s213 + $0xf] sm:$0xff]
        %v245 = vld [vmem:[%s213 + $0x17] sm:$0xff]
        %v246 = vld [vmem:[#allocation6] sm:$0xff]
        %v247 = vld [vmem:[#allocation6 + $0x8] sm:$0xff]
        %v248 = vld [vmem:[#allocation6 + $0x10] sm:$0xff]
        %v249 = vld [vmem:[#allocation6 + $0x18] sm:$0xff]
        %v250 = vld [vmem:[#allocation6 + $0x20] sm:$0xff]
        %v251 = vld [vmem:[#allocation6 + $0x28] sm:$0xff]
        %v252 = vld [vmem:[#allocation6 + $0x30] sm:$0xff]
        %v253 = vld [vmem:[#allocation6 + $0x38] sm:$0xff]
        %v254 = vld [vmem:[#allocation6 + $0x40] sm:$0xff]
        %v255 = vld [vmem:[#allocation6 + $0x48] sm:$0xff]
        %v256 = vld [vmem:[#allocation6 + $0x50] sm:$0xff]
        %v257 = vld [vmem:[#allocation6 + $0x58] sm:$0xff]
        %v258 = vld [vmem:[#allocation6 + $0x60] sm:$0xff]
        %v259 = vld [vmem:[#allocation6 + $0x68] sm:$0xff]
        %v260 = vld [vmem:[#allocation6 + $0x70] sm:$0xff]
        %v261 = vld [vmem:[#allocation6 + $0x78] sm:$0xff]
        %262 = vmatprep.subr.mxu0 0.0
        %263 = vmatpush1.msra.mxu0 %v246
        %264 = vmatprep.subr.mxu0 0.0
        %265 = vmatpush1.msra.mxu0 %v247
        %266 = vmatprep.subr.mxu0 0.0
        %267 = vmatpush1.msra.mxu0 %v248
        %268 = vmatprep.subr.mxu0 0.0
        %269 = vmatpush1.msra.mxu0 %v249
        %270 = vmatprep.subr.mxu0 0.0
        %271 = vmatpush1.msra.mxu0 %v250
        %272 = vmatprep.subr.mxu0 0.0
        %273 = vmatpush1.msra.mxu0 %v251
        %274 = vmatprep.subr.mxu0 0.0
        %275 = vmatpush1.msra.mxu0 %v252
        %276 = vmatprep.subr.mxu0 0.0
        %277 = vmatpush1.msra.mxu0 %v253
        %278 = vmatprep.subr.mxu0 0.0
        %279 = vmatpush1.msra.mxu0 %v254
        %280 = vmatprep.subr.mxu0 0.0
        %281 = vmatpush1.msra.mxu0 %v255
        %282 = vmatprep.subr.mxu0 0.0
        %283 = vmatpush1.msra.mxu0 %v256
        %284 = vmatprep.subr.mxu0 0.0
        %285 = vmatpush1.msra.mxu0 %v257
        %286 = vmatprep.subr.mxu0 0.0
        %287 = vmatpush1.msra.mxu0 %v258
        %288 = vmatprep.subr.mxu0 0.0
        %289 = vmatpush1.msra.mxu0 %v259
        %290 = vmatprep.subr.mxu0 0.0
        %291 = vmatpush1.msra.mxu0 %v260
        %292 = vmatprep.subr.mxu0 0.0
        %293 = vmatpush1.msra.mxu0 %v261
        %294 = vmatprep.subr.mxu0 0.0
        %295 = vmatpush1.msra.mxu0 0.0
        %296 = vmatprep.subr.mxu0 0.0
        %297 = vmatpush1.msra.mxu0 0.0
        %298 = vmatprep.subr.mxu0 0.0
        %299 = vmatpush1.msra.mxu0 0.0
        %300 = vmatprep.subr.mxu0 0.0
        %301 = vmatpush1.msra.mxu0 0.0
        %302 = vmatprep.subr.mxu0 0.0
        %303 = vmatpush1.msra.mxu0 0.0
        %304 = vmatprep.subr.mxu0 0.0
        %305 = vmatpush1.msra.mxu0 0.0
        %306 = vmatprep.subr.mxu0 0.0
        %307 = vmatpush1.msra.mxu0 0.0
        %308 = vmatprep.subr.mxu0 0.0
        %309 = vmatpush1.msra.mxu0 0.0
        %310 = vmatprep.subr.mxu0 0.0
        %311 = vmatpush1.msra.mxu0 0.0
        %312 = vmatprep.subr.mxu0 0.0
        %313 = vmatpush1.msra.mxu0 0.0
        %314 = vmatprep.subr.mxu0 0.0
        %315 = vmatpush1.msra.mxu0 0.0
        %316 = vmatprep.subr.mxu0 0.0
        %317 = vmatpush1.msra.mxu0 0.0
        %318 = vmatprep.subr.mxu0 0.0
        %319 = vmatpush1.msra.mxu0 0.0
        %320 = vmatprep.subr.mxu0 0.0
        %321 = vmatpush1.msra.mxu0 0.0
        %322 = vmatprep.subr.mxu0 0.0
        %323 = vmatpush1.msra.mxu0 0.0
        %324 = vmatprep.subr.mxu0 0.0
        %325 = vmatpush1.msra.mxu0 0.0
        %326 = vmatprep.mubr.f32.mxu0 0.0
        %327 = vmatmul.mubr.f32.gmra.mrb[0].mxu0 %v244
        %v328 = vpop.f32.mrb[0].mxu0
        %v329 = vadd.f32 0.0, %v328
        %v330 = vpop.f32.mrb[0].mxu0
        %331 = vmatprep.mubr.f32.mxu0 0.0
        %332 = vmatmul.mubr.f32.gmra.mrb[0].mxu0 %v245
        %v333 = vpop.f32.mrb[0].mxu0
        %v334 = vadd.f32 0.0, %v333
        %v335 = vpop.f32.mrb[0].mxu0
        %336 = vdwg.mxu0
        %337 = vst [vmem:[#allocation2] sm:$0xff] %v329
        %338 = vst [vmem:[#allocation2 + $0x8] sm:$0xff] %v334
        %v339 = vld [vmem:[%s213 + $0x10] sm:$0xff]
        %v340 = vld [vmem:[%s213 + $0x18] sm:$0xff]
        %s341 = scalar_lea.vmem [#allocation6], 128
        %v342 = vld [vmem:[%s341] sm:$0xff]
        %v343 = vld [vmem:[%s341 + $0x8] sm:$0xff]
        %v344 = vld [vmem:[%s341 + $0x10] sm:$0xff]
        %v345 = vld [vmem:[%s341 + $0x18] sm:$0xff]
        %v346 = vld [vmem:[%s341 + $0x20] sm:$0xff]
        %v347 = vld [vmem:[%s341 + $0x28] sm:$0xff]
        %v348 = vld [vmem:[%s341 + $0x30] sm:$0xff]
        %v349 = vld [vmem:[%s341 + $0x38] sm:$0xff]
        %v350 = vld [vmem:[%s341 + $0x40] sm:$0xff]
        %v351 = vld [vmem:[%s341 + $0x48] sm:$0xff]
        %v352 = vld [vmem:[%s341 + $0x50] sm:$0xff]
        %v353 = vld [vmem:[%s341 + $0x58] sm:$0xff]
        %v354 = vld [vmem:[%s341 + $0x60] sm:$0xff]
        %v355 = vld [vmem:[%s341 + $0x68] sm:$0xff]
        %v356 = vld [vmem:[%s341 + $0x70] sm:$0xff]
        %v357 = vld [vmem:[%s341 + $0x78] sm:$0xff]
        %358 = vmatprep.subr.mxu0 0.0
        %359 = vmatpush1.msra.mxu0 %v342
        %360 = vmatprep.subr.mxu0 0.0
        %361 = vmatpush1.msra.mxu0 %v343
        %362 = vmatprep.subr.mxu0 0.0
        %363 = vmatpush1.msra.mxu0 %v344
        %364 = vmatprep.subr.mxu0 0.0
        %365 = vmatpush1.msra.mxu0 %v345
        %366 = vmatprep.subr.mxu0 0.0
        %367 = vmatpush1.msra.mxu0 %v346
        %368 = vmatprep.subr.mxu0 0.0
        %369 = vmatpush1.msra.mxu0 %v347
        %370 = vmatprep.subr.mxu0 0.0
        %371 = vmatpush1.msra.mxu0 %v348
        %372 = vmatprep.subr.mxu0 0.0
        %373 = vmatpush1.msra.mxu0 %v349
        %374 = vmatprep.subr.mxu0 0.0
        %375 = vmatpush1.msra.mxu0 %v350
        %376 = vmatprep.subr.mxu0 0.0
        %377 = vmatpush1.msra.mxu0 %v351
        %378 = vmatprep.subr.mxu0 0.0
        %379 = vmatpush1.msra.mxu0 %v352
        %380 = vmatprep.subr.mxu0 0.0
        %381 = vmatpush1.msra.mxu0 %v353
        %382 = vmatprep.subr.mxu0 0.0
        %383 = vmatpush1.msra.mxu0 %v354
        %384 = vmatprep.subr.mxu0 0.0
        %385 = vmatpush1.msra.mxu0 %v355
        %386 = vmatprep.subr.mxu0 0.0
        %387 = vmatpush1.msra.mxu0 %v356
        %388 = vmatprep.subr.mxu0 0.0
        %389 = vmatpush1.msra.mxu0 %v357
        %390 = vmatprep.subr.mxu0 0.0
        %391 = vmatpush1.msra.mxu0 0.0
        %392 = vmatprep.subr.mxu0 0.0
        %393 = vmatpush1.msra.mxu0 0.0
        %394 = vmatprep.subr.mxu0 0.0
        %395 = vmatpush1.msra.mxu0 0.0
        %396 = vmatprep.subr.mxu0 0.0
        %397 = vmatpush1.msra.mxu0 0.0
        %398 = vmatprep.subr.mxu0 0.0
        %399 = vmatpush1.msra.mxu0 0.0
        %400 = vmatprep.subr.mxu0 0.0
        %401 = vmatpush1.msra.mxu0 0.0
        %402 = vmatprep.subr.mxu0 0.0
        %403 = vmatpush1.msra.mxu0 0.0
        %404 = vmatprep.subr.mxu0 0.0
        %405 = vmatpush1.msra.mxu0 0.0
        %406 = vmatprep.subr.mxu0 0.0
        %407 = vmatpush1.msra.mxu0 0.0
        %408 = vmatprep.subr.mxu0 0.0
        %409 = vmatpush1.msra.mxu0 0.0
        %410 = vmatprep.subr.mxu0 0.0
        %411 = vmatpush1.msra.mxu0 0.0
        %412 = vmatprep.subr.mxu0 0.0
        %413 = vmatpush1.msra.mxu0 0.0
        %414 = vmatprep.subr.mxu0 0.0
        %415 = vmatpush1.msra.mxu0 0.0
        %416 = vmatprep.subr.mxu0 0.0
        %417 = vmatpush1.msra.mxu0 0.0
        %418 = vmatprep.subr.mxu0 0.0
        %419 = vmatpush1.msra.mxu0 0.0
        %420 = vmatprep.subr.mxu0 0.0
        %421 = vmatpush1.msra.mxu0 0.0
        %422 = vmatprep.mubr.f32.mxu0 0.0
        %423 = vmatmul.mubr.f32.gmra.mrb[0].mxu0 %v339
        %v424 = vpop.f32.mrb[0].mxu0
        %v425 = vadd.f32 0.0, %v424
        %v426 = vpop.f32.mrb[0].mxu0
        %427 = vmatprep.mubr.f32.mxu0 0.0
        %428 = vmatmul.mubr.f32.gmra.mrb[0].mxu0 %v340
        %v429 = vpop.f32.mrb[0].mxu0
        %v430 = vadd.f32 0.0, %v429
        %v431 = vpop.f32.mrb[0].mxu0
        %432 = vdwg.mxu0
        %v433 = vld [vmem:[#allocation2] sm:$0xff]
        %v434 = vld [vmem:[#allocation2 + $0x8] sm:$0xff]
        %v435 = vadd.f32 %v433, %v425
        %v436 = vadd.f32 %v434, %v430
        %437 = vst [vmem:[#allocation2] sm:$0xff] %v435
        %438 = vst [vmem:[#allocation2 + $0x8] sm:$0xff] %v436
        %v439 = vld [vmem:[%s213 + $0x11] sm:$0xff]
        %v440 = vld [vmem:[%s213 + $0x19] sm:$0xff]
        %s441 = scalar_lea.vmem [#allocation6], 256
        %v442 = vld [vmem:[%s441] sm:$0xff]
        %v443 = vld [vmem:[%s441 + $0x8] sm:$0xff]
        %v444 = vld [vmem:[%s441 + $0x10] sm:$0xff]
        %v445 = vld [vmem:[%s441 + $0x18] sm:$0xff]
        %v446 = vld [vmem:[%s441 + $0x20] sm:$0xff]
        %v447 = vld [vmem:[%s441 + $0x28] sm:$0xff]
        %v448 = vld [vmem:[%s441 + $0x30] sm:$0xff]
        %v449 = vld [vmem:[%s441 + $0x38] sm:$0xff]
        %v450 = vld [vmem:[%s441 + $0x40] sm:$0xff]
        %v451 = vld [vmem:[%s441 + $0x48] sm:$0xff]
        %v452 = vld [vmem:[%s441 + $0x50] sm:$0xff]
        %v453 = vld [vmem:[%s441 + $0x58] sm:$0xff]
        %v454 = vld [vmem:[%s441 + $0x60] sm:$0xff]
        %v455 = vld [vmem:[%s441 + $0x68] sm:$0xff]
        %v456 = vld [vmem:[%s441 + $0x70] sm:$0xff]
        %v457 = vld [vmem:[%s441 + $0x78] sm:$0xff]
        %458 = vmatprep.subr.mxu0 0.0
        %459 = vmatpush1.msra.mxu0 %v442
        %460 = vmatprep.subr.mxu0 0.0
        %461 = vmatpush1.msra.mxu0 %v443
        %462 = vmatprep.subr.mxu0 0.0
        %463 = vmatpush1.msra.mxu0 %v444
        %464 = vmatprep.subr.mxu0 0.0
        %465 = vmatpush1.msra.mxu0 %v445
        %466 = vmatprep.subr.mxu0 0.0
        %467 = vmatpush1.msra.mxu0 %v446
        %468 = vmatprep.subr.mxu0 0.0
        %469 = vmatpush1.msra.mxu0 %v447
        %470 = vmatprep.subr.mxu0 0.0
        %471 = vmatpush1.msra.mxu0 %v448
        %472 = vmatprep.subr.mxu0 0.0
        %473 = vmatpush1.msra.mxu0 %v449
        %474 = vmatprep.subr.mxu0 0.0
        %475 = vmatpush1.msra.mxu0 %v450
        %476 = vmatprep.subr.mxu0 0.0
        %477 = vmatpush1.msra.mxu0 %v451
        %478 = vmatprep.subr.mxu0 0.0
        %479 = vmatpush1.msra.mxu0 %v452
        %480 = vmatprep.subr.mxu0 0.0
        %481 = vmatpush1.msra.mxu0 %v453
        %482 = vmatprep.subr.mxu0 0.0
        %483 = vmatpush1.msra.mxu0 %v454
        %484 = vmatprep.subr.mxu0 0.0
        %485 = vmatpush1.msra.mxu0 %v455
        %486 = vmatprep.subr.mxu0 0.0
        %487 = vmatpush1.msra.mxu0 %v456
        %488 = vmatprep.subr.mxu0 0.0
        %489 = vmatpush1.msra.mxu0 %v457
        %490 = vmatprep.subr.mxu0 0.0
        %491 = vmatpush1.msra.mxu0 0.0
        %492 = vmatprep.subr.mxu0 0.0
        %493 = vmatpush1.msra.mxu0 0.0
        %494 = vmatprep.subr.mxu0 0.0
        %495 = vmatpush1.msra.mxu0 0.0
        %496 = vmatprep.subr.mxu0 0.0
        %497 = vmatpush1.msra.mxu0 0.0
        %498 = vmatprep.subr.mxu0 0.0
        %499 = vmatpush1.msra.mxu0 0.0
        %500 = vmatprep.subr.mxu0 0.0
        %501 = vmatpush1.msra.mxu0 0.0
        %502 = vmatprep.subr.mxu0 0.0
        %503 = vmatpush1.msra.mxu0 0.0
        %504 = vmatprep.subr.mxu0 0.0
        %505 = vmatpush1.msra.mxu0 0.0
        %506 = vmatprep.subr.mxu0 0.0
        %507 = vmatpush1.msra.mxu0 0.0
        %508 = vmatprep.subr.mxu0 0.0
        %509 = vmatpush1.msra.mxu0 0.0
        %510 = vmatprep.subr.mxu0 0.0
        %511 = vmatpush1.msra.mxu0 0.0
        %512 = vmatprep.subr.mxu0 0.0
        %513 = vmatpush1.msra.mxu0 0.0
        %514 = vmatprep.subr.mxu0 0.0
        %515 = vmatpush1.msra.mxu0 0.0
        %516 = vmatprep.subr.mxu0 0.0
        %517 = vmatpush1.msra.mxu0 0.0
        %518 = vmatprep.subr.mxu0 0.0
        %519 = vmatpush1.msra.mxu0 0.0
        %520 = vmatprep.subr.mxu0 0.0
        %521 = vmatpush1.msra.mxu0 0.0
        %522 = vmatprep.mubr.f32.mxu0 0.0
        %523 = vmatmul.mubr.f32.gmra.mrb[0].mxu0 %v439
        %v524 = vpop.f32.mrb[0].mxu0
        %v525 = vadd.f32 0.0, %v524
        %v526 = vpop.f32.mrb[0].mxu0
        %527 = vmatprep.mubr.f32.mxu0 0.0
        %528 = vmatmul.mubr.f32.gmra.mrb[0].mxu0 %v440
        %v529 = vpop.f32.mrb[0].mxu0
        %v530 = vadd.f32 0.0, %v529
        %v531 = vpop.f32.mrb[0].mxu0
        %532 = vdwg.mxu0
        %v533 = vld [vmem:[#allocation2] sm:$0xff]
        %v534 = vld [vmem:[#allocation2 + $0x8] sm:$0xff]
        %v535 = vadd.f32 %v533, %v525
        %v536 = vadd.f32 %v534, %v530
        %537 = vst [vmem:[#allocation2] sm:$0xff] %v535
        %538 = vst [vmem:[#allocation2 + $0x8] sm:$0xff] %v536
        %v539 = vld [vmem:[#allocation2] sm:$0xff]
        %v540 = vld [vmem:[#allocation2 + $0x8] sm:$0xff]
        %v541 = vld [vmem:[#allocation8] sm:$0x1]
        %v543 = vlaneseq
        %v544 = vshrl.u32 %v543, 7
        %v545 = vsub.s32 0, %v544
        %v546 = vrot.slane %v541, %v545
        %v548 = vadd.f32 %v539, %v546
        %v549 = vadd.f32 %v540, %v546
        %v550 = vmax.f32 %v548, 0.0
        %v551 = vmax.f32 %v549, 0.0
        %552 = vst [vmem:[%s243 + $0x10] sm:$0xff] %v550
        %553 = vst [vmem:[%s243 + $0x18] sm:$0xff] %v551
        %554 = vst [vmem:[%s243] sm:$0xff] 0.0
        %555 = vst [vmem:[%s243 + $0x8] sm:$0xff] 0.0
        %556 = vst [vmem:[%s243 + $0x20] sm:$0xff] 0.0
        %557 = vst [vmem:[%s243 + $0x28] sm:$0xff] 0.0
        %s558 = sand.u32 %s121, 1
        %s559 = scalar_lea.sflag [#allocation5], %s558
        %s560 = sand.u32 %s121, 1
        %s561 = smul.addr %s560, 48
        %s562 = scalar_lea.vmem [#allocation9], %s561
        // Predicated region
        $region45: #{jasper_forward.9} parent=31 // pred_check
          %p563 = pneg %p131
        $region46: #{jasper_forward.9} parent=31 // pred_check_branch
          %565 = sbr.rel (%p563) target = $region48
        $region47: #{jasper_forward.9} parent=31 // pred_region
          %s567 = ssub.s32 768, 768
          %568 = vsyncadd %s559, %s567
          %s569 = smul.addr %s25, 6
          %s570 = sadd.s32 %s26, %s569
          %s571 = smul.addr %s570, 128
          %s572 = scalar_lea.hbm %s3, %s571
          %s573 = sshll.u32 %s562, 4
          %s574 = int_to_ptr.vmem [resolvable:$true] %s573
          %579 = dma.vmem_to_hbm [thread:$0]  %s574, 768, %s572, %s559, 128, 128, 8
        $region48: #{jasper_forward.9} parent=31 // pred_fallthru
          _
      $region32: #{jasper_forward.9} parent=5 // pred_fallthru
        _
      %p580 = scmp.le.s32.totalorder 2, %s16
      // Predicated region
      $region49: #{jasper_forward.9} parent=5 // pred_check
        %p581 = pneg %p580
      $region50: #{jasper_forward.9} parent=5 // pred_check_branch
        %583 = sbr.rel (%p581) target = $region52
      $region51: #{jasper_forward.9} parent=5 // pred_region
        %s584 = ssub.s32 %s16, 2
        // Predicated region
        $region53: #{jasper_forward.9} parent=51 // pred_check
          %p585 = pneg %p137
        $region54: #{jasper_forward.9} parent=51 // pred_check_branch
          %587 = sbr.rel (%p585) target = $region56
        $region55: #{jasper_forward.9} parent=51 // pred_region
          %s588 = sand.u32 %s122, 1
          %s589 = scalar_lea.sflag [#allocation5], %s588
          %s590 = sand.u32 %s122, 1
          %s591 = smul.addr %s590, 48
          %s592 = scalar_lea.vmem [#allocation9], %s591
          %593 = dma.done %s589, 768
        $region56: #{jasper_forward.9} parent=51 // pred_fallthru
          _
      $region52: #{jasper_forward.9} parent=5 // pred_fallthru
        _
    $region6: #{jasper_forward.9} parent=1 // loop_footer
      %s20 = sadd.s32 1, %s16
    $region7: #{jasper_forward.9} parent=1 // loop_footer_branch
      %15 = sbr.rel target = $region3
    $region8: #{jasper_forward.9} parent=1 // loop_exit
      _
    %594 = vsyncpa [#allocation4], 1
    %s595 = scalar_lea.sflag [#allocation4], 1
    %596 = vsyncpa %s595, 1
    %597 = vsyncpa [#allocation7], 1
    %598 = vsyncpa [#allocation5], 1
    %s599 = scalar_lea.sflag [#allocation5], 1
    %600 = vsyncpa %s599, 1

// kernel: jasper_forward.8
$region0: #{jasper_forward.8}
  #allocation0 [shape = 'u32[]', space=smem, size = 0x4, offset = 0x4, fixed_abs, tag = 'smem constant byte address 0x4 - core index']
  #allocation1 [shape = 'u32[144,128]{1,0:T(1,128)}', space=vmem, size = 0x12000, scoped, tag = 'internal scratch']
  #allocation2 [shape = 'f32[16,128]{1,0:T(8,128)}', space=vmem, size = 0x2000, scoped, tag = 'scratch operand']
  %s0 = inlined_call_operand.hbm [shape: f32[2,48,256], index: 0, kind: input, shape index: {}]
  %s1 = inlined_call_operand.hbm [shape: f32[2,256,128], index: 1, kind: input, shape index: {}]
  %s2 = inlined_call_operand.hbm [shape: f32[1,128], index: 2, kind: input, shape index: {}]
  %s3 = inlined_call_operand.hbm [shape: f32[2,48,128], index: 3, kind: output, shape index: {}]
  %s4 = sld [smem:[#allocation0]]
  $region57: #{jasper_forward.8} parent=0
    _
  %s6 = ssub.s32 1, %s4
  %s7 = scalar_select 0, %s6, %s4
  $region1: #{jasper_forward.8} parent=0
    #allocation3 [shape = 'u8[98304]{0}', space=vmem, size = 0x18000, scoped, tag = 'input window, operand 0']
    #allocation4 [shape = 's32[2]{0}', space=sflag, size = 0x8, scoped, tag = 'scoped memory for jasper_forward.8']
    #allocation5 [shape = 's32[2]{0}', space=sflag, size = 0x8, scoped, tag = 'scoped memory for jasper_forward.8']
    #allocation6 [shape = 'u8[262144]{0}', space=vmem, size = 0x40000, scoped, tag = 'input window, operand 1, single buffered']
    #allocation7 [shape = 's32[1]{0}', space=sflag, size = 0x4, scoped, tag = 'scoped memory for jasper_forward.8']
    #allocation8 [shape = 'u8[512]{0}', space=vmem, size = 0x400, scoped, tag = 'input window, operand 2, single buffered']
    #allocation9 [shape = 'u8[49152]{0}', space=vmem, size = 0xc000, scoped, tag = 'output window, operand 0']
    %8 = vsyncpa [#allocation4], 0
    %s9 = scalar_lea.sflag [#allocation4], 1
    %10 = vsyncpa %s9, 0
    %11 = vsyncpa [#allocation7], 0
    %12 = vsyncpa [#allocation5], 0
    %s13 = scalar_lea.sflag [#allocation5], 1
    %14 = vsyncpa %s13, 0
    loop: start=0, step=1, limit=4
    $region2: #{jasper_forward.8} parent=1 // loop_pre_header
      _
    $region3: #{jasper_forward.8} parent=1 // loop_header
      %s16 = sphi 0, %s20
      %p17 = scmp.ge.s32.totalorder %s16, 4
      %s23 = sphi 0, %s35
      %s24 = sphi 0, %s31
      %s25 = sphi 0, %s23
      %s26 = sphi 0, %s24
      %s27 = sphi 0, %s25
      %s28 = sphi 0, %s26
      %s38 = sphi 0, %s40
      %s41 = sphi 0, %s38
      %s42 = sphi 0, %s41
      %s58 = sphi 0, %s42
      %s64 = sphi 0, %s66
      %s67 = sphi 0, %s64
      %s68 = sphi 0, %s67
      %s84 = sphi 0, %s68
      %s90 = sphi 0, %s92
      %s93 = sphi 0, %s90
      %s94 = sphi 0, %s93
      %s110 = sphi 0, %s94
      %s118 = sphi 0, %s120
      %s121 = sphi 0, %s118
      %s122 = sphi 0, %s121
      %s138 = sphi 0, %s122
    $region4: #{jasper_forward.8} parent=1 // loop_header_branch
      %19 = sbr.rel (%p17) target = $region8
    $region5: #{jasper_forward.8} parent=1 // loop_body
      %s21 = ssub.s32 %s16, 1
      %s22 = ssub.s32 %s16, 2
      %s29 = sadd.s32 1, %s24
      %p30 = scmp.ge.s32.totalorder %s29, 1
      %s31 = scalar_select %p30, 0, %s29
      %s32 = sadd.s32 1, %s23
      %s33 = scalar_select %p30, %s32, %s23
      %p34 = scmp.ge.s32.totalorder %s33, 2
      %s35 = scalar_select %p34, 0, %s33
      %s36 = ssub.s32 %s23, %s35
      %p37 = scmp.eq.s32.totalorder %s36, 0
      %s39 = sadd.s32 %s38, 1
      %s40 = scalar_select %p37, %s38, %s39
      %p43 = pneg %p37
      %p44 = scmp.eq.s32.totalorder %s16, 1
      %p45 = por %p43, %p44
      %p46 = scmp.ne.s32.totalorder %s38, %s41
      %p47 = scmp.eq.s32.totalorder %s16, 0
      %p48 = por %p46, %p47
      %p49 = scmp.ne.s32.totalorder %s38, %s41
      %p50 = scmp.eq.s32.totalorder %s21, 1
      %p51 = por %p49, %p50
      %p52 = scmp.ne.s32.totalorder %s41, %s42
      %p53 = scmp.eq.s32.totalorder %s21, 0
      %p54 = por %p52, %p53
      %p55 = scmp.ne.s32.totalorder %s41, %s42
      %p56 = scmp.eq.s32.totalorder %s22, 1
      %p57 = por %p55, %p56
      %p59 = scmp.ne.s32.totalorder %s42, %s58
      %p60 = scmp.eq.s32.totalorder %s22, 0
      %p61 = por %p59, %p60
      %s62 = ssub.s32 %s24, %s31
      %p63 = scmp.eq.s32.totalorder %s62, 0
      %s65 = sadd.s32 %s64, 1
      %s66 = scalar_select %p63, %s64, %s65
      %p69 = pneg %p63
      %p70 = scmp.eq.s32.totalorder %s16, 1
      %p71 = por %p69, %p70
      %p72 = scmp.ne.s32.totalorder %s64, %s67
      %p73 = scmp.eq.s32.totalorder %s16, 0
      %p74 = por %p72, %p73
      %p75 = scmp.ne.s32.totalorder %s64, %s67
      %p76 = scmp.eq.s32.totalorder %s21, 1
      %p77 = por %p75, %p76
      %p78 = scmp.ne.s32.totalorder %s67, %s68
      %p79 = scmp.eq.s32.totalorder %s21, 0
      %p80 = por %p78, %p79
      %p81 = scmp.ne.s32.totalorder %s67, %s68
      %p82 = scmp.eq.s32.totalorder %s22, 1
      %p83 = por %p81, %p82
      %p85 = scmp.ne.s32.totalorder %s68, %s84
      %p86 = scmp.eq.s32.totalorder %s22, 0
      %p87 = por %p85, %p86
      %s88 = ssub.s32 %s24, %s31
      %p89 = scmp.eq.s32.totalorder %s88, 0
      %s91 = sadd.s32 %s90, 1
      %s92 = scalar_select %p89, %s90, %s91
      %p95 = pneg %p89
      %p96 = scmp.eq.s32.totalorder %s16, 1
      %p97 = por %p95, %p96
      %p98 = scmp.ne.s32.totalorder %s90, %s93
      %p99 = scmp.eq.s32.totalorder %s16, 0
      %p100 = por %p98, %p99
      %p101 = scmp.ne.s32.totalorder %s90, %s93
      %p102 = scmp.eq.s32.totalorder %s21, 1
      %p103 = por %p101, %p102
      %p104 = scmp.ne.s32.totalorder %s93, %s94
      %p105 = scmp.eq.s32.totalorder %s21, 0
      %p106 = por %p104, %p105
      %p107 = scmp.ne.s32.totalorder %s93, %s94
      %p108 = scmp.eq.s32.totalorder %s22, 1
      %p109 = por %p107, %p108
      %p111 = scmp.ne.s32.totalorder %s94, %s110
      %p112 = scmp.eq.s32.totalorder %s22, 0
      %p113 = por %p111, %p112
      %s114 = ssub.s32 %s23, %s35
      %s115 = ssub.s32 %s24, %s31
      %s116 = sor.u32 %s114, %s115
      %p117 = scmp.eq.s32.totalorder %s116, 0
      %s119 = sadd.s32 %s118, 1
      %s120 = scalar_select %p117, %s118, %s119
      %p123 = pneg %p117
      %p124 = scmp.eq.s32.totalorder %s16, 1
      %p125 = por %p123, %p124
      %p126 = scmp.ne.s32.totalorder %s118, %s121
      %p127 = scmp.eq.s32.totalorder %s16, 0
      %p128 = por %p126, %p127
      %p129 = scmp.ne.s32.totalorder %s118, %s121
      %p130 = scmp.eq.s32.totalorder %s21, 1
      %p131 = por %p129, %p130
      %p132 = scmp.ne.s32.totalorder %s121, %s122
      %p133 = scmp.eq.s32.totalorder %s21, 0
      %p134 = por %p132, %p133
      %p135 = scmp.ne.s32.totalorder %s121, %s122
      %p136 = scmp.eq.s32.totalorder %s22, 1
      %p137 = por %p135, %p136
      %p139 = scmp.ne.s32.totalorder %s122, %s138
      %p140 = scmp.eq.s32.totalorder %s22, 0
      %p141 = por %p139, %p140
      %p142 = scmp.le.s32.totalorder 1, %s16
      %p143 = scmp.lt.s32.totalorder %s16, 3
      %p144 = pnand %p142, %p143
      %p145 = pneg %p144
      // Predicated region
      $region9: #{jasper_forward.8} parent=5 // pred_check
        _
      $region10: #{jasper_forward.8} parent=5 // pred_check_branch
        %147 = sbr.rel (%p144) target = $region12
      $region11: #{jasper_forward.8} parent=5 // pred_region
        %s148 = ssub.s32 %s16, 1
        // Predicated region
        $region13: #{jasper_forward.8} parent=11 // pred_check
          %p149 = pneg %p80
        $region14: #{jasper_forward.8} parent=11 // pred_check_branch
          %151 = sbr.rel (%p149) target = $region16
        $region15: #{jasper_forward.8} parent=11 // pred_region
          %s153 = ssub.s32 8192, 8192
          %154 = vsyncadd [#allocation7], %s153
          %s155 = smul.addr %s26, 128
          %s156 = scalar_lea.hbm %s1, %s155
          %s157 = sshll.u32 [#allocation6], 4
          %s158 = int_to_ptr.vmem [resolvable:$true] %s157
          %163 = dma.hbm_to_vmem [thread:$0]  %s156, 8192, %s158, [#allocation7], 128, 128, 8
        $region16: #{jasper_forward.8} parent=11 // pred_fallthru
          _
        // Predicated region
        $region17: #{jasper_forward.8} parent=11 // pred_check
          %p164 = pneg %p106
        $region18: #{jasper_forward.8} parent=11 // pred_check_branch
          %166 = sbr.rel (%p164) target = $region20
        $region19: #{jasper_forward.8} parent=11 // pred_region
          %s168 = ssub.s32 16, 16
          %169 = vsyncadd [#allocation7], %s168
          %s170 = smul.addr %s26, 16
          %s171 = scalar_lea.hbm %s2, %s170
          %s173 = sshll.u32 [#allocation8], 4
          %s174 = int_to_ptr.vmem [resolvable:$true] %s173
          %176 = dma.hbm_to_vmem [thread:$0]  %s171, 16, %s174, [#allocation7]
        $region20: #{jasper_forward.8} parent=11 // pred_fallthru
          _
      $region12: #{jasper_forward.8} parent=5 // pred_fallthru
        _
      %p177 = scmp.lt.s32.totalorder %s16, 2
      // Predicated region
      $region21: #{jasper_forward.8} parent=5 // pred_check
        %p178 = pneg %p177
      $region22: #{jasper_forward.8} parent=5 // pred_check_branch
        %180 = sbr.rel (%p178) target = $region24
      $region23: #{jasper_forward.8} parent=5 // pred_region
        // Predicated region
        $region25: #{jasper_forward.8} parent=23 // pred_check
          %p181 = pneg %p48
        $region26: #{jasper_forward.8} parent=23 // pred_check_branch
          %183 = sbr.rel (%p181) target = $region28
        $region27: #{jasper_forward.8} parent=23 // pred_region
          %s184 = sand.u32 %s38, 1
          %s185 = scalar_lea.sflag [#allocation4], %s184
          %s186 = sand.u32 %s38, 1
          %s187 = smul.addr %s186, 96
          %s188 = scalar_lea.vmem [#allocation3], %s187
          %s190 = ssub.s32 1536, 1536
          %191 = vsyncadd %s185, %s190
          %s192 = smul.addr %s23, 12
          %s193 = smul.addr %s192, 128
          %s194 = scalar_lea.hbm %s0, %s193
          %s195 = sshll.u32 %s188, 4
          %s196 = int_to_ptr.vmem [resolvable:$true] %s195
          %201 = dma.hbm_to_vmem [thread:$0]  %s194, 1536, %s196, %s185, 256, 256, 16
        $region28: #{jasper_forward.8} parent=23 // pred_fallthru
          _
      $region24: #{jasper_forward.8} parent=5 // pred_fallthru
        _
      %p202 = scmp.le.s32.totalorder 1, %s16
      %p203 = scmp.lt.s32.totalorder %s16, 3
      %p204 = pnand %p202, %p203
      %p205 = pneg %p204
      // Predicated region
      $region29: #{jasper_forward.8} parent=5 // pred_check
        _
      $region30: #{jasper_forward.8} parent=5 // pred_check_branch
        %207 = sbr.rel (%p204) target = $region32
      $region31: #{jasper_forward.8} parent=5 // pred_region
        %s208 = ssub.s32 %s16, 1
        %s209 = sand.u32 %s41, 1
        %s210 = scalar_lea.sflag [#allocation4], %s209
        %s211 = sand.u32 %s41, 1
        %s212 = smul.addr %s211, 96
        %s213 = scalar_lea.vmem [#allocation3], %s212
        // Predicated region
        $region33: #{jasper_forward.8} parent=31 // pred_check
          %p214 = pneg %p54
        $region34: #{jasper_forward.8} parent=31 // pred_check_branch
          %216 = sbr.rel (%p214) target = $region36
        $region35: #{jasper_forward.8} parent=31 // pred_region
          %217 = dma.done %s210, 1536
        $region36: #{jasper_forward.8} parent=31 // pred_fallthru
          _
        // Predicated region
        $region37: #{jasper_forward.8} parent=31 // pred_check
          %p218 = pneg %p80
        $region38: #{jasper_forward.8} parent=31 // pred_check_branch
          %220 = sbr.rel (%p218) target = $region40
        $region39: #{jasper_forward.8} parent=31 // pred_region
          %221 = dma.done [#allocation7], 8192
        $region40: #{jasper_forward.8} parent=31 // pred_fallthru
          _
        // Predicated region
        $region41: #{jasper_forward.8} parent=31 // pred_check
          %p222 = pneg %p106
        $region42: #{jasper_forward.8} parent=31 // pred_check_branch
          %224 = sbr.rel (%p222) target = $region44
        $region43: #{jasper_forward.8} parent=31 // pred_region
          %225 = dma.done [#allocation7], 16
        $region44: #{jasper_forward.8} parent=31 // pred_fallthru
          _
        %s226 = sand.u32 %s41, 1
        %s227 = scalar_lea.sflag [#allocation4], %s226
        %s228 = sand.u32 %s41, 1
        %s229 = smul.addr %s228, 96
        %s230 = scalar_lea.vmem [#allocation3], %s229
        %p231 = pneg %p54
        %p232 = pneg %p51
        %p233 = pneg %p80
        %p234 = pneg %p77
        %p235 = pneg %p106
        %p236 = pneg %p103
        %p237 = pneg %p134
        %p238 = pneg %p131
        %s239 = sand.u32 %s121, 1
        %s240 = scalar_lea.sflag [#allocation5], %s239
        %s241 = sand.u32 %s121, 1
        %s242 = smul.addr %s241, 48
        %s243 = scalar_lea.vmem [#allocation9], %s242
        %v244 = vld [vmem:[%s213 + $0x20] sm:$0xff]
        %v245 = vld [vmem:[%s213 + $0x28] sm:$0xff]
        %v246 = vld [vmem:[%s213 + $0x30] sm:$0xff]
        %v247 = vld [vmem:[%s213 + $0x38] sm:$0xff]
        %v248 = vld [vmem:[#allocation6] sm:$0xff]
        %v249 = vld [vmem:[#allocation6 + $0x8] sm:$0xff]
        %v250 = vld [vmem:[#allocation6 + $0x10] sm:$0xff]
        %v251 = vld [vmem:[#allocation6 + $0x18] sm:$0xff]
        %v252 = vld [vmem:[#allocation6 + $0x20] sm:$0xff]
        %v253 = vld [vmem:[#allocation6 + $0x28] sm:$0xff]
        %v254 = vld [vmem:[#allocation6 + $0x30] sm:$0xff]
        %v255 = vld [vmem:[#allocation6 + $0x38] sm:$0xff]
        %v256 = vld [vmem:[#allocation6 + $0x40] sm:$0xff]
        %v257 = vld [vmem:[#allocation6 + $0x48] sm:$0xff]
        %v258 = vld [vmem:[#allocation6 + $0x50] sm:$0xff]
        %v259 = vld [vmem:[#allocation6 + $0x58] sm:$0xff]
        %v260 = vld [vmem:[#allocation6 + $0x60] sm:$0xff]
        %v261 = vld [vmem:[#allocation6 + $0x68] sm:$0xff]
        %v262 = vld [vmem:[#allocation6 + $0x70] sm:$0xff]
        %v263 = vld [vmem:[#allocation6 + $0x78] sm:$0xff]
        %v264 = vld [vmem:[#allocation6 + $0x80] sm:$0xff]
        %v265 = vld [vmem:[#allocation6 + $0x88] sm:$0xff]
        %v266 = vld [vmem:[#allocation6 + $0x90] sm:$0xff]
        %v267 = vld [vmem:[#allocation6 + $0x98] sm:$0xff]
        %v268 = vld [vmem:[#allocation6 + $0xa0] sm:$0xff]
        %v269 = vld [vmem:[#allocation6 + $0xa8] sm:$0xff]
        %v270 = vld [vmem:[#allocation6 + $0xb0] sm:$0xff]
        %v271 = vld [vmem:[#allocation6 + $0xb8] sm:$0xff]
        %v272 = vld [vmem:[#allocation6 + $0xc0] sm:$0xff]
        %v273 = vld [vmem:[#allocation6 + $0xc8] sm:$0xff]
        %v274 = vld [vmem:[#allocation6 + $0xd0] sm:$0xff]
        %v275 = vld [vmem:[#allocation6 + $0xd8] sm:$0xff]
        %v276 = vld [vmem:[#allocation6 + $0xe0] sm:$0xff]
        %v277 = vld [vmem:[#allocation6 + $0xe8] sm:$0xff]
        %v278 = vld [vmem:[#allocation6 + $0xf0] sm:$0xff]
        %v279 = vld [vmem:[#allocation6 + $0xf8] sm:$0xff]
        %280 = vmatprep.subr.mxu0 0.0
        %281 = vmatpush1.msra.mxu0 %v248
        %282 = vmatprep.subr.mxu0 0.0
        %283 = vmatpush1.msra.mxu0 %v249
        %284 = vmatprep.subr.mxu0 0.0
        %285 = vmatpush1.msra.mxu0 %v250
        %286 = vmatprep.subr.mxu0 0.0
        %287 = vmatpush1.msra.mxu0 %v251
        %288 = vmatprep.subr.mxu0 0.0
        %289 = vmatpush1.msra.mxu0 %v252
        %290 = vmatprep.subr.mxu0 0.0
        %291 = vmatpush1.msra.mxu0 %v253
        %292 = vmatprep.subr.mxu0 0.0
        %293 = vmatpush1.msra.mxu0 %v254
        %294 = vmatprep.subr.mxu0 0.0
        %295 = vmatpush1.msra.mxu0 %v255
        %296 = vmatprep.subr.mxu0 0.0
        %297 = vmatpush1.msra.mxu0 %v256
        %298 = vmatprep.subr.mxu0 0.0
        %299 = vmatpush1.msra.mxu0 %v257
        %300 = vmatprep.subr.mxu0 0.0
        %301 = vmatpush1.msra.mxu0 %v258
        %302 = vmatprep.subr.mxu0 0.0
        %303 = vmatpush1.msra.mxu0 %v259
        %304 = vmatprep.subr.mxu0 0.0
        %305 = vmatpush1.msra.mxu0 %v260
        %306 = vmatprep.subr.mxu0 0.0
        %307 = vmatpush1.msra.mxu0 %v261
        %308 = vmatprep.subr.mxu0 0.0
        %309 = vmatpush1.msra.mxu0 %v262
        %310 = vmatprep.subr.mxu0 0.0
        %311 = vmatpush1.msra.mxu0 %v263
        %312 = vmatprep.subr.mxu0 0.0
        %313 = vmatpush1.msra.mxu0 %v264
        %314 = vmatprep.subr.mxu0 0.0
        %315 = vmatpush1.msra.mxu0 %v265
        %316 = vmatprep.subr.mxu0 0.0
        %317 = vmatpush1.msra.mxu0 %v266
        %318 = vmatprep.subr.mxu0 0.0
        %319 = vmatpush1.msra.mxu0 %v267
        %320 = vmatprep.subr.mxu0 0.0
        %321 = vmatpush1.msra.mxu0 %v268
        %322 = vmatprep.subr.mxu0 0.0
        %323 = vmatpush1.msra.mxu0 %v269
        %324 = vmatprep.subr.mxu0 0.0
        %325 = vmatpush1.msra.mxu0 %v270
        %326 = vmatprep.subr.mxu0 0.0
        %327 = vmatpush1.msra.mxu0 %v271
        %328 = vmatprep.subr.mxu0 0.0
        %329 = vmatpush1.msra.mxu0 %v272
        %330 = vmatprep.subr.mxu0 0.0
        %331 = vmatpush1.msra.mxu0 %v273
        %332 = vmatprep.subr.mxu0 0.0
        %333 = vmatpush1.msra.mxu0 %v274
        %334 = vmatprep.subr.mxu0 0.0
        %335 = vmatpush1.msra.mxu0 %v275
        %336 = vmatprep.subr.mxu0 0.0
        %337 = vmatpush1.msra.mxu0 %v276
        %338 = vmatprep.subr.mxu0 0.0
        %339 = vmatpush1.msra.mxu0 %v277
        %340 = vmatprep.subr.mxu0 0.0
        %341 = vmatpush1.msra.mxu0 %v278
        %342 = vmatprep.subr.mxu0 0.0
        %343 = vmatpush1.msra.mxu0 %v279
        %344 = vmatprep.mubr.f32.mxu0 %v245
        %345 = vmatmul.mubr.f32.gmra.mrb[0].mxu0 %v244
        %v346 = vpop.f32.mrb[0].mxu0
        %v347 = vadd.f32 0.0, %v346
        %v348 = vpop.f32.mrb[0].mxu0
        %349 = vmatprep.mubr.f32.mxu0 %v247
        %350 = vmatmul.mubr.f32.gmra.mrb[0].mxu0 %v246
        %v351 = vpop.f32.mrb[0].mxu0
        %v352 = vadd.f32 0.0, %v351
        %v353 = vpop.f32.mrb[0].mxu0
        %354 = vdwg.mxu0
        %355 = vst [vmem:[#allocation2] sm:$0xff] %v347
        %356 = vst [vmem:[#allocation2 + $0x8] sm:$0xff] %v352
        %v357 = vld [vmem:[%s213 + $0x20] sm:$0xfe]
        %v358 = vld [vmem:[%s213 + $0x28] sm:$0xfe]
        %v359 = vld [vmem:[%s213 + $0x30] sm:$0xff]
        %v360 = vld [vmem:[%s213 + $0x38] sm:$0xff]
        %v361 = vld [vmem:[%s213 + $0x40] sm:$0x1]
        %v362 = vld [vmem:[%s213 + $0x48] sm:$0x1]
        %s363 = scalar_lea.vmem [#allocation6], 256
        %v364 = vld [vmem:[%s363] sm:$0xff]
        %v365 = vld [vmem:[%s363 + $0x8] sm:$0xff]
        %v366 = vld [vmem:[%s363 + $0x10] sm:$0xff]
        %v367 = vld [vmem:[%s363 + $0x18] sm:$0xff]
        %v368 = vld [vmem:[%s363 + $0x20] sm:$0xff]
        %v369 = vld [vmem:[%s363 + $0x28] sm:$0xff]
        %v370 = vld [vmem:[%s363 + $0x30] sm:$0xff]
        %v371 = vld [vmem:[%s363 + $0x38] sm:$0xff]
        %v372 = vld [vmem:[%s363 + $0x40] sm:$0xff]
        %v373 = vld [vmem:[%s363 + $0x48] sm:$0xff]
        %v374 = vld [vmem:[%s363 + $0x50] sm:$0xff]
        %v375 = vld [vmem:[%s363 + $0x58] sm:$0xff]
        %v376 = vld [vmem:[%s363 + $0x60] sm:$0xff]
        %v377 = vld [vmem:[%s363 + $0x68] sm:$0xff]
        %v378 = vld [vmem:[%s363 + $0x70] sm:$0xff]
        %v379 = vld [vmem:[%s363 + $0x78] sm:$0xff]
        %v380 = vld [vmem:[%s363 + $0x80] sm:$0xff]
        %v381 = vld [vmem:[%s363 + $0x88] sm:$0xff]
        %v382 = vld [vmem:[%s363 + $0x90] sm:$0xff]
        %v383 = vld [vmem:[%s363 + $0x98] sm:$0xff]
        %v384 = vld [vmem:[%s363 + $0xa0] sm:$0xff]
        %v385 = vld [vmem:[%s363 + $0xa8] sm:$0xff]
        %v386 = vld [vmem:[%s363 + $0xb0] sm:$0xff]
        %v387 = vld [vmem:[%s363 + $0xb8] sm:$0xff]
        %v388 = vld [vmem:[%s363 + $0xc0] sm:$0xff]
        %v389 = vld [vmem:[%s363 + $0xc8] sm:$0xff]
        %v390 = vld [vmem:[%s363 + $0xd0] sm:$0xff]
        %v391 = vld [vmem:[%s363 + $0xd8] sm:$0xff]
        %v392 = vld [vmem:[%s363 + $0xe0] sm:$0xff]
        %v393 = vld [vmem:[%s363 + $0xe8] sm:$0xff]
        %v394 = vld [vmem:[%s363 + $0xf0] sm:$0xff]
        %v395 = vld [vmem:[%s363 + $0xf8] sm:$0xff]
        %vm402 = vcmask 1046528
        %v403 = vrot.slane %v357, 1
        %v404 = vrot.slane %v359, 1
        %v405 = vsel %vm402, %v403, %v404
        %v406 = vrot.slane %v358, 1
        %v407 = vrot.slane %v360, 1
        %v408 = vsel %vm402, %v406, %v407
        %v409 = vrot.slane %v361, 1
        %v410 = vsel %vm402, %v404, %v409
        %v411 = vrot.slane %v362, 1
        %v412 = vsel %vm402, %v407, %v411
        %417 = vmatprep.subr.mxu0 0.0
        %418 = vmatpush1.msra.mxu0 %v364
        %419 = vmatprep.subr.mxu0 0.0
        %420 = vmatpush1.msra.mxu0 %v365
        %421 = vmatprep.subr.mxu0 0.0
        %422 = vmatpush1.msra.mxu0 %v366
        %423 = vmatprep.subr.mxu0 0.0
        %424 = vmatpush1.msra.mxu0 %v367
        %425 = vmatprep.subr.mxu0 0.0
        %426 = vmatpush1.msra.mxu0 %v368
        %427 = vmatprep.subr.mxu0 0.0
        %428 = vmatpush1.msra.mxu0 %v369
        %429 = vmatprep.subr.mxu0 0.0
        %430 = vmatpush1.msra.mxu0 %v370
        %431 = vmatprep.subr.mxu0 0.0
        %432 = vmatpush1.msra.mxu0 %v371
        %433 = vmatprep.subr.mxu0 0.0
        %434 = vmatpush1.msra.mxu0 %v372
        %435 = vmatprep.subr.mxu0 0.0
        %436 = vmatpush1.msra.mxu0 %v373
        %437 = vmatprep.subr.mxu0 0.0
        %438 = vmatpush1.msra.mxu0 %v374
        %439 = vmatprep.subr.mxu0 0.0
        %440 = vmatpush1.msra.mxu0 %v375
        %441 = vmatprep.subr.mxu0 0.0
        %442 = vmatpush1.msra.mxu0 %v376
        %443 = vmatprep.subr.mxu0 0.0
        %444 = vmatpush1.msra.mxu0 %v377
        %445 = vmatprep.subr.mxu0 0.0
        %446 = vmatpush1.msra.mxu0 %v378
        %447 = vmatprep.subr.mxu0 0.0
        %448 = vmatpush1.msra.mxu0 %v379
        %449 = vmatprep.subr.mxu0 0.0
        %450 = vmatpush1.msra.mxu0 %v380
        %451 = vmatprep.subr.mxu0 0.0
        %452 = vmatpush1.msra.mxu0 %v381
        %453 = vmatprep.subr.mxu0 0.0
        %454 = vmatpush1.msra.mxu0 %v382
        %455 = vmatprep.subr.mxu0 0.0
        %456 = vmatpush1.msra.mxu0 %v383
        %457 = vmatprep.subr.mxu0 0.0
        %458 = vmatpush1.msra.mxu0 %v384
        %459 = vmatprep.subr.mxu0 0.0
        %460 = vmatpush1.msra.mxu0 %v385
        %461 = vmatprep.subr.mxu0 0.0
        %462 = vmatpush1.msra.mxu0 %v386
        %463 = vmatprep.subr.mxu0 0.0
        %464 = vmatpush1.msra.mxu0 %v387
        %465 = vmatprep.subr.mxu0 0.0
        %466 = vmatpush1.msra.mxu0 %v388
        %467 = vmatprep.subr.mxu0 0.0
        %468 = vmatpush1.msra.mxu0 %v389
        %469 = vmatprep.subr.mxu0 0.0
        %470 = vmatpush1.msra.mxu0 %v390
        %471 = vmatprep.subr.mxu0 0.0
        %472 = vmatpush1.msra.mxu0 %v391
        %473 = vmatprep.subr.mxu0 0.0
        %474 = vmatpush1.msra.mxu0 %v392
        %475 = vmatprep.subr.mxu0 0.0
        %476 = vmatpush1.msra.mxu0 %v393
        %477 = vmatprep.subr.mxu0 0.0
        %478 = vmatpush1.msra.mxu0 %v394
        %479 = vmatprep.subr.mxu0 0.0
        %480 = vmatpush1.msra.mxu0 %v395
        %481 = vmatprep.mubr.f32.mxu0 %v408
        %482 = vmatmul.mubr.f32.gmra.mrb[0].mxu0 %v405
        %v483 = vpop.f32.mrb[0].mxu0
        %v484 = vadd.f32 0.0, %v483
        %v485 = vpop.f32.mrb[0].mxu0
        %486 = vmatprep.mubr.f32.mxu0 %v412
        %487 = vmatmul.mubr.f32.gmra.mrb[0].mxu0 %v410
        %v488 = vpop.f32.mrb[0].mxu0
        %v489 = vadd.f32 0.0, %v488
        %v490 = vpop.f32.mrb[0].mxu0
        %491 = vdwg.mxu0
        %v492 = vld [vmem:[#allocation2] sm:$0xff]
        %v493 = vld [vmem:[#allocation2 + $0x8] sm:$0xff]
        %v494 = vadd.f32 %v492, %v484
        %v495 = vadd.f32 %v493, %v489
        %496 = vst [vmem:[#allocation2] sm:$0xff] %v494
        %497 = vst [vmem:[#allocation2 + $0x8] sm:$0xff] %v495
        %v498 = vld [vmem:[#allocation2] sm:$0xff]
        %v499 = vld [vmem:[#allocation2 + $0x8] sm:$0xff]
        %v500 = vld [vmem:[#allocation8] sm:$0x1]
        %v502 = vlaneseq
        %v503 = vshrl.u32 %v502, 7
        %v504 = vsub.s32 0, %v503
        %v505 = vrot.slane %v500, %v504
        %v507 = vadd.f32 %v498, %v505
        %v508 = vadd.f32 %v499, %v505
        %v509 = vmax.f32 %v507, 0.0
        %v510 = vmax.f32 %v508, 0.0
        %511 = vst [vmem:[%s243 + $0x10] sm:$0xff] %v509
        %512 = vst [vmem:[%s243 + $0x18] sm:$0xff] %v510
        %513 = vst [vmem:[%s243] sm:$0xff] 0.0
        %514 = vst [vmem:[%s243 + $0x8] sm:$0xff] 0.0
        %515 = vst [vmem:[%s243 + $0x20] sm:$0xff] 0.0
        %516 = vst [vmem:[%s243 + $0x28] sm:$0xff] 0.0
        %s517 = sand.u32 %s121, 1
        %s518 = scalar_lea.sflag [#allocation5], %s517
        %s519 = sand.u32 %s121, 1
        %s520 = smul.addr %s519, 48
        %s521 = scalar_lea.vmem [#allocation9], %s520
        // Predicated region
        $region45: #{jasper_forward.8} parent=31 // pred_check
          %p522 = pneg %p131
        $region46: #{jasper_forward.8} parent=31 // pred_check_branch
          %524 = sbr.rel (%p522) target = $region48
        $region47: #{jasper_forward.8} parent=31 // pred_region
          %s526 = ssub.s32 768, 768
          %527 = vsyncadd %s518, %s526
          %s528 = smul.addr %s25, 6
          %s529 = sadd.s32 %s26, %s528
          %s530 = smul.addr %s529, 128
          %s531 = scalar_lea.hbm %s3, %s530
          %s532 = sshll.u32 %s521, 4
          %s533 = int_to_ptr.vmem [resolvable:$true] %s532
          %538 = dma.vmem_to_hbm [thread:$0]  %s533, 768, %s531, %s518, 128, 128, 8
        $region48: #{jasper_forward.8} parent=31 // pred_fallthru
          _
      $region32: #{jasper_forward.8} parent=5 // pred_fallthru
        _
      %p539 = scmp.le.s32.totalorder 2, %s16
      // Predicated region
      $region49: #{jasper_forward.8} parent=5 // pred_check
        %p540 = pneg %p539
      $region50: #{jasper_forward.8} parent=5 // pred_check_branch
        %542 = sbr.rel (%p540) target = $region52
      $region51: #{jasper_forward.8} parent=5 // pred_region
        %s543 = ssub.s32 %s16, 2
        // Predicated region
        $region53: #{jasper_forward.8} parent=51 // pred_check
          %p544 = pneg %p137
        $region54: #{jasper_forward.8} parent=51 // pred_check_branch
          %546 = sbr.rel (%p544) target = $region56
        $region55: #{jasper_forward.8} parent=51 // pred_region
          %s547 = sand.u32 %s122, 1
          %s548 = scalar_lea.sflag [#allocation5], %s547
          %s549 = sand.u32 %s122, 1
          %s550 = smul.addr %s549, 48
          %s551 = scalar_lea.vmem [#allocation9], %s550
          %552 = dma.done %s548, 768
        $region56: #{jasper_forward.8} parent=51 // pred_fallthru
          _
      $region52: #{jasper_forward.8} parent=5 // pred_fallthru
        _
    $region6: #{jasper_forward.8} parent=1 // loop_footer
      %s20 = sadd.s32 1, %s16
    $region7: #{jasper_forward.8} parent=1 // loop_footer_branch
      %15 = sbr.rel target = $region3
    $region8: #{jasper_forward.8} parent=1 // loop_exit
      _
    %553 = vsyncpa [#allocation4], 1
    %s554 = scalar_lea.sflag [#allocation4], 1
    %555 = vsyncpa %s554, 1
    %556 = vsyncpa [#allocation7], 1
    %557 = vsyncpa [#allocation5], 1
    %s558 = scalar_lea.sflag [#allocation5], 1
    %559 = vsyncpa %s558, 1

// kernel: jasper_forward.10
$region0: #{jasper_forward.10}
  #allocation0 [shape = 'u32[]', space=smem, size = 0x4, offset = 0x4, fixed_abs, tag = 'smem constant byte address 0x4 - core index']
  #allocation1 [shape = 'u32[144,128]{1,0:T(1,128)}', space=vmem, size = 0x12000, scoped, tag = 'internal scratch']
  #allocation2 [shape = 'f32[16,128]{1,0:T(8,128)}', space=vmem, size = 0x2000, scoped, tag = 'scratch operand']
  %s0 = inlined_call_operand.hbm [shape: f32[2,48,128], index: 0, kind: input, shape index: {}]
  %s1 = inlined_call_operand.hbm [shape: f32[3,128,128], index: 1, kind: input, shape index: {}]
  %s2 = inlined_call_operand.hbm [shape: f32[1,128], index: 2, kind: input, shape index: {}]
  %s3 = inlined_call_operand.hbm [shape: f32[2,48,128], index: 3, kind: input, shape index: {}]
  %s4 = inlined_call_operand.hbm [shape: f32[1,128,128], index: 4, kind: input, shape index: {}]
  %s5 = inlined_call_operand.hbm [shape: f32[1,128], index: 5, kind: input, shape index: {}]
  %s6 = inlined_call_operand.hbm [shape: f32[2,48,128], index: 6, kind: output, shape index: {}]
  %s7 = sld [smem:[#allocation0]]
  $region81: #{jasper_forward.10} parent=0
    _
  %s9 = ssub.s32 1, %s7
  %s10 = scalar_select 0, %s9, %s7
  $region1: #{jasper_forward.10} parent=0
    #allocation3 [shape = 'u8[49152]{0}', space=vmem, size = 0xc000, scoped, tag = 'input window, operand 0']
    #allocation4 [shape = 's32[2]{0}', space=sflag, size = 0x8, scoped, tag = 'scoped memory for jasper_forward.10']
    #allocation5 [shape = 's32[2]{0}', space=sflag, size = 0x8, scoped, tag = 'scoped memory for jasper_forward.10']
    #allocation6 [shape = 'u8[196608]{0}', space=vmem, size = 0x30000, scoped, tag = 'input window, operand 1, single buffered']
    #allocation7 [shape = 's32[1]{0}', space=sflag, size = 0x4, scoped, tag = 'scoped memory for jasper_forward.10']
    #allocation8 [shape = 'u8[512]{0}', space=vmem, size = 0x400, scoped, tag = 'input window, operand 2, single buffered']
    #allocation9 [shape = 'u8[49152]{0}', space=vmem, size = 0xc000, scoped, tag = 'input window, operand 3']
    #allocation10 [shape = 's32[2]{0}', space=sflag, size = 0x8, scoped, tag = 'scoped memory for jasper_forward.10']
    #allocation11 [shape = 'u8[65536]{0}', space=vmem, size = 0x10000, scoped, tag = 'input window, operand 4, single buffered']
    #allocation12 [shape = 'u8[512]{0}', space=vmem, size = 0x400, scoped, tag = 'input window, operand 5, single buffered']
    #allocation13 [shape = 's32[1]{0}', space=sflag, size = 0x4, scoped, tag = 'scoped memory for jasper_forward.10']
    #allocation14 [shape = 'u8[49152]{0}', space=vmem, size = 0xc000, scoped, tag = 'output window, operand 0']
    %11 = vsyncpa [#allocation4], 0
    %s12 = scalar_lea.sflag [#allocation4], 1
    %13 = vsyncpa %s12, 0
    %14 = vsyncpa [#allocation7], 0
    %15 = vsyncpa [#allocation10], 0
    %s16 = scalar_lea.sflag [#allocation10], 1
    %17 = vsyncpa %s16, 0
    %18 = vsyncpa [#allocation13], 0
    %19 = vsyncpa [#allocation5], 0
    %s20 = scalar_lea.sflag [#allocation5], 1
    %21 = vsyncpa %s20, 0
    loop: start=0, step=1, limit=4
    $region2: #{jasper_forward.10} parent=1 // loop_pre_header
      _
    $region3: #{jasper_forward.10} parent=1 // loop_header
      %s23 = sphi 0, %s27
      %p24 = scmp.ge.s32.totalorder %s23, 4
      %s30 = sphi 0, %s42
      %s31 = sphi 0, %s38
      %s32 = sphi 0, %s30
      %s33 = sphi 0, %s31
      %s34 = sphi 0, %s32
      %s35 = sphi 0, %s33
      %s45 = sphi 0, %s47
      %s48 = sphi 0, %s45
      %s49 = sphi 0, %s48
      %s65 = sphi 0, %s49
      %s71 = sphi 0, %s73
      %s74 = sphi 0, %s71
      %s75 = sphi 0, %s74
      %s91 = sphi 0, %s75
      %s97 = sphi 0, %s99
      %s100 = sphi 0, %s97
      %s101 = sphi 0, %s100
      %s117 = sphi 0, %s101
      %s123 = sphi 0, %s125
      %s126 = sphi 0, %s123
      %s127 = sphi 0, %s126
      %s143 = sphi 0, %s127
      %s149 = sphi 0, %s151
      %s152 = sphi 0, %s149
      %s153 = sphi 0, %s152
      %s169 = sphi 0, %s153
      %s175 = sphi 0, %s177
      %s178 = sphi 0, %s175
      %s179 = sphi 0, %s178
      %s195 = sphi 0, %s179
      %s203 = sphi 0, %s205
      %s206 = sphi 0, %s203
      %s207 = sphi 0, %s206
      %s223 = sphi 0, %s207
    $region4: #{jasper_forward.10} parent=1 // loop_header_branch
      %26 = sbr.rel (%p24) target = $region8
    $region5: #{jasper_forward.10} parent=1 // loop_body
      %s28 = ssub.s32 %s23, 1
      %s29 = ssub.s32 %s23, 2
      %s36 = sadd.s32 1, %s31
      %p37 = scmp.ge.s32.totalorder %s36, 1
      %s38 = scalar_select %p37, 0, %s36
      %s39 = sadd.s32 1, %s30
      %s40 = scalar_select %p37, %s39, %s30
      %p41 = scmp.ge.s32.totalorder %s40, 2
      %s42 = scalar_select %p41, 0, %s40
      %s43 = ssub.s32 %s30, %s42
      %p44 = scmp.eq.s32.totalorder %s43, 0
      %s46 = sadd.s32 %s45, 1
      %s47 = scalar_select %p44, %s45, %s46
      %p50 = pneg %p44
      %p51 = scmp.eq.s32.totalorder %s23, 1
      %p52 = por %p50, %p51
      %p53 = scmp.ne.s32.totalorder %s45, %s48
      %p54 = scmp.eq.s32.totalorder %s23, 0
      %p55 = por %p53, %p54
      %p56 = scmp.ne.s32.totalorder %s45, %s48
      %p57 = scmp.eq.s32.totalorder %s28, 1
      %p58 = por %p56, %p57
      %p59 = scmp.ne.s32.totalorder %s48, %s49
      %p60 = scmp.eq.s32.totalorder %s28, 0
      %p61 = por %p59, %p60
      %p62 = scmp.ne.s32.totalorder %s48, %s49
      %p63 = scmp.eq.s32.totalorder %s29, 1
      %p64 = por %p62, %p63
      %p66 = scmp.ne.s32.totalorder %s49, %s65
      %p67 = scmp.eq.s32.totalorder %s29, 0
      %p68 = por %p66, %p67
      %s69 = ssub.s32 %s31, %s38
      %p70 = scmp.eq.s32.totalorder %s69, 0
      %s72 = sadd.s32 %s71, 1
      %s73 = scalar_select %p70, %s71, %s72
      %p76 = pneg %p70
      %p77 = scmp.eq.s32.totalorder %s23, 1
      %p78 = por %p76, %p77
      %p79 = scmp.ne.s32.totalorder %s71, %s74
      %p80 = scmp.eq.s32.totalorder %s23, 0
      %p81 = por %p79, %p80
      %p82 = scmp.ne.s32.totalorder %s71, %s74
      %p83 = scmp.eq.s32.totalorder %s28, 1
      %p84 = por %p82, %p83
      %p85 = scmp.ne.s32.totalorder %s74, %s75
      %p86 = scmp.eq.s32.totalorder %s28, 0
      %p87 = por %p85, %p86
      %p88 = scmp.ne.s32.totalorder %s74, %s75
      %p89 = scmp.eq.s32.totalorder %s29, 1
      %p90 = por %p88, %p89
      %p92 = scmp.ne.s32.totalorder %s75, %s91
      %p93 = scmp.eq.s32.totalorder %s29, 0
      %p94 = por %p92, %p93
      %s95 = ssub.s32 %s31, %s38
      %p96 = scmp.eq.s32.totalorder %s95, 0
      %s98 = sadd.s32 %s97, 1
      %s99 = scalar_select %p96, %s97, %s98
      %p102 = pneg %p96
      %p103 = scmp.eq.s32.totalorder %s23, 1
      %p104 = por %p102, %p103
      %p105 = scmp.ne.s32.totalorder %s97, %s100
      %p106 = scmp.eq.s32.totalorder %s23, 0
      %p107 = por %p105, %p106
      %p108 = scmp.ne.s32.totalorder %s97, %s100
      %p109 = scmp.eq.s32.totalorder %s28, 1
      %p110 = por %p108, %p109
      %p111 = scmp.ne.s32.totalorder %s100, %s101
      %p112 = scmp.eq.s32.totalorder %s28, 0
      %p113 = por %p111, %p112
      %p114 = scmp.ne.s32.totalorder %s100, %s101
      %p115 = scmp.eq.s32.totalorder %s29, 1
      %p116 = por %p114, %p115
      %p118 = scmp.ne.s32.totalorder %s101, %s117
      %p119 = scmp.eq.s32.totalorder %s29, 0
      %p120 = por %p118, %p119
      %s121 = ssub.s32 %s30, %s42
      %p122 = scmp.eq.s32.totalorder %s121, 0
      %s124 = sadd.s32 %s123, 1
      %s125 = scalar_select %p122, %s123, %s124
      %p128 = pneg %p122
      %p129 = scmp.eq.s32.totalorder %s23, 1
      %p130 = por %p128, %p129
      %p131 = scmp.ne.s32.totalorder %s123, %s126
      %p132 = scmp.eq.s32.totalorder %s23, 0
      %p133 = por %p131, %p132
      %p134 = scmp.ne.s32.totalorder %s123, %s126
      %p135 = scmp.eq.s32.totalorder %s28, 1
      %p136 = por %p134, %p135
      %p137 = scmp.ne.s32.totalorder %s126, %s127
      %p138 = scmp.eq.s32.totalorder %s28, 0
      %p139 = por %p137, %p138
      %p140 = scmp.ne.s32.totalorder %s126, %s127
      %p141 = scmp.eq.s32.totalorder %s29, 1
      %p142 = por %p140, %p141
      %p144 = scmp.ne.s32.totalorder %s127, %s143
      %p145 = scmp.eq.s32.totalorder %s29, 0
      %p146 = por %p144, %p145
      %s147 = ssub.s32 %s31, %s38
      %p148 = scmp.eq.s32.totalorder %s147, 0
      %s150 = sadd.s32 %s149, 1
      %s151 = scalar_select %p148, %s149, %s150
      %p154 = pneg %p148
      %p155 = scmp.eq.s32.totalorder %s23, 1
      %p156 = por %p154, %p155
      %p157 = scmp.ne.s32.totalorder %s149, %s152
      %p158 = scmp.eq.s32.totalorder %s23, 0
      %p159 = por %p157, %p158
      %p160 = scmp.ne.s32.totalorder %s149, %s152
      %p161 = scmp.eq.s32.totalorder %s28, 1
      %p162 = por %p160, %p161
      %p163 = scmp.ne.s32.totalorder %s152, %s153
      %p164 = scmp.eq.s32.totalorder %s28, 0
      %p165 = por %p163, %p164
      %p166 = scmp.ne.s32.totalorder %s152, %s153
      %p167 = scmp.eq.s32.totalorder %s29, 1
      %p168 = por %p166, %p167
      %p170 = scmp.ne.s32.totalorder %s153, %s169
      %p171 = scmp.eq.s32.totalorder %s29, 0
      %p172 = por %p170, %p171
      %s173 = ssub.s32 %s31, %s38
      %p174 = scmp.eq.s32.totalorder %s173, 0
      %s176 = sadd.s32 %s175, 1
      %s177 = scalar_select %p174, %s175, %s176
      %p180 = pneg %p174
      %p181 = scmp.eq.s32.totalorder %s23, 1
      %p182 = por %p180, %p181
      %p183 = scmp.ne.s32.totalorder %s175, %s178
      %p184 = scmp.eq.s32.totalorder %s23, 0
      %p185 = por %p183, %p184
      %p186 = scmp.ne.s32.totalorder %s175, %s178
      %p187 = scmp.eq.s32.totalorder %s28, 1
      %p188 = por %p186, %p187
      %p189 = scmp.ne.s32.totalorder %s178, %s179
      %p190 = scmp.eq.s32.totalorder %s28, 0
      %p191 = por %p189, %p190
      %p192 = scmp.ne.s32.totalorder %s178, %s179
      %p193 = scmp.eq.s32.totalorder %s29, 1
      %p194 = por %p192, %p193
      %p196 = scmp.ne.s32.totalorder %s179, %s195
      %p197 = scmp.eq.s32.totalorder %s29, 0
      %p198 = por %p196, %p197
      %s199 = ssub.s32 %s30, %s42
      %s200 = ssub.s32 %s31, %s38
      %s201 = sor.u32 %s199, %s200
      %p202 = scmp.eq.s32.totalorder %s201, 0
      %s204 = sadd.s32 %s203, 1
      %s205 = scalar_select %p202, %s203, %s204
      %p208 = pneg %p202
      %p209 = scmp.eq.s32.totalorder %s23, 1
      %p210 = por %p208, %p209
      %p211 = scmp.ne.s32.totalorder %s203, %s206
      %p212 = scmp.eq.s32.totalorder %s23, 0
      %p213 = por %p211, %p212
      %p214 = scmp.ne.s32.totalorder %s203, %s206
      %p215 = scmp.eq.s32.totalorder %s28, 1
      %p216 = por %p214, %p215
      %p217 = scmp.ne.s32.totalorder %s206, %s207
      %p218 = scmp.eq.s32.totalorder %s28, 0
      %p219 = por %p217, %p218
      %p220 = scmp.ne.s32.totalorder %s206, %s207
      %p221 = scmp.eq.s32.totalorder %s29, 1
      %p222 = por %p220, %p221
      %p224 = scmp.ne.s32.totalorder %s207, %s223
      %p225 = scmp.eq.s32.totalorder %s29, 0
      %p226 = por %p224, %p225
      %p227 = scmp.le.s32.totalorder 1, %s23
      %p228 = scmp.lt.s32.totalorder %s23, 3
      %p229 = pnand %p227, %p228
      %p230 = pneg %p229
      // Predicated region
      $region9: #{jasper_forward.10} parent=5 // pred_check
        _
      $region10: #{jasper_forward.10} parent=5 // pred_check_branch
        %232 = sbr.rel (%p229) target = $region12
      $region11: #{jasper_forward.10} parent=5 // pred_region
        %s233 = ssub.s32 %s23, 1
        // Predicated region
        $region13: #{jasper_forward.10} parent=11 // pred_check
          %p234 = pneg %p87
        $region14: #{jasper_forward.10} parent=11 // pred_check_branch
          %236 = sbr.rel (%p234) target = $region16
        $region15: #{jasper_forward.10} parent=11 // pred_region
          %s238 = ssub.s32 6144, 6144
          %239 = vsyncadd [#allocation7], %s238
          %s240 = smul.addr %s33, 128
          %s241 = scalar_lea.hbm %s1, %s240
          %s242 = sshll.u32 [#allocation6], 4
          %s243 = int_to_ptr.vmem [resolvable:$true] %s242
          %248 = dma.hbm_to_vmem [thread:$0]  %s241, 6144, %s243, [#allocation7], 128, 128, 8
        $region16: #{jasper_forward.10} parent=11 // pred_fallthru
          _
        // Predicated region
        $region17: #{jasper_forward.10} parent=11 // pred_check
          %p249 = pneg %p113
        $region18: #{jasper_forward.10} parent=11 // pred_check_branch
          %251 = sbr.rel (%p249) target = $region20
        $region19: #{jasper_forward.10} parent=11 // pred_region
          %s253 = ssub.s32 16, 16
          %254 = vsyncadd [#allocation7], %s253
          %s255 = smul.addr %s33, 16
          %s256 = scalar_lea.hbm %s2, %s255
          %s258 = sshll.u32 [#allocation8], 4
          %s259 = int_to_ptr.vmem [resolvable:$true] %s258
          %261 = dma.hbm_to_vmem [thread:$0]  %s256, 16, %s259, [#allocation7]
        $region20: #{jasper_forward.10} parent=11 // pred_fallthru
          _
        // Predicated region
        $region21: #{jasper_forward.10} parent=11 // pred_check
          %p262 = pneg %p165
        $region22: #{jasper_forward.10} parent=11 // pred_check_branch
          %264 = sbr.rel (%p262) target = $region24
        $region23: #{jasper_forward.10} parent=11 // pred_region
          %s266 = ssub.s32 2048, 2048
          %267 = vsyncadd [#allocation10], %s266
          %s268 = smul.addr %s33, 128
          %s269 = scalar_lea.hbm %s4, %s268
          %s270 = sshll.u32 [#allocation11], 4
          %s271 = int_to_ptr.vmem [resolvable:$true] %s270
          %276 = dma.hbm_to_vmem [thread:$0]  %s269, 2048, %s271, [#allocation10], 128, 128, 8
        $region24: #{jasper_forward.10} parent=11 // pred_fallthru
          _
        // Predicated region
        $region25: #{jasper_forward.10} parent=11 // pred_check
          %p277 = pneg %p191
        $region26: #{jasper_forward.10} parent=11 // pred_check_branch
          %279 = sbr.rel (%p277) target = $region28
        $region27: #{jasper_forward.10} parent=11 // pred_region
          %s281 = ssub.s32 16, 16
          %282 = vsyncadd [#allocation13], %s281
          %s283 = smul.addr %s33, 16
          %s284 = scalar_lea.hbm %s5, %s283
          %s286 = sshll.u32 [#allocation12], 4
          %s287 = int_to_ptr.vmem [resolvable:$true] %s286
          %289 = dma.hbm_to_vmem [thread:$0]  %s284, 16, %s287, [#allocation13]
        $region28: #{jasper_forward.10} parent=11 // pred_fallthru
          _
      $region12: #{jasper_forward.10} parent=5 // pred_fallthru
        _
      %p290 = scmp.lt.s32.totalorder %s23, 2
      // Predicated region
      $region29: #{jasper_forward.10} parent=5 // pred_check
        %p291 = pneg %p290
      $region30: #{jasper_forward.10} parent=5 // pred_check_branch
        %293 = sbr.rel (%p291) target = $region32
      $region31: #{jasper_forward.10} parent=5 // pred_region
        // Predicated region
        $region33: #{jasper_forward.10} parent=31 // pred_check
          %p294 = pneg %p55
        $region34: #{jasper_forward.10} parent=31 // pred_check_branch
          %296 = sbr.rel (%p294) target = $region36
        $region35: #{jasper_forward.10} parent=31 // pred_region
          %s297 = sand.u32 %s45, 1
          %s298 = scalar_lea.sflag [#allocation4], %s297
          %s299 = sand.u32 %s45, 1
          %s300 = smul.addr %s299, 48
          %s301 = scalar_lea.vmem [#allocation3], %s300
          %s303 = ssub.s32 768, 768
          %304 = vsyncadd %s298, %s303
          %s305 = smul.addr %s30, 6
          %s306 = smul.addr %s305, 128
          %s307 = scalar_lea.hbm %s0, %s306
          %s308 = sshll.u32 %s301, 4
          %s309 = int_to_ptr.vmem [resolvable:$true] %s308
          %314 = dma.hbm_to_vmem [thread:$0]  %s307, 768, %s309, %s298, 128, 128, 8
        $region36: #{jasper_forward.10} parent=31 // pred_fallthru
          _
        // Predicated region
        $region37: #{jasper_forward.10} parent=31 // pred_check
          %p315 = pneg %p133
        $region38: #{jasper_forward.10} parent=31 // pred_check_branch
          %317 = sbr.rel (%p315) target = $region40
        $region39: #{jasper_forward.10} parent=31 // pred_region
          %s318 = sand.u32 %s23, 1
          %s319 = scalar_lea.sflag [#allocation10], %s318
          %s320 = sand.u32 %s123, 1
          %s321 = smul.addr %s320, 48
          %s322 = scalar_lea.vmem [#allocation9], %s321
          %s324 = ssub.s32 768, 768
          %325 = vsyncadd %s319, %s324
          %s326 = smul.addr %s30, 6
          %s327 = smul.addr %s326, 128
          %s328 = scalar_lea.hbm %s3, %s327
          %s329 = sshll.u32 %s322, 4
          %s330 = int_to_ptr.vmem [resolvable:$true] %s329
          %335 = dma.hbm_to_vmem [thread:$0]  %s328, 768, %s330, %s319, 128, 128, 8
        $region40: #{jasper_forward.10} parent=31 // pred_fallthru
          _
      $region32: #{jasper_forward.10} parent=5 // pred_fallthru
        _
      %p336 = scmp.le.s32.totalorder 1, %s23
      %p337 = scmp.lt.s32.totalorder %s23, 3
      %p338 = pnand %p336, %p337
      %p339 = pneg %p338
      // Predicated region
      $region41: #{jasper_forward.10} parent=5 // pred_check
        _
      $region42: #{jasper_forward.10} parent=5 // pred_check_branch
        %341 = sbr.rel (%p338) target = $region44
      $region43: #{jasper_forward.10} parent=5 // pred_region
        %s342 = ssub.s32 %s23, 1
        %s343 = sand.u32 %s48, 1
        %s344 = scalar_lea.sflag [#allocation4], %s343
        %s345 = sand.u32 %s48, 1
        %s346 = smul.addr %s345, 48
        %s347 = scalar_lea.vmem [#allocation3], %s346
        // Predicated region
        $region45: #{jasper_forward.10} parent=43 // pred_check
          %p348 = pneg %p61
        $region46: #{jasper_forward.10} parent=43 // pred_check_branch
          %350 = sbr.rel (%p348) target = $region48
        $region47: #{jasper_forward.10} parent=43 // pred_region
          %351 = dma.done %s344, 768
        $region48: #{jasper_forward.10} parent=43 // pred_fallthru
          _
        // Predicated region
        $region49: #{jasper_forward.10} parent=43 // pred_check
          %p352 = pneg %p87
        $region50: #{jasper_forward.10} parent=43 // pred_check_branch
          %354 = sbr.rel (%p352) target = $region52
        $region51: #{jasper_forward.10} parent=43 // pred_region
          %355 = dma.done [#allocation7], 6144
        $region52: #{jasper_forward.10} parent=43 // pred_fallthru
          _
        // Predicated region
        $region53: #{jasper_forward.10} parent=43 // pred_check
          %p356 = pneg %p113
        $region54: #{jasper_forward.10} parent=43 // pred_check_branch
          %358 = sbr.rel (%p356) target = $region56
        $region55: #{jasper_forward.10} parent=43 // pred_region
          %359 = dma.done [#allocation7], 16
        $region56: #{jasper_forward.10} parent=43 // pred_fallthru
          _
        %s360 = sand.u32 %s28, 1
        %s361 = scalar_lea.sflag [#allocation10], %s360
        %s362 = sand.u32 %s126, 1
        %s363 = smul.addr %s362, 48
        %s364 = scalar_lea.vmem [#allocation9], %s363
        // Predicated region
        $region57: #{jasper_forward.10} parent=43 // pred_check
          %p365 = pneg %p139
        $region58: #{jasper_forward.10} parent=43 // pred_check_branch
          %367 = sbr.rel (%p365) target = $region60
        $region59: #{jasper_forward.10} parent=43 // pred_region
          %368 = dma.done %s361, 768
        $region60: #{jasper_forward.10} parent=43 // pred_fallthru
          _
        // Predicated region
        $region61: #{jasper_forward.10} parent=43 // pred_check
          %p369 = pneg %p165
        $region62: #{jasper_forward.10} parent=43 // pred_check_branch
          %371 = sbr.rel (%p369) target = $region64
        $region63: #{jasper_forward.10} parent=43 // pred_region
          %372 = dma.done [#allocation10], 2048
        $region64: #{jasper_forward.10} parent=43 // pred_fallthru
          _
        // Predicated region
        $region65: #{jasper_forward.10} parent=43 // pred_check
          %p373 = pneg %p191
        $region66: #{jasper_forward.10} parent=43 // pred_check_branch
          %375 = sbr.rel (%p373) target = $region68
        $region67: #{jasper_forward.10} parent=43 // pred_region
          %376 = dma.done [#allocation13], 16
        $region68: #{jasper_forward.10} parent=43 // pred_fallthru
          _
        %s377 = sand.u32 %s48, 1
        %s378 = scalar_lea.sflag [#allocation4], %s377
        %s379 = sand.u32 %s48, 1
        %s380 = smul.addr %s379, 48
        %s381 = scalar_lea.vmem [#allocation3], %s380
        %p382 = pneg %p61
        %p383 = pneg %p58
        %p384 = pneg %p87
        %p385 = pneg %p84
        %p386 = pneg %p113
        %p387 = pneg %p110
        %s388 = sand.u32 %s28, 1
        %s389 = scalar_lea.sflag [#allocation10], %s388
        %s390 = sand.u32 %s126, 1
        %s391 = smul.addr %s390, 48
        %s392 = scalar_lea.vmem [#allocation9], %s391
        %p393 = pneg %p139
        %p394 = pneg %p136
        %p395 = pneg %p165
        %p396 = pneg %p162
        %p397 = pneg %p191
        %p398 = pneg %p188
        %p399 = pneg %p219
        %p400 = pneg %p216
        %s401 = sand.u32 %s206, 1
        %s402 = scalar_lea.sflag [#allocation5], %s401
        %s403 = sand.u32 %s206, 1
        %s404 = smul.addr %s403, 48
        %s405 = scalar_lea.vmem [#allocation14], %s404
        %v406 = vld [vmem:[%s347 + $0xf] sm:$0xff]
        %v407 = vld [vmem:[%s347 + $0x17] sm:$0xff]
        %v408 = vld [vmem:[#allocation6] sm:$0xff]
        %v409 = vld [vmem:[#allocation6 + $0x8] sm:$0xff]
        %v410 = vld [vmem:[#allocation6 + $0x10] sm:$0xff]
        %v411 = vld [vmem:[#allocation6 + $0x18] sm:$0xff]
        %v412 = vld [vmem:[#allocation6 + $0x20] sm:$0xff]
        %v413 = vld [vmem:[#allocation6 + $0x28] sm:$0xff]
        %v414 = vld [vmem:[#allocation6 + $0x30] sm:$0xff]
        %v415 = vld [vmem:[#allocation6 + $0x38] sm:$0xff]
        %v416 = vld [vmem:[#allocation6 + $0x40] sm:$0xff]
        %v417 = vld [vmem:[#allocation6 + $0x48] sm:$0xff]
        %v418 = vld [vmem:[#allocation6 + $0x50] sm:$0xff]
        %v419 = vld [vmem:[#allocation6 + $0x58] sm:$0xff]
        %v420 = vld [vmem:[#allocation6 + $0x60] sm:$0xff]
        %v421 = vld [vmem:[#allocation6 + $0x68] sm:$0xff]
        %v422 = vld [vmem:[#allocation6 + $0x70] sm:$0xff]
        %v423 = vld [vmem:[#allocation6 + $0x78] sm:$0xff]
        %424 = vmatprep.subr.mxu0 0.0
        %425 = vmatpush1.msra.mxu0 %v408
        %426 = vmatprep.subr.mxu0 0.0
        %427 = vmatpush1.msra.mxu0 %v409
        %428 = vmatprep.subr.mxu0 0.0
        %429 = vmatpush1.msra.mxu0 %v410
        %430 = vmatprep.subr.mxu0 0.0
        %431 = vmatpush1.msra.mxu0 %v411
        %432 = vmatprep.subr.mxu0 0.0
        %433 = vmatpush1.msra.mxu0 %v412
        %434 = vmatprep.subr.mxu0 0.0
        %435 = vmatpush1.msra.mxu0 %v413
        %436 = vmatprep.subr.mxu0 0.0
        %437 = vmatpush1.msra.mxu0 %v414
        %438 = vmatprep.subr.mxu0 0.0
        %439 = vmatpush1.msra.mxu0 %v415
        %440 = vmatprep.subr.mxu0 0.0
        %441 = vmatpush1.msra.mxu0 %v416
        %442 = vmatprep.subr.mxu0 0.0
        %443 = vmatpush1.msra.mxu0 %v417
        %444 = vmatprep.subr.mxu0 0.0
        %445 = vmatpush1.msra.mxu0 %v418
        %446 = vmatprep.subr.mxu0 0.0
        %447 = vmatpush1.msra.mxu0 %v419
        %448 = vmatprep.subr.mxu0 0.0
        %449 = vmatpush1.msra.mxu0 %v420
        %450 = vmatprep.subr.mxu0 0.0
        %451 = vmatpush1.msra.mxu0 %v421
        %452 = vmatprep.subr.mxu0 0.0
        %453 = vmatpush1.msra.mxu0 %v422
        %454 = vmatprep.subr.mxu0 0.0
        %455 = vmatpush1.msra.mxu0 %v423
        %456 = vmatprep.subr.mxu0 0.0
        %457 = vmatpush1.msra.mxu0 0.0
        %458 = vmatprep.subr.mxu0 0.0
        %459 = vmatpush1.msra.mxu0 0.0
        %460 = vmatprep.subr.mxu0 0.0
        %461 = vmatpush1.msra.mxu0 0.0
        %462 = vmatprep.subr.mxu0 0.0
        %463 = vmatpush1.msra.mxu0 0.0
        %464 = vmatprep.subr.mxu0 0.0
        %465 = vmatpush1.msra.mxu0 0.0
        %466 = vmatprep.subr.mxu0 0.0
        %467 = vmatpush1.msra.mxu0 0.0
        %468 = vmatprep.subr.mxu0 0.0
        %469 = vmatpush1.msra.mxu0 0.0
        %470 = vmatprep.subr.mxu0 0.0
        %471 = vmatpush1.msra.mxu0 0.0
        %472 = vmatprep.subr.mxu0 0.0
        %473 = vmatpush1.msra.mxu0 0.0
        %474 = vmatprep.subr.mxu0 0.0
        %475 = vmatpush1.msra.mxu0 0.0
        %476 = vmatprep.subr.mxu0 0.0
        %477 = vmatpush1.msra.mxu0 0.0
        %478 = vmatprep.subr.mxu0 0.0
        %479 = vmatpush1.msra.mxu0 0.0
        %480 = vmatprep.subr.mxu0 0.0
        %481 = vmatpush1.msra.mxu0 0.0
        %482 = vmatprep.subr.mxu0 0.0
        %483 = vmatpush1.msra.mxu0 0.0
        %484 = vmatprep.subr.mxu0 0.0
        %485 = vmatpush1.msra.mxu0 0.0
        %486 = vmatprep.subr.mxu0 0.0
        %487 = vmatpush1.msra.mxu0 0.0
        %488 = vmatprep.mubr.f32.mxu0 0.0
        %489 = vmatmul.mubr.f32.gmra.mrb[0].mxu0 %v406
        %v490 = vpop.f32.mrb[0].mxu0
        %v491 = vadd.f32 0.0, %v490
        %v492 = vpop.f32.mrb[0].mxu0
        %493 = vmatprep.mubr.f32.mxu0 0.0
        %494 = vmatmul.mubr.f32.gmra.mrb[0].mxu0 %v407
        %v495 = vpop.f32.mrb[0].mxu0
        %v496 = vadd.f32 0.0, %v495
        %v497 = vpop.f32.mrb[0].mxu0
        %498 = vdwg.mxu0
        %499 = vst [vmem:[#allocation2] sm:$0xff] %v491
        %500 = vst [vmem:[#allocation2 + $0x8] sm:$0xff] %v496
        %v501 = vld [vmem:[%s347 + $0x10] sm:$0xff]
        %v502 = vld [vmem:[%s347 + $0x18] sm:$0xff]
        %s503 = scalar_lea.vmem [#allocation6], 128
        %v504 = vld [vmem:[%s503] sm:$0xff]
        %v505 = vld [vmem:[%s503 + $0x8] sm:$0xff]
        %v506 = vld [vmem:[%s503 + $0x10] sm:$0xff]
        %v507 = vld [vmem:[%s503 + $0x18] sm:$0xff]
        %v508 = vld [vmem:[%s503 + $0x20] sm:$0xff]
        %v509 = vld [vmem:[%s503 + $0x28] sm:$0xff]
        %v510 = vld [vmem:[%s503 + $0x30] sm:$0xff]
        %v511 = vld [vmem:[%s503 + $0x38] sm:$0xff]
        %v512 = vld [vmem:[%s503 + $0x40] sm:$0xff]
        %v513 = vld [vmem:[%s503 + $0x48] sm:$0xff]
        %v514 = vld [vmem:[%s503 + $0x50] sm:$0xff]
        %v515 = vld [vmem:[%s503 + $0x58] sm:$0xff]
        %v516 = vld [vmem:[%s503 + $0x60] sm:$0xff]
        %v517 = vld [vmem:[%s503 + $0x68] sm:$0xff]
        %v518 = vld [vmem:[%s503 + $0x70] sm:$0xff]
        %v519 = vld [vmem:[%s503 + $0x78] sm:$0xff]
        %520 = vmatprep.subr.mxu0 0.0
        %521 = vmatpush1.msra.mxu0 %v504
        %522 = vmatprep.subr.mxu0 0.0
        %523 = vmatpush1.msra.mxu0 %v505
        %524 = vmatprep.subr.mxu0 0.0
        %525 = vmatpush1.msra.mxu0 %v506
        %526 = vmatprep.subr.mxu0 0.0
        %527 = vmatpush1.msra.mxu0 %v507
        %528 = vmatprep.subr.mxu0 0.0
        %529 = vmatpush1.msra.mxu0 %v508
        %530 = vmatprep.subr.mxu0 0.0
        %531 = vmatpush1.msra.mxu0 %v509
        %532 = vmatprep.subr.mxu0 0.0
        %533 = vmatpush1.msra.mxu0 %v510
        %534 = vmatprep.subr.mxu0 0.0
        %535 = vmatpush1.msra.mxu0 %v511
        %536 = vmatprep.subr.mxu0 0.0
        %537 = vmatpush1.msra.mxu0 %v512
        %538 = vmatprep.subr.mxu0 0.0
        %539 = vmatpush1.msra.mxu0 %v513
        %540 = vmatprep.subr.mxu0 0.0
        %541 = vmatpush1.msra.mxu0 %v514
        %542 = vmatprep.subr.mxu0 0.0
        %543 = vmatpush1.msra.mxu0 %v515
        %544 = vmatprep.subr.mxu0 0.0
        %545 = vmatpush1.msra.mxu0 %v516
        %546 = vmatprep.subr.mxu0 0.0
        %547 = vmatpush1.msra.mxu0 %v517
        %548 = vmatprep.subr.mxu0 0.0
        %549 = vmatpush1.msra.mxu0 %v518
        %550 = vmatprep.subr.mxu0 0.0
        %551 = vmatpush1.msra.mxu0 %v519
        %552 = vmatprep.subr.mxu0 0.0
        %553 = vmatpush1.msra.mxu0 0.0
        %554 = vmatprep.subr.mxu0 0.0
        %555 = vmatpush1.msra.mxu0 0.0
        %556 = vmatprep.subr.mxu0 0.0
        %557 = vmatpush1.msra.mxu0 0.0
        %558 = vmatprep.subr.mxu0 0.0
        %559 = vmatpush1.msra.mxu0 0.0
        %560 = vmatprep.subr.mxu0 0.0
        %561 = vmatpush1.msra.mxu0 0.0
        %562 = vmatprep.subr.mxu0 0.0
        %563 = vmatpush1.msra.mxu0 0.0
        %564 = vmatprep.subr.mxu0 0.0
        %565 = vmatpush1.msra.mxu0 0.0
        %566 = vmatprep.subr.mxu0 0.0
        %567 = vmatpush1.msra.mxu0 0.0
        %568 = vmatprep.subr.mxu0 0.0
        %569 = vmatpush1.msra.mxu0 0.0
        %570 = vmatprep.subr.mxu0 0.0
        %571 = vmatpush1.msra.mxu0 0.0
        %572 = vmatprep.subr.mxu0 0.0
        %573 = vmatpush1.msra.mxu0 0.0
        %574 = vmatprep.subr.mxu0 0.0
        %575 = vmatpush1.msra.mxu0 0.0
        %576 = vmatprep.subr.mxu0 0.0
        %577 = vmatpush1.msra.mxu0 0.0
        %578 = vmatprep.subr.mxu0 0.0
        %579 = vmatpush1.msra.mxu0 0.0
        %580 = vmatprep.subr.mxu0 0.0
        %581 = vmatpush1.msra.mxu0 0.0
        %582 = vmatprep.subr.mxu0 0.0
        %583 = vmatpush1.msra.mxu0 0.0
        %584 = vmatprep.mubr.f32.mxu0 0.0
        %585 = vmatmul.mubr.f32.gmra.mrb[0].mxu0 %v501
        %v586 = vpop.f32.mrb[0].mxu0
        %v587 = vadd.f32 0.0, %v586
        %v588 = vpop.f32.mrb[0].mxu0
        %589 = vmatprep.mubr.f32.mxu0 0.0
        %590 = vmatmul.mubr.f32.gmra.mrb[0].mxu0 %v502
        %v591 = vpop.f32.mrb[0].mxu0
        %v592 = vadd.f32 0.0, %v591
        %v593 = vpop.f32.mrb[0].mxu0
        %594 = vdwg.mxu0
        %v595 = vld [vmem:[#allocation2] sm:$0xff]
        %v596 = vld [vmem:[#allocation2 + $0x8] sm:$0xff]
        %v597 = vadd.f32 %v595, %v587
        %v598 = vadd.f32 %v596, %v592
        %599 = vst [vmem:[#allocation2] sm:$0xff] %v597
        %600 = vst [vmem:[#allocation2 + $0x8] sm:$0xff] %v598
        %v601 = vld [vmem:[%s347 + $0x11] sm:$0xff]
        %v602 = vld [vmem:[%s347 + $0x19] sm:$0xff]
        %s603 = scalar_lea.vmem [#allocation6], 256
        %v604 = vld [vmem:[%s603] sm:$0xff]
        %v605 = vld [vmem:[%s603 + $0x8] sm:$0xff]
        %v606 = vld [vmem:[%s603 + $0x10] sm:$0xff]
        %v607 = vld [vmem:[%s603 + $0x18] sm:$0xff]
        %v608 = vld [vmem:[%s603 + $0x20] sm:$0xff]
        %v609 = vld [vmem:[%s603 + $0x28] sm:$0xff]
        %v610 = vld [vmem:[%s603 + $0x30] sm:$0xff]
        %v611 = vld [vmem:[%s603 + $0x38] sm:$0xff]
        %v612 = vld [vmem:[%s603 + $0x40] sm:$0xff]
        %v613 = vld [vmem:[%s603 + $0x48] sm:$0xff]
        %v614 = vld [vmem:[%s603 + $0x50] sm:$0xff]
        %v615 = vld [vmem:[%s603 + $0x58] sm:$0xff]
        %v616 = vld [vmem:[%s603 + $0x60] sm:$0xff]
        %v617 = vld [vmem:[%s603 + $0x68] sm:$0xff]
        %v618 = vld [vmem:[%s603 + $0x70] sm:$0xff]
        %v619 = vld [vmem:[%s603 + $0x78] sm:$0xff]
        %620 = vmatprep.subr.mxu0 0.0
        %621 = vmatpush1.msra.mxu0 %v604
        %622 = vmatprep.subr.mxu0 0.0
        %623 = vmatpush1.msra.mxu0 %v605
        %624 = vmatprep.subr.mxu0 0.0
        %625 = vmatpush1.msra.mxu0 %v606
        %626 = vmatprep.subr.mxu0 0.0
        %627 = vmatpush1.msra.mxu0 %v607
        %628 = vmatprep.subr.mxu0 0.0
        %629 = vmatpush1.msra.mxu0 %v608
        %630 = vmatprep.subr.mxu0 0.0
        %631 = vmatpush1.msra.mxu0 %v609
        %632 = vmatprep.subr.mxu0 0.0
        %633 = vmatpush1.msra.mxu0 %v610
        %634 = vmatprep.subr.mxu0 0.0
        %635 = vmatpush1.msra.mxu0 %v611
        %636 = vmatprep.subr.mxu0 0.0
        %637 = vmatpush1.msra.mxu0 %v612
        %638 = vmatprep.subr.mxu0 0.0
        %639 = vmatpush1.msra.mxu0 %v613
        %640 = vmatprep.subr.mxu0 0.0
        %641 = vmatpush1.msra.mxu0 %v614
        %642 = vmatprep.subr.mxu0 0.0
        %643 = vmatpush1.msra.mxu0 %v615
        %644 = vmatprep.subr.mxu0 0.0
        %645 = vmatpush1.msra.mxu0 %v616
        %646 = vmatprep.subr.mxu0 0.0
        %647 = vmatpush1.msra.mxu0 %v617
        %648 = vmatprep.subr.mxu0 0.0
        %649 = vmatpush1.msra.mxu0 %v618
        %650 = vmatprep.subr.mxu0 0.0
        %651 = vmatpush1.msra.mxu0 %v619
        %652 = vmatprep.subr.mxu0 0.0
        %653 = vmatpush1.msra.mxu0 0.0
        %654 = vmatprep.subr.mxu0 0.0
        %655 = vmatpush1.msra.mxu0 0.0
        %656 = vmatprep.subr.mxu0 0.0
        %657 = vmatpush1.msra.mxu0 0.0
        %658 = vmatprep.subr.mxu0 0.0
        %659 = vmatpush1.msra.mxu0 0.0
        %660 = vmatprep.subr.mxu0 0.0
        %661 = vmatpush1.msra.mxu0 0.0
        %662 = vmatprep.subr.mxu0 0.0
        %663 = vmatpush1.msra.mxu0 0.0
        %664 = vmatprep.subr.mxu0 0.0
        %665 = vmatpush1.msra.mxu0 0.0
        %666 = vmatprep.subr.mxu0 0.0
        %667 = vmatpush1.msra.mxu0 0.0
        %668 = vmatprep.subr.mxu0 0.0
        %669 = vmatpush1.msra.mxu0 0.0
        %670 = vmatprep.subr.mxu0 0.0
        %671 = vmatpush1.msra.mxu0 0.0
        %672 = vmatprep.subr.mxu0 0.0
        %673 = vmatpush1.msra.mxu0 0.0
        %674 = vmatprep.subr.mxu0 0.0
        %675 = vmatpush1.msra.mxu0 0.0
        %676 = vmatprep.subr.mxu0 0.0
        %677 = vmatpush1.msra.mxu0 0.0
        %678 = vmatprep.subr.mxu0 0.0
        %679 = vmatpush1.msra.mxu0 0.0
        %680 = vmatprep.subr.mxu0 0.0
        %681 = vmatpush1.msra.mxu0 0.0
        %682 = vmatprep.subr.mxu0 0.0
        %683 = vmatpush1.msra.mxu0 0.0
        %684 = vmatprep.mubr.f32.mxu0 0.0
        %685 = vmatmul.mubr.f32.gmra.mrb[0].mxu0 %v601
        %v686 = vpop.f32.mrb[0].mxu0
        %v687 = vadd.f32 0.0, %v686
        %v688 = vpop.f32.mrb[0].mxu0
        %689 = vmatprep.mubr.f32.mxu0 0.0
        %690 = vmatmul.mubr.f32.gmra.mrb[0].mxu0 %v602
        %v691 = vpop.f32.mrb[0].mxu0
        %v692 = vadd.f32 0.0, %v691
        %v693 = vpop.f32.mrb[0].mxu0
        %694 = vdwg.mxu0
        %v695 = vld [vmem:[#allocation2] sm:$0xff]
        %v696 = vld [vmem:[#allocation2 + $0x8] sm:$0xff]
        %v697 = vadd.f32 %v695, %v687
        %v698 = vadd.f32 %v696, %v692
        %699 = vst [vmem:[#allocation2] sm:$0xff] %v697
        %700 = vst [vmem:[#allocation2 + $0x8] sm:$0xff] %v698
        %v701 = vld [vmem:[#allocation2] sm:$0xff]
        %v702 = vld [vmem:[#allocation2 + $0x8] sm:$0xff]
        %v703 = vld [vmem:[#allocation8] sm:$0x1]
        %v705 = vlaneseq
        %v706 = vshrl.u32 %v705, 7
        %v707 = vsub.s32 0, %v706
        %v708 = vrot.slane %v703, %v707
        %v710 = vadd.f32 %v701, %v708
        %v711 = vadd.f32 %v702, %v708
        %v712 = vld [vmem:[%s364 + $0x10] sm:$0xff]
        %v713 = vld [vmem:[%s364 + $0x18] sm:$0xff]
        %v714 = vld [vmem:[#allocation11] sm:$0xff]
        %v715 = vld [vmem:[#allocation11 + $0x8] sm:$0xff]
        %v716 = vld [vmem:[#allocation11 + $0x10] sm:$0xff]
        %v717 = vld [vmem:[#allocation11 + $0x18] sm:$0xff]
        %v718 = vld [vmem:[#allocation11 + $0x20] sm:$0xff]
        %v719 = vld [vmem:[#allocation11 + $0x28] sm:$0xff]
        %v720 = vld [vmem:[#allocation11 + $0x30] sm:$0xff]
        %v721 = vld [vmem:[#allocation11 + $0x38] sm:$0xff]
        %v722 = vld [vmem:[#allocation11 + $0x40] sm:$0xff]
        %v723 = vld [vmem:[#allocation11 + $0x48] sm:$0xff]
        %v724 = vld [vmem:[#allocation11 + $0x50] sm:$0xff]
        %v725 = vld [vmem:[#allocation11 + $0x58] sm:$0xff]
        %v726 = vld [vmem:[#allocation11 + $0x60] sm:$0xff]
        %v727 = vld [vmem:[#allocation11 + $0x68] sm:$0xff]
        %v728 = vld [vmem:[#allocation11 + $0x70] sm:$0xff]
        %v729 = vld [vmem:[#allocation11 + $0x78] sm:$0xff]
        %730 = vmatprep.subr.mxu0 0.0
        %731 = vmatpush1.msra.mxu0 %v714
        %732 = vmatprep.subr.mxu0 0.0
        %733 = vmatpush1.msra.mxu0 %v715
        %734 = vmatprep.subr.mxu0 0.0
        %735 = vmatpush1.msra.mxu0 %v716
        %736 = vmatprep.subr.mxu0 0.0
        %737 = vmatpush1.msra.mxu0 %v717
        %738 = vmatprep.subr.mxu0 0.0
        %739 = vmatpush1.msra.mxu0 %v718
        %740 = vmatprep.subr.mxu0 0.0
        %741 = vmatpush1.msra.mxu0 %v719
        %742 = vmatprep.subr.mxu0 0.0
        %743 = vmatpush1.msra.mxu0 %v720
        %744 = vmatprep.subr.mxu0 0.0
        %745 = vmatpush1.msra.mxu0 %v721
        %746 = vmatprep.subr.mxu0 0.0
        %747 = vmatpush1.msra.mxu0 %v722
        %748 = vmatprep.subr.mxu0 0.0
        %749 = vmatpush1.msra.mxu0 %v723
        %750 = vmatprep.subr.mxu0 0.0
        %751 = vmatpush1.msra.mxu0 %v724
        %752 = vmatprep.subr.mxu0 0.0
        %753 = vmatpush1.msra.mxu0 %v725
        %754 = vmatprep.subr.mxu0 0.0
        %755 = vmatpush1.msra.mxu0 %v726
        %756 = vmatprep.subr.mxu0 0.0
        %757 = vmatpush1.msra.mxu0 %v727
        %758 = vmatprep.subr.mxu0 0.0
        %759 = vmatpush1.msra.mxu0 %v728
        %760 = vmatprep.subr.mxu0 0.0
        %761 = vmatpush1.msra.mxu0 %v729
        %762 = vmatprep.subr.mxu0 0.0
        %763 = vmatpush1.msra.mxu0 0.0
        %764 = vmatprep.subr.mxu0 0.0
        %765 = vmatpush1.msra.mxu0 0.0
        %766 = vmatprep.subr.mxu0 0.0
        %767 = vmatpush1.msra.mxu0 0.0
        %768 = vmatprep.subr.mxu0 0.0
        %769 = vmatpush1.msra.mxu0 0.0
        %770 = vmatprep.subr.mxu0 0.0
        %771 = vmatpush1.msra.mxu0 0.0
        %772 = vmatprep.subr.mxu0 0.0
        %773 = vmatpush1.msra.mxu0 0.0
        %774 = vmatprep.subr.mxu0 0.0
        %775 = vmatpush1.msra.mxu0 0.0
        %776 = vmatprep.subr.mxu0 0.0
        %777 = vmatpush1.msra.mxu0 0.0
        %778 = vmatprep.subr.mxu0 0.0
        %779 = vmatpush1.msra.mxu0 0.0
        %780 = vmatprep.subr.mxu0 0.0
        %781 = vmatpush1.msra.mxu0 0.0
        %782 = vmatprep.subr.mxu0 0.0
        %783 = vmatpush1.msra.mxu0 0.0
        %784 = vmatprep.subr.mxu0 0.0
        %785 = vmatpush1.msra.mxu0 0.0
        %786 = vmatprep.subr.mxu0 0.0
        %787 = vmatpush1.msra.mxu0 0.0
        %788 = vmatprep.subr.mxu0 0.0
        %789 = vmatpush1.msra.mxu0 0.0
        %790 = vmatprep.subr.mxu0 0.0
        %791 = vmatpush1.msra.mxu0 0.0
        %792 = vmatprep.subr.mxu0 0.0
        %793 = vmatpush1.msra.mxu0 0.0
        %794 = vmatprep.mubr.f32.mxu0 0.0
        %795 = vmatmul.mubr.f32.gmra.mrb[0].mxu0 %v712
        %v796 = vpop.f32.mrb[0].mxu0
        %v797 = vadd.f32 0.0, %v796
        %v798 = vpop.f32.mrb[0].mxu0
        %799 = vmatprep.mubr.f32.mxu0 0.0
        %800 = vmatmul.mubr.f32.gmra.mrb[0].mxu0 %v713
        %v801 = vpop.f32.mrb[0].mxu0
        %v802 = vadd.f32 0.0, %v801
        %v803 = vpop.f32.mrb[0].mxu0
        %804 = vdwg.mxu0
        %v805 = vadd.f32 %v710, %v797
        %v806 = vadd.f32 %v711, %v802
        %v807 = vld [vmem:[#allocation12] sm:$0x1]
        %v809 = vlaneseq
        %v810 = vshrl.u32 %v809, 7
        %v811 = vsub.s32 0, %v810
        %v812 = vrot.slane %v807, %v811
        %v814 = vadd.f32 %v805, %v812
        %v815 = vadd.f32 %v806, %v812
        %v816 = vmax.f32 %v814, 0.0
        %v817 = vmax.f32 %v815, 0.0
        %818 = vst [vmem:[%s405 + $0x10] sm:$0xff] %v816
        %819 = vst [vmem:[%s405 + $0x18] sm:$0xff] %v817
        %820 = vst [vmem:[%s405] sm:$0xff] 0.0
        %821 = vst [vmem:[%s405 + $0x8] sm:$0xff] 0.0
        %822 = vst [vmem:[%s405 + $0x20] sm:$0xff] 0.0
        %823 = vst [vmem:[%s405 + $0x28] sm:$0xff] 0.0
        %s824 = sand.u32 %s206, 1
        %s825 = scalar_lea.sflag [#allocation5], %s824
        %s826 = sand.u32 %s206, 1
        %s827 = smul.addr %s826, 48
        %s828 = scalar_lea.vmem [#allocation14], %s827
        // Predicated region
        $region69: #{jasper_forward.10} parent=43 // pred_check
          %p829 = pneg %p216
        $region70: #{jasper_forward.10} parent=43 // pred_check_branch
          %831 = sbr.rel (%p829) target = $region72
        $region71: #{jasper_forward.10} parent=43 // pred_region
          %s833 = ssub.s32 768, 768
          %834 = vsyncadd %s825, %s833
          %s835 = smul.addr %s32, 6
          %s836 = sadd.s32 %s33, %s835
          %s837 = smul.addr %s836, 128
          %s838 = scalar_lea.hbm %s6, %s837
          %s839 = sshll.u32 %s828, 4
          %s840 = int_to_ptr.vmem [resolvable:$true] %s839
          %845 = dma.vmem_to_hbm [thread:$0]  %s840, 768, %s838, %s825, 128, 128, 8
        $region72: #{jasper_forward.10} parent=43 // pred_fallthru
          _
      $region44: #{jasper_forward.10} parent=5 // pred_fallthru
        _
      %p846 = scmp.le.s32.totalorder 2, %s23
      // Predicated region
      $region73: #{jasper_forward.10} parent=5 // pred_check
        %p847 = pneg %p846
      $region74: #{jasper_forward.10} parent=5 // pred_check_branch
        %849 = sbr.rel (%p847) target = $region76
      $region75: #{jasper_forward.10} parent=5 // pred_region
        %s850 = ssub.s32 %s23, 2
        // Predicated region
        $region77: #{jasper_forward.10} parent=75 // pred_check
          %p851 = pneg %p222
        $region78: #{jasper_forward.10} parent=75 // pred_check_branch
          %853 = sbr.rel (%p851) target = $region80
        $region79: #{jasper_forward.10} parent=75 // pred_region
          %s854 = sand.u32 %s207, 1
          %s855 = scalar_lea.sflag [#allocation5], %s854
          %s856 = sand.u32 %s207, 1
          %s857 = smul.addr %s856, 48
          %s858 = scalar_lea.vmem [#allocation14], %s857
          %859 = dma.done %s855, 768
        $region80: #{jasper_forward.10} parent=75 // pred_fallthru
          _
      $region76: #{jasper_forward.10} parent=5 // pred_fallthru
        _
    $region6: #{jasper_forward.10} parent=1 // loop_footer
      %s27 = sadd.s32 1, %s23
    $region7: #{jasper_forward.10} parent=1 // loop_footer_branch
      %22 = sbr.rel target = $region3
    $region8: #{jasper_forward.10} parent=1 // loop_exit
      _
    %860 = vsyncpa [#allocation4], 1
    %s861 = scalar_lea.sflag [#allocation4], 1
    %862 = vsyncpa %s861, 1
    %863 = vsyncpa [#allocation7], 1
    %864 = vsyncpa [#allocation10], 1
    %s865 = scalar_lea.sflag [#allocation10], 1
    %866 = vsyncpa %s865, 1
    %867 = vsyncpa [#allocation13], 1
    %868 = vsyncpa [#allocation5], 1
    %s869 = scalar_lea.sflag [#allocation5], 1
    %870 = vsyncpa %s869, 1

// kernel: jasper_forward.11
$region0: #{jasper_forward.11}
  #allocation0 [shape = 'u32[]', space=smem, size = 0x4, offset = 0x4, fixed_abs, tag = 'smem constant byte address 0x4 - core index']
  #allocation1 [shape = 'u32[144,128]{1,0:T(1,128)}', space=vmem, size = 0x12000, scoped, tag = 'internal scratch']
  #allocation2 [shape = 'f32[16,128]{1,0:T(8,128)}', space=vmem, size = 0x2000, scoped, tag = 'scratch operand']
  %s0 = inlined_call_operand.hbm [shape: f32[2,48,128], index: 0, kind: input, shape index: {}]
  %s1 = inlined_call_operand.hbm [shape: f32[5,128,128], index: 1, kind: input, shape index: {}]
  %s2 = inlined_call_operand.hbm [shape: f32[1,128], index: 2, kind: input, shape index: {}]
  %s3 = inlined_call_operand.hbm [shape: f32[2,48,128], index: 3, kind: output, shape index: {}]
  %s4 = sld [smem:[#allocation0]]
  $region57: #{jasper_forward.11} parent=0
    _
  %s6 = ssub.s32 1, %s4
  %s7 = scalar_select 0, %s6, %s4
  $region1: #{jasper_forward.11} parent=0
    #allocation3 [shape = 'u8[49152]{0}', space=vmem, size = 0xc000, scoped, tag = 'input window, operand 0']
    #allocation4 [shape = 's32[2]{0}', space=sflag, size = 0x8, scoped, tag = 'scoped memory for jasper_forward.11']
    #allocation5 [shape = 's32[2]{0}', space=sflag, size = 0x8, scoped, tag = 'scoped memory for jasper_forward.11']
    #allocation6 [shape = 'u8[327680]{0}', space=vmem, size = 0x50000, scoped, tag = 'input window, operand 1, single buffered']
    #allocation7 [shape = 's32[1]{0}', space=sflag, size = 0x4, scoped, tag = 'scoped memory for jasper_forward.11']
    #allocation8 [shape = 'u8[512]{0}', space=vmem, size = 0x400, scoped, tag = 'input window, operand 2, single buffered']
    #allocation9 [shape = 'u8[49152]{0}', space=vmem, size = 0xc000, scoped, tag = 'output window, operand 0']
    %8 = vsyncpa [#allocation4], 0
    %s9 = scalar_lea.sflag [#allocation4], 1
    %10 = vsyncpa %s9, 0
    %11 = vsyncpa [#allocation7], 0
    %12 = vsyncpa [#allocation5], 0
    %s13 = scalar_lea.sflag [#allocation5], 1
    %14 = vsyncpa %s13, 0
    loop: start=0, step=1, limit=4
    $region2: #{jasper_forward.11} parent=1 // loop_pre_header
      _
    $region3: #{jasper_forward.11} parent=1 // loop_header
      %s16 = sphi 0, %s20
      %p17 = scmp.ge.s32.totalorder %s16, 4
      %s23 = sphi 0, %s35
      %s24 = sphi 0, %s31
      %s25 = sphi 0, %s23
      %s26 = sphi 0, %s24
      %s27 = sphi 0, %s25
      %s28 = sphi 0, %s26
      %s38 = sphi 0, %s40
      %s41 = sphi 0, %s38
      %s42 = sphi 0, %s41
      %s58 = sphi 0, %s42
      %s64 = sphi 0, %s66
      %s67 = sphi 0, %s64
      %s68 = sphi 0, %s67
      %s84 = sphi 0, %s68
      %s90 = sphi 0, %s92
      %s93 = sphi 0, %s90
      %s94 = sphi 0, %s93
      %s110 = sphi 0, %s94
      %s118 = sphi 0, %s120
      %s121 = sphi 0, %s118
      %s122 = sphi 0, %s121
      %s138 = sphi 0, %s122
    $region4: #{jasper_forward.11} parent=1 // loop_header_branch
      %19 = sbr.rel (%p17) target = $region8
    $region5: #{jasper_forward.11} parent=1 // loop_body
      %s21 = ssub.s32 %s16, 1
      %s22 = ssub.s32 %s16, 2
      %s29 = sadd.s32 1, %s24
      %p30 = scmp.ge.s32.totalorder %s29, 1
      %s31 = scalar_select %p30, 0, %s29
      %s32 = sadd.s32 1, %s23
      %s33 = scalar_select %p30, %s32, %s23
      %p34 = scmp.ge.s32.totalorder %s33, 2
      %s35 = scalar_select %p34, 0, %s33
      %s36 = ssub.s32 %s23, %s35
      %p37 = scmp.eq.s32.totalorder %s36, 0
      %s39 = sadd.s32 %s38, 1
      %s40 = scalar_select %p37, %s38, %s39
      %p43 = pneg %p37
      %p44 = scmp.eq.s32.totalorder %s16, 1
      %p45 = por %p43, %p44
      %p46 = scmp.ne.s32.totalorder %s38, %s41
      %p47 = scmp.eq.s32.totalorder %s16, 0
      %p48 = por %p46, %p47
      %p49 = scmp.ne.s32.totalorder %s38, %s41
      %p50 = scmp.eq.s32.totalorder %s21, 1
      %p51 = por %p49, %p50
      %p52 = scmp.ne.s32.totalorder %s41, %s42
      %p53 = scmp.eq.s32.totalorder %s21, 0
      %p54 = por %p52, %p53
      %p55 = scmp.ne.s32.totalorder %s41, %s42
      %p56 = scmp.eq.s32.totalorder %s22, 1
      %p57 = por %p55, %p56
      %p59 = scmp.ne.s32.totalorder %s42, %s58
      %p60 = scmp.eq.s32.totalorder %s22, 0
      %p61 = por %p59, %p60
      %s62 = ssub.s32 %s24, %s31
      %p63 = scmp.eq.s32.totalorder %s62, 0
      %s65 = sadd.s32 %s64, 1
      %s66 = scalar_select %p63, %s64, %s65
      %p69 = pneg %p63
      %p70 = scmp.eq.s32.totalorder %s16, 1
      %p71 = por %p69, %p70
      %p72 = scmp.ne.s32.totalorder %s64, %s67
      %p73 = scmp.eq.s32.totalorder %s16, 0
      %p74 = por %p72, %p73
      %p75 = scmp.ne.s32.totalorder %s64, %s67
      %p76 = scmp.eq.s32.totalorder %s21, 1
      %p77 = por %p75, %p76
      %p78 = scmp.ne.s32.totalorder %s67, %s68
      %p79 = scmp.eq.s32.totalorder %s21, 0
      %p80 = por %p78, %p79
      %p81 = scmp.ne.s32.totalorder %s67, %s68
      %p82 = scmp.eq.s32.totalorder %s22, 1
      %p83 = por %p81, %p82
      %p85 = scmp.ne.s32.totalorder %s68, %s84
      %p86 = scmp.eq.s32.totalorder %s22, 0
      %p87 = por %p85, %p86
      %s88 = ssub.s32 %s24, %s31
      %p89 = scmp.eq.s32.totalorder %s88, 0
      %s91 = sadd.s32 %s90, 1
      %s92 = scalar_select %p89, %s90, %s91
      %p95 = pneg %p89
      %p96 = scmp.eq.s32.totalorder %s16, 1
      %p97 = por %p95, %p96
      %p98 = scmp.ne.s32.totalorder %s90, %s93
      %p99 = scmp.eq.s32.totalorder %s16, 0
      %p100 = por %p98, %p99
      %p101 = scmp.ne.s32.totalorder %s90, %s93
      %p102 = scmp.eq.s32.totalorder %s21, 1
      %p103 = por %p101, %p102
      %p104 = scmp.ne.s32.totalorder %s93, %s94
      %p105 = scmp.eq.s32.totalorder %s21, 0
      %p106 = por %p104, %p105
      %p107 = scmp.ne.s32.totalorder %s93, %s94
      %p108 = scmp.eq.s32.totalorder %s22, 1
      %p109 = por %p107, %p108
      %p111 = scmp.ne.s32.totalorder %s94, %s110
      %p112 = scmp.eq.s32.totalorder %s22, 0
      %p113 = por %p111, %p112
      %s114 = ssub.s32 %s23, %s35
      %s115 = ssub.s32 %s24, %s31
      %s116 = sor.u32 %s114, %s115
      %p117 = scmp.eq.s32.totalorder %s116, 0
      %s119 = sadd.s32 %s118, 1
      %s120 = scalar_select %p117, %s118, %s119
      %p123 = pneg %p117
      %p124 = scmp.eq.s32.totalorder %s16, 1
      %p125 = por %p123, %p124
      %p126 = scmp.ne.s32.totalorder %s118, %s121
      %p127 = scmp.eq.s32.totalorder %s16, 0
      %p128 = por %p126, %p127
      %p129 = scmp.ne.s32.totalorder %s118, %s121
      %p130 = scmp.eq.s32.totalorder %s21, 1
      %p131 = por %p129, %p130
      %p132 = scmp.ne.s32.totalorder %s121, %s122
      %p133 = scmp.eq.s32.totalorder %s21, 0
      %p134 = por %p132, %p133
      %p135 = scmp.ne.s32.totalorder %s121, %s122
      %p136 = scmp.eq.s32.totalorder %s22, 1
      %p137 = por %p135, %p136
      %p139 = scmp.ne.s32.totalorder %s122, %s138
      %p140 = scmp.eq.s32.totalorder %s22, 0
      %p141 = por %p139, %p140
      %p142 = scmp.le.s32.totalorder 1, %s16
      %p143 = scmp.lt.s32.totalorder %s16, 3
      %p144 = pnand %p142, %p143
      %p145 = pneg %p144
      // Predicated region
      $region9: #{jasper_forward.11} parent=5 // pred_check
        _
      $region10: #{jasper_forward.11} parent=5 // pred_check_branch
        %147 = sbr.rel (%p144) target = $region12
      $region11: #{jasper_forward.11} parent=5 // pred_region
        %s148 = ssub.s32 %s16, 1
        // Predicated region
        $region13: #{jasper_forward.11} parent=11 // pred_check
          %p149 = pneg %p80
        $region14: #{jasper_forward.11} parent=11 // pred_check_branch
          %151 = sbr.rel (%p149) target = $region16
        $region15: #{jasper_forward.11} parent=11 // pred_region
          %s153 = ssub.s32 10240, 10240
          %154 = vsyncadd [#allocation7], %s153
          %s155 = smul.addr %s26, 128
          %s156 = scalar_lea.hbm %s1, %s155
          %s157 = sshll.u32 [#allocation6], 4
          %s158 = int_to_ptr.vmem [resolvable:$true] %s157
          %163 = dma.hbm_to_vmem [thread:$0]  %s156, 10240, %s158, [#allocation7], 128, 128, 8
        $region16: #{jasper_forward.11} parent=11 // pred_fallthru
          _
        // Predicated region
        $region17: #{jasper_forward.11} parent=11 // pred_check
          %p164 = pneg %p106
        $region18: #{jasper_forward.11} parent=11 // pred_check_branch
          %166 = sbr.rel (%p164) target = $region20
        $region19: #{jasper_forward.11} parent=11 // pred_region
          %s168 = ssub.s32 16, 16
          %169 = vsyncadd [#allocation7], %s168
          %s170 = smul.addr %s26, 16
          %s171 = scalar_lea.hbm %s2, %s170
          %s173 = sshll.u32 [#allocation8], 4
          %s174 = int_to_ptr.vmem [resolvable:$true] %s173
          %176 = dma.hbm_to_vmem [thread:$0]  %s171, 16, %s174, [#allocation7]
        $region20: #{jasper_forward.11} parent=11 // pred_fallthru
          _
      $region12: #{jasper_forward.11} parent=5 // pred_fallthru
        _
      %p177 = scmp.lt.s32.totalorder %s16, 2
      // Predicated region
      $region21: #{jasper_forward.11} parent=5 // pred_check
        %p178 = pneg %p177
      $region22: #{jasper_forward.11} parent=5 // pred_check_branch
        %180 = sbr.rel (%p178) target = $region24
      $region23: #{jasper_forward.11} parent=5 // pred_region
        // Predicated region
        $region25: #{jasper_forward.11} parent=23 // pred_check
          %p181 = pneg %p48
        $region26: #{jasper_forward.11} parent=23 // pred_check_branch
          %183 = sbr.rel (%p181) target = $region28
        $region27: #{jasper_forward.11} parent=23 // pred_region
          %s184 = sand.u32 %s38, 1
          %s185 = scalar_lea.sflag [#allocation4], %s184
          %s186 = sand.u32 %s38, 1
          %s187 = smul.addr %s186, 48
          %s188 = scalar_lea.vmem [#allocation3], %s187
          %s190 = ssub.s32 768, 768
          %191 = vsyncadd %s185, %s190
          %s192 = smul.addr %s23, 6
          %s193 = smul.addr %s192, 128
          %s194 = scalar_lea.hbm %s0, %s193
          %s195 = sshll.u32 %s188, 4
          %s196 = int_to_ptr.vmem [resolvable:$true] %s195
          %201 = dma.hbm_to_vmem [thread:$0]  %s194, 768, %s196, %s185, 128, 128, 8
        $region28: #{jasper_forward.11} parent=23 // pred_fallthru
          _
      $region24: #{jasper_forward.11} parent=5 // pred_fallthru
        _
      %p202 = scmp.le.s32.totalorder 1, %s16
      %p203 = scmp.lt.s32.totalorder %s16, 3
      %p204 = pnand %p202, %p203
      %p205 = pneg %p204
      // Predicated region
      $region29: #{jasper_forward.11} parent=5 // pred_check
        _
      $region30: #{jasper_forward.11} parent=5 // pred_check_branch
        %207 = sbr.rel (%p204) target = $region32
      $region31: #{jasper_forward.11} parent=5 // pred_region
        %s208 = ssub.s32 %s16, 1
        %s209 = sand.u32 %s41, 1
        %s210 = scalar_lea.sflag [#allocation4], %s209
        %s211 = sand.u32 %s41, 1
        %s212 = smul.addr %s211, 48
        %s213 = scalar_lea.vmem [#allocation3], %s212
        // Predicated region
        $region33: #{jasper_forward.11} parent=31 // pred_check
          %p214 = pneg %p54
        $region34: #{jasper_forward.11} parent=31 // pred_check_branch
          %216 = sbr.rel (%p214) target = $region36
        $region35: #{jasper_forward.11} parent=31 // pred_region
          %217 = dma.done %s210, 768
        $region36: #{jasper_forward.11} parent=31 // pred_fallthru
          _
        // Predicated region
        $region37: #{jasper_forward.11} parent=31 // pred_check
          %p218 = pneg %p80
        $region38: #{jasper_forward.11} parent=31 // pred_check_branch
          %220 = sbr.rel (%p218) target = $region40
        $region39: #{jasper_forward.11} parent=31 // pred_region
          %221 = dma.done [#allocation7], 10240
        $region40: #{jasper_forward.11} parent=31 // pred_fallthru
          _
        // Predicated region
        $region41: #{jasper_forward.11} parent=31 // pred_check
          %p222 = pneg %p106
        $region42: #{jasper_forward.11} parent=31 // pred_check_branch
          %224 = sbr.rel (%p222) target = $region44
        $region43: #{jasper_forward.11} parent=31 // pred_region
          %225 = dma.done [#allocation7], 16
        $region44: #{jasper_forward.11} parent=31 // pred_fallthru
          _
        %s226 = sand.u32 %s41, 1
        %s227 = scalar_lea.sflag [#allocation4], %s226
        %s228 = sand.u32 %s41, 1
        %s229 = smul.addr %s228, 48
        %s230 = scalar_lea.vmem [#allocation3], %s229
        %p231 = pneg %p54
        %p232 = pneg %p51
        %p233 = pneg %p80
        %p234 = pneg %p77
        %p235 = pneg %p106
        %p236 = pneg %p103
        %p237 = pneg %p134
        %p238 = pneg %p131
        %s239 = sand.u32 %s121, 1
        %s240 = scalar_lea.sflag [#allocation5], %s239
        %s241 = sand.u32 %s121, 1
        %s242 = smul.addr %s241, 48
        %s243 = scalar_lea.vmem [#allocation9], %s242
        %v244 = vld [vmem:[%s213 + $0xe] sm:$0xff]
        %v245 = vld [vmem:[%s213 + $0x16] sm:$0xff]
        %v246 = vld [vmem:[#allocation6] sm:$0xff]
        %v247 = vld [vmem:[#allocation6 + $0x8] sm:$0xff]
        %v248 = vld [vmem:[#allocation6 + $0x10] sm:$0xff]
        %v249 = vld [vmem:[#allocation6 + $0x18] sm:$0xff]
        %v250 = vld [vmem:[#allocation6 + $0x20] sm:$0xff]
        %v251 = vld [vmem:[#allocation6 + $0x28] sm:$0xff]
        %v252 = vld [vmem:[#allocation6 + $0x30] sm:$0xff]
        %v253 = vld [vmem:[#allocation6 + $0x38] sm:$0xff]
        %v254 = vld [vmem:[#allocation6 + $0x40] sm:$0xff]
        %v255 = vld [vmem:[#allocation6 + $0x48] sm:$0xff]
        %v256 = vld [vmem:[#allocation6 + $0x50] sm:$0xff]
        %v257 = vld [vmem:[#allocation6 + $0x58] sm:$0xff]
        %v258 = vld [vmem:[#allocation6 + $0x60] sm:$0xff]
        %v259 = vld [vmem:[#allocation6 + $0x68] sm:$0xff]
        %v260 = vld [vmem:[#allocation6 + $0x70] sm:$0xff]
        %v261 = vld [vmem:[#allocation6 + $0x78] sm:$0xff]
        %262 = vmatprep.subr.mxu0 0.0
        %263 = vmatpush1.msra.mxu0 %v246
        %264 = vmatprep.subr.mxu0 0.0
        %265 = vmatpush1.msra.mxu0 %v247
        %266 = vmatprep.subr.mxu0 0.0
        %267 = vmatpush1.msra.mxu0 %v248
        %268 = vmatprep.subr.mxu0 0.0
        %269 = vmatpush1.msra.mxu0 %v249
        %270 = vmatprep.subr.mxu0 0.0
        %271 = vmatpush1.msra.mxu0 %v250
        %272 = vmatprep.subr.mxu0 0.0
        %273 = vmatpush1.msra.mxu0 %v251
        %274 = vmatprep.subr.mxu0 0.0
        %275 = vmatpush1.msra.mxu0 %v252
        %276 = vmatprep.subr.mxu0 0.0
        %277 = vmatpush1.msra.mxu0 %v253
        %278 = vmatprep.subr.mxu0 0.0
        %279 = vmatpush1.msra.mxu0 %v254
        %280 = vmatprep.subr.mxu0 0.0
        %281 = vmatpush1.msra.mxu0 %v255
        %282 = vmatprep.subr.mxu0 0.0
        %283 = vmatpush1.msra.mxu0 %v256
        %284 = vmatprep.subr.mxu0 0.0
        %285 = vmatpush1.msra.mxu0 %v257
        %286 = vmatprep.subr.mxu0 0.0
        %287 = vmatpush1.msra.mxu0 %v258
        %288 = vmatprep.subr.mxu0 0.0
        %289 = vmatpush1.msra.mxu0 %v259
        %290 = vmatprep.subr.mxu0 0.0
        %291 = vmatpush1.msra.mxu0 %v260
        %292 = vmatprep.subr.mxu0 0.0
        %293 = vmatpush1.msra.mxu0 %v261
        %294 = vmatprep.subr.mxu0 0.0
        %295 = vmatpush1.msra.mxu0 0.0
        %296 = vmatprep.subr.mxu0 0.0
        %297 = vmatpush1.msra.mxu0 0.0
        %298 = vmatprep.subr.mxu0 0.0
        %299 = vmatpush1.msra.mxu0 0.0
        %300 = vmatprep.subr.mxu0 0.0
        %301 = vmatpush1.msra.mxu0 0.0
        %302 = vmatprep.subr.mxu0 0.0
        %303 = vmatpush1.msra.mxu0 0.0
        %304 = vmatprep.subr.mxu0 0.0
        %305 = vmatpush1.msra.mxu0 0.0
        %306 = vmatprep.subr.mxu0 0.0
        %307 = vmatpush1.msra.mxu0 0.0
        %308 = vmatprep.subr.mxu0 0.0
        %309 = vmatpush1.msra.mxu0 0.0
        %310 = vmatprep.subr.mxu0 0.0
        %311 = vmatpush1.msra.mxu0 0.0
        %312 = vmatprep.subr.mxu0 0.0
        %313 = vmatpush1.msra.mxu0 0.0
        %314 = vmatprep.subr.mxu0 0.0
        %315 = vmatpush1.msra.mxu0 0.0
        %316 = vmatprep.subr.mxu0 0.0
        %317 = vmatpush1.msra.mxu0 0.0
        %318 = vmatprep.subr.mxu0 0.0
        %319 = vmatpush1.msra.mxu0 0.0
        %320 = vmatprep.subr.mxu0 0.0
        %321 = vmatpush1.msra.mxu0 0.0
        %322 = vmatprep.subr.mxu0 0.0
        %323 = vmatpush1.msra.mxu0 0.0
        %324 = vmatprep.subr.mxu0 0.0
        %325 = vmatpush1.msra.mxu0 0.0
        %326 = vmatprep.mubr.f32.mxu0 0.0
        %327 = vmatmul.mubr.f32.gmra.mrb[0].mxu0 %v244
        %v328 = vpop.f32.mrb[0].mxu0
        %v329 = vadd.f32 0.0, %v328
        %v330 = vpop.f32.mrb[0].mxu0
        %331 = vmatprep.mubr.f32.mxu0 0.0
        %332 = vmatmul.mubr.f32.gmra.mrb[0].mxu0 %v245
        %v333 = vpop.f32.mrb[0].mxu0
        %v334 = vadd.f32 0.0, %v333
        %v335 = vpop.f32.mrb[0].mxu0
        %336 = vdwg.mxu0
        %337 = vst [vmem:[#allocation2] sm:$0xff] %v329
        %338 = vst [vmem:[#allocation2 + $0x8] sm:$0xff] %v334
        %v339 = vld [vmem:[%s213 + $0xf] sm:$0xff]
        %v340 = vld [vmem:[%s213 + $0x17] sm:$0xff]
        %s341 = scalar_lea.vmem [#allocation6], 128
        %v342 = vld [vmem:[%s341] sm:$0xff]
        %v343 = vld [vmem:[%s341 + $0x8] sm:$0xff]
        %v344 = vld [vmem:[%s341 + $0x10] sm:$0xff]
        %v345 = vld [vmem:[%s341 + $0x18] sm:$0xff]
        %v346 = vld [vmem:[%s341 + $0x20] sm:$0xff]
        %v347 = vld [vmem:[%s341 + $0x28] sm:$0xff]
        %v348 = vld [vmem:[%s341 + $0x30] sm:$0xff]
        %v349 = vld [vmem:[%s341 + $0x38] sm:$0xff]
        %v350 = vld [vmem:[%s341 + $0x40] sm:$0xff]
        %v351 = vld [vmem:[%s341 + $0x48] sm:$0xff]
        %v352 = vld [vmem:[%s341 + $0x50] sm:$0xff]
        %v353 = vld [vmem:[%s341 + $0x58] sm:$0xff]
        %v354 = vld [vmem:[%s341 + $0x60] sm:$0xff]
        %v355 = vld [vmem:[%s341 + $0x68] sm:$0xff]
        %v356 = vld [vmem:[%s341 + $0x70] sm:$0xff]
        %v357 = vld [vmem:[%s341 + $0x78] sm:$0xff]
        %358 = vmatprep.subr.mxu0 0.0
        %359 = vmatpush1.msra.mxu0 %v342
        %360 = vmatprep.subr.mxu0 0.0
        %361 = vmatpush1.msra.mxu0 %v343
        %362 = vmatprep.subr.mxu0 0.0
        %363 = vmatpush1.msra.mxu0 %v344
        %364 = vmatprep.subr.mxu0 0.0
        %365 = vmatpush1.msra.mxu0 %v345
        %366 = vmatprep.subr.mxu0 0.0
        %367 = vmatpush1.msra.mxu0 %v346
        %368 = vmatprep.subr.mxu0 0.0
        %369 = vmatpush1.msra.mxu0 %v347
        %370 = vmatprep.subr.mxu0 0.0
        %371 = vmatpush1.msra.mxu0 %v348
        %372 = vmatprep.subr.mxu0 0.0
        %373 = vmatpush1.msra.mxu0 %v349
        %374 = vmatprep.subr.mxu0 0.0
        %375 = vmatpush1.msra.mxu0 %v350
        %376 = vmatprep.subr.mxu0 0.0
        %377 = vmatpush1.msra.mxu0 %v351
        %378 = vmatprep.subr.mxu0 0.0
        %379 = vmatpush1.msra.mxu0 %v352
        %380 = vmatprep.subr.mxu0 0.0
        %381 = vmatpush1.msra.mxu0 %v353
        %382 = vmatprep.subr.mxu0 0.0
        %383 = vmatpush1.msra.mxu0 %v354
        %384 = vmatprep.subr.mxu0 0.0
        %385 = vmatpush1.msra.mxu0 %v355
        %386 = vmatprep.subr.mxu0 0.0
        %387 = vmatpush1.msra.mxu0 %v356
        %388 = vmatprep.subr.mxu0 0.0
        %389 = vmatpush1.msra.mxu0 %v357
        %390 = vmatprep.subr.mxu0 0.0
        %391 = vmatpush1.msra.mxu0 0.0
        %392 = vmatprep.subr.mxu0 0.0
        %393 = vmatpush1.msra.mxu0 0.0
        %394 = vmatprep.subr.mxu0 0.0
        %395 = vmatpush1.msra.mxu0 0.0
        %396 = vmatprep.subr.mxu0 0.0
        %397 = vmatpush1.msra.mxu0 0.0
        %398 = vmatprep.subr.mxu0 0.0
        %399 = vmatpush1.msra.mxu0 0.0
        %400 = vmatprep.subr.mxu0 0.0
        %401 = vmatpush1.msra.mxu0 0.0
        %402 = vmatprep.subr.mxu0 0.0
        %403 = vmatpush1.msra.mxu0 0.0
        %404 = vmatprep.subr.mxu0 0.0
        %405 = vmatpush1.msra.mxu0 0.0
        %406 = vmatprep.subr.mxu0 0.0
        %407 = vmatpush1.msra.mxu0 0.0
        %408 = vmatprep.subr.mxu0 0.0
        %409 = vmatpush1.msra.mxu0 0.0
        %410 = vmatprep.subr.mxu0 0.0
        %411 = vmatpush1.msra.mxu0 0.0
        %412 = vmatprep.subr.mxu0 0.0
        %413 = vmatpush1.msra.mxu0 0.0
        %414 = vmatprep.subr.mxu0 0.0
        %415 = vmatpush1.msra.mxu0 0.0
        %416 = vmatprep.subr.mxu0 0.0
        %417 = vmatpush1.msra.mxu0 0.0
        %418 = vmatprep.subr.mxu0 0.0
        %419 = vmatpush1.msra.mxu0 0.0
        %420 = vmatprep.subr.mxu0 0.0
        %421 = vmatpush1.msra.mxu0 0.0
        %422 = vmatprep.mubr.f32.mxu0 0.0
        %423 = vmatmul.mubr.f32.gmra.mrb[0].mxu0 %v339
        %v424 = vpop.f32.mrb[0].mxu0
        %v425 = vadd.f32 0.0, %v424
        %v426 = vpop.f32.mrb[0].mxu0
        %427 = vmatprep.mubr.f32.mxu0 0.0
        %428 = vmatmul.mubr.f32.gmra.mrb[0].mxu0 %v340
        %v429 = vpop.f32.mrb[0].mxu0
        %v430 = vadd.f32 0.0, %v429
        %v431 = vpop.f32.mrb[0].mxu0
        %432 = vdwg.mxu0
        %v433 = vld [vmem:[#allocation2] sm:$0xff]
        %v434 = vld [vmem:[#allocation2 + $0x8] sm:$0xff]
        %v435 = vadd.f32 %v433, %v425
        %v436 = vadd.f32 %v434, %v430
        %437 = vst [vmem:[#allocation2] sm:$0xff] %v435
        %438 = vst [vmem:[#allocation2 + $0x8] sm:$0xff] %v436
        %v439 = vld [vmem:[%s213 + $0x10] sm:$0xff]
        %v440 = vld [vmem:[%s213 + $0x18] sm:$0xff]
        %s441 = scalar_lea.vmem [#allocation6], 256
        %v442 = vld [vmem:[%s441] sm:$0xff]
        %v443 = vld [vmem:[%s441 + $0x8] sm:$0xff]
        %v444 = vld [vmem:[%s441 + $0x10] sm:$0xff]
        %v445 = vld [vmem:[%s441 + $0x18] sm:$0xff]
        %v446 = vld [vmem:[%s441 + $0x20] sm:$0xff]
        %v447 = vld [vmem:[%s441 + $0x28] sm:$0xff]
        %v448 = vld [vmem:[%s441 + $0x30] sm:$0xff]
        %v449 = vld [vmem:[%s441 + $0x38] sm:$0xff]
        %v450 = vld [vmem:[%s441 + $0x40] sm:$0xff]
        %v451 = vld [vmem:[%s441 + $0x48] sm:$0xff]
        %v452 = vld [vmem:[%s441 + $0x50] sm:$0xff]
        %v453 = vld [vmem:[%s441 + $0x58] sm:$0xff]
        %v454 = vld [vmem:[%s441 + $0x60] sm:$0xff]
        %v455 = vld [vmem:[%s441 + $0x68] sm:$0xff]
        %v456 = vld [vmem:[%s441 + $0x70] sm:$0xff]
        %v457 = vld [vmem:[%s441 + $0x78] sm:$0xff]
        %458 = vmatprep.subr.mxu0 0.0
        %459 = vmatpush1.msra.mxu0 %v442
        %460 = vmatprep.subr.mxu0 0.0
        %461 = vmatpush1.msra.mxu0 %v443
        %462 = vmatprep.subr.mxu0 0.0
        %463 = vmatpush1.msra.mxu0 %v444
        %464 = vmatprep.subr.mxu0 0.0
        %465 = vmatpush1.msra.mxu0 %v445
        %466 = vmatprep.subr.mxu0 0.0
        %467 = vmatpush1.msra.mxu0 %v446
        %468 = vmatprep.subr.mxu0 0.0
        %469 = vmatpush1.msra.mxu0 %v447
        %470 = vmatprep.subr.mxu0 0.0
        %471 = vmatpush1.msra.mxu0 %v448
        %472 = vmatprep.subr.mxu0 0.0
        %473 = vmatpush1.msra.mxu0 %v449
        %474 = vmatprep.subr.mxu0 0.0
        %475 = vmatpush1.msra.mxu0 %v450
        %476 = vmatprep.subr.mxu0 0.0
        %477 = vmatpush1.msra.mxu0 %v451
        %478 = vmatprep.subr.mxu0 0.0
        %479 = vmatpush1.msra.mxu0 %v452
        %480 = vmatprep.subr.mxu0 0.0
        %481 = vmatpush1.msra.mxu0 %v453
        %482 = vmatprep.subr.mxu0 0.0
        %483 = vmatpush1.msra.mxu0 %v454
        %484 = vmatprep.subr.mxu0 0.0
        %485 = vmatpush1.msra.mxu0 %v455
        %486 = vmatprep.subr.mxu0 0.0
        %487 = vmatpush1.msra.mxu0 %v456
        %488 = vmatprep.subr.mxu0 0.0
        %489 = vmatpush1.msra.mxu0 %v457
        %490 = vmatprep.subr.mxu0 0.0
        %491 = vmatpush1.msra.mxu0 0.0
        %492 = vmatprep.subr.mxu0 0.0
        %493 = vmatpush1.msra.mxu0 0.0
        %494 = vmatprep.subr.mxu0 0.0
        %495 = vmatpush1.msra.mxu0 0.0
        %496 = vmatprep.subr.mxu0 0.0
        %497 = vmatpush1.msra.mxu0 0.0
        %498 = vmatprep.subr.mxu0 0.0
        %499 = vmatpush1.msra.mxu0 0.0
        %500 = vmatprep.subr.mxu0 0.0
        %501 = vmatpush1.msra.mxu0 0.0
        %502 = vmatprep.subr.mxu0 0.0
        %503 = vmatpush1.msra.mxu0 0.0
        %504 = vmatprep.subr.mxu0 0.0
        %505 = vmatpush1.msra.mxu0 0.0
        %506 = vmatprep.subr.mxu0 0.0
        %507 = vmatpush1.msra.mxu0 0.0
        %508 = vmatprep.subr.mxu0 0.0
        %509 = vmatpush1.msra.mxu0 0.0
        %510 = vmatprep.subr.mxu0 0.0
        %511 = vmatpush1.msra.mxu0 0.0
        %512 = vmatprep.subr.mxu0 0.0
        %513 = vmatpush1.msra.mxu0 0.0
        %514 = vmatprep.subr.mxu0 0.0
        %515 = vmatpush1.msra.mxu0 0.0
        %516 = vmatprep.subr.mxu0 0.0
        %517 = vmatpush1.msra.mxu0 0.0
        %518 = vmatprep.subr.mxu0 0.0
        %519 = vmatpush1.msra.mxu0 0.0
        %520 = vmatprep.subr.mxu0 0.0
        %521 = vmatpush1.msra.mxu0 0.0
        %522 = vmatprep.mubr.f32.mxu0 0.0
        %523 = vmatmul.mubr.f32.gmra.mrb[0].mxu0 %v439
        %v524 = vpop.f32.mrb[0].mxu0
        %v525 = vadd.f32 0.0, %v524
        %v526 = vpop.f32.mrb[0].mxu0
        %527 = vmatprep.mubr.f32.mxu0 0.0
        %528 = vmatmul.mubr.f32.gmra.mrb[0].mxu0 %v440
        %v529 = vpop.f32.mrb[0].mxu0
        %v530 = vadd.f32 0.0, %v529
        %v531 = vpop.f32.mrb[0].mxu0
        %532 = vdwg.mxu0
        %v533 = vld [vmem:[#allocation2] sm:$0xff]
        %v534 = vld [vmem:[#allocation2 + $0x8] sm:$0xff]
        %v535 = vadd.f32 %v533, %v525
        %v536 = vadd.f32 %v534, %v530
        %537 = vst [vmem:[#allocation2] sm:$0xff] %v535
        %538 = vst [vmem:[#allocation2 + $0x8] sm:$0xff] %v536
        %v539 = vld [vmem:[%s213 + $0x11] sm:$0xff]
        %v540 = vld [vmem:[%s213 + $0x19] sm:$0xff]
        %s541 = scalar_lea.vmem [#allocation6], 384
        %v542 = vld [vmem:[%s541] sm:$0xff]
        %v543 = vld [vmem:[%s541 + $0x8] sm:$0xff]
        %v544 = vld [vmem:[%s541 + $0x10] sm:$0xff]
        %v545 = vld [vmem:[%s541 + $0x18] sm:$0xff]
        %v546 = vld [vmem:[%s541 + $0x20] sm:$0xff]
        %v547 = vld [vmem:[%s541 + $0x28] sm:$0xff]
        %v548 = vld [vmem:[%s541 + $0x30] sm:$0xff]
        %v549 = vld [vmem:[%s541 + $0x38] sm:$0xff]
        %v550 = vld [vmem:[%s541 + $0x40] sm:$0xff]
        %v551 = vld [vmem:[%s541 + $0x48] sm:$0xff]
        %v552 = vld [vmem:[%s541 + $0x50] sm:$0xff]
        %v553 = vld [vmem:[%s541 + $0x58] sm:$0xff]
        %v554 = vld [vmem:[%s541 + $0x60] sm:$0xff]
        %v555 = vld [vmem:[%s541 + $0x68] sm:$0xff]
        %v556 = vld [vmem:[%s541 + $0x70] sm:$0xff]
        %v557 = vld [vmem:[%s541 + $0x78] sm:$0xff]
        %558 = vmatprep.subr.mxu0 0.0
        %559 = vmatpush1.msra.mxu0 %v542
        %560 = vmatprep.subr.mxu0 0.0
        %561 = vmatpush1.msra.mxu0 %v543
        %562 = vmatprep.subr.mxu0 0.0
        %563 = vmatpush1.msra.mxu0 %v544
        %564 = vmatprep.subr.mxu0 0.0
        %565 = vmatpush1.msra.mxu0 %v545
        %566 = vmatprep.subr.mxu0 0.0
        %567 = vmatpush1.msra.mxu0 %v546
        %568 = vmatprep.subr.mxu0 0.0
        %569 = vmatpush1.msra.mxu0 %v547
        %570 = vmatprep.subr.mxu0 0.0
        %571 = vmatpush1.msra.mxu0 %v548
        %572 = vmatprep.subr.mxu0 0.0
        %573 = vmatpush1.msra.mxu0 %v549
        %574 = vmatprep.subr.mxu0 0.0
        %575 = vmatpush1.msra.mxu0 %v550
        %576 = vmatprep.subr.mxu0 0.0
        %577 = vmatpush1.msra.mxu0 %v551
        %578 = vmatprep.subr.mxu0 0.0
        %579 = vmatpush1.msra.mxu0 %v552
        %580 = vmatprep.subr.mxu0 0.0
        %581 = vmatpush1.msra.mxu0 %v553
        %582 = vmatprep.subr.mxu0 0.0
        %583 = vmatpush1.msra.mxu0 %v554
        %584 = vmatprep.subr.mxu0 0.0
        %585 = vmatpush1.msra.mxu0 %v555
        %586 = vmatprep.subr.mxu0 0.0
        %587 = vmatpush1.msra.mxu0 %v556
        %588 = vmatprep.subr.mxu0 0.0
        %589 = vmatpush1.msra.mxu0 %v557
        %590 = vmatprep.subr.mxu0 0.0
        %591 = vmatpush1.msra.mxu0 0.0
        %592 = vmatprep.subr.mxu0 0.0
        %593 = vmatpush1.msra.mxu0 0.0
        %594 = vmatprep.subr.mxu0 0.0
        %595 = vmatpush1.msra.mxu0 0.0
        %596 = vmatprep.subr.mxu0 0.0
        %597 = vmatpush1.msra.mxu0 0.0
        %598 = vmatprep.subr.mxu0 0.0
        %599 = vmatpush1.msra.mxu0 0.0
        %600 = vmatprep.subr.mxu0 0.0
        %601 = vmatpush1.msra.mxu0 0.0
        %602 = vmatprep.subr.mxu0 0.0
        %603 = vmatpush1.msra.mxu0 0.0
        %604 = vmatprep.subr.mxu0 0.0
        %605 = vmatpush1.msra.mxu0 0.0
        %606 = vmatprep.subr.mxu0 0.0
        %607 = vmatpush1.msra.mxu0 0.0
        %608 = vmatprep.subr.mxu0 0.0
        %609 = vmatpush1.msra.mxu0 0.0
        %610 = vmatprep.subr.mxu0 0.0
        %611 = vmatpush1.msra.mxu0 0.0
        %612 = vmatprep.subr.mxu0 0.0
        %613 = vmatpush1.msra.mxu0 0.0
        %614 = vmatprep.subr.mxu0 0.0
        %615 = vmatpush1.msra.mxu0 0.0
        %616 = vmatprep.subr.mxu0 0.0
        %617 = vmatpush1.msra.mxu0 0.0
        %618 = vmatprep.subr.mxu0 0.0
        %619 = vmatpush1.msra.mxu0 0.0
        %620 = vmatprep.subr.mxu0 0.0
        %621 = vmatpush1.msra.mxu0 0.0
        %622 = vmatprep.mubr.f32.mxu0 0.0
        %623 = vmatmul.mubr.f32.gmra.mrb[0].mxu0 %v539
        %v624 = vpop.f32.mrb[0].mxu0
        %v625 = vadd.f32 0.0, %v624
        %v626 = vpop.f32.mrb[0].mxu0
        %627 = vmatprep.mubr.f32.mxu0 0.0
        %628 = vmatmul.mubr.f32.gmra.mrb[0].mxu0 %v540
        %v629 = vpop.f32.mrb[0].mxu0
        %v630 = vadd.f32 0.0, %v629
        %v631 = vpop.f32.mrb[0].mxu0
        %632 = vdwg.mxu0
        %v633 = vld [vmem:[#allocation2] sm:$0xff]
        %v634 = vld [vmem:[#allocation2 + $0x8] sm:$0xff]
        %v635 = vadd.f32 %v633, %v625
        %v636 = vadd.f32 %v634, %v630
        %637 = vst [vmem:[#allocation2] sm:$0xff] %v635
        %638 = vst [vmem:[#allocation2 + $0x8] sm:$0xff] %v636
        %v639 = vld [vmem:[%s213 + $0x12] sm:$0xff]
        %v640 = vld [vmem:[%s213 + $0x1a] sm:$0xff]
        %s641 = scalar_lea.vmem [#allocation6], 512
        %v642 = vld [vmem:[%s641] sm:$0xff]
        %v643 = vld [vmem:[%s641 + $0x8] sm:$0xff]
        %v644 = vld [vmem:[%s641 + $0x10] sm:$0xff]
        %v645 = vld [vmem:[%s641 + $0x18] sm:$0xff]
        %v646 = vld [vmem:[%s641 + $0x20] sm:$0xff]
        %v647 = vld [vmem:[%s641 + $0x28] sm:$0xff]
        %v648 = vld [vmem:[%s641 + $0x30] sm:$0xff]
        %v649 = vld [vmem:[%s641 + $0x38] sm:$0xff]
        %v650 = vld [vmem:[%s641 + $0x40] sm:$0xff]
        %v651 = vld [vmem:[%s641 + $0x48] sm:$0xff]
        %v652 = vld [vmem:[%s641 + $0x50] sm:$0xff]
        %v653 = vld [vmem:[%s641 + $0x58] sm:$0xff]
        %v654 = vld [vmem:[%s641 + $0x60] sm:$0xff]
        %v655 = vld [vmem:[%s641 + $0x68] sm:$0xff]
        %v656 = vld [vmem:[%s641 + $0x70] sm:$0xff]
        %v657 = vld [vmem:[%s641 + $0x78] sm:$0xff]
        %658 = vmatprep.subr.mxu0 0.0
        %659 = vmatpush1.msra.mxu0 %v642
        %660 = vmatprep.subr.mxu0 0.0
        %661 = vmatpush1.msra.mxu0 %v643
        %662 = vmatprep.subr.mxu0 0.0
        %663 = vmatpush1.msra.mxu0 %v644
        %664 = vmatprep.subr.mxu0 0.0
        %665 = vmatpush1.msra.mxu0 %v645
        %666 = vmatprep.subr.mxu0 0.0
        %667 = vmatpush1.msra.mxu0 %v646
        %668 = vmatprep.subr.mxu0 0.0
        %669 = vmatpush1.msra.mxu0 %v647
        %670 = vmatprep.subr.mxu0 0.0
        %671 = vmatpush1.msra.mxu0 %v648
        %672 = vmatprep.subr.mxu0 0.0
        %673 = vmatpush1.msra.mxu0 %v649
        %674 = vmatprep.subr.mxu0 0.0
        %675 = vmatpush1.msra.mxu0 %v650
        %676 = vmatprep.subr.mxu0 0.0
        %677 = vmatpush1.msra.mxu0 %v651
        %678 = vmatprep.subr.mxu0 0.0
        %679 = vmatpush1.msra.mxu0 %v652
        %680 = vmatprep.subr.mxu0 0.0
        %681 = vmatpush1.msra.mxu0 %v653
        %682 = vmatprep.subr.mxu0 0.0
        %683 = vmatpush1.msra.mxu0 %v654
        %684 = vmatprep.subr.mxu0 0.0
        %685 = vmatpush1.msra.mxu0 %v655
        %686 = vmatprep.subr.mxu0 0.0
        %687 = vmatpush1.msra.mxu0 %v656
        %688 = vmatprep.subr.mxu0 0.0
        %689 = vmatpush1.msra.mxu0 %v657
        %690 = vmatprep.subr.mxu0 0.0
        %691 = vmatpush1.msra.mxu0 0.0
        %692 = vmatprep.subr.mxu0 0.0
        %693 = vmatpush1.msra.mxu0 0.0
        %694 = vmatprep.subr.mxu0 0.0
        %695 = vmatpush1.msra.mxu0 0.0
        %696 = vmatprep.subr.mxu0 0.0
        %697 = vmatpush1.msra.mxu0 0.0
        %698 = vmatprep.subr.mxu0 0.0
        %699 = vmatpush1.msra.mxu0 0.0
        %700 = vmatprep.subr.mxu0 0.0
        %701 = vmatpush1.msra.mxu0 0.0
        %702 = vmatprep.subr.mxu0 0.0
        %703 = vmatpush1.msra.mxu0 0.0
        %704 = vmatprep.subr.mxu0 0.0
        %705 = vmatpush1.msra.mxu0 0.0
        %706 = vmatprep.subr.mxu0 0.0
        %707 = vmatpush1.msra.mxu0 0.0
        %708 = vmatprep.subr.mxu0 0.0
        %709 = vmatpush1.msra.mxu0 0.0
        %710 = vmatprep.subr.mxu0 0.0
        %711 = vmatpush1.msra.mxu0 0.0
        %712 = vmatprep.subr.mxu0 0.0
        %713 = vmatpush1.msra.mxu0 0.0
        %714 = vmatprep.subr.mxu0 0.0
        %715 = vmatpush1.msra.mxu0 0.0
        %716 = vmatprep.subr.mxu0 0.0
        %717 = vmatpush1.msra.mxu0 0.0
        %718 = vmatprep.subr.mxu0 0.0
        %719 = vmatpush1.msra.mxu0 0.0
        %720 = vmatprep.subr.mxu0 0.0
        %721 = vmatpush1.msra.mxu0 0.0
        %722 = vmatprep.mubr.f32.mxu0 0.0
        %723 = vmatmul.mubr.f32.gmra.mrb[0].mxu0 %v639
        %v724 = vpop.f32.mrb[0].mxu0
        %v725 = vadd.f32 0.0, %v724
        %v726 = vpop.f32.mrb[0].mxu0
        %727 = vmatprep.mubr.f32.mxu0 0.0
        %728 = vmatmul.mubr.f32.gmra.mrb[0].mxu0 %v640
        %v729 = vpop.f32.mrb[0].mxu0
        %v730 = vadd.f32 0.0, %v729
        %v731 = vpop.f32.mrb[0].mxu0
        %732 = vdwg.mxu0
        %v733 = vld [vmem:[#allocation2] sm:$0xff]
        %v734 = vld [vmem:[#allocation2 + $0x8] sm:$0xff]
        %v735 = vadd.f32 %v733, %v725
        %v736 = vadd.f32 %v734, %v730
        %737 = vst [vmem:[#allocation2] sm:$0xff] %v735
        %738 = vst [vmem:[#allocation2 + $0x8] sm:$0xff] %v736
        %v739 = vld [vmem:[#allocation2] sm:$0xff]
        %v740 = vld [vmem:[#allocation2 + $0x8] sm:$0xff]
        %v741 = vld [vmem:[#allocation8] sm:$0x1]
        %v743 = vlaneseq
        %v744 = vshrl.u32 %v743, 7
        %v745 = vsub.s32 0, %v744
        %v746 = vrot.slane %v741, %v745
        %v748 = vadd.f32 %v739, %v746
        %v749 = vadd.f32 %v740, %v746
        %v750 = vmax.f32 %v748, 0.0
        %v751 = vmax.f32 %v749, 0.0
        %752 = vst [vmem:[%s243 + $0x10] sm:$0xff] %v750
        %753 = vst [vmem:[%s243 + $0x18] sm:$0xff] %v751
        %754 = vst [vmem:[%s243] sm:$0xff] 0.0
        %755 = vst [vmem:[%s243 + $0x8] sm:$0xff] 0.0
        %756 = vst [vmem:[%s243 + $0x20] sm:$0xff] 0.0
        %757 = vst [vmem:[%s243 + $0x28] sm:$0xff] 0.0
        %s758 = sand.u32 %s121, 1
        %s759 = scalar_lea.sflag [#allocation5], %s758
        %s760 = sand.u32 %s121, 1
        %s761 = smul.addr %s760, 48
        %s762 = scalar_lea.vmem [#allocation9], %s761
        // Predicated region
        $region45: #{jasper_forward.11} parent=31 // pred_check
          %p763 = pneg %p131
        $region46: #{jasper_forward.11} parent=31 // pred_check_branch
          %765 = sbr.rel (%p763) target = $region48
        $region47: #{jasper_forward.11} parent=31 // pred_region
          %s767 = ssub.s32 768, 768
          %768 = vsyncadd %s759, %s767
          %s769 = smul.addr %s25, 6
          %s770 = sadd.s32 %s26, %s769
          %s771 = smul.addr %s770, 128
          %s772 = scalar_lea.hbm %s3, %s771
          %s773 = sshll.u32 %s762, 4
          %s774 = int_to_ptr.vmem [resolvable:$true] %s773
          %779 = dma.vmem_to_hbm [thread:$0]  %s774, 768, %s772, %s759, 128, 128, 8
        $region48: #{jasper_forward.11} parent=31 // pred_fallthru
          _
      $region32: #{jasper_forward.11} parent=5 // pred_fallthru
        _
      %p780 = scmp.le.s32.totalorder 2, %s16
      // Predicated region
      $region49: #{jasper_forward.11} parent=5 // pred_check
        %p781 = pneg %p780
      $region50: #{jasper_forward.11} parent=5 // pred_check_branch
        %783 = sbr.rel (%p781) target = $region52
      $region51: #{jasper_forward.11} parent=5 // pred_region
        %s784 = ssub.s32 %s16, 2
        // Predicated region
        $region53: #{jasper_forward.11} parent=51 // pred_check
          %p785 = pneg %p137
        $region54: #{jasper_forward.11} parent=51 // pred_check_branch
          %787 = sbr.rel (%p785) target = $region56
        $region55: #{jasper_forward.11} parent=51 // pred_region
          %s788 = sand.u32 %s122, 1
          %s789 = scalar_lea.sflag [#allocation5], %s788
          %s790 = sand.u32 %s122, 1
          %s791 = smul.addr %s790, 48
          %s792 = scalar_lea.vmem [#allocation9], %s791
          %793 = dma.done %s789, 768
        $region56: #{jasper_forward.11} parent=51 // pred_fallthru
          _
      $region52: #{jasper_forward.11} parent=5 // pred_fallthru
        _
    $region6: #{jasper_forward.11} parent=1 // loop_footer
      %s20 = sadd.s32 1, %s16
    $region7: #{jasper_forward.11} parent=1 // loop_footer_branch
      %15 = sbr.rel target = $region3
    $region8: #{jasper_forward.11} parent=1 // loop_exit
      _
    %794 = vsyncpa [#allocation4], 1
    %s795 = scalar_lea.sflag [#allocation4], 1
    %796 = vsyncpa %s795, 1
    %797 = vsyncpa [#allocation7], 1
    %798 = vsyncpa [#allocation5], 1
    %s799 = scalar_lea.sflag [#allocation5], 1
    %800 = vsyncpa %s799, 1

// kernel: jasper_forward.14
$region0: #{jasper_forward.14}
  #allocation0 [shape = 'u32[]', space=smem, size = 0x4, offset = 0x4, fixed_abs, tag = 'smem constant byte address 0x4 - core index']
  #allocation1 [shape = 'u32[144,128]{1,0:T(1,128)}', space=vmem, size = 0x12000, scoped, tag = 'internal scratch']
  #allocation2 [shape = 'f32[16,128]{1,0:T(8,128)}', space=vmem, size = 0x2000, scoped, tag = 'scratch operand']
  %s0 = inlined_call_operand.hbm [shape: f32[2,48,128], index: 0, kind: input, shape index: {}]
  %s1 = inlined_call_operand.hbm [shape: f32[1,128,128], index: 1, kind: input, shape index: {}]
  %s2 = inlined_call_operand.hbm [shape: f32[1,128], index: 2, kind: input, shape index: {}]
  %s3 = inlined_call_operand.hbm [shape: f32[2,48,128], index: 3, kind: output, shape index: {}]
  %s4 = sld [smem:[#allocation0]]
  $region57: #{jasper_forward.14} parent=0
    _
  %s6 = ssub.s32 1, %s4
  %s7 = scalar_select 0, %s6, %s4
  $region1: #{jasper_forward.14} parent=0
    #allocation3 [shape = 'u8[49152]{0}', space=vmem, size = 0xc000, scoped, tag = 'input window, operand 0']
    #allocation4 [shape = 's32[2]{0}', space=sflag, size = 0x8, scoped, tag = 'scoped memory for jasper_forward.14']
    #allocation5 [shape = 's32[2]{0}', space=sflag, size = 0x8, scoped, tag = 'scoped memory for jasper_forward.14']
    #allocation6 [shape = 'u8[65536]{0}', space=vmem, size = 0x10000, scoped, tag = 'input window, operand 1, single buffered']
    #allocation7 [shape = 's32[1]{0}', space=sflag, size = 0x4, scoped, tag = 'scoped memory for jasper_forward.14']
    #allocation8 [shape = 'u8[512]{0}', space=vmem, size = 0x400, scoped, tag = 'input window, operand 2, single buffered']
    #allocation9 [shape = 'u8[49152]{0}', space=vmem, size = 0xc000, scoped, tag = 'output window, operand 0']
    %8 = vsyncpa [#allocation4], 0
    %s9 = scalar_lea.sflag [#allocation4], 1
    %10 = vsyncpa %s9, 0
    %11 = vsyncpa [#allocation7], 0
    %12 = vsyncpa [#allocation5], 0
    %s13 = scalar_lea.sflag [#allocation5], 1
    %14 = vsyncpa %s13, 0
    loop: start=0, step=1, limit=4
    $region2: #{jasper_forward.14} parent=1 // loop_pre_header
      _
    $region3: #{jasper_forward.14} parent=1 // loop_header
      %s16 = sphi 0, %s20
      %p17 = scmp.ge.s32.totalorder %s16, 4
      %s23 = sphi 0, %s35
      %s24 = sphi 0, %s31
      %s25 = sphi 0, %s23
      %s26 = sphi 0, %s24
      %s27 = sphi 0, %s25
      %s28 = sphi 0, %s26
      %s38 = sphi 0, %s40
      %s41 = sphi 0, %s38
      %s42 = sphi 0, %s41
      %s58 = sphi 0, %s42
      %s64 = sphi 0, %s66
      %s67 = sphi 0, %s64
      %s68 = sphi 0, %s67
      %s84 = sphi 0, %s68
      %s90 = sphi 0, %s92
      %s93 = sphi 0, %s90
      %s94 = sphi 0, %s93
      %s110 = sphi 0, %s94
      %s118 = sphi 0, %s120
      %s121 = sphi 0, %s118
      %s122 = sphi 0, %s121
      %s138 = sphi 0, %s122
    $region4: #{jasper_forward.14} parent=1 // loop_header_branch
      %19 = sbr.rel (%p17) target = $region8
    $region5: #{jasper_forward.14} parent=1 // loop_body
      %s21 = ssub.s32 %s16, 1
      %s22 = ssub.s32 %s16, 2
      %s29 = sadd.s32 1, %s24
      %p30 = scmp.ge.s32.totalorder %s29, 1
      %s31 = scalar_select %p30, 0, %s29
      %s32 = sadd.s32 1, %s23
      %s33 = scalar_select %p30, %s32, %s23
      %p34 = scmp.ge.s32.totalorder %s33, 2
      %s35 = scalar_select %p34, 0, %s33
      %s36 = ssub.s32 %s23, %s35
      %p37 = scmp.eq.s32.totalorder %s36, 0
      %s39 = sadd.s32 %s38, 1
      %s40 = scalar_select %p37, %s38, %s39
      %p43 = pneg %p37
      %p44 = scmp.eq.s32.totalorder %s16, 1
      %p45 = por %p43, %p44
      %p46 = scmp.ne.s32.totalorder %s38, %s41
      %p47 = scmp.eq.s32.totalorder %s16, 0
      %p48 = por %p46, %p47
      %p49 = scmp.ne.s32.totalorder %s38, %s41
      %p50 = scmp.eq.s32.totalorder %s21, 1
      %p51 = por %p49, %p50
      %p52 = scmp.ne.s32.totalorder %s41, %s42
      %p53 = scmp.eq.s32.totalorder %s21, 0
      %p54 = por %p52, %p53
      %p55 = scmp.ne.s32.totalorder %s41, %s42
      %p56 = scmp.eq.s32.totalorder %s22, 1
      %p57 = por %p55, %p56
      %p59 = scmp.ne.s32.totalorder %s42, %s58
      %p60 = scmp.eq.s32.totalorder %s22, 0
      %p61 = por %p59, %p60
      %s62 = ssub.s32 %s24, %s31
      %p63 = scmp.eq.s32.totalorder %s62, 0
      %s65 = sadd.s32 %s64, 1
      %s66 = scalar_select %p63, %s64, %s65
      %p69 = pneg %p63
      %p70 = scmp.eq.s32.totalorder %s16, 1
      %p71 = por %p69, %p70
      %p72 = scmp.ne.s32.totalorder %s64, %s67
      %p73 = scmp.eq.s32.totalorder %s16, 0
      %p74 = por %p72, %p73
      %p75 = scmp.ne.s32.totalorder %s64, %s67
      %p76 = scmp.eq.s32.totalorder %s21, 1
      %p77 = por %p75, %p76
      %p78 = scmp.ne.s32.totalorder %s67, %s68
      %p79 = scmp.eq.s32.totalorder %s21, 0
      %p80 = por %p78, %p79
      %p81 = scmp.ne.s32.totalorder %s67, %s68
      %p82 = scmp.eq.s32.totalorder %s22, 1
      %p83 = por %p81, %p82
      %p85 = scmp.ne.s32.totalorder %s68, %s84
      %p86 = scmp.eq.s32.totalorder %s22, 0
      %p87 = por %p85, %p86
      %s88 = ssub.s32 %s24, %s31
      %p89 = scmp.eq.s32.totalorder %s88, 0
      %s91 = sadd.s32 %s90, 1
      %s92 = scalar_select %p89, %s90, %s91
      %p95 = pneg %p89
      %p96 = scmp.eq.s32.totalorder %s16, 1
      %p97 = por %p95, %p96
      %p98 = scmp.ne.s32.totalorder %s90, %s93
      %p99 = scmp.eq.s32.totalorder %s16, 0
      %p100 = por %p98, %p99
      %p101 = scmp.ne.s32.totalorder %s90, %s93
      %p102 = scmp.eq.s32.totalorder %s21, 1
      %p103 = por %p101, %p102
      %p104 = scmp.ne.s32.totalorder %s93, %s94
      %p105 = scmp.eq.s32.totalorder %s21, 0
      %p106 = por %p104, %p105
      %p107 = scmp.ne.s32.totalorder %s93, %s94
      %p108 = scmp.eq.s32.totalorder %s22, 1
      %p109 = por %p107, %p108
      %p111 = scmp.ne.s32.totalorder %s94, %s110
      %p112 = scmp.eq.s32.totalorder %s22, 0
      %p113 = por %p111, %p112
      %s114 = ssub.s32 %s23, %s35
      %s115 = ssub.s32 %s24, %s31
      %s116 = sor.u32 %s114, %s115
      %p117 = scmp.eq.s32.totalorder %s116, 0
      %s119 = sadd.s32 %s118, 1
      %s120 = scalar_select %p117, %s118, %s119
      %p123 = pneg %p117
      %p124 = scmp.eq.s32.totalorder %s16, 1
      %p125 = por %p123, %p124
      %p126 = scmp.ne.s32.totalorder %s118, %s121
      %p127 = scmp.eq.s32.totalorder %s16, 0
      %p128 = por %p126, %p127
      %p129 = scmp.ne.s32.totalorder %s118, %s121
      %p130 = scmp.eq.s32.totalorder %s21, 1
      %p131 = por %p129, %p130
      %p132 = scmp.ne.s32.totalorder %s121, %s122
      %p133 = scmp.eq.s32.totalorder %s21, 0
      %p134 = por %p132, %p133
      %p135 = scmp.ne.s32.totalorder %s121, %s122
      %p136 = scmp.eq.s32.totalorder %s22, 1
      %p137 = por %p135, %p136
      %p139 = scmp.ne.s32.totalorder %s122, %s138
      %p140 = scmp.eq.s32.totalorder %s22, 0
      %p141 = por %p139, %p140
      %p142 = scmp.le.s32.totalorder 1, %s16
      %p143 = scmp.lt.s32.totalorder %s16, 3
      %p144 = pnand %p142, %p143
      %p145 = pneg %p144
      // Predicated region
      $region9: #{jasper_forward.14} parent=5 // pred_check
        _
      $region10: #{jasper_forward.14} parent=5 // pred_check_branch
        %147 = sbr.rel (%p144) target = $region12
      $region11: #{jasper_forward.14} parent=5 // pred_region
        %s148 = ssub.s32 %s16, 1
        // Predicated region
        $region13: #{jasper_forward.14} parent=11 // pred_check
          %p149 = pneg %p80
        $region14: #{jasper_forward.14} parent=11 // pred_check_branch
          %151 = sbr.rel (%p149) target = $region16
        $region15: #{jasper_forward.14} parent=11 // pred_region
          %s153 = ssub.s32 2048, 2048
          %154 = vsyncadd [#allocation7], %s153
          %s155 = smul.addr %s26, 128
          %s156 = scalar_lea.hbm %s1, %s155
          %s157 = sshll.u32 [#allocation6], 4
          %s158 = int_to_ptr.vmem [resolvable:$true] %s157
          %163 = dma.hbm_to_vmem [thread:$0]  %s156, 2048, %s158, [#allocation7], 128, 128, 8
        $region16: #{jasper_forward.14} parent=11 // pred_fallthru
          _
        // Predicated region
        $region17: #{jasper_forward.14} parent=11 // pred_check
          %p164 = pneg %p106
        $region18: #{jasper_forward.14} parent=11 // pred_check_branch
          %166 = sbr.rel (%p164) target = $region20
        $region19: #{jasper_forward.14} parent=11 // pred_region
          %s168 = ssub.s32 16, 16
          %169 = vsyncadd [#allocation7], %s168
          %s170 = smul.addr %s26, 16
          %s171 = scalar_lea.hbm %s2, %s170
          %s173 = sshll.u32 [#allocation8], 4
          %s174 = int_to_ptr.vmem [resolvable:$true] %s173
          %176 = dma.hbm_to_vmem [thread:$0]  %s171, 16, %s174, [#allocation7]
        $region20: #{jasper_forward.14} parent=11 // pred_fallthru
          _
      $region12: #{jasper_forward.14} parent=5 // pred_fallthru
        _
      %p177 = scmp.lt.s32.totalorder %s16, 2
      // Predicated region
      $region21: #{jasper_forward.14} parent=5 // pred_check
        %p178 = pneg %p177
      $region22: #{jasper_forward.14} parent=5 // pred_check_branch
        %180 = sbr.rel (%p178) target = $region24
      $region23: #{jasper_forward.14} parent=5 // pred_region
        // Predicated region
        $region25: #{jasper_forward.14} parent=23 // pred_check
          %p181 = pneg %p48
        $region26: #{jasper_forward.14} parent=23 // pred_check_branch
          %183 = sbr.rel (%p181) target = $region28
        $region27: #{jasper_forward.14} parent=23 // pred_region
          %s184 = sand.u32 %s38, 1
          %s185 = scalar_lea.sflag [#allocation4], %s184
          %s186 = sand.u32 %s38, 1
          %s187 = smul.addr %s186, 48
          %s188 = scalar_lea.vmem [#allocation3], %s187
          %s190 = ssub.s32 768, 768
          %191 = vsyncadd %s185, %s190
          %s192 = smul.addr %s23, 6
          %s193 = smul.addr %s192, 128
          %s194 = scalar_lea.hbm %s0, %s193
          %s195 = sshll.u32 %s188, 4
          %s196 = int_to_ptr.vmem [resolvable:$true] %s195
          %201 = dma.hbm_to_vmem [thread:$0]  %s194, 768, %s196, %s185, 128, 128, 8
        $region28: #{jasper_forward.14} parent=23 // pred_fallthru
          _
      $region24: #{jasper_forward.14} parent=5 // pred_fallthru
        _
      %p202 = scmp.le.s32.totalorder 1, %s16
      %p203 = scmp.lt.s32.totalorder %s16, 3
      %p204 = pnand %p202, %p203
      %p205 = pneg %p204
      // Predicated region
      $region29: #{jasper_forward.14} parent=5 // pred_check
        _
      $region30: #{jasper_forward.14} parent=5 // pred_check_branch
        %207 = sbr.rel (%p204) target = $region32
      $region31: #{jasper_forward.14} parent=5 // pred_region
        %s208 = ssub.s32 %s16, 1
        %s209 = sand.u32 %s41, 1
        %s210 = scalar_lea.sflag [#allocation4], %s209
        %s211 = sand.u32 %s41, 1
        %s212 = smul.addr %s211, 48
        %s213 = scalar_lea.vmem [#allocation3], %s212
        // Predicated region
        $region33: #{jasper_forward.14} parent=31 // pred_check
          %p214 = pneg %p54
        $region34: #{jasper_forward.14} parent=31 // pred_check_branch
          %216 = sbr.rel (%p214) target = $region36
        $region35: #{jasper_forward.14} parent=31 // pred_region
          %217 = dma.done %s210, 768
        $region36: #{jasper_forward.14} parent=31 // pred_fallthru
          _
        // Predicated region
        $region37: #{jasper_forward.14} parent=31 // pred_check
          %p218 = pneg %p80
        $region38: #{jasper_forward.14} parent=31 // pred_check_branch
          %220 = sbr.rel (%p218) target = $region40
        $region39: #{jasper_forward.14} parent=31 // pred_region
          %221 = dma.done [#allocation7], 2048
        $region40: #{jasper_forward.14} parent=31 // pred_fallthru
          _
        // Predicated region
        $region41: #{jasper_forward.14} parent=31 // pred_check
          %p222 = pneg %p106
        $region42: #{jasper_forward.14} parent=31 // pred_check_branch
          %224 = sbr.rel (%p222) target = $region44
        $region43: #{jasper_forward.14} parent=31 // pred_region
          %225 = dma.done [#allocation7], 16
        $region44: #{jasper_forward.14} parent=31 // pred_fallthru
          _
        %s226 = sand.u32 %s41, 1
        %s227 = scalar_lea.sflag [#allocation4], %s226
        %s228 = sand.u32 %s41, 1
        %s229 = smul.addr %s228, 48
        %s230 = scalar_lea.vmem [#allocation3], %s229
        %p231 = pneg %p54
        %p232 = pneg %p51
        %p233 = pneg %p80
        %p234 = pneg %p77
        %p235 = pneg %p106
        %p236 = pneg %p103
        %p237 = pneg %p134
        %p238 = pneg %p131
        %s239 = sand.u32 %s121, 1
        %s240 = scalar_lea.sflag [#allocation5], %s239
        %s241 = sand.u32 %s121, 1
        %s242 = smul.addr %s241, 48
        %s243 = scalar_lea.vmem [#allocation9], %s242
        %v244 = vld [vmem:[%s213 + $0x10] sm:$0xff]
        %v245 = vld [vmem:[%s213 + $0x18] sm:$0xff]
        %v246 = vld [vmem:[#allocation6] sm:$0xff]
        %v247 = vld [vmem:[#allocation6 + $0x8] sm:$0xff]
        %v248 = vld [vmem:[#allocation6 + $0x10] sm:$0xff]
        %v249 = vld [vmem:[#allocation6 + $0x18] sm:$0xff]
        %v250 = vld [vmem:[#allocation6 + $0x20] sm:$0xff]
        %v251 = vld [vmem:[#allocation6 + $0x28] sm:$0xff]
        %v252 = vld [vmem:[#allocation6 + $0x30] sm:$0xff]
        %v253 = vld [vmem:[#allocation6 + $0x38] sm:$0xff]
        %v254 = vld [vmem:[#allocation6 + $0x40] sm:$0xff]
        %v255 = vld [vmem:[#allocation6 + $0x48] sm:$0xff]
        %v256 = vld [vmem:[#allocation6 + $0x50] sm:$0xff]
        %v257 = vld [vmem:[#allocation6 + $0x58] sm:$0xff]
        %v258 = vld [vmem:[#allocation6 + $0x60] sm:$0xff]
        %v259 = vld [vmem:[#allocation6 + $0x68] sm:$0xff]
        %v260 = vld [vmem:[#allocation6 + $0x70] sm:$0xff]
        %v261 = vld [vmem:[#allocation6 + $0x78] sm:$0xff]
        %262 = vmatprep.subr.mxu0 0.0
        %263 = vmatpush1.msra.mxu0 %v246
        %264 = vmatprep.subr.mxu0 0.0
        %265 = vmatpush1.msra.mxu0 %v247
        %266 = vmatprep.subr.mxu0 0.0
        %267 = vmatpush1.msra.mxu0 %v248
        %268 = vmatprep.subr.mxu0 0.0
        %269 = vmatpush1.msra.mxu0 %v249
        %270 = vmatprep.subr.mxu0 0.0
        %271 = vmatpush1.msra.mxu0 %v250
        %272 = vmatprep.subr.mxu0 0.0
        %273 = vmatpush1.msra.mxu0 %v251
        %274 = vmatprep.subr.mxu0 0.0
        %275 = vmatpush1.msra.mxu0 %v252
        %276 = vmatprep.subr.mxu0 0.0
        %277 = vmatpush1.msra.mxu0 %v253
        %278 = vmatprep.subr.mxu0 0.0
        %279 = vmatpush1.msra.mxu0 %v254
        %280 = vmatprep.subr.mxu0 0.0
        %281 = vmatpush1.msra.mxu0 %v255
        %282 = vmatprep.subr.mxu0 0.0
        %283 = vmatpush1.msra.mxu0 %v256
        %284 = vmatprep.subr.mxu0 0.0
        %285 = vmatpush1.msra.mxu0 %v257
        %286 = vmatprep.subr.mxu0 0.0
        %287 = vmatpush1.msra.mxu0 %v258
        %288 = vmatprep.subr.mxu0 0.0
        %289 = vmatpush1.msra.mxu0 %v259
        %290 = vmatprep.subr.mxu0 0.0
        %291 = vmatpush1.msra.mxu0 %v260
        %292 = vmatprep.subr.mxu0 0.0
        %293 = vmatpush1.msra.mxu0 %v261
        %294 = vmatprep.subr.mxu0 0.0
        %295 = vmatpush1.msra.mxu0 0.0
        %296 = vmatprep.subr.mxu0 0.0
        %297 = vmatpush1.msra.mxu0 0.0
        %298 = vmatprep.subr.mxu0 0.0
        %299 = vmatpush1.msra.mxu0 0.0
        %300 = vmatprep.subr.mxu0 0.0
        %301 = vmatpush1.msra.mxu0 0.0
        %302 = vmatprep.subr.mxu0 0.0
        %303 = vmatpush1.msra.mxu0 0.0
        %304 = vmatprep.subr.mxu0 0.0
        %305 = vmatpush1.msra.mxu0 0.0
        %306 = vmatprep.subr.mxu0 0.0
        %307 = vmatpush1.msra.mxu0 0.0
        %308 = vmatprep.subr.mxu0 0.0
        %309 = vmatpush1.msra.mxu0 0.0
        %310 = vmatprep.subr.mxu0 0.0
        %311 = vmatpush1.msra.mxu0 0.0
        %312 = vmatprep.subr.mxu0 0.0
        %313 = vmatpush1.msra.mxu0 0.0
        %314 = vmatprep.subr.mxu0 0.0
        %315 = vmatpush1.msra.mxu0 0.0
        %316 = vmatprep.subr.mxu0 0.0
        %317 = vmatpush1.msra.mxu0 0.0
        %318 = vmatprep.subr.mxu0 0.0
        %319 = vmatpush1.msra.mxu0 0.0
        %320 = vmatprep.subr.mxu0 0.0
        %321 = vmatpush1.msra.mxu0 0.0
        %322 = vmatprep.subr.mxu0 0.0
        %323 = vmatpush1.msra.mxu0 0.0
        %324 = vmatprep.subr.mxu0 0.0
        %325 = vmatpush1.msra.mxu0 0.0
        %326 = vmatprep.mubr.f32.mxu0 0.0
        %327 = vmatmul.mubr.f32.gmra.mrb[0].mxu0 %v244
        %v328 = vpop.f32.mrb[0].mxu0
        %v329 = vadd.f32 0.0, %v328
        %v330 = vpop.f32.mrb[0].mxu0
        %331 = vmatprep.mubr.f32.mxu0 0.0
        %332 = vmatmul.mubr.f32.gmra.mrb[0].mxu0 %v245
        %v333 = vpop.f32.mrb[0].mxu0
        %v334 = vadd.f32 0.0, %v333
        %v335 = vpop.f32.mrb[0].mxu0
        %336 = vdwg.mxu0
        %337 = vst [vmem:[#allocation2] sm:$0xff] %v329
        %338 = vst [vmem:[#allocation2 + $0x8] sm:$0xff] %v334
        %v339 = vld [vmem:[#allocation2] sm:$0xff]
        %v340 = vld [vmem:[#allocation2 + $0x8] sm:$0xff]
        %v341 = vld [vmem:[#allocation8] sm:$0x1]
        %v343 = vlaneseq
        %v344 = vshrl.u32 %v343, 7
        %v345 = vsub.s32 0, %v344
        %v346 = vrot.slane %v341, %v345
        %v348 = vadd.f32 %v339, %v346
        %v349 = vadd.f32 %v340, %v346
        %v350 = vmax.f32 %v348, 0.0
        %v351 = vmax.f32 %v349, 0.0
        %352 = vst [vmem:[%s243 + $0x10] sm:$0xff] %v350
        %353 = vst [vmem:[%s243 + $0x18] sm:$0xff] %v351
        %354 = vst [vmem:[%s243] sm:$0xff] 0.0
        %355 = vst [vmem:[%s243 + $0x8] sm:$0xff] 0.0
        %356 = vst [vmem:[%s243 + $0x20] sm:$0xff] 0.0
        %357 = vst [vmem:[%s243 + $0x28] sm:$0xff] 0.0
        %s358 = sand.u32 %s121, 1
        %s359 = scalar_lea.sflag [#allocation5], %s358
        %s360 = sand.u32 %s121, 1
        %s361 = smul.addr %s360, 48
        %s362 = scalar_lea.vmem [#allocation9], %s361
        // Predicated region
        $region45: #{jasper_forward.14} parent=31 // pred_check
          %p363 = pneg %p131
        $region46: #{jasper_forward.14} parent=31 // pred_check_branch
          %365 = sbr.rel (%p363) target = $region48
        $region47: #{jasper_forward.14} parent=31 // pred_region
          %s367 = ssub.s32 768, 768
          %368 = vsyncadd %s359, %s367
          %s369 = smul.addr %s25, 6
          %s370 = sadd.s32 %s26, %s369
          %s371 = smul.addr %s370, 128
          %s372 = scalar_lea.hbm %s3, %s371
          %s373 = sshll.u32 %s362, 4
          %s374 = int_to_ptr.vmem [resolvable:$true] %s373
          %379 = dma.vmem_to_hbm [thread:$0]  %s374, 768, %s372, %s359, 128, 128, 8
        $region48: #{jasper_forward.14} parent=31 // pred_fallthru
          _
      $region32: #{jasper_forward.14} parent=5 // pred_fallthru
        _
      %p380 = scmp.le.s32.totalorder 2, %s16
      // Predicated region
      $region49: #{jasper_forward.14} parent=5 // pred_check
        %p381 = pneg %p380
      $region50: #{jasper_forward.14} parent=5 // pred_check_branch
        %383 = sbr.rel (%p381) target = $region52
      $region51: #{jasper_forward.14} parent=5 // pred_region
        %s384 = ssub.s32 %s16, 2
        // Predicated region
        $region53: #{jasper_forward.14} parent=51 // pred_check
          %p385 = pneg %p137
        $region54: #{jasper_forward.14} parent=51 // pred_check_branch
          %387 = sbr.rel (%p385) target = $region56
        $region55: #{jasper_forward.14} parent=51 // pred_region
          %s388 = sand.u32 %s122, 1
          %s389 = scalar_lea.sflag [#allocation5], %s388
          %s390 = sand.u32 %s122, 1
          %s391 = smul.addr %s390, 48
          %s392 = scalar_lea.vmem [#allocation9], %s391
          %393 = dma.done %s389, 768
        $region56: #{jasper_forward.14} parent=51 // pred_fallthru
          _
      $region52: #{jasper_forward.14} parent=5 // pred_fallthru
        _
    $region6: #{jasper_forward.14} parent=1 // loop_footer
      %s20 = sadd.s32 1, %s16
    $region7: #{jasper_forward.14} parent=1 // loop_footer_branch
      %15 = sbr.rel target = $region3
    $region8: #{jasper_forward.14} parent=1 // loop_exit
      _
    %394 = vsyncpa [#allocation4], 1
    %s395 = scalar_lea.sflag [#allocation4], 1
    %396 = vsyncpa %s395, 1
    %397 = vsyncpa [#allocation7], 1
    %398 = vsyncpa [#allocation5], 1
    %s399 = scalar_lea.sflag [#allocation5], 1
    %400 = vsyncpa %s399, 1

// kernel: jasper_forward.15
$region0: #{jasper_forward.15}
  #allocation0 [shape = 'u32[]', space=smem, size = 0x4, offset = 0x4, fixed_abs, tag = 'smem constant byte address 0x4 - core index']
  #allocation1 [shape = 'u32[144,128]{1,0:T(1,128)}', space=vmem, size = 0x12000, scoped, tag = 'internal scratch']
  #allocation2 [shape = 'f32[16,128]{1,0:T(8,128)}', space=vmem, size = 0x2000, scoped, tag = 'scratch operand']
  %s0 = inlined_call_operand.hbm [shape: f32[2,48,128], index: 0, kind: input, shape index: {}]
  %s1 = inlined_call_operand.hbm [shape: f32[1,128,128], index: 1, kind: input, shape index: {}]
  %s2 = inlined_call_operand.hbm [shape: f32[1,128], index: 2, kind: input, shape index: {}]
  %s3 = inlined_call_operand.hbm [shape: f32[2,48,128], index: 3, kind: output, shape index: {}]
  %s4 = sld [smem:[#allocation0]]
  $region57: #{jasper_forward.15} parent=0
    _
  %s6 = ssub.s32 1, %s4
  %s7 = scalar_select 0, %s6, %s4
  $region1: #{jasper_forward.15} parent=0
    #allocation3 [shape = 'u8[49152]{0}', space=vmem, size = 0xc000, scoped, tag = 'input window, operand 0']
    #allocation4 [shape = 's32[2]{0}', space=sflag, size = 0x8, scoped, tag = 'scoped memory for jasper_forward.15']
    #allocation5 [shape = 's32[2]{0}', space=sflag, size = 0x8, scoped, tag = 'scoped memory for jasper_forward.15']
    #allocation6 [shape = 'u8[65536]{0}', space=vmem, size = 0x10000, scoped, tag = 'input window, operand 1, single buffered']
    #allocation7 [shape = 's32[1]{0}', space=sflag, size = 0x4, scoped, tag = 'scoped memory for jasper_forward.15']
    #allocation8 [shape = 'u8[512]{0}', space=vmem, size = 0x400, scoped, tag = 'input window, operand 2, single buffered']
    #allocation9 [shape = 'u8[49152]{0}', space=vmem, size = 0xc000, scoped, tag = 'output window, operand 0']
    %8 = vsyncpa [#allocation4], 0
    %s9 = scalar_lea.sflag [#allocation4], 1
    %10 = vsyncpa %s9, 0
    %11 = vsyncpa [#allocation7], 0
    %12 = vsyncpa [#allocation5], 0
    %s13 = scalar_lea.sflag [#allocation5], 1
    %14 = vsyncpa %s13, 0
    loop: start=0, step=1, limit=4
    $region2: #{jasper_forward.15} parent=1 // loop_pre_header
      _
    $region3: #{jasper_forward.15} parent=1 // loop_header
      %s16 = sphi 0, %s20
      %p17 = scmp.ge.s32.totalorder %s16, 4
      %s23 = sphi 0, %s35
      %s24 = sphi 0, %s31
      %s25 = sphi 0, %s23
      %s26 = sphi 0, %s24
      %s27 = sphi 0, %s25
      %s28 = sphi 0, %s26
      %s38 = sphi 0, %s40
      %s41 = sphi 0, %s38
      %s42 = sphi 0, %s41
      %s58 = sphi 0, %s42
      %s64 = sphi 0, %s66
      %s67 = sphi 0, %s64
      %s68 = sphi 0, %s67
      %s84 = sphi 0, %s68
      %s90 = sphi 0, %s92
      %s93 = sphi 0, %s90
      %s94 = sphi 0, %s93
      %s110 = sphi 0, %s94
      %s118 = sphi 0, %s120
      %s121 = sphi 0, %s118
      %s122 = sphi 0, %s121
      %s138 = sphi 0, %s122
    $region4: #{jasper_forward.15} parent=1 // loop_header_branch
      %19 = sbr.rel (%p17) target = $region8
    $region5: #{jasper_forward.15} parent=1 // loop_body
      %s21 = ssub.s32 %s16, 1
      %s22 = ssub.s32 %s16, 2
      %s29 = sadd.s32 1, %s24
      %p30 = scmp.ge.s32.totalorder %s29, 1
      %s31 = scalar_select %p30, 0, %s29
      %s32 = sadd.s32 1, %s23
      %s33 = scalar_select %p30, %s32, %s23
      %p34 = scmp.ge.s32.totalorder %s33, 2
      %s35 = scalar_select %p34, 0, %s33
      %s36 = ssub.s32 %s23, %s35
      %p37 = scmp.eq.s32.totalorder %s36, 0
      %s39 = sadd.s32 %s38, 1
      %s40 = scalar_select %p37, %s38, %s39
      %p43 = pneg %p37
      %p44 = scmp.eq.s32.totalorder %s16, 1
      %p45 = por %p43, %p44
      %p46 = scmp.ne.s32.totalorder %s38, %s41
      %p47 = scmp.eq.s32.totalorder %s16, 0
      %p48 = por %p46, %p47
      %p49 = scmp.ne.s32.totalorder %s38, %s41
      %p50 = scmp.eq.s32.totalorder %s21, 1
      %p51 = por %p49, %p50
      %p52 = scmp.ne.s32.totalorder %s41, %s42
      %p53 = scmp.eq.s32.totalorder %s21, 0
      %p54 = por %p52, %p53
      %p55 = scmp.ne.s32.totalorder %s41, %s42
      %p56 = scmp.eq.s32.totalorder %s22, 1
      %p57 = por %p55, %p56
      %p59 = scmp.ne.s32.totalorder %s42, %s58
      %p60 = scmp.eq.s32.totalorder %s22, 0
      %p61 = por %p59, %p60
      %s62 = ssub.s32 %s24, %s31
      %p63 = scmp.eq.s32.totalorder %s62, 0
      %s65 = sadd.s32 %s64, 1
      %s66 = scalar_select %p63, %s64, %s65
      %p69 = pneg %p63
      %p70 = scmp.eq.s32.totalorder %s16, 1
      %p71 = por %p69, %p70
      %p72 = scmp.ne.s32.totalorder %s64, %s67
      %p73 = scmp.eq.s32.totalorder %s16, 0
      %p74 = por %p72, %p73
      %p75 = scmp.ne.s32.totalorder %s64, %s67
      %p76 = scmp.eq.s32.totalorder %s21, 1
      %p77 = por %p75, %p76
      %p78 = scmp.ne.s32.totalorder %s67, %s68
      %p79 = scmp.eq.s32.totalorder %s21, 0
      %p80 = por %p78, %p79
      %p81 = scmp.ne.s32.totalorder %s67, %s68
      %p82 = scmp.eq.s32.totalorder %s22, 1
      %p83 = por %p81, %p82
      %p85 = scmp.ne.s32.totalorder %s68, %s84
      %p86 = scmp.eq.s32.totalorder %s22, 0
      %p87 = por %p85, %p86
      %s88 = ssub.s32 %s24, %s31
      %p89 = scmp.eq.s32.totalorder %s88, 0
      %s91 = sadd.s32 %s90, 1
      %s92 = scalar_select %p89, %s90, %s91
      %p95 = pneg %p89
      %p96 = scmp.eq.s32.totalorder %s16, 1
      %p97 = por %p95, %p96
      %p98 = scmp.ne.s32.totalorder %s90, %s93
      %p99 = scmp.eq.s32.totalorder %s16, 0
      %p100 = por %p98, %p99
      %p101 = scmp.ne.s32.totalorder %s90, %s93
      %p102 = scmp.eq.s32.totalorder %s21, 1
      %p103 = por %p101, %p102
      %p104 = scmp.ne.s32.totalorder %s93, %s94
      %p105 = scmp.eq.s32.totalorder %s21, 0
      %p106 = por %p104, %p105
      %p107 = scmp.ne.s32.totalorder %s93, %s94
      %p108 = scmp.eq.s32.totalorder %s22, 1
      %p109 = por %p107, %p108
      %p111 = scmp.ne.s32.totalorder %s94, %s110
      %p112 = scmp.eq.s32.totalorder %s22, 0
      %p113 = por %p111, %p112
      %s114 = ssub.s32 %s23, %s35
      %s115 = ssub.s32 %s24, %s31
      %s116 = sor.u32 %s114, %s115
      %p117 = scmp.eq.s32.totalorder %s116, 0
      %s119 = sadd.s32 %s118, 1
      %s120 = scalar_select %p117, %s118, %s119
      %p123 = pneg %p117
      %p124 = scmp.eq.s32.totalorder %s16, 1
      %p125 = por %p123, %p124
      %p126 = scmp.ne.s32.totalorder %s118, %s121
      %p127 = scmp.eq.s32.totalorder %s16, 0
      %p128 = por %p126, %p127
      %p129 = scmp.ne.s32.totalorder %s118, %s121
      %p130 = scmp.eq.s32.totalorder %s21, 1
      %p131 = por %p129, %p130
      %p132 = scmp.ne.s32.totalorder %s121, %s122
      %p133 = scmp.eq.s32.totalorder %s21, 0
      %p134 = por %p132, %p133
      %p135 = scmp.ne.s32.totalorder %s121, %s122
      %p136 = scmp.eq.s32.totalorder %s22, 1
      %p137 = por %p135, %p136
      %p139 = scmp.ne.s32.totalorder %s122, %s138
      %p140 = scmp.eq.s32.totalorder %s22, 0
      %p141 = por %p139, %p140
      %p142 = scmp.le.s32.totalorder 1, %s16
      %p143 = scmp.lt.s32.totalorder %s16, 3
      %p144 = pnand %p142, %p143
      %p145 = pneg %p144
      // Predicated region
      $region9: #{jasper_forward.15} parent=5 // pred_check
        _
      $region10: #{jasper_forward.15} parent=5 // pred_check_branch
        %147 = sbr.rel (%p144) target = $region12
      $region11: #{jasper_forward.15} parent=5 // pred_region
        %s148 = ssub.s32 %s16, 1
        // Predicated region
        $region13: #{jasper_forward.15} parent=11 // pred_check
          %p149 = pneg %p80
        $region14: #{jasper_forward.15} parent=11 // pred_check_branch
          %151 = sbr.rel (%p149) target = $region16
        $region15: #{jasper_forward.15} parent=11 // pred_region
          %s153 = ssub.s32 2048, 2048
          %154 = vsyncadd [#allocation7], %s153
          %s155 = smul.addr %s26, 128
          %s156 = scalar_lea.hbm %s1, %s155
          %s157 = sshll.u32 [#allocation6], 4
          %s158 = int_to_ptr.vmem [resolvable:$true] %s157
          %163 = dma.hbm_to_vmem [thread:$0]  %s156, 2048, %s158, [#allocation7], 128, 128, 8
        $region16: #{jasper_forward.15} parent=11 // pred_fallthru
          _
        // Predicated region
        $region17: #{jasper_forward.15} parent=11 // pred_check
          %p164 = pneg %p106
        $region18: #{jasper_forward.15} parent=11 // pred_check_branch
          %166 = sbr.rel (%p164) target = $region20
        $region19: #{jasper_forward.15} parent=11 // pred_region
          %s168 = ssub.s32 16, 16
          %169 = vsyncadd [#allocation7], %s168
          %s170 = smul.addr %s26, 16
          %s171 = scalar_lea.hbm %s2, %s170
          %s173 = sshll.u32 [#allocation8], 4
          %s174 = int_to_ptr.vmem [resolvable:$true] %s173
          %176 = dma.hbm_to_vmem [thread:$0]  %s171, 16, %s174, [#allocation7]
        $region20: #{jasper_forward.15} parent=11 // pred_fallthru
          _
      $region12: #{jasper_forward.15} parent=5 // pred_fallthru
        _
      %p177 = scmp.lt.s32.totalorder %s16, 2
      // Predicated region
      $region21: #{jasper_forward.15} parent=5 // pred_check
        %p178 = pneg %p177
      $region22: #{jasper_forward.15} parent=5 // pred_check_branch
        %180 = sbr.rel (%p178) target = $region24
      $region23: #{jasper_forward.15} parent=5 // pred_region
        // Predicated region
        $region25: #{jasper_forward.15} parent=23 // pred_check
          %p181 = pneg %p48
        $region26: #{jasper_forward.15} parent=23 // pred_check_branch
          %183 = sbr.rel (%p181) target = $region28
        $region27: #{jasper_forward.15} parent=23 // pred_region
          %s184 = sand.u32 %s38, 1
          %s185 = scalar_lea.sflag [#allocation4], %s184
          %s186 = sand.u32 %s38, 1
          %s187 = smul.addr %s186, 48
          %s188 = scalar_lea.vmem [#allocation3], %s187
          %s190 = ssub.s32 768, 768
          %191 = vsyncadd %s185, %s190
          %s192 = smul.addr %s23, 6
          %s193 = smul.addr %s192, 128
          %s194 = scalar_lea.hbm %s0, %s193
          %s195 = sshll.u32 %s188, 4
          %s196 = int_to_ptr.vmem [resolvable:$true] %s195
          %201 = dma.hbm_to_vmem [thread:$0]  %s194, 768, %s196, %s185, 128, 128, 8
        $region28: #{jasper_forward.15} parent=23 // pred_fallthru
          _
      $region24: #{jasper_forward.15} parent=5 // pred_fallthru
        _
      %p202 = scmp.le.s32.totalorder 1, %s16
      %p203 = scmp.lt.s32.totalorder %s16, 3
      %p204 = pnand %p202, %p203
      %p205 = pneg %p204
      // Predicated region
      $region29: #{jasper_forward.15} parent=5 // pred_check
        _
      $region30: #{jasper_forward.15} parent=5 // pred_check_branch
        %207 = sbr.rel (%p204) target = $region32
      $region31: #{jasper_forward.15} parent=5 // pred_region
        %s208 = ssub.s32 %s16, 1
        %s209 = sand.u32 %s41, 1
        %s210 = scalar_lea.sflag [#allocation4], %s209
        %s211 = sand.u32 %s41, 1
        %s212 = smul.addr %s211, 48
        %s213 = scalar_lea.vmem [#allocation3], %s212
        // Predicated region
        $region33: #{jasper_forward.15} parent=31 // pred_check
          %p214 = pneg %p54
        $region34: #{jasper_forward.15} parent=31 // pred_check_branch
          %216 = sbr.rel (%p214) target = $region36
        $region35: #{jasper_forward.15} parent=31 // pred_region
          %217 = dma.done %s210, 768
        $region36: #{jasper_forward.15} parent=31 // pred_fallthru
          _
        // Predicated region
        $region37: #{jasper_forward.15} parent=31 // pred_check
          %p218 = pneg %p80
        $region38: #{jasper_forward.15} parent=31 // pred_check_branch
          %220 = sbr.rel (%p218) target = $region40
        $region39: #{jasper_forward.15} parent=31 // pred_region
          %221 = dma.done [#allocation7], 2048
        $region40: #{jasper_forward.15} parent=31 // pred_fallthru
          _
        // Predicated region
        $region41: #{jasper_forward.15} parent=31 // pred_check
          %p222 = pneg %p106
        $region42: #{jasper_forward.15} parent=31 // pred_check_branch
          %224 = sbr.rel (%p222) target = $region44
        $region43: #{jasper_forward.15} parent=31 // pred_region
          %225 = dma.done [#allocation7], 16
        $region44: #{jasper_forward.15} parent=31 // pred_fallthru
          _
        %s226 = sand.u32 %s41, 1
        %s227 = scalar_lea.sflag [#allocation4], %s226
        %s228 = sand.u32 %s41, 1
        %s229 = smul.addr %s228, 48
        %s230 = scalar_lea.vmem [#allocation3], %s229
        %p231 = pneg %p54
        %p232 = pneg %p51
        %p233 = pneg %p80
        %p234 = pneg %p77
        %p235 = pneg %p106
        %p236 = pneg %p103
        %p237 = pneg %p134
        %p238 = pneg %p131
        %s239 = sand.u32 %s121, 1
        %s240 = scalar_lea.sflag [#allocation5], %s239
        %s241 = sand.u32 %s121, 1
        %s242 = smul.addr %s241, 48
        %s243 = scalar_lea.vmem [#allocation9], %s242
        %v244 = vld [vmem:[%s213 + $0x10] sm:$0xff]
        %v245 = vld [vmem:[%s213 + $0x18] sm:$0xff]
        %v246 = vld [vmem:[#allocation6] sm:$0xff]
        %v247 = vld [vmem:[#allocation6 + $0x8] sm:$0xff]
        %v248 = vld [vmem:[#allocation6 + $0x10] sm:$0xff]
        %v249 = vld [vmem:[#allocation6 + $0x18] sm:$0xff]
        %v250 = vld [vmem:[#allocation6 + $0x20] sm:$0xff]
        %v251 = vld [vmem:[#allocation6 + $0x28] sm:$0xff]
        %v252 = vld [vmem:[#allocation6 + $0x30] sm:$0xff]
        %v253 = vld [vmem:[#allocation6 + $0x38] sm:$0xff]
        %v254 = vld [vmem:[#allocation6 + $0x40] sm:$0xff]
        %v255 = vld [vmem:[#allocation6 + $0x48] sm:$0xff]
        %v256 = vld [vmem:[#allocation6 + $0x50] sm:$0xff]
        %v257 = vld [vmem:[#allocation6 + $0x58] sm:$0xff]
        %v258 = vld [vmem:[#allocation6 + $0x60] sm:$0xff]
        %v259 = vld [vmem:[#allocation6 + $0x68] sm:$0xff]
        %v260 = vld [vmem:[#allocation6 + $0x70] sm:$0xff]
        %v261 = vld [vmem:[#allocation6 + $0x78] sm:$0xff]
        %262 = vmatprep.subr.mxu0 0.0
        %263 = vmatpush1.msra.mxu0 %v246
        %264 = vmatprep.subr.mxu0 0.0
        %265 = vmatpush1.msra.mxu0 %v247
        %266 = vmatprep.subr.mxu0 0.0
        %267 = vmatpush1.msra.mxu0 %v248
        %268 = vmatprep.subr.mxu0 0.0
        %269 = vmatpush1.msra.mxu0 %v249
        %270 = vmatprep.subr.mxu0 0.0
        %271 = vmatpush1.msra.mxu0 %v250
        %272 = vmatprep.subr.mxu0 0.0
        %273 = vmatpush1.msra.mxu0 %v251
        %274 = vmatprep.subr.mxu0 0.0
        %275 = vmatpush1.msra.mxu0 %v252
        %276 = vmatprep.subr.mxu0 0.0
        %277 = vmatpush1.msra.mxu0 %v253
        %278 = vmatprep.subr.mxu0 0.0
        %279 = vmatpush1.msra.mxu0 %v254
        %280 = vmatprep.subr.mxu0 0.0
        %281 = vmatpush1.msra.mxu0 %v255
        %282 = vmatprep.subr.mxu0 0.0
        %283 = vmatpush1.msra.mxu0 %v256
        %284 = vmatprep.subr.mxu0 0.0
        %285 = vmatpush1.msra.mxu0 %v257
        %286 = vmatprep.subr.mxu0 0.0
        %287 = vmatpush1.msra.mxu0 %v258
        %288 = vmatprep.subr.mxu0 0.0
        %289 = vmatpush1.msra.mxu0 %v259
        %290 = vmatprep.subr.mxu0 0.0
        %291 = vmatpush1.msra.mxu0 %v260
        %292 = vmatprep.subr.mxu0 0.0
        %293 = vmatpush1.msra.mxu0 %v261
        %294 = vmatprep.subr.mxu0 0.0
        %295 = vmatpush1.msra.mxu0 0.0
        %296 = vmatprep.subr.mxu0 0.0
        %297 = vmatpush1.msra.mxu0 0.0
        %298 = vmatprep.subr.mxu0 0.0
        %299 = vmatpush1.msra.mxu0 0.0
        %300 = vmatprep.subr.mxu0 0.0
        %301 = vmatpush1.msra.mxu0 0.0
        %302 = vmatprep.subr.mxu0 0.0
        %303 = vmatpush1.msra.mxu0 0.0
        %304 = vmatprep.subr.mxu0 0.0
        %305 = vmatpush1.msra.mxu0 0.0
        %306 = vmatprep.subr.mxu0 0.0
        %307 = vmatpush1.msra.mxu0 0.0
        %308 = vmatprep.subr.mxu0 0.0
        %309 = vmatpush1.msra.mxu0 0.0
        %310 = vmatprep.subr.mxu0 0.0
        %311 = vmatpush1.msra.mxu0 0.0
        %312 = vmatprep.subr.mxu0 0.0
        %313 = vmatpush1.msra.mxu0 0.0
        %314 = vmatprep.subr.mxu0 0.0
        %315 = vmatpush1.msra.mxu0 0.0
        %316 = vmatprep.subr.mxu0 0.0
        %317 = vmatpush1.msra.mxu0 0.0
        %318 = vmatprep.subr.mxu0 0.0
        %319 = vmatpush1.msra.mxu0 0.0
        %320 = vmatprep.subr.mxu0 0.0
        %321 = vmatpush1.msra.mxu0 0.0
        %322 = vmatprep.subr.mxu0 0.0
        %323 = vmatpush1.msra.mxu0 0.0
        %324 = vmatprep.subr.mxu0 0.0
        %325 = vmatpush1.msra.mxu0 0.0
        %326 = vmatprep.mubr.f32.mxu0 0.0
        %327 = vmatmul.mubr.f32.gmra.mrb[0].mxu0 %v244
        %v328 = vpop.f32.mrb[0].mxu0
        %v329 = vadd.f32 0.0, %v328
        %v330 = vpop.f32.mrb[0].mxu0
        %331 = vmatprep.mubr.f32.mxu0 0.0
        %332 = vmatmul.mubr.f32.gmra.mrb[0].mxu0 %v245
        %v333 = vpop.f32.mrb[0].mxu0
        %v334 = vadd.f32 0.0, %v333
        %v335 = vpop.f32.mrb[0].mxu0
        %336 = vdwg.mxu0
        %337 = vst [vmem:[#allocation2] sm:$0xff] %v329
        %338 = vst [vmem:[#allocation2 + $0x8] sm:$0xff] %v334
        %v339 = vld [vmem:[#allocation2] sm:$0xff]
        %v340 = vld [vmem:[#allocation2 + $0x8] sm:$0xff]
        %v341 = vld [vmem:[#allocation8] sm:$0x1]
        %v343 = vlaneseq
        %v344 = vshrl.u32 %v343, 7
        %v345 = vsub.s32 0, %v344
        %v346 = vrot.slane %v341, %v345
        %v348 = vadd.f32 %v339, %v346
        %v349 = vadd.f32 %v340, %v346
        %350 = vst [vmem:[%s243 + $0x10] sm:$0xff] %v348
        %351 = vst [vmem:[%s243 + $0x18] sm:$0xff] %v349
        %352 = vst [vmem:[%s243] sm:$0xff] 0.0
        %353 = vst [vmem:[%s243 + $0x8] sm:$0xff] 0.0
        %354 = vst [vmem:[%s243 + $0x20] sm:$0xff] 0.0
        %355 = vst [vmem:[%s243 + $0x28] sm:$0xff] 0.0
        %s356 = sand.u32 %s121, 1
        %s357 = scalar_lea.sflag [#allocation5], %s356
        %s358 = sand.u32 %s121, 1
        %s359 = smul.addr %s358, 48
        %s360 = scalar_lea.vmem [#allocation9], %s359
        // Predicated region
        $region45: #{jasper_forward.15} parent=31 // pred_check
          %p361 = pneg %p131
        $region46: #{jasper_forward.15} parent=31 // pred_check_branch
          %363 = sbr.rel (%p361) target = $region48
        $region47: #{jasper_forward.15} parent=31 // pred_region
          %s365 = ssub.s32 768, 768
          %366 = vsyncadd %s357, %s365
          %s367 = smul.addr %s25, 6
          %s368 = sadd.s32 %s26, %s367
          %s369 = smul.addr %s368, 128
          %s370 = scalar_lea.hbm %s3, %s369
          %s371 = sshll.u32 %s360, 4
          %s372 = int_to_ptr.vmem [resolvable:$true] %s371
          %377 = dma.vmem_to_hbm [thread:$0]  %s372, 768, %s370, %s357, 128, 128, 8
        $region48: #{jasper_forward.15} parent=31 // pred_fallthru
          _
      $region32: #{jasper_forward.15} parent=5 // pred_fallthru
        _
      %p378 = scmp.le.s32.totalorder 2, %s16
      // Predicated region
      $region49: #{jasper_forward.15} parent=5 // pred_check
        %p379 = pneg %p378
      $region50: #{jasper_forward.15} parent=5 // pred_check_branch
        %381 = sbr.rel (%p379) target = $region52
      $region51: #{jasper_forward.15} parent=5 // pred_region
        %s382 = ssub.s32 %s16, 2
        // Predicated region
        $region53: #{jasper_forward.15} parent=51 // pred_check
          %p383 = pneg %p137
        $region54: #{jasper_forward.15} parent=51 // pred_check_branch
          %385 = sbr.rel (%p383) target = $region56
        $region55: #{jasper_forward.15} parent=51 // pred_region
          %s386 = sand.u32 %s122, 1
          %s387 = scalar_lea.sflag [#allocation5], %s386
          %s388 = sand.u32 %s122, 1
          %s389 = smul.addr %s388, 48
          %s390 = scalar_lea.vmem [#allocation9], %s389
          %391 = dma.done %s387, 768
        $region56: #{jasper_forward.15} parent=51 // pred_fallthru
          _
      $region52: #{jasper_forward.15} parent=5 // pred_fallthru
        _
    $region6: #{jasper_forward.15} parent=1 // loop_footer
      %s20 = sadd.s32 1, %s16
    $region7: #{jasper_forward.15} parent=1 // loop_footer_branch
      %15 = sbr.rel target = $region3
    $region8: #{jasper_forward.15} parent=1 // loop_exit
      _
    %392 = vsyncpa [#allocation4], 1
    %s393 = scalar_lea.sflag [#allocation4], 1
    %394 = vsyncpa %s393, 1
    %395 = vsyncpa [#allocation7], 1
    %396 = vsyncpa [#allocation5], 1
    %s397 = scalar_lea.sflag [#allocation5], 1
    %398 = vsyncpa %s397, 1

// kernel: jasper_forward.12
$region0: #{jasper_forward.12}
  #allocation0 [shape = 'u32[]', space=smem, size = 0x4, offset = 0x4, fixed_abs, tag = 'smem constant byte address 0x4 - core index']
  #allocation1 [shape = 'u32[144,128]{1,0:T(1,128)}', space=vmem, size = 0x12000, scoped, tag = 'internal scratch']
  #allocation2 [shape = 'f32[16,128]{1,0:T(8,128)}', space=vmem, size = 0x2000, scoped, tag = 'scratch operand']
  %s0 = inlined_call_operand.hbm [shape: f32[2,48,128], index: 0, kind: input, shape index: {}]
  %s1 = inlined_call_operand.hbm [shape: f32[5,128,128], index: 1, kind: input, shape index: {}]
  %s2 = inlined_call_operand.hbm [shape: f32[1,128], index: 2, kind: input, shape index: {}]
  %s3 = inlined_call_operand.hbm [shape: f32[2,48,128], index: 3, kind: input, shape index: {}]
  %s4 = inlined_call_operand.hbm [shape: f32[1,128,128], index: 4, kind: input, shape index: {}]
  %s5 = inlined_call_operand.hbm [shape: f32[1,128], index: 5, kind: input, shape index: {}]
  %s6 = inlined_call_operand.hbm [shape: f32[2,48,128], index: 6, kind: output, shape index: {}]
  %s7 = sld [smem:[#allocation0]]
  $region81: #{jasper_forward.12} parent=0
    _
  %s9 = ssub.s32 1, %s7
  %s10 = scalar_select 0, %s9, %s7
  $region1: #{jasper_forward.12} parent=0
    #allocation3 [shape = 'u8[49152]{0}', space=vmem, size = 0xc000, scoped, tag = 'input window, operand 0']
    #allocation4 [shape = 's32[2]{0}', space=sflag, size = 0x8, scoped, tag = 'scoped memory for jasper_forward.12']
    #allocation5 [shape = 's32[2]{0}', space=sflag, size = 0x8, scoped, tag = 'scoped memory for jasper_forward.12']
    #allocation6 [shape = 'u8[327680]{0}', space=vmem, size = 0x50000, scoped, tag = 'input window, operand 1, single buffered']
    #allocation7 [shape = 's32[1]{0}', space=sflag, size = 0x4, scoped, tag = 'scoped memory for jasper_forward.12']
    #allocation8 [shape = 'u8[512]{0}', space=vmem, size = 0x400, scoped, tag = 'input window, operand 2, single buffered']
    #allocation9 [shape = 'u8[49152]{0}', space=vmem, size = 0xc000, scoped, tag = 'input window, operand 3']
    #allocation10 [shape = 's32[2]{0}', space=sflag, size = 0x8, scoped, tag = 'scoped memory for jasper_forward.12']
    #allocation11 [shape = 'u8[65536]{0}', space=vmem, size = 0x10000, scoped, tag = 'input window, operand 4, single buffered']
    #allocation12 [shape = 'u8[512]{0}', space=vmem, size = 0x400, scoped, tag = 'input window, operand 5, single buffered']
    #allocation13 [shape = 's32[1]{0}', space=sflag, size = 0x4, scoped, tag = 'scoped memory for jasper_forward.12']
    #allocation14 [shape = 'u8[49152]{0}', space=vmem, size = 0xc000, scoped, tag = 'output window, operand 0']
    %11 = vsyncpa [#allocation4], 0
    %s12 = scalar_lea.sflag [#allocation4], 1
    %13 = vsyncpa %s12, 0
    %14 = vsyncpa [#allocation7], 0
    %15 = vsyncpa [#allocation10], 0
    %s16 = scalar_lea.sflag [#allocation10], 1
    %17 = vsyncpa %s16, 0
    %18 = vsyncpa [#allocation13], 0
    %19 = vsyncpa [#allocation5], 0
    %s20 = scalar_lea.sflag [#allocation5], 1
    %21 = vsyncpa %s20, 0
    loop: start=0, step=1, limit=4
    $region2: #{jasper_forward.12} parent=1 // loop_pre_header
      _
    $region3: #{jasper_forward.12} parent=1 // loop_header
      %s23 = sphi 0, %s27
      %p24 = scmp.ge.s32.totalorder %s23, 4
      %s30 = sphi 0, %s42
      %s31 = sphi 0, %s38
      %s32 = sphi 0, %s30
      %s33 = sphi 0, %s31
      %s34 = sphi 0, %s32
      %s35 = sphi 0, %s33
      %s45 = sphi 0, %s47
      %s48 = sphi 0, %s45
      %s49 = sphi 0, %s48
      %s65 = sphi 0, %s49
      %s71 = sphi 0, %s73
      %s74 = sphi 0, %s71
      %s75 = sphi 0, %s74
      %s91 = sphi 0, %s75
      %s97 = sphi 0, %s99
      %s100 = sphi 0, %s97
      %s101 = sphi 0, %s100
      %s117 = sphi 0, %s101
      %s123 = sphi 0, %s125
      %s126 = sphi 0, %s123
      %s127 = sphi 0, %s126
      %s143 = sphi 0, %s127
      %s149 = sphi 0, %s151
      %s152 = sphi 0, %s149
      %s153 = sphi 0, %s152
      %s169 = sphi 0, %s153
      %s175 = sphi 0, %s177
      %s178 = sphi 0, %s175
      %s179 = sphi 0, %s178
      %s195 = sphi 0, %s179
      %s203 = sphi 0, %s205
      %s206 = sphi 0, %s203
      %s207 = sphi 0, %s206
      %s223 = sphi 0, %s207
    $region4: #{jasper_forward.12} parent=1 // loop_header_branch
      %26 = sbr.rel (%p24) target = $region8
    $region5: #{jasper_forward.12} parent=1 // loop_body
      %s28 = ssub.s32 %s23, 1
      %s29 = ssub.s32 %s23, 2
      %s36 = sadd.s32 1, %s31
      %p37 = scmp.ge.s32.totalorder %s36, 1
      %s38 = scalar_select %p37, 0, %s36
      %s39 = sadd.s32 1, %s30
      %s40 = scalar_select %p37, %s39, %s30
      %p41 = scmp.ge.s32.totalorder %s40, 2
      %s42 = scalar_select %p41, 0, %s40
      %s43 = ssub.s32 %s30, %s42
      %p44 = scmp.eq.s32.totalorder %s43, 0
      %s46 = sadd.s32 %s45, 1
      %s47 = scalar_select %p44, %s45, %s46
      %p50 = pneg %p44
      %p51 = scmp.eq.s32.totalorder %s23, 1
      %p52 = por %p50, %p51
      %p53 = scmp.ne.s32.totalorder %s45, %s48
      %p54 = scmp.eq.s32.totalorder %s23, 0
      %p55 = por %p53, %p54
      %p56 = scmp.ne.s32.totalorder %s45, %s48
      %p57 = scmp.eq.s32.totalorder %s28, 1
      %p58 = por %p56, %p57
      %p59 = scmp.ne.s32.totalorder %s48, %s49
      %p60 = scmp.eq.s32.totalorder %s28, 0
      %p61 = por %p59, %p60
      %p62 = scmp.ne.s32.totalorder %s48, %s49
      %p63 = scmp.eq.s32.totalorder %s29, 1
      %p64 = por %p62, %p63
      %p66 = scmp.ne.s32.totalorder %s49, %s65
      %p67 = scmp.eq.s32.totalorder %s29, 0
      %p68 = por %p66, %p67
      %s69 = ssub.s32 %s31, %s38
      %p70 = scmp.eq.s32.totalorder %s69, 0
      %s72 = sadd.s32 %s71, 1
      %s73 = scalar_select %p70, %s71, %s72
      %p76 = pneg %p70
      %p77 = scmp.eq.s32.totalorder %s23, 1
      %p78 = por %p76, %p77
      %p79 = scmp.ne.s32.totalorder %s71, %s74
      %p80 = scmp.eq.s32.totalorder %s23, 0
      %p81 = por %p79, %p80
      %p82 = scmp.ne.s32.totalorder %s71, %s74
      %p83 = scmp.eq.s32.totalorder %s28, 1
      %p84 = por %p82, %p83
      %p85 = scmp.ne.s32.totalorder %s74, %s75
      %p86 = scmp.eq.s32.totalorder %s28, 0
      %p87 = por %p85, %p86
      %p88 = scmp.ne.s32.totalorder %s74, %s75
      %p89 = scmp.eq.s32.totalorder %s29, 1
      %p90 = por %p88, %p89
      %p92 = scmp.ne.s32.totalorder %s75, %s91
      %p93 = scmp.eq.s32.totalorder %s29, 0
      %p94 = por %p92, %p93
      %s95 = ssub.s32 %s31, %s38
      %p96 = scmp.eq.s32.totalorder %s95, 0
      %s98 = sadd.s32 %s97, 1
      %s99 = scalar_select %p96, %s97, %s98
      %p102 = pneg %p96
      %p103 = scmp.eq.s32.totalorder %s23, 1
      %p104 = por %p102, %p103
      %p105 = scmp.ne.s32.totalorder %s97, %s100
      %p106 = scmp.eq.s32.totalorder %s23, 0
      %p107 = por %p105, %p106
      %p108 = scmp.ne.s32.totalorder %s97, %s100
      %p109 = scmp.eq.s32.totalorder %s28, 1
      %p110 = por %p108, %p109
      %p111 = scmp.ne.s32.totalorder %s100, %s101
      %p112 = scmp.eq.s32.totalorder %s28, 0
      %p113 = por %p111, %p112
      %p114 = scmp.ne.s32.totalorder %s100, %s101
      %p115 = scmp.eq.s32.totalorder %s29, 1
      %p116 = por %p114, %p115
      %p118 = scmp.ne.s32.totalorder %s101, %s117
      %p119 = scmp.eq.s32.totalorder %s29, 0
      %p120 = por %p118, %p119
      %s121 = ssub.s32 %s30, %s42
      %p122 = scmp.eq.s32.totalorder %s121, 0
      %s124 = sadd.s32 %s123, 1
      %s125 = scalar_select %p122, %s123, %s124
      %p128 = pneg %p122
      %p129 = scmp.eq.s32.totalorder %s23, 1
      %p130 = por %p128, %p129
      %p131 = scmp.ne.s32.totalorder %s123, %s126
      %p132 = scmp.eq.s32.totalorder %s23, 0
      %p133 = por %p131, %p132
      %p134 = scmp.ne.s32.totalorder %s123, %s126
      %p135 = scmp.eq.s32.totalorder %s28, 1
      %p136 = por %p134, %p135
      %p137 = scmp.ne.s32.totalorder %s126, %s127
      %p138 = scmp.eq.s32.totalorder %s28, 0
      %p139 = por %p137, %p138
      %p140 = scmp.ne.s32.totalorder %s126, %s127
      %p141 = scmp.eq.s32.totalorder %s29, 1
      %p142 = por %p140, %p141
      %p144 = scmp.ne.s32.totalorder %s127, %s143
      %p145 = scmp.eq.s32.totalorder %s29, 0
      %p146 = por %p144, %p145
      %s147 = ssub.s32 %s31, %s38
      %p148 = scmp.eq.s32.totalorder %s147, 0
      %s150 = sadd.s32 %s149, 1
      %s151 = scalar_select %p148, %s149, %s150
      %p154 = pneg %p148
      %p155 = scmp.eq.s32.totalorder %s23, 1
      %p156 = por %p154, %p155
      %p157 = scmp.ne.s32.totalorder %s149, %s152
      %p158 = scmp.eq.s32.totalorder %s23, 0
      %p159 = por %p157, %p158
      %p160 = scmp.ne.s32.totalorder %s149, %s152
      %p161 = scmp.eq.s32.totalorder %s28, 1
      %p162 = por %p160, %p161
      %p163 = scmp.ne.s32.totalorder %s152, %s153
      %p164 = scmp.eq.s32.totalorder %s28, 0
      %p165 = por %p163, %p164
      %p166 = scmp.ne.s32.totalorder %s152, %s153
      %p167 = scmp.eq.s32.totalorder %s29, 1
      %p168 = por %p166, %p167
      %p170 = scmp.ne.s32.totalorder %s153, %s169
      %p171 = scmp.eq.s32.totalorder %s29, 0
      %p172 = por %p170, %p171
      %s173 = ssub.s32 %s31, %s38
      %p174 = scmp.eq.s32.totalorder %s173, 0
      %s176 = sadd.s32 %s175, 1
      %s177 = scalar_select %p174, %s175, %s176
      %p180 = pneg %p174
      %p181 = scmp.eq.s32.totalorder %s23, 1
      %p182 = por %p180, %p181
      %p183 = scmp.ne.s32.totalorder %s175, %s178
      %p184 = scmp.eq.s32.totalorder %s23, 0
      %p185 = por %p183, %p184
      %p186 = scmp.ne.s32.totalorder %s175, %s178
      %p187 = scmp.eq.s32.totalorder %s28, 1
      %p188 = por %p186, %p187
      %p189 = scmp.ne.s32.totalorder %s178, %s179
      %p190 = scmp.eq.s32.totalorder %s28, 0
      %p191 = por %p189, %p190
      %p192 = scmp.ne.s32.totalorder %s178, %s179
      %p193 = scmp.eq.s32.totalorder %s29, 1
      %p194 = por %p192, %p193
      %p196 = scmp.ne.s32.totalorder %s179, %s195
      %p197 = scmp.eq.s32.totalorder %s29, 0
      %p198 = por %p196, %p197
      %s199 = ssub.s32 %s30, %s42
      %s200 = ssub.s32 %s31, %s38
      %s201 = sor.u32 %s199, %s200
      %p202 = scmp.eq.s32.totalorder %s201, 0
      %s204 = sadd.s32 %s203, 1
      %s205 = scalar_select %p202, %s203, %s204
      %p208 = pneg %p202
      %p209 = scmp.eq.s32.totalorder %s23, 1
      %p210 = por %p208, %p209
      %p211 = scmp.ne.s32.totalorder %s203, %s206
      %p212 = scmp.eq.s32.totalorder %s23, 0
      %p213 = por %p211, %p212
      %p214 = scmp.ne.s32.totalorder %s203, %s206
      %p215 = scmp.eq.s32.totalorder %s28, 1
      %p216 = por %p214, %p215
      %p217 = scmp.ne.s32.totalorder %s206, %s207
      %p218 = scmp.eq.s32.totalorder %s28, 0
      %p219 = por %p217, %p218
      %p220 = scmp.ne.s32.totalorder %s206, %s207
      %p221 = scmp.eq.s32.totalorder %s29, 1
      %p222 = por %p220, %p221
      %p224 = scmp.ne.s32.totalorder %s207, %s223
      %p225 = scmp.eq.s32.totalorder %s29, 0
      %p226 = por %p224, %p225
      %p227 = scmp.le.s32.totalorder 1, %s23
      %p228 = scmp.lt.s32.totalorder %s23, 3
      %p229 = pnand %p227, %p228
      %p230 = pneg %p229
      // Predicated region
      $region9: #{jasper_forward.12} parent=5 // pred_check
        _
      $region10: #{jasper_forward.12} parent=5 // pred_check_branch
        %232 = sbr.rel (%p229) target = $region12
      $region11: #{jasper_forward.12} parent=5 // pred_region
        %s233 = ssub.s32 %s23, 1
        // Predicated region
        $region13: #{jasper_forward.12} parent=11 // pred_check
          %p234 = pneg %p87
        $region14: #{jasper_forward.12} parent=11 // pred_check_branch
          %236 = sbr.rel (%p234) target = $region16
        $region15: #{jasper_forward.12} parent=11 // pred_region
          %s238 = ssub.s32 10240, 10240
          %239 = vsyncadd [#allocation7], %s238
          %s240 = smul.addr %s33, 128
          %s241 = scalar_lea.hbm %s1, %s240
          %s242 = sshll.u32 [#allocation6], 4
          %s243 = int_to_ptr.vmem [resolvable:$true] %s242
          %248 = dma.hbm_to_vmem [thread:$0]  %s241, 10240, %s243, [#allocation7], 128, 128, 8
        $region16: #{jasper_forward.12} parent=11 // pred_fallthru
          _
        // Predicated region
        $region17: #{jasper_forward.12} parent=11 // pred_check
          %p249 = pneg %p113
        $region18: #{jasper_forward.12} parent=11 // pred_check_branch
          %251 = sbr.rel (%p249) target = $region20
        $region19: #{jasper_forward.12} parent=11 // pred_region
          %s253 = ssub.s32 16, 16
          %254 = vsyncadd [#allocation7], %s253
          %s255 = smul.addr %s33, 16
          %s256 = scalar_lea.hbm %s2, %s255
          %s258 = sshll.u32 [#allocation8], 4
          %s259 = int_to_ptr.vmem [resolvable:$true] %s258
          %261 = dma.hbm_to_vmem [thread:$0]  %s256, 16, %s259, [#allocation7]
        $region20: #{jasper_forward.12} parent=11 // pred_fallthru
          _
        // Predicated region
        $region21: #{jasper_forward.12} parent=11 // pred_check
          %p262 = pneg %p165
        $region22: #{jasper_forward.12} parent=11 // pred_check_branch
          %264 = sbr.rel (%p262) target = $region24
        $region23: #{jasper_forward.12} parent=11 // pred_region
          %s266 = ssub.s32 2048, 2048
          %267 = vsyncadd [#allocation10], %s266
          %s268 = smul.addr %s33, 128
          %s269 = scalar_lea.hbm %s4, %s268
          %s270 = sshll.u32 [#allocation11], 4
          %s271 = int_to_ptr.vmem [resolvable:$true] %s270
          %276 = dma.hbm_to_vmem [thread:$0]  %s269, 2048, %s271, [#allocation10], 128, 128, 8
        $region24: #{jasper_forward.12} parent=11 // pred_fallthru
          _
        // Predicated region
        $region25: #{jasper_forward.12} parent=11 // pred_check
          %p277 = pneg %p191
        $region26: #{jasper_forward.12} parent=11 // pred_check_branch
          %279 = sbr.rel (%p277) target = $region28
        $region27: #{jasper_forward.12} parent=11 // pred_region
          %s281 = ssub.s32 16, 16
          %282 = vsyncadd [#allocation13], %s281
          %s283 = smul.addr %s33, 16
          %s284 = scalar_lea.hbm %s5, %s283
          %s286 = sshll.u32 [#allocation12], 4
          %s287 = int_to_ptr.vmem [resolvable:$true] %s286
          %289 = dma.hbm_to_vmem [thread:$0]  %s284, 16, %s287, [#allocation13]
        $region28: #{jasper_forward.12} parent=11 // pred_fallthru
          _
      $region12: #{jasper_forward.12} parent=5 // pred_fallthru
        _
      %p290 = scmp.lt.s32.totalorder %s23, 2
      // Predicated region
      $region29: #{jasper_forward.12} parent=5 // pred_check
        %p291 = pneg %p290
      $region30: #{jasper_forward.12} parent=5 // pred_check_branch
        %293 = sbr.rel (%p291) target = $region32
      $region31: #{jasper_forward.12} parent=5 // pred_region
        // Predicated region
        $region33: #{jasper_forward.12} parent=31 // pred_check
          %p294 = pneg %p55
        $region34: #{jasper_forward.12} parent=31 // pred_check_branch
          %296 = sbr.rel (%p294) target = $region36
        $region35: #{jasper_forward.12} parent=31 // pred_region
          %s297 = sand.u32 %s45, 1
          %s298 = scalar_lea.sflag [#allocation4], %s297
          %s299 = sand.u32 %s45, 1
          %s300 = smul.addr %s299, 48
          %s301 = scalar_lea.vmem [#allocation3], %s300
          %s303 = ssub.s32 768, 768
          %304 = vsyncadd %s298, %s303
          %s305 = smul.addr %s30, 6
          %s306 = smul.addr %s305, 128
          %s307 = scalar_lea.hbm %s0, %s306
          %s308 = sshll.u32 %s301, 4
          %s309 = int_to_ptr.vmem [resolvable:$true] %s308
          %314 = dma.hbm_to_vmem [thread:$0]  %s307, 768, %s309, %s298, 128, 128, 8
        $region36: #{jasper_forward.12} parent=31 // pred_fallthru
          _
        // Predicated region
        $region37: #{jasper_forward.12} parent=31 // pred_check
          %p315 = pneg %p133
        $region38: #{jasper_forward.12} parent=31 // pred_check_branch
          %317 = sbr.rel (%p315) target = $region40
        $region39: #{jasper_forward.12} parent=31 // pred_region
          %s318 = sand.u32 %s23, 1
          %s319 = scalar_lea.sflag [#allocation10], %s318
          %s320 = sand.u32 %s123, 1
          %s321 = smul.addr %s320, 48
          %s322 = scalar_lea.vmem [#allocation9], %s321
          %s324 = ssub.s32 768, 768
          %325 = vsyncadd %s319, %s324
          %s326 = smul.addr %s30, 6
          %s327 = smul.addr %s326, 128
          %s328 = scalar_lea.hbm %s3, %s327
          %s329 = sshll.u32 %s322, 4
          %s330 = int_to_ptr.vmem [resolvable:$true] %s329
          %335 = dma.hbm_to_vmem [thread:$0]  %s328, 768, %s330, %s319, 128, 128, 8
        $region40: #{jasper_forward.12} parent=31 // pred_fallthru
          _
      $region32: #{jasper_forward.12} parent=5 // pred_fallthru
        _
      %p336 = scmp.le.s32.totalorder 1, %s23
      %p337 = scmp.lt.s32.totalorder %s23, 3
      %p338 = pnand %p336, %p337
      %p339 = pneg %p338
      // Predicated region
      $region41: #{jasper_forward.12} parent=5 // pred_check
        _
      $region42: #{jasper_forward.12} parent=5 // pred_check_branch
        %341 = sbr.rel (%p338) target = $region44
      $region43: #{jasper_forward.12} parent=5 // pred_region
        %s342 = ssub.s32 %s23, 1
        %s343 = sand.u32 %s48, 1
        %s344 = scalar_lea.sflag [#allocation4], %s343
        %s345 = sand.u32 %s48, 1
        %s346 = smul.addr %s345, 48
        %s347 = scalar_lea.vmem [#allocation3], %s346
        // Predicated region
        $region45: #{jasper_forward.12} parent=43 // pred_check
          %p348 = pneg %p61
        $region46: #{jasper_forward.12} parent=43 // pred_check_branch
          %350 = sbr.rel (%p348) target = $region48
        $region47: #{jasper_forward.12} parent=43 // pred_region
          %351 = dma.done %s344, 768
        $region48: #{jasper_forward.12} parent=43 // pred_fallthru
          _
        // Predicated region
        $region49: #{jasper_forward.12} parent=43 // pred_check
          %p352 = pneg %p87
        $region50: #{jasper_forward.12} parent=43 // pred_check_branch
          %354 = sbr.rel (%p352) target = $region52
        $region51: #{jasper_forward.12} parent=43 // pred_region
          %355 = dma.done [#allocation7], 10240
        $region52: #{jasper_forward.12} parent=43 // pred_fallthru
          _
        // Predicated region
        $region53: #{jasper_forward.12} parent=43 // pred_check
          %p356 = pneg %p113
        $region54: #{jasper_forward.12} parent=43 // pred_check_branch
          %358 = sbr.rel (%p356) target = $region56
        $region55: #{jasper_forward.12} parent=43 // pred_region
          %359 = dma.done [#allocation7], 16
        $region56: #{jasper_forward.12} parent=43 // pred_fallthru
          _
        %s360 = sand.u32 %s28, 1
        %s361 = scalar_lea.sflag [#allocation10], %s360
        %s362 = sand.u32 %s126, 1
        %s363 = smul.addr %s362, 48
        %s364 = scalar_lea.vmem [#allocation9], %s363
        // Predicated region
        $region57: #{jasper_forward.12} parent=43 // pred_check
          %p365 = pneg %p139
        $region58: #{jasper_forward.12} parent=43 // pred_check_branch
          %367 = sbr.rel (%p365) target = $region60
        $region59: #{jasper_forward.12} parent=43 // pred_region
          %368 = dma.done %s361, 768
        $region60: #{jasper_forward.12} parent=43 // pred_fallthru
          _
        // Predicated region
        $region61: #{jasper_forward.12} parent=43 // pred_check
          %p369 = pneg %p165
        $region62: #{jasper_forward.12} parent=43 // pred_check_branch
          %371 = sbr.rel (%p369) target = $region64
        $region63: #{jasper_forward.12} parent=43 // pred_region
          %372 = dma.done [#allocation10], 2048
        $region64: #{jasper_forward.12} parent=43 // pred_fallthru
          _
        // Predicated region
        $region65: #{jasper_forward.12} parent=43 // pred_check
          %p373 = pneg %p191
        $region66: #{jasper_forward.12} parent=43 // pred_check_branch
          %375 = sbr.rel (%p373) target = $region68
        $region67: #{jasper_forward.12} parent=43 // pred_region
          %376 = dma.done [#allocation13], 16
        $region68: #{jasper_forward.12} parent=43 // pred_fallthru
          _
        %s377 = sand.u32 %s48, 1
        %s378 = scalar_lea.sflag [#allocation4], %s377
        %s379 = sand.u32 %s48, 1
        %s380 = smul.addr %s379, 48
        %s381 = scalar_lea.vmem [#allocation3], %s380
        %p382 = pneg %p61
        %p383 = pneg %p58
        %p384 = pneg %p87
        %p385 = pneg %p84
        %p386 = pneg %p113
        %p387 = pneg %p110
        %s388 = sand.u32 %s28, 1
        %s389 = scalar_lea.sflag [#allocation10], %s388
        %s390 = sand.u32 %s126, 1
        %s391 = smul.addr %s390, 48
        %s392 = scalar_lea.vmem [#allocation9], %s391
        %p393 = pneg %p139
        %p394 = pneg %p136
        %p395 = pneg %p165
        %p396 = pneg %p162
        %p397 = pneg %p191
        %p398 = pneg %p188
        %p399 = pneg %p219
        %p400 = pneg %p216
        %s401 = sand.u32 %s206, 1
        %s402 = scalar_lea.sflag [#allocation5], %s401
        %s403 = sand.u32 %s206, 1
        %s404 = smul.addr %s403, 48
        %s405 = scalar_lea.vmem [#allocation14], %s404
        %v406 = vld [vmem:[%s347 + $0xe] sm:$0xff]
        %v407 = vld [vmem:[%s347 + $0x16] sm:$0xff]
        %v408 = vld [vmem:[#allocation6] sm:$0xff]
        %v409 = vld [vmem:[#allocation6 + $0x8] sm:$0xff]
        %v410 = vld [vmem:[#allocation6 + $0x10] sm:$0xff]
        %v411 = vld [vmem:[#allocation6 + $0x18] sm:$0xff]
        %v412 = vld [vmem:[#allocation6 + $0x20] sm:$0xff]
        %v413 = vld [vmem:[#allocation6 + $0x28] sm:$0xff]
        %v414 = vld [vmem:[#allocation6 + $0x30] sm:$0xff]
        %v415 = vld [vmem:[#allocation6 + $0x38] sm:$0xff]
        %v416 = vld [vmem:[#allocation6 + $0x40] sm:$0xff]
        %v417 = vld [vmem:[#allocation6 + $0x48] sm:$0xff]
        %v418 = vld [vmem:[#allocation6 + $0x50] sm:$0xff]
        %v419 = vld [vmem:[#allocation6 + $0x58] sm:$0xff]
        %v420 = vld [vmem:[#allocation6 + $0x60] sm:$0xff]
        %v421 = vld [vmem:[#allocation6 + $0x68] sm:$0xff]
        %v422 = vld [vmem:[#allocation6 + $0x70] sm:$0xff]
        %v423 = vld [vmem:[#allocation6 + $0x78] sm:$0xff]
        %424 = vmatprep.subr.mxu0 0.0
        %425 = vmatpush1.msra.mxu0 %v408
        %426 = vmatprep.subr.mxu0 0.0
        %427 = vmatpush1.msra.mxu0 %v409
        %428 = vmatprep.subr.mxu0 0.0
        %429 = vmatpush1.msra.mxu0 %v410
        %430 = vmatprep.subr.mxu0 0.0
        %431 = vmatpush1.msra.mxu0 %v411
        %432 = vmatprep.subr.mxu0 0.0
        %433 = vmatpush1.msra.mxu0 %v412
        %434 = vmatprep.subr.mxu0 0.0
        %435 = vmatpush1.msra.mxu0 %v413
        %436 = vmatprep.subr.mxu0 0.0
        %437 = vmatpush1.msra.mxu0 %v414
        %438 = vmatprep.subr.mxu0 0.0
        %439 = vmatpush1.msra.mxu0 %v415
        %440 = vmatprep.subr.mxu0 0.0
        %441 = vmatpush1.msra.mxu0 %v416
        %442 = vmatprep.subr.mxu0 0.0
        %443 = vmatpush1.msra.mxu0 %v417
        %444 = vmatprep.subr.mxu0 0.0
        %445 = vmatpush1.msra.mxu0 %v418
        %446 = vmatprep.subr.mxu0 0.0
        %447 = vmatpush1.msra.mxu0 %v419
        %448 = vmatprep.subr.mxu0 0.0
        %449 = vmatpush1.msra.mxu0 %v420
        %450 = vmatprep.subr.mxu0 0.0
        %451 = vmatpush1.msra.mxu0 %v421
        %452 = vmatprep.subr.mxu0 0.0
        %453 = vmatpush1.msra.mxu0 %v422
        %454 = vmatprep.subr.mxu0 0.0
        %455 = vmatpush1.msra.mxu0 %v423
        %456 = vmatprep.subr.mxu0 0.0
        %457 = vmatpush1.msra.mxu0 0.0
        %458 = vmatprep.subr.mxu0 0.0
        %459 = vmatpush1.msra.mxu0 0.0
        %460 = vmatprep.subr.mxu0 0.0
        %461 = vmatpush1.msra.mxu0 0.0
        %462 = vmatprep.subr.mxu0 0.0
        %463 = vmatpush1.msra.mxu0 0.0
        %464 = vmatprep.subr.mxu0 0.0
        %465 = vmatpush1.msra.mxu0 0.0
        %466 = vmatprep.subr.mxu0 0.0
        %467 = vmatpush1.msra.mxu0 0.0
        %468 = vmatprep.subr.mxu0 0.0
        %469 = vmatpush1.msra.mxu0 0.0
        %470 = vmatprep.subr.mxu0 0.0
        %471 = vmatpush1.msra.mxu0 0.0
        %472 = vmatprep.subr.mxu0 0.0
        %473 = vmatpush1.msra.mxu0 0.0
        %474 = vmatprep.subr.mxu0 0.0
        %475 = vmatpush1.msra.mxu0 0.0
        %476 = vmatprep.subr.mxu0 0.0
        %477 = vmatpush1.msra.mxu0 0.0
        %478 = vmatprep.subr.mxu0 0.0
        %479 = vmatpush1.msra.mxu0 0.0
        %480 = vmatprep.subr.mxu0 0.0
        %481 = vmatpush1.msra.mxu0 0.0
        %482 = vmatprep.subr.mxu0 0.0
        %483 = vmatpush1.msra.mxu0 0.0
        %484 = vmatprep.subr.mxu0 0.0
        %485 = vmatpush1.msra.mxu0 0.0
        %486 = vmatprep.subr.mxu0 0.0
        %487 = vmatpush1.msra.mxu0 0.0
        %488 = vmatprep.mubr.f32.mxu0 0.0
        %489 = vmatmul.mubr.f32.gmra.mrb[0].mxu0 %v406
        %v490 = vpop.f32.mrb[0].mxu0
        %v491 = vadd.f32 0.0, %v490
        %v492 = vpop.f32.mrb[0].mxu0
        %493 = vmatprep.mubr.f32.mxu0 0.0
        %494 = vmatmul.mubr.f32.gmra.mrb[0].mxu0 %v407
        %v495 = vpop.f32.mrb[0].mxu0
        %v496 = vadd.f32 0.0, %v495
        %v497 = vpop.f32.mrb[0].mxu0
        %498 = vdwg.mxu0
        %499 = vst [vmem:[#allocation2] sm:$0xff] %v491
        %500 = vst [vmem:[#allocation2 + $0x8] sm:$0xff] %v496
        %v501 = vld [vmem:[%s347 + $0xf] sm:$0xff]
        %v502 = vld [vmem:[%s347 + $0x17] sm:$0xff]
        %s503 = scalar_lea.vmem [#allocation6], 128
        %v504 = vld [vmem:[%s503] sm:$0xff]
        %v505 = vld [vmem:[%s503 + $0x8] sm:$0xff]
        %v506 = vld [vmem:[%s503 + $0x10] sm:$0xff]
        %v507 = vld [vmem:[%s503 + $0x18] sm:$0xff]
        %v508 = vld [vmem:[%s503 + $0x20] sm:$0xff]
        %v509 = vld [vmem:[%s503 + $0x28] sm:$0xff]
        %v510 = vld [vmem:[%s503 + $0x30] sm:$0xff]
        %v511 = vld [vmem:[%s503 + $0x38] sm:$0xff]
        %v512 = vld [vmem:[%s503 + $0x40] sm:$0xff]
        %v513 = vld [vmem:[%s503 + $0x48] sm:$0xff]
        %v514 = vld [vmem:[%s503 + $0x50] sm:$0xff]
        %v515 = vld [vmem:[%s503 + $0x58] sm:$0xff]
        %v516 = vld [vmem:[%s503 + $0x60] sm:$0xff]
        %v517 = vld [vmem:[%s503 + $0x68] sm:$0xff]
        %v518 = vld [vmem:[%s503 + $0x70] sm:$0xff]
        %v519 = vld [vmem:[%s503 + $0x78] sm:$0xff]
        %520 = vmatprep.subr.mxu0 0.0
        %521 = vmatpush1.msra.mxu0 %v504
        %522 = vmatprep.subr.mxu0 0.0
        %523 = vmatpush1.msra.mxu0 %v505
        %524 = vmatprep.subr.mxu0 0.0
        %525 = vmatpush1.msra.mxu0 %v506
        %526 = vmatprep.subr.mxu0 0.0
        %527 = vmatpush1.msra.mxu0 %v507
        %528 = vmatprep.subr.mxu0 0.0
        %529 = vmatpush1.msra.mxu0 %v508
        %530 = vmatprep.subr.mxu0 0.0
        %531 = vmatpush1.msra.mxu0 %v509
        %532 = vmatprep.subr.mxu0 0.0
        %533 = vmatpush1.msra.mxu0 %v510
        %534 = vmatprep.subr.mxu0 0.0
        %535 = vmatpush1.msra.mxu0 %v511
        %536 = vmatprep.subr.mxu0 0.0
        %537 = vmatpush1.msra.mxu0 %v512
        %538 = vmatprep.subr.mxu0 0.0
        %539 = vmatpush1.msra.mxu0 %v513
        %540 = vmatprep.subr.mxu0 0.0
        %541 = vmatpush1.msra.mxu0 %v514
        %542 = vmatprep.subr.mxu0 0.0
        %543 = vmatpush1.msra.mxu0 %v515
        %544 = vmatprep.subr.mxu0 0.0
        %545 = vmatpush1.msra.mxu0 %v516
        %546 = vmatprep.subr.mxu0 0.0
        %547 = vmatpush1.msra.mxu0 %v517
        %548 = vmatprep.subr.mxu0 0.0
        %549 = vmatpush1.msra.mxu0 %v518
        %550 = vmatprep.subr.mxu0 0.0
        %551 = vmatpush1.msra.mxu0 %v519
        %552 = vmatprep.subr.mxu0 0.0
        %553 = vmatpush1.msra.mxu0 0.0
        %554 = vmatprep.subr.mxu0 0.0
        %555 = vmatpush1.msra.mxu0 0.0
        %556 = vmatprep.subr.mxu0 0.0
        %557 = vmatpush1.msra.mxu0 0.0
        %558 = vmatprep.subr.mxu0 0.0
        %559 = vmatpush1.msra.mxu0 0.0
        %560 = vmatprep.subr.mxu0 0.0
        %561 = vmatpush1.msra.mxu0 0.0
        %562 = vmatprep.subr.mxu0 0.0
        %563 = vmatpush1.msra.mxu0 0.0
        %564 = vmatprep.subr.mxu0 0.0
        %565 = vmatpush1.msra.mxu0 0.0
        %566 = vmatprep.subr.mxu0 0.0
        %567 = vmatpush1.msra.mxu0 0.0
        %568 = vmatprep.subr.mxu0 0.0
        %569 = vmatpush1.msra.mxu0 0.0
        %570 = vmatprep.subr.mxu0 0.0
        %571 = vmatpush1.msra.mxu0 0.0
        %572 = vmatprep.subr.mxu0 0.0
        %573 = vmatpush1.msra.mxu0 0.0
        %574 = vmatprep.subr.mxu0 0.0
        %575 = vmatpush1.msra.mxu0 0.0
        %576 = vmatprep.subr.mxu0 0.0
        %577 = vmatpush1.msra.mxu0 0.0
        %578 = vmatprep.subr.mxu0 0.0
        %579 = vmatpush1.msra.mxu0 0.0
        %580 = vmatprep.subr.mxu0 0.0
        %581 = vmatpush1.msra.mxu0 0.0
        %582 = vmatprep.subr.mxu0 0.0
        %583 = vmatpush1.msra.mxu0 0.0
        %584 = vmatprep.mubr.f32.mxu0 0.0
        %585 = vmatmul.mubr.f32.gmra.mrb[0].mxu0 %v501
        %v586 = vpop.f32.mrb[0].mxu0
        %v587 = vadd.f32 0.0, %v586
        %v588 = vpop.f32.mrb[0].mxu0
        %589 = vmatprep.mubr.f32.mxu0 0.0
        %590 = vmatmul.mubr.f32.gmra.mrb[0].mxu0 %v502
        %v591 = vpop.f32.mrb[0].mxu0
        %v592 = vadd.f32 0.0, %v591
        %v593 = vpop.f32.mrb[0].mxu0
        %594 = vdwg.mxu0
        %v595 = vld [vmem:[#allocation2] sm:$0xff]
        %v596 = vld [vmem:[#allocation2 + $0x8] sm:$0xff]
        %v597 = vadd.f32 %v595, %v587
        %v598 = vadd.f32 %v596, %v592
        %599 = vst [vmem:[#allocation2] sm:$0xff] %v597
        %600 = vst [vmem:[#allocation2 + $0x8] sm:$0xff] %v598
        %v601 = vld [vmem:[%s347 + $0x10] sm:$0xff]
        %v602 = vld [vmem:[%s347 + $0x18] sm:$0xff]
        %s603 = scalar_lea.vmem [#allocation6], 256
        %v604 = vld [vmem:[%s603] sm:$0xff]
        %v605 = vld [vmem:[%s603 + $0x8] sm:$0xff]
        %v606 = vld [vmem:[%s603 + $0x10] sm:$0xff]
        %v607 = vld [vmem:[%s603 + $0x18] sm:$0xff]
        %v608 = vld [vmem:[%s603 + $0x20] sm:$0xff]
        %v609 = vld [vmem:[%s603 + $0x28] sm:$0xff]
        %v610 = vld [vmem:[%s603 + $0x30] sm:$0xff]
        %v611 = vld [vmem:[%s603 + $0x38] sm:$0xff]
        %v612 = vld [vmem:[%s603 + $0x40] sm:$0xff]
        %v613 = vld [vmem:[%s603 + $0x48] sm:$0xff]
        %v614 = vld [vmem:[%s603 + $0x50] sm:$0xff]
        %v615 = vld [vmem:[%s603 + $0x58] sm:$0xff]
        %v616 = vld [vmem:[%s603 + $0x60] sm:$0xff]
        %v617 = vld [vmem:[%s603 + $0x68] sm:$0xff]
        %v618 = vld [vmem:[%s603 + $0x70] sm:$0xff]
        %v619 = vld [vmem:[%s603 + $0x78] sm:$0xff]
        %620 = vmatprep.subr.mxu0 0.0
        %621 = vmatpush1.msra.mxu0 %v604
        %622 = vmatprep.subr.mxu0 0.0
        %623 = vmatpush1.msra.mxu0 %v605
        %624 = vmatprep.subr.mxu0 0.0
        %625 = vmatpush1.msra.mxu0 %v606
        %626 = vmatprep.subr.mxu0 0.0
        %627 = vmatpush1.msra.mxu0 %v607
        %628 = vmatprep.subr.mxu0 0.0
        %629 = vmatpush1.msra.mxu0 %v608
        %630 = vmatprep.subr.mxu0 0.0
        %631 = vmatpush1.msra.mxu0 %v609
        %632 = vmatprep.subr.mxu0 0.0
        %633 = vmatpush1.msra.mxu0 %v610
        %634 = vmatprep.subr.mxu0 0.0
        %635 = vmatpush1.msra.mxu0 %v611
        %636 = vmatprep.subr.mxu0 0.0
        %637 = vmatpush1.msra.mxu0 %v612
        %638 = vmatprep.subr.mxu0 0.0
        %639 = vmatpush1.msra.mxu0 %v613
        %640 = vmatprep.subr.mxu0 0.0
        %641 = vmatpush1.msra.mxu0 %v614
        %642 = vmatprep.subr.mxu0 0.0
        %643 = vmatpush1.msra.mxu0 %v615
        %644 = vmatprep.subr.mxu0 0.0
        %645 = vmatpush1.msra.mxu0 %v616
        %646 = vmatprep.subr.mxu0 0.0
        %647 = vmatpush1.msra.mxu0 %v617
        %648 = vmatprep.subr.mxu0 0.0
        %649 = vmatpush1.msra.mxu0 %v618
        %650 = vmatprep.subr.mxu0 0.0
        %651 = vmatpush1.msra.mxu0 %v619
        %652 = vmatprep.subr.mxu0 0.0
        %653 = vmatpush1.msra.mxu0 0.0
        %654 = vmatprep.subr.mxu0 0.0
        %655 = vmatpush1.msra.mxu0 0.0
        %656 = vmatprep.subr.mxu0 0.0
        %657 = vmatpush1.msra.mxu0 0.0
        %658 = vmatprep.subr.mxu0 0.0
        %659 = vmatpush1.msra.mxu0 0.0
        %660 = vmatprep.subr.mxu0 0.0
        %661 = vmatpush1.msra.mxu0 0.0
        %662 = vmatprep.subr.mxu0 0.0
        %663 = vmatpush1.msra.mxu0 0.0
        %664 = vmatprep.subr.mxu0 0.0
        %665 = vmatpush1.msra.mxu0 0.0
        %666 = vmatprep.subr.mxu0 0.0
        %667 = vmatpush1.msra.mxu0 0.0
        %668 = vmatprep.subr.mxu0 0.0
        %669 = vmatpush1.msra.mxu0 0.0
        %670 = vmatprep.subr.mxu0 0.0
        %671 = vmatpush1.msra.mxu0 0.0
        %672 = vmatprep.subr.mxu0 0.0
        %673 = vmatpush1.msra.mxu0 0.0
        %674 = vmatprep.subr.mxu0 0.0
        %675 = vmatpush1.msra.mxu0 0.0
        %676 = vmatprep.subr.mxu0 0.0
        %677 = vmatpush1.msra.mxu0 0.0
        %678 = vmatprep.subr.mxu0 0.0
        %679 = vmatpush1.msra.mxu0 0.0
        %680 = vmatprep.subr.mxu0 0.0
        %681 = vmatpush1.msra.mxu0 0.0
        %682 = vmatprep.subr.mxu0 0.0
        %683 = vmatpush1.msra.mxu0 0.0
        %684 = vmatprep.mubr.f32.mxu0 0.0
        %685 = vmatmul.mubr.f32.gmra.mrb[0].mxu0 %v601
        %v686 = vpop.f32.mrb[0].mxu0
        %v687 = vadd.f32 0.0, %v686
        %v688 = vpop.f32.mrb[0].mxu0
        %689 = vmatprep.mubr.f32.mxu0 0.0
        %690 = vmatmul.mubr.f32.gmra.mrb[0].mxu0 %v602
        %v691 = vpop.f32.mrb[0].mxu0
        %v692 = vadd.f32 0.0, %v691
        %v693 = vpop.f32.mrb[0].mxu0
        %694 = vdwg.mxu0
        %v695 = vld [vmem:[#allocation2] sm:$0xff]
        %v696 = vld [vmem:[#allocation2 + $0x8] sm:$0xff]
        %v697 = vadd.f32 %v695, %v687
        %v698 = vadd.f32 %v696, %v692
        %699 = vst [vmem:[#allocation2] sm:$0xff] %v697
        %700 = vst [vmem:[#allocation2 + $0x8] sm:$0xff] %v698
        %v701 = vld [vmem:[%s347 + $0x11] sm:$0xff]
        %v702 = vld [vmem:[%s347 + $0x19] sm:$0xff]
        %s703 = scalar_lea.vmem [#allocation6], 384
        %v704 = vld [vmem:[%s703] sm:$0xff]
        %v705 = vld [vmem:[%s703 + $0x8] sm:$0xff]
        %v706 = vld [vmem:[%s703 + $0x10] sm:$0xff]
        %v707 = vld [vmem:[%s703 + $0x18] sm:$0xff]
        %v708 = vld [vmem:[%s703 + $0x20] sm:$0xff]
        %v709 = vld [vmem:[%s703 + $0x28] sm:$0xff]
        %v710 = vld [vmem:[%s703 + $0x30] sm:$0xff]
        %v711 = vld [vmem:[%s703 + $0x38] sm:$0xff]
        %v712 = vld [vmem:[%s703 + $0x40] sm:$0xff]
        %v713 = vld [vmem:[%s703 + $0x48] sm:$0xff]
        %v714 = vld [vmem:[%s703 + $0x50] sm:$0xff]
        %v715 = vld [vmem:[%s703 + $0x58] sm:$0xff]
        %v716 = vld [vmem:[%s703 + $0x60] sm:$0xff]
        %v717 = vld [vmem:[%s703 + $0x68] sm:$0xff]
        %v718 = vld [vmem:[%s703 + $0x70] sm:$0xff]
        %v719 = vld [vmem:[%s703 + $0x78] sm:$0xff]
        %720 = vmatprep.subr.mxu0 0.0
        %721 = vmatpush1.msra.mxu0 %v704
        %722 = vmatprep.subr.mxu0 0.0
        %723 = vmatpush1.msra.mxu0 %v705
        %724 = vmatprep.subr.mxu0 0.0
        %725 = vmatpush1.msra.mxu0 %v706
        %726 = vmatprep.subr.mxu0 0.0
        %727 = vmatpush1.msra.mxu0 %v707
        %728 = vmatprep.subr.mxu0 0.0
        %729 = vmatpush1.msra.mxu0 %v708
        %730 = vmatprep.subr.mxu0 0.0
        %731 = vmatpush1.msra.mxu0 %v709
        %732 = vmatprep.subr.mxu0 0.0
        %733 = vmatpush1.msra.mxu0 %v710
        %734 = vmatprep.subr.mxu0 0.0
        %735 = vmatpush1.msra.mxu0 %v711
        %736 = vmatprep.subr.mxu0 0.0
        %737 = vmatpush1.msra.mxu0 %v712
        %738 = vmatprep.subr.mxu0 0.0
        %739 = vmatpush1.msra.mxu0 %v713
        %740 = vmatprep.subr.mxu0 0.0
        %741 = vmatpush1.msra.mxu0 %v714
        %742 = vmatprep.subr.mxu0 0.0
        %743 = vmatpush1.msra.mxu0 %v715
        %744 = vmatprep.subr.mxu0 0.0
        %745 = vmatpush1.msra.mxu0 %v716
        %746 = vmatprep.subr.mxu0 0.0
        %747 = vmatpush1.msra.mxu0 %v717
        %748 = vmatprep.subr.mxu0 0.0
        %749 = vmatpush1.msra.mxu0 %v718
        %750 = vmatprep.subr.mxu0 0.0
        %751 = vmatpush1.msra.mxu0 %v719
        %752 = vmatprep.subr.mxu0 0.0
        %753 = vmatpush1.msra.mxu0 0.0
        %754 = vmatprep.subr.mxu0 0.0
        %755 = vmatpush1.msra.mxu0 0.0
        %756 = vmatprep.subr.mxu0 0.0
        %757 = vmatpush1.msra.mxu0 0.0
        %758 = vmatprep.subr.mxu0 0.0
        %759 = vmatpush1.msra.mxu0 0.0
        %760 = vmatprep.subr.mxu0 0.0
        %761 = vmatpush1.msra.mxu0 0.0
        %762 = vmatprep.subr.mxu0 0.0
        %763 = vmatpush1.msra.mxu0 0.0
        %764 = vmatprep.subr.mxu0 0.0
        %765 = vmatpush1.msra.mxu0 0.0
        %766 = vmatprep.subr.mxu0 0.0
        %767 = vmatpush1.msra.mxu0 0.0
        %768 = vmatprep.subr.mxu0 0.0
        %769 = vmatpush1.msra.mxu0 0.0
        %770 = vmatprep.subr.mxu0 0.0
        %771 = vmatpush1.msra.mxu0 0.0
        %772 = vmatprep.subr.mxu0 0.0
        %773 = vmatpush1.msra.mxu0 0.0
        %774 = vmatprep.subr.mxu0 0.0
        %775 = vmatpush1.msra.mxu0 0.0
        %776 = vmatprep.subr.mxu0 0.0
        %777 = vmatpush1.msra.mxu0 0.0
        %778 = vmatprep.subr.mxu0 0.0
        %779 = vmatpush1.msra.mxu0 0.0
        %780 = vmatprep.subr.mxu0 0.0
        %781 = vmatpush1.msra.mxu0 0.0
        %782 = vmatprep.subr.mxu0 0.0
        %783 = vmatpush1.msra.mxu0 0.0
        %784 = vmatprep.mubr.f32.mxu0 0.0
        %785 = vmatmul.mubr.f32.gmra.mrb[0].mxu0 %v701
        %v786 = vpop.f32.mrb[0].mxu0
        %v787 = vadd.f32 0.0, %v786
        %v788 = vpop.f32.mrb[0].mxu0
        %789 = vmatprep.mubr.f32.mxu0 0.0
        %790 = vmatmul.mubr.f32.gmra.mrb[0].mxu0 %v702
        %v791 = vpop.f32.mrb[0].mxu0
        %v792 = vadd.f32 0.0, %v791
        %v793 = vpop.f32.mrb[0].mxu0
        %794 = vdwg.mxu0
        %v795 = vld [vmem:[#allocation2] sm:$0xff]
        %v796 = vld [vmem:[#allocation2 + $0x8] sm:$0xff]
        %v797 = vadd.f32 %v795, %v787
        %v798 = vadd.f32 %v796, %v792
        %799 = vst [vmem:[#allocation2] sm:$0xff] %v797
        %800 = vst [vmem:[#allocation2 + $0x8] sm:$0xff] %v798
        %v801 = vld [vmem:[%s347 + $0x12] sm:$0xff]
        %v802 = vld [vmem:[%s347 + $0x1a] sm:$0xff]
        %s803 = scalar_lea.vmem [#allocation6], 512
        %v804 = vld [vmem:[%s803] sm:$0xff]
        %v805 = vld [vmem:[%s803 + $0x8] sm:$0xff]
        %v806 = vld [vmem:[%s803 + $0x10] sm:$0xff]
        %v807 = vld [vmem:[%s803 + $0x18] sm:$0xff]
        %v808 = vld [vmem:[%s803 + $0x20] sm:$0xff]
        %v809 = vld [vmem:[%s803 + $0x28] sm:$0xff]
        %v810 = vld [vmem:[%s803 + $0x30] sm:$0xff]
        %v811 = vld [vmem:[%s803 + $0x38] sm:$0xff]
        %v812 = vld [vmem:[%s803 + $0x40] sm:$0xff]
        %v813 = vld [vmem:[%s803 + $0x48] sm:$0xff]
        %v814 = vld [vmem:[%s803 + $0x50] sm:$0xff]
        %v815 = vld [vmem:[%s803 + $0x58] sm:$0xff]
        %v816 = vld [vmem:[%s803 + $0x60] sm:$0xff]
        %v817 = vld [vmem:[%s803 + $0x68] sm:$0xff]
        %v818 = vld [vmem:[%s803 + $0x70] sm:$0xff]
        %v819 = vld [vmem:[%s803 + $0x78] sm:$0xff]
        %820 = vmatprep.subr.mxu0 0.0
        %821 = vmatpush1.msra.mxu0 %v804
        %822 = vmatprep.subr.mxu0 0.0
        %823 = vmatpush1.msra.mxu0 %v805
        %824 = vmatprep.subr.mxu0 0.0
        %825 = vmatpush1.msra.mxu0 %v806
        %826 = vmatprep.subr.mxu0 0.0
        %827 = vmatpush1.msra.mxu0 %v807
        %828 = vmatprep.subr.mxu0 0.0
        %829 = vmatpush1.msra.mxu0 %v808
        %830 = vmatprep.subr.mxu0 0.0
        %831 = vmatpush1.msra.mxu0 %v809
        %832 = vmatprep.subr.mxu0 0.0
        %833 = vmatpush1.msra.mxu0 %v810
        %834 = vmatprep.subr.mxu0 0.0
        %835 = vmatpush1.msra.mxu0 %v811
        %836 = vmatprep.subr.mxu0 0.0
        %837 = vmatpush1.msra.mxu0 %v812
        %838 = vmatprep.subr.mxu0 0.0
        %839 = vmatpush1.msra.mxu0 %v813
        %840 = vmatprep.subr.mxu0 0.0
        %841 = vmatpush1.msra.mxu0 %v814
        %842 = vmatprep.subr.mxu0 0.0
        %843 = vmatpush1.msra.mxu0 %v815
        %844 = vmatprep.subr.mxu0 0.0
        %845 = vmatpush1.msra.mxu0 %v816
        %846 = vmatprep.subr.mxu0 0.0
        %847 = vmatpush1.msra.mxu0 %v817
        %848 = vmatprep.subr.mxu0 0.0
        %849 = vmatpush1.msra.mxu0 %v818
        %850 = vmatprep.subr.mxu0 0.0
        %851 = vmatpush1.msra.mxu0 %v819
        %852 = vmatprep.subr.mxu0 0.0
        %853 = vmatpush1.msra.mxu0 0.0
        %854 = vmatprep.subr.mxu0 0.0
        %855 = vmatpush1.msra.mxu0 0.0
        %856 = vmatprep.subr.mxu0 0.0
        %857 = vmatpush1.msra.mxu0 0.0
        %858 = vmatprep.subr.mxu0 0.0
        %859 = vmatpush1.msra.mxu0 0.0
        %860 = vmatprep.subr.mxu0 0.0
        %861 = vmatpush1.msra.mxu0 0.0
        %862 = vmatprep.subr.mxu0 0.0
        %863 = vmatpush1.msra.mxu0 0.0
        %864 = vmatprep.subr.mxu0 0.0
        %865 = vmatpush1.msra.mxu0 0.0
        %866 = vmatprep.subr.mxu0 0.0
        %867 = vmatpush1.msra.mxu0 0.0
        %868 = vmatprep.subr.mxu0 0.0
        %869 = vmatpush1.msra.mxu0 0.0
        %870 = vmatprep.subr.mxu0 0.0
        %871 = vmatpush1.msra.mxu0 0.0
        %872 = vmatprep.subr.mxu0 0.0
        %873 = vmatpush1.msra.mxu0 0.0
        %874 = vmatprep.subr.mxu0 0.0
        %875 = vmatpush1.msra.mxu0 0.0
        %876 = vmatprep.subr.mxu0 0.0
        %877 = vmatpush1.msra.mxu0 0.0
        %878 = vmatprep.subr.mxu0 0.0
        %879 = vmatpush1.msra.mxu0 0.0
        %880 = vmatprep.subr.mxu0 0.0
        %881 = vmatpush1.msra.mxu0 0.0
        %882 = vmatprep.subr.mxu0 0.0
        %883 = vmatpush1.msra.mxu0 0.0
        %884 = vmatprep.mubr.f32.mxu0 0.0
        %885 = vmatmul.mubr.f32.gmra.mrb[0].mxu0 %v801
        %v886 = vpop.f32.mrb[0].mxu0
        %v887 = vadd.f32 0.0, %v886
        %v888 = vpop.f32.mrb[0].mxu0
        %889 = vmatprep.mubr.f32.mxu0 0.0
        %890 = vmatmul.mubr.f32.gmra.mrb[0].mxu0 %v802
        %v891 = vpop.f32.mrb[0].mxu0
        %v892 = vadd.f32 0.0, %v891
        %v893 = vpop.f32.mrb[0].mxu0
        %894 = vdwg.mxu0
        %v895 = vld [vmem:[#allocation2] sm:$0xff]
        %v896 = vld [vmem:[#allocation2 + $0x8] sm:$0xff]
        %v897 = vadd.f32 %v895, %v887
        %v898 = vadd.f32 %v896, %v892
        %899 = vst [vmem:[#allocation2] sm:$0xff] %v897
        %900 = vst [vmem:[#allocation2 + $0x8] sm:$0xff] %v898
        %v901 = vld [vmem:[#allocation2] sm:$0xff]
        %v902 = vld [vmem:[#allocation2 + $0x8] sm:$0xff]
        %v903 = vld [vmem:[#allocation8] sm:$0x1]
        %v905 = vlaneseq
        %v906 = vshrl.u32 %v905, 7
        %v907 = vsub.s32 0, %v906
        %v908 = vrot.slane %v903, %v907
        %v910 = vadd.f32 %v901, %v908
        %v911 = vadd.f32 %v902, %v908
        %v912 = vld [vmem:[%s364 + $0x10] sm:$0xff]
        %v913 = vld [vmem:[%s364 + $0x18] sm:$0xff]
        %v914 = vld [vmem:[#allocation11] sm:$0xff]
        %v915 = vld [vmem:[#allocation11 + $0x8] sm:$0xff]
        %v916 = vld [vmem:[#allocation11 + $0x10] sm:$0xff]
        %v917 = vld [vmem:[#allocation11 + $0x18] sm:$0xff]
        %v918 = vld [vmem:[#allocation11 + $0x20] sm:$0xff]
        %v919 = vld [vmem:[#allocation11 + $0x28] sm:$0xff]
        %v920 = vld [vmem:[#allocation11 + $0x30] sm:$0xff]
        %v921 = vld [vmem:[#allocation11 + $0x38] sm:$0xff]
        %v922 = vld [vmem:[#allocation11 + $0x40] sm:$0xff]
        %v923 = vld [vmem:[#allocation11 + $0x48] sm:$0xff]
        %v924 = vld [vmem:[#allocation11 + $0x50] sm:$0xff]
        %v925 = vld [vmem:[#allocation11 + $0x58] sm:$0xff]
        %v926 = vld [vmem:[#allocation11 + $0x60] sm:$0xff]
        %v927 = vld [vmem:[#allocation11 + $0x68] sm:$0xff]
        %v928 = vld [vmem:[#allocation11 + $0x70] sm:$0xff]
        %v929 = vld [vmem:[#allocation11 + $0x78] sm:$0xff]
        %930 = vmatprep.subr.mxu0 0.0
        %931 = vmatpush1.msra.mxu0 %v914
        %932 = vmatprep.subr.mxu0 0.0
        %933 = vmatpush1.msra.mxu0 %v915
        %934 = vmatprep.subr.mxu0 0.0
        %935 = vmatpush1.msra.mxu0 %v916
        %936 = vmatprep.subr.mxu0 0.0
        %937 = vmatpush1.msra.mxu0 %v917
        %938 = vmatprep.subr.mxu0 0.0
        %939 = vmatpush1.msra.mxu0 %v918
        %940 = vmatprep.subr.mxu0 0.0
        %941 = vmatpush1.msra.mxu0 %v919
        %942 = vmatprep.subr.mxu0 0.0
        %943 = vmatpush1.msra.mxu0 %v920
        %944 = vmatprep.subr.mxu0 0.0
        %945 = vmatpush1.msra.mxu0 %v921
        %946 = vmatprep.subr.mxu0 0.0
        %947 = vmatpush1.msra.mxu0 %v922
        %948 = vmatprep.subr.mxu0 0.0
        %949 = vmatpush1.msra.mxu0 %v923
        %950 = vmatprep.subr.mxu0 0.0
        %951 = vmatpush1.msra.mxu0 %v924
        %952 = vmatprep.subr.mxu0 0.0
        %953 = vmatpush1.msra.mxu0 %v925
        %954 = vmatprep.subr.mxu0 0.0
        %955 = vmatpush1.msra.mxu0 %v926
        %956 = vmatprep.subr.mxu0 0.0
        %957 = vmatpush1.msra.mxu0 %v927
        %958 = vmatprep.subr.mxu0 0.0
        %959 = vmatpush1.msra.mxu0 %v928
        %960 = vmatprep.subr.mxu0 0.0
        %961 = vmatpush1.msra.mxu0 %v929
        %962 = vmatprep.subr.mxu0 0.0
        %963 = vmatpush1.msra.mxu0 0.0
        %964 = vmatprep.subr.mxu0 0.0
        %965 = vmatpush1.msra.mxu0 0.0
        %966 = vmatprep.subr.mxu0 0.0
        %967 = vmatpush1.msra.mxu0 0.0
        %968 = vmatprep.subr.mxu0 0.0
        %969 = vmatpush1.msra.mxu0 0.0
        %970 = vmatprep.subr.mxu0 0.0
        %971 = vmatpush1.msra.mxu0 0.0
        %972 = vmatprep.subr.mxu0 0.0
        %973 = vmatpush1.msra.mxu0 0.0
        %974 = vmatprep.subr.mxu0 0.0
        %975 = vmatpush1.msra.mxu0 0.0
        %976 = vmatprep.subr.mxu0 0.0
        %977 = vmatpush1.msra.mxu0 0.0
        %978 = vmatprep.subr.mxu0 0.0
        %979 = vmatpush1.msra.mxu0 0.0
        %980 = vmatprep.subr.mxu0 0.0
        %981 = vmatpush1.msra.mxu0 0.0
        %982 = vmatprep.subr.mxu0 0.0
        %983 = vmatpush1.msra.mxu0 0.0
        %984 = vmatprep.subr.mxu0 0.0
        %985 = vmatpush1.msra.mxu0 0.0
        %986 = vmatprep.subr.mxu0 0.0
        %987 = vmatpush1.msra.mxu0 0.0
        %988 = vmatprep.subr.mxu0 0.0
        %989 = vmatpush1.msra.mxu0 0.0
        %990 = vmatprep.subr.mxu0 0.0
        %991 = vmatpush1.msra.mxu0 0.0
        %992 = vmatprep.subr.mxu0 0.0
        %993 = vmatpush1.msra.mxu0 0.0
        %994 = vmatprep.mubr.f32.mxu0 0.0
        %995 = vmatmul.mubr.f32.gmra.mrb[0].mxu0 %v912
        %v996 = vpop.f32.mrb[0].mxu0
        %v997 = vadd.f32 0.0, %v996
        %v998 = vpop.f32.mrb[0].mxu0
        %999 = vmatprep.mubr.f32.mxu0 0.0
        %1000 = vmatmul.mubr.f32.gmra.mrb[0].mxu0 %v913
        %v1001 = vpop.f32.mrb[0].mxu0
        %v1002 = vadd.f32 0.0, %v1001
        %v1003 = vpop.f32.mrb[0].mxu0
        %1004 = vdwg.mxu0
        %v1005 = vadd.f32 %v910, %v997
        %v1006 = vadd.f32 %v911, %v1002
        %v1007 = vld [vmem:[#allocation12] sm:$0x1]
        %v1009 = vlaneseq
        %v1010 = vshrl.u32 %v1009, 7
        %v1011 = vsub.s32 0, %v1010
        %v1012 = vrot.slane %v1007, %v1011
        %v1014 = vadd.f32 %v1005, %v1012
        %v1015 = vadd.f32 %v1006, %v1012
        %v1016 = vmax.f32 %v1014, 0.0
        %v1017 = vmax.f32 %v1015, 0.0
        %1018 = vst [vmem:[%s405 + $0x10] sm:$0xff] %v1016
        %1019 = vst [vmem:[%s405 + $0x18] sm:$0xff] %v1017
        %1020 = vst [vmem:[%s405] sm:$0xff] 0.0
        %1021 = vst [vmem:[%s405 + $0x8] sm:$0xff] 0.0
        %1022 = vst [vmem:[%s405 + $0x20] sm:$0xff] 0.0
        %1023 = vst [vmem:[%s405 + $0x28] sm:$0xff] 0.0
        %s1024 = sand.u32 %s206, 1
        %s1025 = scalar_lea.sflag [#allocation5], %s1024
        %s1026 = sand.u32 %s206, 1
        %s1027 = smul.addr %s1026, 48
        %s1028 = scalar_lea.vmem [#allocation14], %s1027
        // Predicated region
        $region69: #{jasper_forward.12} parent=43 // pred_check
          %p1029 = pneg %p216
        $region70: #{jasper_forward.12} parent=43 // pred_check_branch
          %1031 = sbr.rel (%p1029) target = $region72
        $region71: #{jasper_forward.12} parent=43 // pred_region
          %s1033 = ssub.s32 768, 768
          %1034 = vsyncadd %s1025, %s1033
          %s1035 = smul.addr %s32, 6
          %s1036 = sadd.s32 %s33, %s1035
          %s1037 = smul.addr %s1036, 128
          %s1038 = scalar_lea.hbm %s6, %s1037
          %s1039 = sshll.u32 %s1028, 4
          %s1040 = int_to_ptr.vmem [resolvable:$true] %s1039
          %1045 = dma.vmem_to_hbm [thread:$0]  %s1040, 768, %s1038, %s1025, 128, 128, 8
        $region72: #{jasper_forward.12} parent=43 // pred_fallthru
          _
      $region44: #{jasper_forward.12} parent=5 // pred_fallthru
        _
      %p1046 = scmp.le.s32.totalorder 2, %s23
      // Predicated region
      $region73: #{jasper_forward.12} parent=5 // pred_check
        %p1047 = pneg %p1046
      $region74: #{jasper_forward.12} parent=5 // pred_check_branch
        %1049 = sbr.rel (%p1047) target = $region76
      $region75: #{jasper_forward.12} parent=5 // pred_region
        %s1050 = ssub.s32 %s23, 2
        // Predicated region
        $region77: #{jasper_forward.12} parent=75 // pred_check
          %p1051 = pneg %p222
        $region78: #{jasper_forward.12} parent=75 // pred_check_branch
          %1053 = sbr.rel (%p1051) target = $region80
        $region79: #{jasper_forward.12} parent=75 // pred_region
          %s1054 = sand.u32 %s207, 1
          %s1055 = scalar_lea.sflag [#allocation5], %s1054
          %s1056 = sand.u32 %s207, 1
          %s1057 = smul.addr %s1056, 48
          %s1058 = scalar_lea.vmem [#allocation14], %s1057
          %1059 = dma.done %s1055, 768
        $region80: #{jasper_forward.12} parent=75 // pred_fallthru
          _
      $region76: #{jasper_forward.12} parent=5 // pred_fallthru
        _
    $region6: #{jasper_forward.12} parent=1 // loop_footer
      %s27 = sadd.s32 1, %s23
    $region7: #{jasper_forward.12} parent=1 // loop_footer_branch
      %22 = sbr.rel target = $region3
    $region8: #{jasper_forward.12} parent=1 // loop_exit
      _
    %1060 = vsyncpa [#allocation4], 1
    %s1061 = scalar_lea.sflag [#allocation4], 1
    %1062 = vsyncpa %s1061, 1
    %1063 = vsyncpa [#allocation7], 1
    %1064 = vsyncpa [#allocation10], 1
    %s1065 = scalar_lea.sflag [#allocation10], 1
    %1066 = vsyncpa %s1065, 1
    %1067 = vsyncpa [#allocation13], 1
    %1068 = vsyncpa [#allocation5], 1
    %s1069 = scalar_lea.sflag [#allocation5], 1
    %1070 = vsyncpa %s1069, 1

// kernel: jasper_forward.13
$region0: #{jasper_forward.13}
  #allocation0 [shape = 'u32[]', space=smem, size = 0x4, offset = 0x4, fixed_abs, tag = 'smem constant byte address 0x4 - core index']
  #allocation1 [shape = 'u32[144,128]{1,0:T(1,128)}', space=vmem, size = 0x12000, scoped, tag = 'internal scratch']
  #allocation2 [shape = 'f32[16,128]{1,0:T(8,128)}', space=vmem, size = 0x2000, scoped, tag = 'scratch operand']
  %s0 = inlined_call_operand.hbm [shape: f32[2,48,128], index: 0, kind: input, shape index: {}]
  %s1 = inlined_call_operand.hbm [shape: f32[7,128,128], index: 1, kind: input, shape index: {}]
  %s2 = inlined_call_operand.hbm [shape: f32[1,128], index: 2, kind: input, shape index: {}]
  %s3 = inlined_call_operand.hbm [shape: f32[2,48,128], index: 3, kind: output, shape index: {}]
  %s4 = sld [smem:[#allocation0]]
  $region57: #{jasper_forward.13} parent=0
    _
  %s6 = ssub.s32 1, %s4
  %s7 = scalar_select 0, %s6, %s4
  $region1: #{jasper_forward.13} parent=0
    #allocation3 [shape = 'u8[49152]{0}', space=vmem, size = 0xc000, scoped, tag = 'input window, operand 0']
    #allocation4 [shape = 's32[2]{0}', space=sflag, size = 0x8, scoped, tag = 'scoped memory for jasper_forward.13']
    #allocation5 [shape = 's32[2]{0}', space=sflag, size = 0x8, scoped, tag = 'scoped memory for jasper_forward.13']
    #allocation6 [shape = 'u8[458752]{0}', space=vmem, size = 0x70000, scoped, tag = 'input window, operand 1, single buffered']
    #allocation7 [shape = 's32[1]{0}', space=sflag, size = 0x4, scoped, tag = 'scoped memory for jasper_forward.13']
    #allocation8 [shape = 'u8[512]{0}', space=vmem, size = 0x400, scoped, tag = 'input window, operand 2, single buffered']
    #allocation9 [shape = 'u8[49152]{0}', space=vmem, size = 0xc000, scoped, tag = 'output window, operand 0']
    %8 = vsyncpa [#allocation4], 0
    %s9 = scalar_lea.sflag [#allocation4], 1
    %10 = vsyncpa %s9, 0
    %11 = vsyncpa [#allocation7], 0
    %12 = vsyncpa [#allocation5], 0
    %s13 = scalar_lea.sflag [#allocation5], 1
    %14 = vsyncpa %s13, 0
    loop: start=0, step=1, limit=4
    $region2: #{jasper_forward.13} parent=1 // loop_pre_header
      _
    $region3: #{jasper_forward.13} parent=1 // loop_header
      %s16 = sphi 0, %s20
      %p17 = scmp.ge.s32.totalorder %s16, 4
      %s23 = sphi 0, %s35
      %s24 = sphi 0, %s31
      %s25 = sphi 0, %s23
      %s26 = sphi 0, %s24
      %s27 = sphi 0, %s25
      %s28 = sphi 0, %s26
      %s38 = sphi 0, %s40
      %s41 = sphi 0, %s38
      %s42 = sphi 0, %s41
      %s58 = sphi 0, %s42
      %s64 = sphi 0, %s66
      %s67 = sphi 0, %s64
      %s68 = sphi 0, %s67
      %s84 = sphi 0, %s68
      %s90 = sphi 0, %s92
      %s93 = sphi 0, %s90
      %s94 = sphi 0, %s93
      %s110 = sphi 0, %s94
      %s118 = sphi 0, %s120
      %s121 = sphi 0, %s118
      %s122 = sphi 0, %s121
      %s138 = sphi 0, %s122
    $region4: #{jasper_forward.13} parent=1 // loop_header_branch
      %19 = sbr.rel (%p17) target = $region8
    $region5: #{jasper_forward.13} parent=1 // loop_body
      %s21 = ssub.s32 %s16, 1
      %s22 = ssub.s32 %s16, 2
      %s29 = sadd.s32 1, %s24
      %p30 = scmp.ge.s32.totalorder %s29, 1
      %s31 = scalar_select %p30, 0, %s29
      %s32 = sadd.s32 1, %s23
      %s33 = scalar_select %p30, %s32, %s23
      %p34 = scmp.ge.s32.totalorder %s33, 2
      %s35 = scalar_select %p34, 0, %s33
      %s36 = ssub.s32 %s23, %s35
      %p37 = scmp.eq.s32.totalorder %s36, 0
      %s39 = sadd.s32 %s38, 1
      %s40 = scalar_select %p37, %s38, %s39
      %p43 = pneg %p37
      %p44 = scmp.eq.s32.totalorder %s16, 1
      %p45 = por %p43, %p44
      %p46 = scmp.ne.s32.totalorder %s38, %s41
      %p47 = scmp.eq.s32.totalorder %s16, 0
      %p48 = por %p46, %p47
      %p49 = scmp.ne.s32.totalorder %s38, %s41
      %p50 = scmp.eq.s32.totalorder %s21, 1
      %p51 = por %p49, %p50
      %p52 = scmp.ne.s32.totalorder %s41, %s42
      %p53 = scmp.eq.s32.totalorder %s21, 0
      %p54 = por %p52, %p53
      %p55 = scmp.ne.s32.totalorder %s41, %s42
      %p56 = scmp.eq.s32.totalorder %s22, 1
      %p57 = por %p55, %p56
      %p59 = scmp.ne.s32.totalorder %s42, %s58
      %p60 = scmp.eq.s32.totalorder %s22, 0
      %p61 = por %p59, %p60
      %s62 = ssub.s32 %s24, %s31
      %p63 = scmp.eq.s32.totalorder %s62, 0
      %s65 = sadd.s32 %s64, 1
      %s66 = scalar_select %p63, %s64, %s65
      %p69 = pneg %p63
      %p70 = scmp.eq.s32.totalorder %s16, 1
      %p71 = por %p69, %p70
      %p72 = scmp.ne.s32.totalorder %s64, %s67
      %p73 = scmp.eq.s32.totalorder %s16, 0
      %p74 = por %p72, %p73
      %p75 = scmp.ne.s32.totalorder %s64, %s67
      %p76 = scmp.eq.s32.totalorder %s21, 1
      %p77 = por %p75, %p76
      %p78 = scmp.ne.s32.totalorder %s67, %s68
      %p79 = scmp.eq.s32.totalorder %s21, 0
      %p80 = por %p78, %p79
      %p81 = scmp.ne.s32.totalorder %s67, %s68
      %p82 = scmp.eq.s32.totalorder %s22, 1
      %p83 = por %p81, %p82
      %p85 = scmp.ne.s32.totalorder %s68, %s84
      %p86 = scmp.eq.s32.totalorder %s22, 0
      %p87 = por %p85, %p86
      %s88 = ssub.s32 %s24, %s31
      %p89 = scmp.eq.s32.totalorder %s88, 0
      %s91 = sadd.s32 %s90, 1
      %s92 = scalar_select %p89, %s90, %s91
      %p95 = pneg %p89
      %p96 = scmp.eq.s32.totalorder %s16, 1
      %p97 = por %p95, %p96
      %p98 = scmp.ne.s32.totalorder %s90, %s93
      %p99 = scmp.eq.s32.totalorder %s16, 0
      %p100 = por %p98, %p99
      %p101 = scmp.ne.s32.totalorder %s90, %s93
      %p102 = scmp.eq.s32.totalorder %s21, 1
      %p103 = por %p101, %p102
      %p104 = scmp.ne.s32.totalorder %s93, %s94
      %p105 = scmp.eq.s32.totalorder %s21, 0
      %p106 = por %p104, %p105
      %p107 = scmp.ne.s32.totalorder %s93, %s94
      %p108 = scmp.eq.s32.totalorder %s22, 1
      %p109 = por %p107, %p108
      %p111 = scmp.ne.s32.totalorder %s94, %s110
      %p112 = scmp.eq.s32.totalorder %s22, 0
      %p113 = por %p111, %p112
      %s114 = ssub.s32 %s23, %s35
      %s115 = ssub.s32 %s24, %s31
      %s116 = sor.u32 %s114, %s115
      %p117 = scmp.eq.s32.totalorder %s116, 0
      %s119 = sadd.s32 %s118, 1
      %s120 = scalar_select %p117, %s118, %s119
      %p123 = pneg %p117
      %p124 = scmp.eq.s32.totalorder %s16, 1
      %p125 = por %p123, %p124
      %p126 = scmp.ne.s32.totalorder %s118, %s121
      %p127 = scmp.eq.s32.totalorder %s16, 0
      %p128 = por %p126, %p127
      %p129 = scmp.ne.s32.totalorder %s118, %s121
      %p130 = scmp.eq.s32.totalorder %s21, 1
      %p131 = por %p129, %p130
      %p132 = scmp.ne.s32.totalorder %s121, %s122
      %p133 = scmp.eq.s32.totalorder %s21, 0
      %p134 = por %p132, %p133
      %p135 = scmp.ne.s32.totalorder %s121, %s122
      %p136 = scmp.eq.s32.totalorder %s22, 1
      %p137 = por %p135, %p136
      %p139 = scmp.ne.s32.totalorder %s122, %s138
      %p140 = scmp.eq.s32.totalorder %s22, 0
      %p141 = por %p139, %p140
      %p142 = scmp.le.s32.totalorder 1, %s16
      %p143 = scmp.lt.s32.totalorder %s16, 3
      %p144 = pnand %p142, %p143
      %p145 = pneg %p144
      // Predicated region
      $region9: #{jasper_forward.13} parent=5 // pred_check
        _
      $region10: #{jasper_forward.13} parent=5 // pred_check_branch
        %147 = sbr.rel (%p144) target = $region12
      $region11: #{jasper_forward.13} parent=5 // pred_region
        %s148 = ssub.s32 %s16, 1
        // Predicated region
        $region13: #{jasper_forward.13} parent=11 // pred_check
          %p149 = pneg %p80
        $region14: #{jasper_forward.13} parent=11 // pred_check_branch
          %151 = sbr.rel (%p149) target = $region16
        $region15: #{jasper_forward.13} parent=11 // pred_region
          %s153 = ssub.s32 14336, 14336
          %154 = vsyncadd [#allocation7], %s153
          %s155 = smul.addr %s26, 128
          %s156 = scalar_lea.hbm %s1, %s155
          %s157 = sshll.u32 [#allocation6], 4
          %s158 = int_to_ptr.vmem [resolvable:$true] %s157
          %163 = dma.hbm_to_vmem [thread:$0]  %s156, 14336, %s158, [#allocation7], 128, 128, 8
        $region16: #{jasper_forward.13} parent=11 // pred_fallthru
          _
        // Predicated region
        $region17: #{jasper_forward.13} parent=11 // pred_check
          %p164 = pneg %p106
        $region18: #{jasper_forward.13} parent=11 // pred_check_branch
          %166 = sbr.rel (%p164) target = $region20
        $region19: #{jasper_forward.13} parent=11 // pred_region
          %s168 = ssub.s32 16, 16
          %169 = vsyncadd [#allocation7], %s168
          %s170 = smul.addr %s26, 16
          %s171 = scalar_lea.hbm %s2, %s170
          %s173 = sshll.u32 [#allocation8], 4
          %s174 = int_to_ptr.vmem [resolvable:$true] %s173
          %176 = dma.hbm_to_vmem [thread:$0]  %s171, 16, %s174, [#allocation7]
        $region20: #{jasper_forward.13} parent=11 // pred_fallthru
          _
      $region12: #{jasper_forward.13} parent=5 // pred_fallthru
        _
      %p177 = scmp.lt.s32.totalorder %s16, 2
      // Predicated region
      $region21: #{jasper_forward.13} parent=5 // pred_check
        %p178 = pneg %p177
      $region22: #{jasper_forward.13} parent=5 // pred_check_branch
        %180 = sbr.rel (%p178) target = $region24
      $region23: #{jasper_forward.13} parent=5 // pred_region
        // Predicated region
        $region25: #{jasper_forward.13} parent=23 // pred_check
          %p181 = pneg %p48
        $region26: #{jasper_forward.13} parent=23 // pred_check_branch
          %183 = sbr.rel (%p181) target = $region28
        $region27: #{jasper_forward.13} parent=23 // pred_region
          %s184 = sand.u32 %s38, 1
          %s185 = scalar_lea.sflag [#allocation4], %s184
          %s186 = sand.u32 %s38, 1
          %s187 = smul.addr %s186, 48
          %s188 = scalar_lea.vmem [#allocation3], %s187
          %s190 = ssub.s32 768, 768
          %191 = vsyncadd %s185, %s190
          %s192 = smul.addr %s23, 6
          %s193 = smul.addr %s192, 128
          %s194 = scalar_lea.hbm %s0, %s193
          %s195 = sshll.u32 %s188, 4
          %s196 = int_to_ptr.vmem [resolvable:$true] %s195
          %201 = dma.hbm_to_vmem [thread:$0]  %s194, 768, %s196, %s185, 128, 128, 8
        $region28: #{jasper_forward.13} parent=23 // pred_fallthru
          _
      $region24: #{jasper_forward.13} parent=5 // pred_fallthru
        _
      %p202 = scmp.le.s32.totalorder 1, %s16
      %p203 = scmp.lt.s32.totalorder %s16, 3
      %p204 = pnand %p202, %p203
      %p205 = pneg %p204
      // Predicated region
      $region29: #{jasper_forward.13} parent=5 // pred_check
        _
      $region30: #{jasper_forward.13} parent=5 // pred_check_branch
        %207 = sbr.rel (%p204) target = $region32
      $region31: #{jasper_forward.13} parent=5 // pred_region
        %s208 = ssub.s32 %s16, 1
        %s209 = sand.u32 %s41, 1
        %s210 = scalar_lea.sflag [#allocation4], %s209
        %s211 = sand.u32 %s41, 1
        %s212 = smul.addr %s211, 48
        %s213 = scalar_lea.vmem [#allocation3], %s212
        // Predicated region
        $region33: #{jasper_forward.13} parent=31 // pred_check
          %p214 = pneg %p54
        $region34: #{jasper_forward.13} parent=31 // pred_check_branch
          %216 = sbr.rel (%p214) target = $region36
        $region35: #{jasper_forward.13} parent=31 // pred_region
          %217 = dma.done %s210, 768
        $region36: #{jasper_forward.13} parent=31 // pred_fallthru
          _
        // Predicated region
        $region37: #{jasper_forward.13} parent=31 // pred_check
          %p218 = pneg %p80
        $region38: #{jasper_forward.13} parent=31 // pred_check_branch
          %220 = sbr.rel (%p218) target = $region40
        $region39: #{jasper_forward.13} parent=31 // pred_region
          %221 = dma.done [#allocation7], 14336
        $region40: #{jasper_forward.13} parent=31 // pred_fallthru
          _
        // Predicated region
        $region41: #{jasper_forward.13} parent=31 // pred_check
          %p222 = pneg %p106
        $region42: #{jasper_forward.13} parent=31 // pred_check_branch
          %224 = sbr.rel (%p222) target = $region44
        $region43: #{jasper_forward.13} parent=31 // pred_region
          %225 = dma.done [#allocation7], 16
        $region44: #{jasper_forward.13} parent=31 // pred_fallthru
          _
        %s226 = sand.u32 %s41, 1
        %s227 = scalar_lea.sflag [#allocation4], %s226
        %s228 = sand.u32 %s41, 1
        %s229 = smul.addr %s228, 48
        %s230 = scalar_lea.vmem [#allocation3], %s229
        %p231 = pneg %p54
        %p232 = pneg %p51
        %p233 = pneg %p80
        %p234 = pneg %p77
        %p235 = pneg %p106
        %p236 = pneg %p103
        %p237 = pneg %p134
        %p238 = pneg %p131
        %s239 = sand.u32 %s121, 1
        %s240 = scalar_lea.sflag [#allocation5], %s239
        %s241 = sand.u32 %s121, 1
        %s242 = smul.addr %s241, 48
        %s243 = scalar_lea.vmem [#allocation9], %s242
        %v244 = vld [vmem:[%s213 + $0xa] sm:$0xff]
        %v245 = vld [vmem:[%s213 + $0x12] sm:$0xff]
        %v246 = vld [vmem:[#allocation6] sm:$0xff]
        %v247 = vld [vmem:[#allocation6 + $0x8] sm:$0xff]
        %v248 = vld [vmem:[#allocation6 + $0x10] sm:$0xff]
        %v249 = vld [vmem:[#allocation6 + $0x18] sm:$0xff]
        %v250 = vld [vmem:[#allocation6 + $0x20] sm:$0xff]
        %v251 = vld [vmem:[#allocation6 + $0x28] sm:$0xff]
        %v252 = vld [vmem:[#allocation6 + $0x30] sm:$0xff]
        %v253 = vld [vmem:[#allocation6 + $0x38] sm:$0xff]
        %v254 = vld [vmem:[#allocation6 + $0x40] sm:$0xff]
        %v255 = vld [vmem:[#allocation6 + $0x48] sm:$0xff]
        %v256 = vld [vmem:[#allocation6 + $0x50] sm:$0xff]
        %v257 = vld [vmem:[#allocation6 + $0x58] sm:$0xff]
        %v258 = vld [vmem:[#allocation6 + $0x60] sm:$0xff]
        %v259 = vld [vmem:[#allocation6 + $0x68] sm:$0xff]
        %v260 = vld [vmem:[#allocation6 + $0x70] sm:$0xff]
        %v261 = vld [vmem:[#allocation6 + $0x78] sm:$0xff]
        %262 = vmatprep.subr.mxu0 0.0
        %263 = vmatpush1.msra.mxu0 %v246
        %264 = vmatprep.subr.mxu0 0.0
        %265 = vmatpush1.msra.mxu0 %v247
        %266 = vmatprep.subr.mxu0 0.0
        %267 = vmatpush1.msra.mxu0 %v248
        %268 = vmatprep.subr.mxu0 0.0
        %269 = vmatpush1.msra.mxu0 %v249
        %270 = vmatprep.subr.mxu0 0.0
        %271 = vmatpush1.msra.mxu0 %v250
        %272 = vmatprep.subr.mxu0 0.0
        %273 = vmatpush1.msra.mxu0 %v251
        %274 = vmatprep.subr.mxu0 0.0
        %275 = vmatpush1.msra.mxu0 %v252
        %276 = vmatprep.subr.mxu0 0.0
        %277 = vmatpush1.msra.mxu0 %v253
        %278 = vmatprep.subr.mxu0 0.0
        %279 = vmatpush1.msra.mxu0 %v254
        %280 = vmatprep.subr.mxu0 0.0
        %281 = vmatpush1.msra.mxu0 %v255
        %282 = vmatprep.subr.mxu0 0.0
        %283 = vmatpush1.msra.mxu0 %v256
        %284 = vmatprep.subr.mxu0 0.0
        %285 = vmatpush1.msra.mxu0 %v257
        %286 = vmatprep.subr.mxu0 0.0
        %287 = vmatpush1.msra.mxu0 %v258
        %288 = vmatprep.subr.mxu0 0.0
        %289 = vmatpush1.msra.mxu0 %v259
        %290 = vmatprep.subr.mxu0 0.0
        %291 = vmatpush1.msra.mxu0 %v260
        %292 = vmatprep.subr.mxu0 0.0
        %293 = vmatpush1.msra.mxu0 %v261
        %294 = vmatprep.subr.mxu0 0.0
        %295 = vmatpush1.msra.mxu0 0.0
        %296 = vmatprep.subr.mxu0 0.0
        %297 = vmatpush1.msra.mxu0 0.0
        %298 = vmatprep.subr.mxu0 0.0
        %299 = vmatpush1.msra.mxu0 0.0
        %300 = vmatprep.subr.mxu0 0.0
        %301 = vmatpush1.msra.mxu0 0.0
        %302 = vmatprep.subr.mxu0 0.0
        %303 = vmatpush1.msra.mxu0 0.0
        %304 = vmatprep.subr.mxu0 0.0
        %305 = vmatpush1.msra.mxu0 0.0
        %306 = vmatprep.subr.mxu0 0.0
        %307 = vmatpush1.msra.mxu0 0.0
        %308 = vmatprep.subr.mxu0 0.0
        %309 = vmatpush1.msra.mxu0 0.0
        %310 = vmatprep.subr.mxu0 0.0
        %311 = vmatpush1.msra.mxu0 0.0
        %312 = vmatprep.subr.mxu0 0.0
        %313 = vmatpush1.msra.mxu0 0.0
        %314 = vmatprep.subr.mxu0 0.0
        %315 = vmatpush1.msra.mxu0 0.0
        %316 = vmatprep.subr.mxu0 0.0
        %317 = vmatpush1.msra.mxu0 0.0
        %318 = vmatprep.subr.mxu0 0.0
        %319 = vmatpush1.msra.mxu0 0.0
        %320 = vmatprep.subr.mxu0 0.0
        %321 = vmatpush1.msra.mxu0 0.0
        %322 = vmatprep.subr.mxu0 0.0
        %323 = vmatpush1.msra.mxu0 0.0
        %324 = vmatprep.subr.mxu0 0.0
        %325 = vmatpush1.msra.mxu0 0.0
        %326 = vmatprep.mubr.f32.mxu0 0.0
        %327 = vmatmul.mubr.f32.gmra.mrb[0].mxu0 %v244
        %v328 = vpop.f32.mrb[0].mxu0
        %v329 = vadd.f32 0.0, %v328
        %v330 = vpop.f32.mrb[0].mxu0
        %331 = vmatprep.mubr.f32.mxu0 0.0
        %332 = vmatmul.mubr.f32.gmra.mrb[0].mxu0 %v245
        %v333 = vpop.f32.mrb[0].mxu0
        %v334 = vadd.f32 0.0, %v333
        %v335 = vpop.f32.mrb[0].mxu0
        %336 = vdwg.mxu0
        %337 = vst [vmem:[#allocation2] sm:$0xff] %v329
        %338 = vst [vmem:[#allocation2 + $0x8] sm:$0xff] %v334
        %v339 = vld [vmem:[%s213 + $0xc] sm:$0xff]
        %v340 = vld [vmem:[%s213 + $0x14] sm:$0xff]
        %s341 = scalar_lea.vmem [#allocation6], 128
        %v342 = vld [vmem:[%s341] sm:$0xff]
        %v343 = vld [vmem:[%s341 + $0x8] sm:$0xff]
        %v344 = vld [vmem:[%s341 + $0x10] sm:$0xff]
        %v345 = vld [vmem:[%s341 + $0x18] sm:$0xff]
        %v346 = vld [vmem:[%s341 + $0x20] sm:$0xff]
        %v347 = vld [vmem:[%s341 + $0x28] sm:$0xff]
        %v348 = vld [vmem:[%s341 + $0x30] sm:$0xff]
        %v349 = vld [vmem:[%s341 + $0x38] sm:$0xff]
        %v350 = vld [vmem:[%s341 + $0x40] sm:$0xff]
        %v351 = vld [vmem:[%s341 + $0x48] sm:$0xff]
        %v352 = vld [vmem:[%s341 + $0x50] sm:$0xff]
        %v353 = vld [vmem:[%s341 + $0x58] sm:$0xff]
        %v354 = vld [vmem:[%s341 + $0x60] sm:$0xff]
        %v355 = vld [vmem:[%s341 + $0x68] sm:$0xff]
        %v356 = vld [vmem:[%s341 + $0x70] sm:$0xff]
        %v357 = vld [vmem:[%s341 + $0x78] sm:$0xff]
        %358 = vmatprep.subr.mxu0 0.0
        %359 = vmatpush1.msra.mxu0 %v342
        %360 = vmatprep.subr.mxu0 0.0
        %361 = vmatpush1.msra.mxu0 %v343
        %362 = vmatprep.subr.mxu0 0.0
        %363 = vmatpush1.msra.mxu0 %v344
        %364 = vmatprep.subr.mxu0 0.0
        %365 = vmatpush1.msra.mxu0 %v345
        %366 = vmatprep.subr.mxu0 0.0
        %367 = vmatpush1.msra.mxu0 %v346
        %368 = vmatprep.subr.mxu0 0.0
        %369 = vmatpush1.msra.mxu0 %v347
        %370 = vmatprep.subr.mxu0 0.0
        %371 = vmatpush1.msra.mxu0 %v348
        %372 = vmatprep.subr.mxu0 0.0
        %373 = vmatpush1.msra.mxu0 %v349
        %374 = vmatprep.subr.mxu0 0.0
        %375 = vmatpush1.msra.mxu0 %v350
        %376 = vmatprep.subr.mxu0 0.0
        %377 = vmatpush1.msra.mxu0 %v351
        %378 = vmatprep.subr.mxu0 0.0
        %379 = vmatpush1.msra.mxu0 %v352
        %380 = vmatprep.subr.mxu0 0.0
        %381 = vmatpush1.msra.mxu0 %v353
        %382 = vmatprep.subr.mxu0 0.0
        %383 = vmatpush1.msra.mxu0 %v354
        %384 = vmatprep.subr.mxu0 0.0
        %385 = vmatpush1.msra.mxu0 %v355
        %386 = vmatprep.subr.mxu0 0.0
        %387 = vmatpush1.msra.mxu0 %v356
        %388 = vmatprep.subr.mxu0 0.0
        %389 = vmatpush1.msra.mxu0 %v357
        %390 = vmatprep.subr.mxu0 0.0
        %391 = vmatpush1.msra.mxu0 0.0
        %392 = vmatprep.subr.mxu0 0.0
        %393 = vmatpush1.msra.mxu0 0.0
        %394 = vmatprep.subr.mxu0 0.0
        %395 = vmatpush1.msra.mxu0 0.0
        %396 = vmatprep.subr.mxu0 0.0
        %397 = vmatpush1.msra.mxu0 0.0
        %398 = vmatprep.subr.mxu0 0.0
        %399 = vmatpush1.msra.mxu0 0.0
        %400 = vmatprep.subr.mxu0 0.0
        %401 = vmatpush1.msra.mxu0 0.0
        %402 = vmatprep.subr.mxu0 0.0
        %403 = vmatpush1.msra.mxu0 0.0
        %404 = vmatprep.subr.mxu0 0.0
        %405 = vmatpush1.msra.mxu0 0.0
        %406 = vmatprep.subr.mxu0 0.0
        %407 = vmatpush1.msra.mxu0 0.0
        %408 = vmatprep.subr.mxu0 0.0
        %409 = vmatpush1.msra.mxu0 0.0
        %410 = vmatprep.subr.mxu0 0.0
        %411 = vmatpush1.msra.mxu0 0.0
        %412 = vmatprep.subr.mxu0 0.0
        %413 = vmatpush1.msra.mxu0 0.0
        %414 = vmatprep.subr.mxu0 0.0
        %415 = vmatpush1.msra.mxu0 0.0
        %416 = vmatprep.subr.mxu0 0.0
        %417 = vmatpush1.msra.mxu0 0.0
        %418 = vmatprep.subr.mxu0 0.0
        %419 = vmatpush1.msra.mxu0 0.0
        %420 = vmatprep.subr.mxu0 0.0
        %421 = vmatpush1.msra.mxu0 0.0
        %422 = vmatprep.mubr.f32.mxu0 0.0
        %423 = vmatmul.mubr.f32.gmra.mrb[0].mxu0 %v339
        %v424 = vpop.f32.mrb[0].mxu0
        %v425 = vadd.f32 0.0, %v424
        %v426 = vpop.f32.mrb[0].mxu0
        %427 = vmatprep.mubr.f32.mxu0 0.0
        %428 = vmatmul.mubr.f32.gmra.mrb[0].mxu0 %v340
        %v429 = vpop.f32.mrb[0].mxu0
        %v430 = vadd.f32 0.0, %v429
        %v431 = vpop.f32.mrb[0].mxu0
        %432 = vdwg.mxu0
        %v433 = vld [vmem:[#allocation2] sm:$0xff]
        %v434 = vld [vmem:[#allocation2 + $0x8] sm:$0xff]
        %v435 = vadd.f32 %v433, %v425
        %v436 = vadd.f32 %v434, %v430
        %437 = vst [vmem:[#allocation2] sm:$0xff] %v435
        %438 = vst [vmem:[#allocation2 + $0x8] sm:$0xff] %v436
        %v439 = vld [vmem:[%s213 + $0xe] sm:$0xff]
        %v440 = vld [vmem:[%s213 + $0x16] sm:$0xff]
        %s441 = scalar_lea.vmem [#allocation6], 256
        %v442 = vld [vmem:[%s441] sm:$0xff]
        %v443 = vld [vmem:[%s441 + $0x8] sm:$0xff]
        %v444 = vld [vmem:[%s441 + $0x10] sm:$0xff]
        %v445 = vld [vmem:[%s441 + $0x18] sm:$0xff]
        %v446 = vld [vmem:[%s441 + $0x20] sm:$0xff]
        %v447 = vld [vmem:[%s441 + $0x28] sm:$0xff]
        %v448 = vld [vmem:[%s441 + $0x30] sm:$0xff]
        %v449 = vld [vmem:[%s441 + $0x38] sm:$0xff]
        %v450 = vld [vmem:[%s441 + $0x40] sm:$0xff]
        %v451 = vld [vmem:[%s441 + $0x48] sm:$0xff]
        %v452 = vld [vmem:[%s441 + $0x50] sm:$0xff]
        %v453 = vld [vmem:[%s441 + $0x58] sm:$0xff]
        %v454 = vld [vmem:[%s441 + $0x60] sm:$0xff]
        %v455 = vld [vmem:[%s441 + $0x68] sm:$0xff]
        %v456 = vld [vmem:[%s441 + $0x70] sm:$0xff]
        %v457 = vld [vmem:[%s441 + $0x78] sm:$0xff]
        %458 = vmatprep.subr.mxu0 0.0
        %459 = vmatpush1.msra.mxu0 %v442
        %460 = vmatprep.subr.mxu0 0.0
        %461 = vmatpush1.msra.mxu0 %v443
        %462 = vmatprep.subr.mxu0 0.0
        %463 = vmatpush1.msra.mxu0 %v444
        %464 = vmatprep.subr.mxu0 0.0
        %465 = vmatpush1.msra.mxu0 %v445
        %466 = vmatprep.subr.mxu0 0.0
        %467 = vmatpush1.msra.mxu0 %v446
        %468 = vmatprep.subr.mxu0 0.0
        %469 = vmatpush1.msra.mxu0 %v447
        %470 = vmatprep.subr.mxu0 0.0
        %471 = vmatpush1.msra.mxu0 %v448
        %472 = vmatprep.subr.mxu0 0.0
        %473 = vmatpush1.msra.mxu0 %v449
        %474 = vmatprep.subr.mxu0 0.0
        %475 = vmatpush1.msra.mxu0 %v450
        %476 = vmatprep.subr.mxu0 0.0
        %477 = vmatpush1.msra.mxu0 %v451
        %478 = vmatprep.subr.mxu0 0.0
        %479 = vmatpush1.msra.mxu0 %v452
        %480 = vmatprep.subr.mxu0 0.0
        %481 = vmatpush1.msra.mxu0 %v453
        %482 = vmatprep.subr.mxu0 0.0
        %483 = vmatpush1.msra.mxu0 %v454
        %484 = vmatprep.subr.mxu0 0.0
        %485 = vmatpush1.msra.mxu0 %v455
        %486 = vmatprep.subr.mxu0 0.0
        %487 = vmatpush1.msra.mxu0 %v456
        %488 = vmatprep.subr.mxu0 0.0
        %489 = vmatpush1.msra.mxu0 %v457
        %490 = vmatprep.subr.mxu0 0.0
        %491 = vmatpush1.msra.mxu0 0.0
        %492 = vmatprep.subr.mxu0 0.0
        %493 = vmatpush1.msra.mxu0 0.0
        %494 = vmatprep.subr.mxu0 0.0
        %495 = vmatpush1.msra.mxu0 0.0
        %496 = vmatprep.subr.mxu0 0.0
        %497 = vmatpush1.msra.mxu0 0.0
        %498 = vmatprep.subr.mxu0 0.0
        %499 = vmatpush1.msra.mxu0 0.0
        %500 = vmatprep.subr.mxu0 0.0
        %501 = vmatpush1.msra.mxu0 0.0
        %502 = vmatprep.subr.mxu0 0.0
        %503 = vmatpush1.msra.mxu0 0.0
        %504 = vmatprep.subr.mxu0 0.0
        %505 = vmatpush1.msra.mxu0 0.0
        %506 = vmatprep.subr.mxu0 0.0
        %507 = vmatpush1.msra.mxu0 0.0
        %508 = vmatprep.subr.mxu0 0.0
        %509 = vmatpush1.msra.mxu0 0.0
        %510 = vmatprep.subr.mxu0 0.0
        %511 = vmatpush1.msra.mxu0 0.0
        %512 = vmatprep.subr.mxu0 0.0
        %513 = vmatpush1.msra.mxu0 0.0
        %514 = vmatprep.subr.mxu0 0.0
        %515 = vmatpush1.msra.mxu0 0.0
        %516 = vmatprep.subr.mxu0 0.0
        %517 = vmatpush1.msra.mxu0 0.0
        %518 = vmatprep.subr.mxu0 0.0
        %519 = vmatpush1.msra.mxu0 0.0
        %520 = vmatprep.subr.mxu0 0.0
        %521 = vmatpush1.msra.mxu0 0.0
        %522 = vmatprep.mubr.f32.mxu0 0.0
        %523 = vmatmul.mubr.f32.gmra.mrb[0].mxu0 %v439
        %v524 = vpop.f32.mrb[0].mxu0
        %v525 = vadd.f32 0.0, %v524
        %v526 = vpop.f32.mrb[0].mxu0
        %527 = vmatprep.mubr.f32.mxu0 0.0
        %528 = vmatmul.mubr.f32.gmra.mrb[0].mxu0 %v440
        %v529 = vpop.f32.mrb[0].mxu0
        %v530 = vadd.f32 0.0, %v529
        %v531 = vpop.f32.mrb[0].mxu0
        %532 = vdwg.mxu0
        %v533 = vld [vmem:[#allocation2] sm:$0xff]
        %v534 = vld [vmem:[#allocation2 + $0x8] sm:$0xff]
        %v535 = vadd.f32 %v533, %v525
        %v536 = vadd.f32 %v534, %v530
        %537 = vst [vmem:[#allocation2] sm:$0xff] %v535
        %538 = vst [vmem:[#allocation2 + $0x8] sm:$0xff] %v536
        %v539 = vld [vmem:[%s213 + $0x10] sm:$0xff]
        %v540 = vld [vmem:[%s213 + $0x18] sm:$0xff]
        %s541 = scalar_lea.vmem [#allocation6], 384
        %v542 = vld [vmem:[%s541] sm:$0xff]
        %v543 = vld [vmem:[%s541 + $0x8] sm:$0xff]
        %v544 = vld [vmem:[%s541 + $0x10] sm:$0xff]
        %v545 = vld [vmem:[%s541 + $0x18] sm:$0xff]
        %v546 = vld [vmem:[%s541 + $0x20] sm:$0xff]
        %v547 = vld [vmem:[%s541 + $0x28] sm:$0xff]
        %v548 = vld [vmem:[%s541 + $0x30] sm:$0xff]
        %v549 = vld [vmem:[%s541 + $0x38] sm:$0xff]
        %v550 = vld [vmem:[%s541 + $0x40] sm:$0xff]
        %v551 = vld [vmem:[%s541 + $0x48] sm:$0xff]
        %v552 = vld [vmem:[%s541 + $0x50] sm:$0xff]
        %v553 = vld [vmem:[%s541 + $0x58] sm:$0xff]
        %v554 = vld [vmem:[%s541 + $0x60] sm:$0xff]
        %v555 = vld [vmem:[%s541 + $0x68] sm:$0xff]
        %v556 = vld [vmem:[%s541 + $0x70] sm:$0xff]
        %v557 = vld [vmem:[%s541 + $0x78] sm:$0xff]
        %558 = vmatprep.subr.mxu0 0.0
        %559 = vmatpush1.msra.mxu0 %v542
        %560 = vmatprep.subr.mxu0 0.0
        %561 = vmatpush1.msra.mxu0 %v543
        %562 = vmatprep.subr.mxu0 0.0
        %563 = vmatpush1.msra.mxu0 %v544
        %564 = vmatprep.subr.mxu0 0.0
        %565 = vmatpush1.msra.mxu0 %v545
        %566 = vmatprep.subr.mxu0 0.0
        %567 = vmatpush1.msra.mxu0 %v546
        %568 = vmatprep.subr.mxu0 0.0
        %569 = vmatpush1.msra.mxu0 %v547
        %570 = vmatprep.subr.mxu0 0.0
        %571 = vmatpush1.msra.mxu0 %v548
        %572 = vmatprep.subr.mxu0 0.0
        %573 = vmatpush1.msra.mxu0 %v549
        %574 = vmatprep.subr.mxu0 0.0
        %575 = vmatpush1.msra.mxu0 %v550
        %576 = vmatprep.subr.mxu0 0.0
        %577 = vmatpush1.msra.mxu0 %v551
        %578 = vmatprep.subr.mxu0 0.0
        %579 = vmatpush1.msra.mxu0 %v552
        %580 = vmatprep.subr.mxu0 0.0
        %581 = vmatpush1.msra.mxu0 %v553
        %582 = vmatprep.subr.mxu0 0.0
        %583 = vmatpush1.msra.mxu0 %v554
        %584 = vmatprep.subr.mxu0 0.0
        %585 = vmatpush1.msra.mxu0 %v555
        %586 = vmatprep.subr.mxu0 0.0
        %587 = vmatpush1.msra.mxu0 %v556
        %588 = vmatprep.subr.mxu0 0.0
        %589 = vmatpush1.msra.mxu0 %v557
        %590 = vmatprep.subr.mxu0 0.0
        %591 = vmatpush1.msra.mxu0 0.0
        %592 = vmatprep.subr.mxu0 0.0
        %593 = vmatpush1.msra.mxu0 0.0
        %594 = vmatprep.subr.mxu0 0.0
        %595 = vmatpush1.msra.mxu0 0.0
        %596 = vmatprep.subr.mxu0 0.0
        %597 = vmatpush1.msra.mxu0 0.0
        %598 = vmatprep.subr.mxu0 0.0
        %599 = vmatpush1.msra.mxu0 0.0
        %600 = vmatprep.subr.mxu0 0.0
        %601 = vmatpush1.msra.mxu0 0.0
        %602 = vmatprep.subr.mxu0 0.0
        %603 = vmatpush1.msra.mxu0 0.0
        %604 = vmatprep.subr.mxu0 0.0
        %605 = vmatpush1.msra.mxu0 0.0
        %606 = vmatprep.subr.mxu0 0.0
        %607 = vmatpush1.msra.mxu0 0.0
        %608 = vmatprep.subr.mxu0 0.0
        %609 = vmatpush1.msra.mxu0 0.0
        %610 = vmatprep.subr.mxu0 0.0
        %611 = vmatpush1.msra.mxu0 0.0
        %612 = vmatprep.subr.mxu0 0.0
        %613 = vmatpush1.msra.mxu0 0.0
        %614 = vmatprep.subr.mxu0 0.0
        %615 = vmatpush1.msra.mxu0 0.0
        %616 = vmatprep.subr.mxu0 0.0
        %617 = vmatpush1.msra.mxu0 0.0
        %618 = vmatprep.subr.mxu0 0.0
        %619 = vmatpush1.msra.mxu0 0.0
        %620 = vmatprep.subr.mxu0 0.0
        %621 = vmatpush1.msra.mxu0 0.0
        %622 = vmatprep.mubr.f32.mxu0 0.0
        %623 = vmatmul.mubr.f32.gmra.mrb[0].mxu0 %v539
        %v624 = vpop.f32.mrb[0].mxu0
        %v625 = vadd.f32 0.0, %v624
        %v626 = vpop.f32.mrb[0].mxu0
        %627 = vmatprep.mubr.f32.mxu0 0.0
        %628 = vmatmul.mubr.f32.gmra.mrb[0].mxu0 %v540
        %v629 = vpop.f32.mrb[0].mxu0
        %v630 = vadd.f32 0.0, %v629
        %v631 = vpop.f32.mrb[0].mxu0
        %632 = vdwg.mxu0
        %v633 = vld [vmem:[#allocation2] sm:$0xff]
        %v634 = vld [vmem:[#allocation2 + $0x8] sm:$0xff]
        %v635 = vadd.f32 %v633, %v625
        %v636 = vadd.f32 %v634, %v630
        %637 = vst [vmem:[#allocation2] sm:$0xff] %v635
        %638 = vst [vmem:[#allocation2 + $0x8] sm:$0xff] %v636
        %v639 = vld [vmem:[%s213 + $0x12] sm:$0xff]
        %v640 = vld [vmem:[%s213 + $0x1a] sm:$0xff]
        %s641 = scalar_lea.vmem [#allocation6], 512
        %v642 = vld [vmem:[%s641] sm:$0xff]
        %v643 = vld [vmem:[%s641 + $0x8] sm:$0xff]
        %v644 = vld [vmem:[%s641 + $0x10] sm:$0xff]
        %v645 = vld [vmem:[%s641 + $0x18] sm:$0xff]
        %v646 = vld [vmem:[%s641 + $0x20] sm:$0xff]
        %v647 = vld [vmem:[%s641 + $0x28] sm:$0xff]
        %v648 = vld [vmem:[%s641 + $0x30] sm:$0xff]
        %v649 = vld [vmem:[%s641 + $0x38] sm:$0xff]
        %v650 = vld [vmem:[%s641 + $0x40] sm:$0xff]
        %v651 = vld [vmem:[%s641 + $0x48] sm:$0xff]
        %v652 = vld [vmem:[%s641 + $0x50] sm:$0xff]
        %v653 = vld [vmem:[%s641 + $0x58] sm:$0xff]
        %v654 = vld [vmem:[%s641 + $0x60] sm:$0xff]
        %v655 = vld [vmem:[%s641 + $0x68] sm:$0xff]
        %v656 = vld [vmem:[%s641 + $0x70] sm:$0xff]
        %v657 = vld [vmem:[%s641 + $0x78] sm:$0xff]
        %658 = vmatprep.subr.mxu0 0.0
        %659 = vmatpush1.msra.mxu0 %v642
        %660 = vmatprep.subr.mxu0 0.0
        %661 = vmatpush1.msra.mxu0 %v643
        %662 = vmatprep.subr.mxu0 0.0
        %663 = vmatpush1.msra.mxu0 %v644
        %664 = vmatprep.subr.mxu0 0.0
        %665 = vmatpush1.msra.mxu0 %v645
        %666 = vmatprep.subr.mxu0 0.0
        %667 = vmatpush1.msra.mxu0 %v646
        %668 = vmatprep.subr.mxu0 0.0
        %669 = vmatpush1.msra.mxu0 %v647
        %670 = vmatprep.subr.mxu0 0.0
        %671 = vmatpush1.msra.mxu0 %v648
        %672 = vmatprep.subr.mxu0 0.0
        %673 = vmatpush1.msra.mxu0 %v649
        %674 = vmatprep.subr.mxu0 0.0
        %675 = vmatpush1.msra.mxu0 %v650
        %676 = vmatprep.subr.mxu0 0.0
        %677 = vmatpush1.msra.mxu0 %v651
        %678 = vmatprep.subr.mxu0 0.0
        %679 = vmatpush1.msra.mxu0 %v652
        %680 = vmatprep.subr.mxu0 0.0
        %681 = vmatpush1.msra.mxu0 %v653
        %682 = vmatprep.subr.mxu0 0.0
        %683 = vmatpush1.msra.mxu0 %v654
        %684 = vmatprep.subr.mxu0 0.0
        %685 = vmatpush1.msra.mxu0 %v655
        %686 = vmatprep.subr.mxu0 0.0
        %687 = vmatpush1.msra.mxu0 %v656
        %688 = vmatprep.subr.mxu0 0.0
        %689 = vmatpush1.msra.mxu0 %v657
        %690 = vmatprep.subr.mxu0 0.0
        %691 = vmatpush1.msra.mxu0 0.0
        %692 = vmatprep.subr.mxu0 0.0
        %693 = vmatpush1.msra.mxu0 0.0
        %694 = vmatprep.subr.mxu0 0.0
        %695 = vmatpush1.msra.mxu0 0.0
        %696 = vmatprep.subr.mxu0 0.0
        %697 = vmatpush1.msra.mxu0 0.0
        %698 = vmatprep.subr.mxu0 0.0
        %699 = vmatpush1.msra.mxu0 0.0
        %700 = vmatprep.subr.mxu0 0.0
        %701 = vmatpush1.msra.mxu0 0.0
        %702 = vmatprep.subr.mxu0 0.0
        %703 = vmatpush1.msra.mxu0 0.0
        %704 = vmatprep.subr.mxu0 0.0
        %705 = vmatpush1.msra.mxu0 0.0
        %706 = vmatprep.subr.mxu0 0.0
        %707 = vmatpush1.msra.mxu0 0.0
        %708 = vmatprep.subr.mxu0 0.0
        %709 = vmatpush1.msra.mxu0 0.0
        %710 = vmatprep.subr.mxu0 0.0
        %711 = vmatpush1.msra.mxu0 0.0
        %712 = vmatprep.subr.mxu0 0.0
        %713 = vmatpush1.msra.mxu0 0.0
        %714 = vmatprep.subr.mxu0 0.0
        %715 = vmatpush1.msra.mxu0 0.0
        %716 = vmatprep.subr.mxu0 0.0
        %717 = vmatpush1.msra.mxu0 0.0
        %718 = vmatprep.subr.mxu0 0.0
        %719 = vmatpush1.msra.mxu0 0.0
        %720 = vmatprep.subr.mxu0 0.0
        %721 = vmatpush1.msra.mxu0 0.0
        %722 = vmatprep.mubr.f32.mxu0 0.0
        %723 = vmatmul.mubr.f32.gmra.mrb[0].mxu0 %v639
        %v724 = vpop.f32.mrb[0].mxu0
        %v725 = vadd.f32 0.0, %v724
        %v726 = vpop.f32.mrb[0].mxu0
        %727 = vmatprep.mubr.f32.mxu0 0.0
        %728 = vmatmul.mubr.f32.gmra.mrb[0].mxu0 %v640
        %v729 = vpop.f32.mrb[0].mxu0
        %v730 = vadd.f32 0.0, %v729
        %v731 = vpop.f32.mrb[0].mxu0
        %732 = vdwg.mxu0
        %v733 = vld [vmem:[#allocation2] sm:$0xff]
        %v734 = vld [vmem:[#allocation2 + $0x8] sm:$0xff]
        %v735 = vadd.f32 %v733, %v725
        %v736 = vadd.f32 %v734, %v730
        %737 = vst [vmem:[#allocation2] sm:$0xff] %v735
        %738 = vst [vmem:[#allocation2 + $0x8] sm:$0xff] %v736
        %v739 = vld [vmem:[%s213 + $0x14] sm:$0xff]
        %v740 = vld [vmem:[%s213 + $0x1c] sm:$0xff]
        %s741 = scalar_lea.vmem [#allocation6], 640
        %v742 = vld [vmem:[%s741] sm:$0xff]
        %v743 = vld [vmem:[%s741 + $0x8] sm:$0xff]
        %v744 = vld [vmem:[%s741 + $0x10] sm:$0xff]
        %v745 = vld [vmem:[%s741 + $0x18] sm:$0xff]
        %v746 = vld [vmem:[%s741 + $0x20] sm:$0xff]
        %v747 = vld [vmem:[%s741 + $0x28] sm:$0xff]
        %v748 = vld [vmem:[%s741 + $0x30] sm:$0xff]
        %v749 = vld [vmem:[%s741 + $0x38] sm:$0xff]
        %v750 = vld [vmem:[%s741 + $0x40] sm:$0xff]
        %v751 = vld [vmem:[%s741 + $0x48] sm:$0xff]
        %v752 = vld [vmem:[%s741 + $0x50] sm:$0xff]
        %v753 = vld [vmem:[%s741 + $0x58] sm:$0xff]
        %v754 = vld [vmem:[%s741 + $0x60] sm:$0xff]
        %v755 = vld [vmem:[%s741 + $0x68] sm:$0xff]
        %v756 = vld [vmem:[%s741 + $0x70] sm:$0xff]
        %v757 = vld [vmem:[%s741 + $0x78] sm:$0xff]
        %758 = vmatprep.subr.mxu0 0.0
        %759 = vmatpush1.msra.mxu0 %v742
        %760 = vmatprep.subr.mxu0 0.0
        %761 = vmatpush1.msra.mxu0 %v743
        %762 = vmatprep.subr.mxu0 0.0
        %763 = vmatpush1.msra.mxu0 %v744
        %764 = vmatprep.subr.mxu0 0.0
        %765 = vmatpush1.msra.mxu0 %v745
        %766 = vmatprep.subr.mxu0 0.0
        %767 = vmatpush1.msra.mxu0 %v746
        %768 = vmatprep.subr.mxu0 0.0
        %769 = vmatpush1.msra.mxu0 %v747
        %770 = vmatprep.subr.mxu0 0.0
        %771 = vmatpush1.msra.mxu0 %v748
        %772 = vmatprep.subr.mxu0 0.0
        %773 = vmatpush1.msra.mxu0 %v749
        %774 = vmatprep.subr.mxu0 0.0
        %775 = vmatpush1.msra.mxu0 %v750
        %776 = vmatprep.subr.mxu0 0.0
        %777 = vmatpush1.msra.mxu0 %v751
        %778 = vmatprep.subr.mxu0 0.0
        %779 = vmatpush1.msra.mxu0 %v752
        %780 = vmatprep.subr.mxu0 0.0
        %781 = vmatpush1.msra.mxu0 %v753
        %782 = vmatprep.subr.mxu0 0.0
        %783 = vmatpush1.msra.mxu0 %v754
        %784 = vmatprep.subr.mxu0 0.0
        %785 = vmatpush1.msra.mxu0 %v755
        %786 = vmatprep.subr.mxu0 0.0
        %787 = vmatpush1.msra.mxu0 %v756
        %788 = vmatprep.subr.mxu0 0.0
        %789 = vmatpush1.msra.mxu0 %v757
        %790 = vmatprep.subr.mxu0 0.0
        %791 = vmatpush1.msra.mxu0 0.0
        %792 = vmatprep.subr.mxu0 0.0
        %793 = vmatpush1.msra.mxu0 0.0
        %794 = vmatprep.subr.mxu0 0.0
        %795 = vmatpush1.msra.mxu0 0.0
        %796 = vmatprep.subr.mxu0 0.0
        %797 = vmatpush1.msra.mxu0 0.0
        %798 = vmatprep.subr.mxu0 0.0
        %799 = vmatpush1.msra.mxu0 0.0
        %800 = vmatprep.subr.mxu0 0.0
        %801 = vmatpush1.msra.mxu0 0.0
        %802 = vmatprep.subr.mxu0 0.0
        %803 = vmatpush1.msra.mxu0 0.0
        %804 = vmatprep.subr.mxu0 0.0
        %805 = vmatpush1.msra.mxu0 0.0
        %806 = vmatprep.subr.mxu0 0.0
        %807 = vmatpush1.msra.mxu0 0.0
        %808 = vmatprep.subr.mxu0 0.0
        %809 = vmatpush1.msra.mxu0 0.0
        %810 = vmatprep.subr.mxu0 0.0
        %811 = vmatpush1.msra.mxu0 0.0
        %812 = vmatprep.subr.mxu0 0.0
        %813 = vmatpush1.msra.mxu0 0.0
        %814 = vmatprep.subr.mxu0 0.0
        %815 = vmatpush1.msra.mxu0 0.0
        %816 = vmatprep.subr.mxu0 0.0
        %817 = vmatpush1.msra.mxu0 0.0
        %818 = vmatprep.subr.mxu0 0.0
        %819 = vmatpush1.msra.mxu0 0.0
        %820 = vmatprep.subr.mxu0 0.0
        %821 = vmatpush1.msra.mxu0 0.0
        %822 = vmatprep.mubr.f32.mxu0 0.0
        %823 = vmatmul.mubr.f32.gmra.mrb[0].mxu0 %v739
        %v824 = vpop.f32.mrb[0].mxu0
        %v825 = vadd.f32 0.0, %v824
        %v826 = vpop.f32.mrb[0].mxu0
        %827 = vmatprep.mubr.f32.mxu0 0.0
        %828 = vmatmul.mubr.f32.gmra.mrb[0].mxu0 %v740
        %v829 = vpop.f32.mrb[0].mxu0
        %v830 = vadd.f32 0.0, %v829
        %v831 = vpop.f32.mrb[0].mxu0
        %832 = vdwg.mxu0
        %v833 = vld [vmem:[#allocation2] sm:$0xff]
        %v834 = vld [vmem:[#allocation2 + $0x8] sm:$0xff]
        %v835 = vadd.f32 %v833, %v825
        %v836 = vadd.f32 %v834, %v830
        %837 = vst [vmem:[#allocation2] sm:$0xff] %v835
        %838 = vst [vmem:[#allocation2 + $0x8] sm:$0xff] %v836
        %v839 = vld [vmem:[%s213 + $0x16] sm:$0xff]
        %v840 = vld [vmem:[%s213 + $0x1e] sm:$0xff]
        %s841 = scalar_lea.vmem [#allocation6], 768
        %v842 = vld [vmem:[%s841] sm:$0xff]
        %v843 = vld [vmem:[%s841 + $0x8] sm:$0xff]
        %v844 = vld [vmem:[%s841 + $0x10] sm:$0xff]
        %v845 = vld [vmem:[%s841 + $0x18] sm:$0xff]
        %v846 = vld [vmem:[%s841 + $0x20] sm:$0xff]
        %v847 = vld [vmem:[%s841 + $0x28] sm:$0xff]
        %v848 = vld [vmem:[%s841 + $0x30] sm:$0xff]
        %v849 = vld [vmem:[%s841 + $0x38] sm:$0xff]
        %v850 = vld [vmem:[%s841 + $0x40] sm:$0xff]
        %v851 = vld [vmem:[%s841 + $0x48] sm:$0xff]
        %v852 = vld [vmem:[%s841 + $0x50] sm:$0xff]
        %v853 = vld [vmem:[%s841 + $0x58] sm:$0xff]
        %v854 = vld [vmem:[%s841 + $0x60] sm:$0xff]
        %v855 = vld [vmem:[%s841 + $0x68] sm:$0xff]
        %v856 = vld [vmem:[%s841 + $0x70] sm:$0xff]
        %v857 = vld [vmem:[%s841 + $0x78] sm:$0xff]
        %858 = vmatprep.subr.mxu0 0.0
        %859 = vmatpush1.msra.mxu0 %v842
        %860 = vmatprep.subr.mxu0 0.0
        %861 = vmatpush1.msra.mxu0 %v843
        %862 = vmatprep.subr.mxu0 0.0
        %863 = vmatpush1.msra.mxu0 %v844
        %864 = vmatprep.subr.mxu0 0.0
        %865 = vmatpush1.msra.mxu0 %v845
        %866 = vmatprep.subr.mxu0 0.0
        %867 = vmatpush1.msra.mxu0 %v846
        %868 = vmatprep.subr.mxu0 0.0
        %869 = vmatpush1.msra.mxu0 %v847
        %870 = vmatprep.subr.mxu0 0.0
        %871 = vmatpush1.msra.mxu0 %v848
        %872 = vmatprep.subr.mxu0 0.0
        %873 = vmatpush1.msra.mxu0 %v849
        %874 = vmatprep.subr.mxu0 0.0
        %875 = vmatpush1.msra.mxu0 %v850
        %876 = vmatprep.subr.mxu0 0.0
        %877 = vmatpush1.msra.mxu0 %v851
        %878 = vmatprep.subr.mxu0 0.0
        %879 = vmatpush1.msra.mxu0 %v852
        %880 = vmatprep.subr.mxu0 0.0
        %881 = vmatpush1.msra.mxu0 %v853
        %882 = vmatprep.subr.mxu0 0.0
        %883 = vmatpush1.msra.mxu0 %v854
        %884 = vmatprep.subr.mxu0 0.0
        %885 = vmatpush1.msra.mxu0 %v855
        %886 = vmatprep.subr.mxu0 0.0
        %887 = vmatpush1.msra.mxu0 %v856
        %888 = vmatprep.subr.mxu0 0.0
        %889 = vmatpush1.msra.mxu0 %v857
        %890 = vmatprep.subr.mxu0 0.0
        %891 = vmatpush1.msra.mxu0 0.0
        %892 = vmatprep.subr.mxu0 0.0
        %893 = vmatpush1.msra.mxu0 0.0
        %894 = vmatprep.subr.mxu0 0.0
        %895 = vmatpush1.msra.mxu0 0.0
        %896 = vmatprep.subr.mxu0 0.0
        %897 = vmatpush1.msra.mxu0 0.0
        %898 = vmatprep.subr.mxu0 0.0
        %899 = vmatpush1.msra.mxu0 0.0
        %900 = vmatprep.subr.mxu0 0.0
        %901 = vmatpush1.msra.mxu0 0.0
        %902 = vmatprep.subr.mxu0 0.0
        %903 = vmatpush1.msra.mxu0 0.0
        %904 = vmatprep.subr.mxu0 0.0
        %905 = vmatpush1.msra.mxu0 0.0
        %906 = vmatprep.subr.mxu0 0.0
        %907 = vmatpush1.msra.mxu0 0.0
        %908 = vmatprep.subr.mxu0 0.0
        %909 = vmatpush1.msra.mxu0 0.0
        %910 = vmatprep.subr.mxu0 0.0
        %911 = vmatpush1.msra.mxu0 0.0
        %912 = vmatprep.subr.mxu0 0.0
        %913 = vmatpush1.msra.mxu0 0.0
        %914 = vmatprep.subr.mxu0 0.0
        %915 = vmatpush1.msra.mxu0 0.0
        %916 = vmatprep.subr.mxu0 0.0
        %917 = vmatpush1.msra.mxu0 0.0
        %918 = vmatprep.subr.mxu0 0.0
        %919 = vmatpush1.msra.mxu0 0.0
        %920 = vmatprep.subr.mxu0 0.0
        %921 = vmatpush1.msra.mxu0 0.0
        %922 = vmatprep.mubr.f32.mxu0 0.0
        %923 = vmatmul.mubr.f32.gmra.mrb[0].mxu0 %v839
        %v924 = vpop.f32.mrb[0].mxu0
        %v925 = vadd.f32 0.0, %v924
        %v926 = vpop.f32.mrb[0].mxu0
        %927 = vmatprep.mubr.f32.mxu0 0.0
        %928 = vmatmul.mubr.f32.gmra.mrb[0].mxu0 %v840
        %v929 = vpop.f32.mrb[0].mxu0
        %v930 = vadd.f32 0.0, %v929
        %v931 = vpop.f32.mrb[0].mxu0
        %932 = vdwg.mxu0
        %v933 = vld [vmem:[#allocation2] sm:$0xff]
        %v934 = vld [vmem:[#allocation2 + $0x8] sm:$0xff]
        %v935 = vadd.f32 %v933, %v925
        %v936 = vadd.f32 %v934, %v930
        %937 = vst [vmem:[#allocation2] sm:$0xff] %v935
        %938 = vst [vmem:[#allocation2 + $0x8] sm:$0xff] %v936
        %v939 = vld [vmem:[#allocation2] sm:$0xff]
        %v940 = vld [vmem:[#allocation2 + $0x8] sm:$0xff]
        %v941 = vld [vmem:[#allocation8] sm:$0x1]
        %v943 = vlaneseq
        %v944 = vshrl.u32 %v943, 7
        %v945 = vsub.s32 0, %v944
        %v946 = vrot.slane %v941, %v945
        %v948 = vadd.f32 %v939, %v946
        %v949 = vadd.f32 %v940, %v946
        %v950 = vmax.f32 %v948, 0.0
        %v951 = vmax.f32 %v949, 0.0
        %952 = vst [vmem:[%s243 + $0x10] sm:$0xff] %v950
        %953 = vst [vmem:[%s243 + $0x18] sm:$0xff] %v951
        %954 = vst [vmem:[%s243] sm:$0xff] 0.0
        %955 = vst [vmem:[%s243 + $0x8] sm:$0xff] 0.0
        %956 = vst [vmem:[%s243 + $0x20] sm:$0xff] 0.0
        %957 = vst [vmem:[%s243 + $0x28] sm:$0xff] 0.0
        %s958 = sand.u32 %s121, 1
        %s959 = scalar_lea.sflag [#allocation5], %s958
        %s960 = sand.u32 %s121, 1
        %s961 = smul.addr %s960, 48
        %s962 = scalar_lea.vmem [#allocation9], %s961
        // Predicated region
        $region45: #{jasper_forward.13} parent=31 // pred_check
          %p963 = pneg %p131
        $region46: #{jasper_forward.13} parent=31 // pred_check_branch
          %965 = sbr.rel (%p963) target = $region48
        $region47: #{jasper_forward.13} parent=31 // pred_region
          %s967 = ssub.s32 768, 768
          %968 = vsyncadd %s959, %s967
          %s969 = smul.addr %s25, 6
          %s970 = sadd.s32 %s26, %s969
          %s971 = smul.addr %s970, 128
          %s972 = scalar_lea.hbm %s3, %s971
          %s973 = sshll.u32 %s962, 4
          %s974 = int_to_ptr.vmem [resolvable:$true] %s973
          %979 = dma.vmem_to_hbm [thread:$0]  %s974, 768, %s972, %s959, 128, 128, 8
        $region48: #{jasper_forward.13} parent=31 // pred_fallthru
          _
      $region32: #{jasper_forward.13} parent=5 // pred_fallthru
        _
      %p980 = scmp.le.s32.totalorder 2, %s16
      // Predicated region
      $region49: #{jasper_forward.13} parent=5 // pred_check
        %p981 = pneg %p980
      $region50: #{jasper_forward.13} parent=5 // pred_check_branch
        %983 = sbr.rel (%p981) target = $region52
      $region51: #{jasper_forward.13} parent=5 // pred_region
        %s984 = ssub.s32 %s16, 2
        // Predicated region
        $region53: #{jasper_forward.13} parent=51 // pred_check
          %p985 = pneg %p137
        $region54: #{jasper_forward.13} parent=51 // pred_check_branch
          %987 = sbr.rel (%p985) target = $region56
        $region55: #{jasper_forward.13} parent=51 // pred_region
          %s988 = sand.u32 %s122, 1
          %s989 = scalar_lea.sflag [#allocation5], %s988
          %s990 = sand.u32 %s122, 1
          %s991 = smul.addr %s990, 48
          %s992 = scalar_lea.vmem [#allocation9], %s991
          %993 = dma.done %s989, 768
        $region56: #{jasper_forward.13} parent=51 // pred_fallthru
          _
      $region52: #{jasper_forward.13} parent=5 // pred_fallthru
        _
    $region6: #{jasper_forward.13} parent=1 // loop_footer
      %s20 = sadd.s32 1, %s16
    $region7: #{jasper_forward.13} parent=1 // loop_footer_branch
      %15 = sbr.rel target = $region3
    $region8: #{jasper_forward.13} parent=1 // loop_exit
      _
    %994 = vsyncpa [#allocation4], 1
    %s995 = scalar_lea.sflag [#allocation4], 1
    %996 = vsyncpa %s995, 1
    %997 = vsyncpa [#allocation7], 1
    %998 = vsyncpa [#allocation5], 1
    %s999 = scalar_lea.sflag [#allocation5], 1
    %1000 = vsyncpa %s999, 1

</llo_original>
